<compile_context>
chip_gen: v5e
topology: v5e:2x2
jax: 0.10.0
libtpu: 0.0.40
codegen_flags: <defaults>
</compile_context>

<pallas_src>
import functools

import jax
import jax.numpy as jnp
from jax.experimental import pallas as pl
from jax.experimental.pallas import tpu as pltpu


# ----------------------------------------------------------------------------
# Helpers
# ----------------------------------------------------------------------------
def _largest_aligned_divisor(total, target, align):
    """Largest divisor of `total` that is <= target and a multiple of `align`.
    Falls back to `total` (full extent, always a legal block) if none exists."""
    for d in range(min(total, target), 0, -1):
        if total % d == 0 and d % align == 0:
            return d
    return total


def _chip_config():
    """Per-generation tuning knobs (see header notes)."""
    kind = jax.devices()[0].device_kind.lower()
    is_v7 = ("v7" in kind) or ("7x" in kind)
    is_v6 = "v6" in kind
    # bf16 EUP/VPU exist on v6e/v7x only -> bf16 SiLU epilogue there.
    bf16_epilogue = is_v6 or is_v7
    # v7x has 64 MiB physical VMEM per TC; v5e/v6e have 128 MiB.
    vmem_limit = (48 if is_v7 else 96) * 1024 * 1024
    # v7x: 2 TensorCores -> keep a 2-way split on the "parallel" channel axis.
    # Elsewhere: single channel tile (no stem recompute / patches re-DMA).
    channel_split = 2 if is_v7 else 1
    return bf16_epilogue, vmem_limit, channel_split


def fold_bn(gamma, beta, mean, var, eps=1e-5):
    scale = gamma / jnp.sqrt(var + eps)
    shift = beta - mean * scale
    return scale, shift


def im2col(x_nhwc, kh, kw, stride, pad):
    # TODO(synk): im2col is still plain-JAX glue (one extra HBM write+read of
    # the expanded patches).  It could be folded into the Pallas pipeline with
    # 3-row-halo NHWC DMAs per spatial step; biggest relative win on v5e.
    x = jnp.pad(x_nhwc, ((0, 0), (pad, pad), (pad, pad), (0, 0)))
    n, h, w, c = x.shape
    ho = (h - kh) // stride + 1
    wo = (w - kw) // stride + 1
    cols = []
    for i in range(kh):
        for j in range(kw):
            cols.append(x[:, i:i + stride * ho:stride, j:j + stride * wo:stride, :])
    p = jnp.stack(cols, axis=3)                     # (N, Ho, Wo, kh*kw, C)
    return p.reshape(n, ho * wo, kh * kw * c), (n, ho, wo)


# ----------------------------------------------------------------------------
# Kernel 1: fused stem conv (im2col matmul) + BN + SiLU
#           -> 1x1 projection + BN + SiLU -> global-average-pool accumulation.
#   grid = (channel_tiles ["parallel"], spatial_tiles ["arbitrary"]).
#   GAP partial sums accumulate in a VMEM scratch; o_ref written once at the
#   last spatial tile.
# ----------------------------------------------------------------------------
def _stem_proj_gap_kernel(x_ref, ws_ref, ss_ref, sh_ref,
                          wp_ref, ps_ref, ph_ref, o_ref, acc_ref,
                          *, inv_hw, bf16_epilogue):
    t = pl.program_id(1)

    @pl.when(t == 0)
    def _init():
        acc_ref[...] = jnp.zeros_like(acc_ref)

    nb, thw, kp = x_ref.shape
    # Fold batch into the matmul M dim: one MXU push per grid step instead of
    # nb small ones (leading-dim merge; layout no-op since thw % 16 == 0).
    x = x_ref[...].reshape(nb * thw, kp)                            # bf16
    # stem conv (as matmul) + folded BN + SiLU   (f32 epilogue)
    h = jnp.dot(x, ws_ref[...], preferred_element_type=jnp.float32)
    h = h * ss_ref[...] + sh_ref[...]
    h = h * jax.nn.sigmoid(h)                                       # SiLU
    # 1x1 projection (this channel tile) + folded BN
    p = jnp.dot(h.astype(wp_ref.dtype), wp_ref[...],
                preferred_element_type=jnp.float32)
    p = p * ps_ref[...] + ph_ref[...]
    # SiLU epilogue is the EUP-bound stream: bf16 on v6e/v7x (~2x EUP rate),
    # f32 on v5e (no bf16 EUP/VPU).  BN affine + GAP sum stay f32.
    if bf16_epilogue:
        pb = p.astype(jnp.bfloat16)
        p = (pb * jax.nn.sigmoid(pb)).astype(jnp.float32)
    else:
        p = p * jax.nn.sigmoid(p)                                   # SiLU
    # GAP partial sum of this spatial tile: one full-block scratch update
    # (no per-batch-row masked stores, no o_ref read-modify-write).
    acc_ref[...] += jnp.sum(p.reshape(nb, thw, -1), axis=1)

    @pl.when(t == pl.num_programs(1) - 1)
    def _finalize():
        o_ref[...] = acc_ref[...] * inv_hw


def stem_proj_gap(patches, w_stem, s_scale, s_shift, w_proj, p_scale, p_shift,
                  *, tile_hw=1024, tile_n=None, bf16_epilogue=None):
    n, hw, k = patches.shape
    k_w, cs = w_stem.shape
    cs2, cout = w_proj.shape
    assert k == k_w and cs == cs2

    auto_bf16, vmem_limit, channel_split = _chip_config()
    if bf16_epilogue is None:
        bf16_epilogue = auto_bf16
    if tile_n is None:
        tile_n = max(128, cout // channel_split)

    # Pad the contraction dim 27 -> 32 (avoids ragged masked loads); bf16 DMAs.
    k_pad = max(32, ((k + 7) // 8) * 8)
    patches = jnp.pad(patches, ((0, 0), (0, 0), (0, k_pad - k))).astype(jnp.bfloat16)
    w_stem = jnp.pad(w_stem, ((0, k_pad - k), (0, 0))).astype(jnp.bfloat16)
    w_proj = w_proj.astype(jnp.bfloat16)
    s_scale = s_scale.reshape(1, cs).astype(jnp.float32)
    s_shift = s_shift.reshape(1, cs).astype(jnp.float32)
    p_scale = p_scale.reshape(1, cout).astype(jnp.float32)
    p_shift = p_shift.reshape(1, cout).astype(jnp.float32)

    tile_hw = _largest_aligned_divisor(hw, tile_hw, 16)    # bf16 sublane pack = 16
    tile_n = _largest_aligned_divisor(cout, tile_n, 128)   # lane-dense output
    grid = (cout // tile_n, hw // tile_hw)

    kernel = functools.partial(_stem_proj_gap_kernel, inv_hw=1.0 / hw,
                               bf16_epilogue=bf16_epilogue)
    return pl.pallas_call(
        kernel,
        out_shape=jax.ShapeDtypeStruct((n, cout), jnp.float32),
        grid=grid,
        in_specs=[
            pl.BlockSpec((n, tile_hw, k_pad), lambda j, t: (0, t, 0)),
            pl.BlockSpec((k_pad, cs), lambda j, t: (0, 0)),
            pl.BlockSpec((1, cs), lambda j, t: (0, 0)),
            pl.BlockSpec((1, cs), lambda j, t: (0, 0)),
            pl.BlockSpec((cs, tile_n), lambda j, t: (0, j)),
            pl.BlockSpec((1, tile_n), lambda j, t: (0, j)),
            pl.BlockSpec((1, tile_n), lambda j, t: (0, j)),
        ],
        out_specs=pl.BlockSpec((n, tile_n), lambda j, t: (0, j)),
        scratch_shapes=[pltpu.VMEM((n, tile_n), jnp.float32)],
        compiler_params=pltpu.CompilerParams(
            dimension_semantics=("parallel", "arbitrary"),
            vmem_limit_bytes=vmem_limit,
        ),
    )(patches, w_stem, s_scale, s_shift, w_proj, p_scale, p_shift)


# ----------------------------------------------------------------------------
# Kernel 2: replaced classifier head
#   Linear(1280,512) -> ReLU -> BatchNorm1d(512)(eval, folded into Linear2)
#   -> Dropout(0.3)(eval, identity) -> Linear(512,2)
#   Output padded to 128 lanes (lane-dense store), sliced back outside.
# TODO(synk): on v5e/v6e (single channel tile) this could be fused into the
#   GAP kernel's final spatial step to save one launch + the feat HBM trip.
# ----------------------------------------------------------------------------
def _head_kernel(x_ref, w1_ref, b1_ref, w2_ref, b2_ref, o_ref):
    x = x_ref[...].astype(jnp.bfloat16)
    h = jnp.dot(x, w1_ref[...], preferred_element_type=jnp.float32)
    h = jnp.maximum(h + b1_ref[...], 0.0)                      # ReLU
    # BatchNorm1d (eval) already folded into w2/b2; Dropout(0.3) -> identity
    o = jnp.dot(h.astype(jnp.bfloat16), w2_ref[...],
                preferred_element_type=jnp.float32)
    o_ref[...] = o + b2_ref[...]


def classifier_head(x, w1, b1, gamma, beta, mean, var, w2, b2, eps=1e-5):
    n, _ = x.shape
    hid = w1.shape[1]
    out_dim = w2.shape[1]

    # Fold eval-mode BatchNorm1d into the second Linear at trace time.
    bn_scale = gamma * jax.lax.rsqrt(var + eps)
    w2_f = w2 * bn_scale[:, None]
    b2_f = b2 + (beta - mean * bn_scale) @ w2

    out_pad = ((out_dim + 127) // 128) * 128
    w2_p = jnp.zeros((hid, out_pad), jnp.float32).at[:, :out_dim].set(w2_f)
    b2_p = jnp.zeros((1, out_pad), jnp.float32).at[:, :out_dim].set(b2_f)

    out = pl.pallas_call(
        _head_kernel,
        out_shape=jax.ShapeDtypeStruct((n, out_pad), jnp.float32),
        compiler_params=pltpu.CompilerParams(vmem_limit_bytes=32 * 1024 * 1024),
    )(x,
      w1.astype(jnp.bfloat16),
      b1.reshape(1, hid).astype(jnp.float32),
      w2_p.astype(jnp.bfloat16),
      b2_p)
    return out[:, :out_dim]


# ----------------------------------------------------------------------------
# GeolocationCNN forward (inference)
# ----------------------------------------------------------------------------
def geolocation_cnn_forward(x_nchw, params, *, tile_hw=1024, tile_n=None,
                            bf16_epilogue=None):
    # NCHW (PyTorch) -> NHWC (kernel layout)
    x = jnp.transpose(x_nchw, (0, 2, 3, 1)).astype(jnp.float32)

    # --- EfficientNet-B0 stem: Conv 3x3 s2 p1 (3->32, no bias) + BN + SiLU ---
    patches, (n, ho, wo) = im2col(x, 3, 3, 2, 1)              # (N, Ho*Wo, 27)

    # TODO(synk): EfficientNet-B0 MBConv blocks 1-16 (depthwise convs + SE) are
    # omitted; the stem output feeds the final 1x1 projection directly.

    # torchvision efficientnet_b0 uses default BatchNorm2d eps=1e-5.
    s_scale, s_shift = fold_bn(*params["stem_bn"])
    p_scale, p_shift = fold_bn(*params["proj_bn"])

    # --- Fused: stem conv+BN+SiLU -> 1x1 proj(1280)+BN+SiLU -> avgpool(1,1) --
    feat = stem_proj_gap(patches, params["w_stem"], s_scale, s_shift,
                         params["w_proj"], p_scale, p_shift,
                         tile_hw=tile_hw, tile_n=tile_n,
                         bf16_epilogue=bf16_epilogue)          # (N, 1280)

    # classifier[0] = Dropout(p=0.2): inference mode -> identity
    g, b, mu, var = params["head_bn"]
    logits = classifier_head(feat, params["w1"], params["b1"],
                             g, b, mu, var, params["w2"], params["b2"])
    return logits                                              # (N, 2)


# ----------------------------------------------------------------------------
# Pure-JAX reference (f32) for numerical sanity checking
# ----------------------------------------------------------------------------
def reference_forward(x_nchw, params, eps=1e-5):
    x = jnp.transpose(x_nchw, (0, 2, 3, 1)).astype(jnp.float32)
    patches, _ = im2col(x, 3, 3, 2, 1)
    silu = lambda v: v * jax.nn.sigmoid(v)
    s_scale, s_shift = fold_bn(*params["stem_bn"])
    h = silu(jnp.einsum("bsk,kc->bsc", patches, params["w_stem"]) * s_scale + s_shift)
    p_scale, p_shift = fold_bn(*params["proj_bn"])
    p = silu(jnp.einsum("bsk,kc->bsc", h, params["w_proj"]) * p_scale + p_shift)
    feat = p.mean(axis=1)
    g, b, mu, var = params["head_bn"]
    h1 = jnp.maximum(feat @ params["w1"] + params["b1"], 0.0)
    h1 = (h1 - mu) * (g * jax.lax.rsqrt(var + eps)) + b
    return h1 @ params["w2"] + params["b2"]


def init_params(key):
    ks = jax.random.split(key, 16)
    f32 = jnp.float32

    def bn(k, c):
        k1, k2, k3, k4 = jax.random.split(k, 4)
        gamma = 1.0 + 0.1 * jax.random.normal(k1, (c,), f32)
        beta = 0.05 * jax.random.normal(k2, (c,), f32)
        mean = 0.1 * jax.random.normal(k3, (c,), f32)
        var = 1.0 + 0.5 * jax.random.uniform(k4, (c,), f32)
        return gamma, beta, mean, var

    p = {}
    # stem conv: (kh*kw*Cin, Cout) = (27, 32)
    p["w_stem"] = jax.random.normal(ks[0], (27, 32), f32) * 0.1
    p["stem_bn"] = bn(ks[1], 32)
    # final 1x1 projection conv to 1280 features
    p["w_proj"] = jax.random.normal(ks[2], (32, 1280), f32) * 0.05
    p["proj_bn"] = bn(ks[3], 1280)
    # replaced classifier head
    p["w1"] = jax.random.normal(ks[4], (1280, 512), f32) * 0.02
    p["b1"] = 0.01 * jax.random.normal(ks[5], (512,), f32)
    p["head_bn"] = bn(ks[6], 512)
    p["w2"] = jax.random.normal(ks[7], (512, 2), f32) * 0.05
    p["b2"] = 0.01 * jax.random.normal(ks[8], (2,), f32)
    return p


if __name__ == "__main__":
    key = jax.random.PRNGKey(0)
    k_x, k_p = jax.random.split(key)
    # small image batch, NCHW like the PyTorch module expects (RGB, 32x32)
    x = jax.random.normal(k_x, (2, 3, 32, 32), jnp.float32)
    params = init_params(k_p)

    ref = reference_forward(x, params)

    # 1) auto-tuned per-chip config; small spatial tile so the toy input still
    #    exercises multi-step GAP accumulation and the pl.when init/finalize.
    fwd = jax.jit(functools.partial(geolocation_cnn_forward, tile_hw=64))
    logits = jax.block_until_ready(fwd(x, params))
    assert logits.shape == (2, 2) and logits.dtype == jnp.float32
    err = float(jnp.max(jnp.abs(logits - ref)))
    assert err < 1e-2, f"numerical mismatch vs reference (auto config): {err}"

    # 2) explicit 2-way channel split (v7x-style layout) to exercise the
    #    channel-tiled accumulator re-init path.
    fwd2 = jax.jit(functools.partial(geolocation_cnn_forward,
                                     tile_hw=64, tile_n=640))
    logits2 = jax.block_until_ready(fwd2(x, params))
    err2 = float(jnp.max(jnp.abs(logits2 - ref)))
    assert err2 < 1e-2, f"numerical mismatch vs reference (split config): {err2}"

    print("KERNEL_OK")
</pallas_src>

<mosaic_0001>
module attributes {stable_mosaic.version = 11 : i64} {
  func.func @_stem_proj_gap_kernel(%arg0: i32, %arg1: i32, %arg2: memref<2x64x32xbf16, #tpu.memory_space<vmem>>, %arg3: memref<32x32xbf16, #tpu.memory_space<vmem>>, %arg4: memref<1x32xf32, #tpu.memory_space<vmem>>, %arg5: memref<1x32xf32, #tpu.memory_space<vmem>>, %arg6: memref<32x1280xbf16, #tpu.memory_space<vmem>>, %arg7: memref<1x1280xf32, #tpu.memory_space<vmem>>, %arg8: memref<1x1280xf32, #tpu.memory_space<vmem>>, %arg9: memref<2x1280xf32, #tpu.memory_space<vmem>>, %arg10: memref<2x1280xf32, #tpu.memory_space<vmem>>) attributes {dimension_semantics = [#tpu.dimension_semantics<parallel>, #tpu.dimension_semantics<arbitrary>], iteration_bounds = array<i64: 1, 4>, scalar_prefetch = 0 : i64, scratch_operands = 1 : i64, tpu.core_type = #tpu.core_type<tc>, window_params = [{transform_indices = @transform_0, window_bounds = array<i64: 2, 64, 32>}, {pipeline_mode = #tpu.pipeline_mode<synchronous>, transform_indices = @transform_1, window_bounds = array<i64: 32, 32>}, {pipeline_mode = #tpu.pipeline_mode<synchronous>, transform_indices = @transform_2, window_bounds = array<i64: 1, 32>}, {pipeline_mode = #tpu.pipeline_mode<synchronous>, transform_indices = @transform_3, window_bounds = array<i64: 1, 32>}, {transform_indices = @transform_4, window_bounds = array<i64: 32, 1280>}, {transform_indices = @transform_5, window_bounds = array<i64: 1, 1280>}, {transform_indices = @transform_6, window_bounds = array<i64: 1, 1280>}, {transform_indices = @transform_7, window_bounds = array<i64: 2, 1280>}]} {
    %c0_i32 = arith.constant 0 : i32
    %0 = arith.cmpi eq, %arg1, %c0_i32 : i32
    %1 = arith.extui %0 : i1 to i32
    %c0_i32_0 = arith.constant 0 : i32
    %2 = arith.cmpi ne, %1, %c0_i32_0 : i32
    scf.if %2 {
      %cst_24 = arith.constant 0.000000e+00 : f32
      %42 = vector.broadcast %cst_24 : f32 to vector<2x1280xf32>
      %c0_25 = arith.constant 0 : index
      %c0_26 = arith.constant 0 : index
      %43 = vector.load %arg10[%c0_25, %c0_26] : memref<2x1280xf32, #tpu.memory_space<vmem>>, vector<2x1280xf32>
      tpu.vector_store %arg10[%c0_25, %c0_26], %42 {strides = array<i32>} : memref<2x1280xf32, #tpu.memory_space<vmem>>, vector<2x1280xf32>,
    } else {
    }
    %c0 = arith.constant 0 : index
    %c0_1 = arith.constant 0 : index
    %c0_2 = arith.constant 0 : index
    %3 = vector.load %arg2[%c0, %c0_1, %c0_2] : memref<2x64x32xbf16, #tpu.memory_space<vmem>>, vector<2x64x32xbf16>
    %4 = vector.shape_cast %3 : vector<2x64x32xbf16> to vector<128x32xbf16>
    %c0_3 = arith.constant 0 : index
    %c0_4 = arith.constant 0 : index
    %5 = vector.load %arg3[%c0_3, %c0_4] : memref<32x32xbf16, #tpu.memory_space<vmem>>, vector<32x32xbf16>
    %cst = arith.constant dense<0.000000e+00> : vector<128x32xf32>
    %6 = tpu.matmul %4, %5, %cst {dimension_numbers = #tpu.dot_dimension_numbers<[1], [0], [0], [1], [0, 0, 1, 1], [], []>} : vector<128x32xbf16>, vector<32x32xbf16>, vector<128x32xf32> -> vector<128x32xf32>
    %c0_5 = arith.constant 0 : index
    %c0_6 = arith.constant 0 : index
    %7 = vector.load %arg4[%c0_5, %c0_6] : memref<1x32xf32, #tpu.memory_space<vmem>>, vector<1x32xf32>
    %8 = vector.broadcast %7 : vector<1x32xf32> to vector<128x32xf32>
    %9 = arith.mulf %6, %8 : vector<128x32xf32>
    %c0_7 = arith.constant 0 : index
    %c0_8 = arith.constant 0 : index
    %10 = vector.load %arg5[%c0_7, %c0_8] : memref<1x32xf32, #tpu.memory_space<vmem>>, vector<1x32xf32>
    %11 = vector.broadcast %10 : vector<1x32xf32> to vector<128x32xf32>
    %12 = arith.addf %9, %11 : vector<128x32xf32>
    %13 = arith.negf %12 : vector<128x32xf32>
    %14 = math.exp %13 : vector<128x32xf32>
    %cst_9 = arith.constant 1.000000e+00 : f32
    %15 = vector.broadcast %cst_9 : f32 to vector<128x32xf32>
    %16 = arith.addf %15, %14 : vector<128x32xf32>
    %17 = arith.divf %15, %16 : vector<128x32xf32>
    %18 = arith.mulf %12, %17 : vector<128x32xf32>
    %19 = arith.truncf %18 : vector<128x32xf32> to vector<128x32xbf16>
    %c0_10 = arith.constant 0 : index
    %c0_11 = arith.constant 0 : index
    %20 = vector.load %arg6[%c0_10, %c0_11] : memref<32x1280xbf16, #tpu.memory_space<vmem>>, vector<32x1280xbf16>
    %cst_12 = arith.constant dense<0.000000e+00> : vector<128x1280xf32>
    %21 = tpu.matmul %19, %20, %cst_12 {dimension_numbers = #tpu.dot_dimension_numbers<[1], [0], [0], [1], [0, 0, 1, 1], [], []>} : vector<128x32xbf16>, vector<32x1280xbf16>, vector<128x1280xf32> -> vector<128x1280xf32>
    %c0_13 = arith.constant 0 : index
    %c0_14 = arith.constant 0 : index
    %22 = vector.load %arg7[%c0_13, %c0_14] : memref<1x1280xf32, #tpu.memory_space<vmem>>, vector<1x1280xf32>
    %23 = vector.broadcast %22 : vector<1x1280xf32> to vector<128x1280xf32>
    %24 = arith.mulf %21, %23 : vector<128x1280xf32>
    %c0_15 = arith.constant 0 : index
    %c0_16 = arith.constant 0 : index
    %25 = vector.load %arg8[%c0_15, %c0_16] : memref<1x1280xf32, #tpu.memory_space<vmem>>, vector<1x1280xf32>
    %26 = vector.broadcast %25 : vector<1x1280xf32> to vector<128x1280xf32>
    %27 = arith.addf %24, %26 : vector<128x1280xf32>
    %28 = arith.negf %27 : vector<128x1280xf32>
    %29 = math.exp %28 : vector<128x1280xf32>
    %cst_17 = arith.constant 1.000000e+00 : f32
    %30 = vector.broadcast %cst_17 : f32 to vector<128x1280xf32>
    %31 = arith.addf %30, %29 : vector<128x1280xf32>
    %32 = arith.divf %30, %31 : vector<128x1280xf32>
    %33 = arith.mulf %27, %32 : vector<128x1280xf32>
    %c0_18 = arith.constant 0 : index
    %c0_19 = arith.constant 0 : index
    %34 = vector.load %arg10[%c0_18, %c0_19] : memref<2x1280xf32, #tpu.memory_space<vmem>>, vector<2x1280xf32>
    %35 = vector.shape_cast %33 : vector<128x1280xf32> to vector<2x64x1280xf32>
    %cst_20 = arith.constant dense<0.000000e+00> : vector<2x1280xf32>
    %36 = vector.multi_reduction <add>, %35, %cst_20 [1] : vector<2x64x1280xf32> to vector<2x1280xf32>
    %37 = arith.addf %34, %36 : vector<2x1280xf32>
    %c0_21 = arith.constant 0 : index
    %c0_22 = arith.constant 0 : index
    %38 = vector.load %arg10[%c0_21, %c0_22] : memref<2x1280xf32, #tpu.memory_space<vmem>>, vector<2x1280xf32>
    tpu.vector_store %arg10[%c0_21, %c0_22], %37 {strides = array<i32>} : memref<2x1280xf32, #tpu.memory_space<vmem>>, vector<2x1280xf32>,
    %c3_i32 = arith.constant 3 : i32
    %39 = arith.cmpi eq, %arg1, %c3_i32 : i32
    %40 = arith.extui %39 : i1 to i32
    %c0_i32_23 = arith.constant 0 : i32
    %41 = arith.cmpi ne, %40, %c0_i32_23 : i32
    scf.if %41 {
      %c0_24 = arith.constant 0 : index
      %c0_25 = arith.constant 0 : index
      %42 = vector.load %arg10[%c0_24, %c0_25] : memref<2x1280xf32, #tpu.memory_space<vmem>>, vector<2x1280xf32>
      %cst_26 = arith.constant 3.906250e-03 : f32
      %43 = vector.broadcast %cst_26 : f32 to vector<2x1280xf32>
      %44 = arith.mulf %42, %43 : vector<2x1280xf32>
      %c0_27 = arith.constant 0 : index
      %c0_28 = arith.constant 0 : index
      %45 = vector.load %arg9[%c0_27, %c0_28] : memref<2x1280xf32, #tpu.memory_space<vmem>>, vector<2x1280xf32>
      tpu.vector_store %arg9[%c0_27, %c0_28], %44 {strides = array<i32>} : memref<2x1280xf32, #tpu.memory_space<vmem>>, vector<2x1280xf32>,
    } else {
    }
    return
  }
  func.func @transform_0(%arg0: i32, %arg1: i32) -> (i32, i32, i32) {
    %c0_i32 = arith.constant 0 : i32
    %c0_i32_0 = arith.constant 0 : i32
    %c0_i32_1 = arith.constant 0 : i32
    return %c0_i32, %arg1, %c0_i32_0 : i32, i32, i32
  }
  func.func @transform_1(%arg0: i32, %arg1: i32) -> (i32, i32) {
    %c0_i32 = arith.constant 0 : i32
    %c0_i32_0 = arith.constant 0 : i32
    %c0_i32_1 = arith.constant 0 : i32
    return %c0_i32, %c0_i32_0 : i32, i32
  }
  func.func @transform_2(%arg0: i32, %arg1: i32) -> (i32, i32) {
    %c0_i32 = arith.constant 0 : i32
    %c0_i32_0 = arith.constant 0 : i32
    %c0_i32_1 = arith.constant 0 : i32
    return %c0_i32, %c0_i32_0 : i32, i32
  }
  func.func @transform_3(%arg0: i32, %arg1: i32) -> (i32, i32) {
    %c0_i32 = arith.constant 0 : i32
    %c0_i32_0 = arith.constant 0 : i32
    %c0_i32_1 = arith.constant 0 : i32
    return %c0_i32, %c0_i32_0 : i32, i32
  }
  func.func @transform_4(%arg0: i32, %arg1: i32) -> (i32, i32) {
    %c0_i32 = arith.constant 0 : i32
    %c0_i32_0 = arith.constant 0 : i32
    return %c0_i32, %arg0 : i32, i32
  }
  func.func @transform_5(%arg0: i32, %arg1: i32) -> (i32, i32) {
    %c0_i32 = arith.constant 0 : i32
    %c0_i32_0 = arith.constant 0 : i32
    return %c0_i32, %arg0 : i32, i32
  }
  func.func @transform_6(%arg0: i32, %arg1: i32) -> (i32, i32) {
    %c0_i32 = arith.constant 0 : i32
    %c0_i32_0 = arith.constant 0 : i32
    return %c0_i32, %arg0 : i32, i32
  }
  func.func @transform_7(%arg0: i32, %arg1: i32) -> (i32, i32) {
    %c0_i32 = arith.constant 0 : i32
    %c0_i32_0 = arith.constant 0 : i32
    return %c0_i32, %arg0 : i32, i32
  }
}

module attributes {stable_mosaic.version = 11 : i64} {
  func.func @_head_kernel(%arg0: memref<2x1280xf32, #tpu.memory_space<vmem>>, %arg1: memref<1280x512xbf16, #tpu.memory_space<vmem>>, %arg2: memref<1x512xf32, #tpu.memory_space<vmem>>, %arg3: memref<512x128xbf16, #tpu.memory_space<vmem>>, %arg4: memref<1x128xf32, #tpu.memory_space<vmem>>, %arg5: memref<2x128xf32, #tpu.memory_space<vmem>>) attributes {dimension_semantics = [], scalar_prefetch = 0 : i64, scratch_operands = 0 : i64, tpu.core_type = #tpu.core_type<tc>} {
    %c0 = arith.constant 0 : index
    %c0_0 = arith.constant 0 : index
    %0 = vector.load %arg0[%c0, %c0_0] : memref<2x1280xf32, #tpu.memory_space<vmem>>, vector<2x1280xf32>
    %1 = arith.truncf %0 : vector<2x1280xf32> to vector<2x1280xbf16>
    %c0_1 = arith.constant 0 : index
    %c0_2 = arith.constant 0 : index
    %2 = vector.load %arg1[%c0_1, %c0_2] : memref<1280x512xbf16, #tpu.memory_space<vmem>>, vector<1280x512xbf16>
    %cst = arith.constant dense<0.000000e+00> : vector<2x512xf32>
    %3 = tpu.matmul %1, %2, %cst {dimension_numbers = #tpu.dot_dimension_numbers<[1], [0], [0], [1], [0, 0, 1, 1], [], []>} : vector<2x1280xbf16>, vector<1280x512xbf16>, vector<2x512xf32> -> vector<2x512xf32>
    %c0_3 = arith.constant 0 : index
    %c0_4 = arith.constant 0 : index
    %4 = vector.load %arg2[%c0_3, %c0_4] : memref<1x512xf32, #tpu.memory_space<vmem>>, vector<1x512xf32>
    %5 = vector.broadcast %4 : vector<1x512xf32> to vector<2x512xf32>
    %6 = arith.addf %3, %5 : vector<2x512xf32>
    %cst_5 = arith.constant 0.000000e+00 : f32
    %7 = vector.broadcast %cst_5 : f32 to vector<2x512xf32>
    %8 = arith.maximumf %6, %7 : vector<2x512xf32>
    %9 = arith.truncf %8 : vector<2x512xf32> to vector<2x512xbf16>
    %c0_6 = arith.constant 0 : index
    %c0_7 = arith.constant 0 : index
    %10 = vector.load %arg3[%c0_6, %c0_7] : memref<512x128xbf16, #tpu.memory_space<vmem>>, vector<512x128xbf16>
    %cst_8 = arith.constant dense<0.000000e+00> : vector<2x128xf32>
    %11 = tpu.matmul %9, %10, %cst_8 {dimension_numbers = #tpu.dot_dimension_numbers<[1], [0], [0], [1], [0, 0, 1, 1], [], []>} : vector<2x512xbf16>, vector<512x128xbf16>, vector<2x128xf32> -> vector<2x128xf32>
    %c0_9 = arith.constant 0 : index
    %c0_10 = arith.constant 0 : index
    %12 = vector.load %arg4[%c0_9, %c0_10] : memref<1x128xf32, #tpu.memory_space<vmem>>, vector<1x128xf32>
    %13 = vector.broadcast %12 : vector<1x128xf32> to vector<2x128xf32>
    %14 = arith.addf %11, %13 : vector<2x128xf32>
    %c0_11 = arith.constant 0 : index
    %c0_12 = arith.constant 0 : index
    %15 = vector.load %arg5[%c0_11, %c0_12] : memref<2x128xf32, #tpu.memory_space<vmem>>, vector<2x128xf32>
    tpu.vector_store %arg5[%c0_11, %c0_12], %14 {strides = array<i32>} : memref<2x128xf32, #tpu.memory_space<vmem>>, vector<2x128xf32>,
    return
  }
}

</mosaic_0001>

<llo_original>
// kernel: geolocation_cnn_forward.2
$region0: #{geolocation_cnn_forward.2}
  #allocation0 [shape = 'u32[]', space=smem, size = 0x4, offset = 0x4, fixed_abs, tag = 'smem constant byte address 0x4 - core index']
  #allocation1 [shape = 'u32[72,128]{1,0:T(1,128)}', space=vmem, size = 0x9000, scoped, tag = 'internal scratch']
  #allocation2 [shape = 'f32[2,1280]{1,0:T(2,128)}', space=vmem, size = 0x2800, scoped, tag = 'scratch operand']
  %s0 = inlined_call_operand.vmem [shape: bf16[2,256,32], index: 0, kind: input, shape index: {}]
  %s1 = inlined_call_operand.vmem [shape: bf16[32,32], index: 1, kind: input, shape index: {}]
  %s2 = inlined_call_operand.vmem [shape: f32[1,32], index: 2, kind: input, shape index: {}]
  %s3 = inlined_call_operand.vmem [shape: f32[1,32], index: 3, kind: input, shape index: {}]
  %s4 = inlined_call_operand.vmem [shape: bf16[32,1280], index: 4, kind: input, shape index: {}]
  %s5 = inlined_call_operand.vmem [shape: f32[1,1280], index: 5, kind: input, shape index: {}]
  %s6 = inlined_call_operand.vmem [shape: f32[1,1280], index: 6, kind: input, shape index: {}]
  %s7 = inlined_call_operand.vmem [shape: f32[2,1280], index: 7, kind: output, shape index: {}]
  %s8 = sld [smem:[#allocation0]]
  $region110: #{geolocation_cnn_forward.2} parent=0
    _
  %s10 = ssub.s32 1, %s8
  %s11 = scalar_select 0, %s10, %s8
  $region1: #{geolocation_cnn_forward.2} parent=0
    #allocation3 [shape = 'u8[65536]{0}', space=vmem, size = 0x10000, scoped, tag = 'input window, operand 0']
    loop: start=0, step=1, limit=6
    $region2: #{geolocation_cnn_forward.2} parent=1 // loop_pre_header
      _
    $region3: #{geolocation_cnn_forward.2} parent=1 // loop_header
      %s13 = sphi 0, %s17
      %p14 = scmp.ge.s32.totalorder %s13, 6
      %s20 = sphi 0, %s32
      %s21 = sphi 0, %s28
      %s22 = sphi 0, %s20
      %s23 = sphi 0, %s21
      %s24 = sphi 0, %s22
      %s25 = sphi 0, %s23
      %s35 = sphi 0, %s37
      %s38 = sphi 0, %s35
      %s39 = sphi 0, %s38
      %s55 = sphi 0, %s39
      %s59 = sphi 0, %s59
      %s61 = sphi 0, %s59
      %s62 = sphi 0, %s61
      %s76 = sphi 0, %s62
      %s80 = sphi 0, %s80
      %s82 = sphi 0, %s80
      %s83 = sphi 0, %s82
      %s97 = sphi 0, %s83
      %s101 = sphi 0, %s101
      %s103 = sphi 0, %s101
      %s104 = sphi 0, %s103
      %s118 = sphi 0, %s104
      %s124 = sphi 0, %s126
      %s127 = sphi 0, %s124
      %s128 = sphi 0, %s127
      %s144 = sphi 0, %s128
      %s150 = sphi 0, %s152
      %s153 = sphi 0, %s150
      %s154 = sphi 0, %s153
      %s170 = sphi 0, %s154
      %s176 = sphi 0, %s178
      %s179 = sphi 0, %s176
      %s180 = sphi 0, %s179
      %s196 = sphi 0, %s180
      %s202 = sphi 0, %s204
      %s205 = sphi 0, %s202
      %s206 = sphi 0, %s205
      %s222 = sphi 0, %s206
    $region4: #{geolocation_cnn_forward.2} parent=1 // loop_header_branch
      %16 = sbr.rel (%p14) target = $region8
    $region5: #{geolocation_cnn_forward.2} parent=1 // loop_body
      %s18 = ssub.s32 %s13, 1
      %s19 = ssub.s32 %s13, 2
      %s26 = sadd.s32 1, %s21
      %p27 = scmp.ge.s32.totalorder %s26, 4
      %s28 = scalar_select %p27, 0, %s26
      %s29 = sadd.s32 1, %s20
      %s30 = scalar_select %p27, %s29, %s20
      %p31 = scmp.ge.s32.totalorder %s30, 1
      %s32 = scalar_select %p31, 0, %s30
      %s33 = ssub.s32 %s21, %s28
      %p34 = scmp.eq.s32.totalorder %s33, 0
      %s36 = sadd.s32 %s35, 1
      %s37 = scalar_select %p34, %s35, %s36
      %p40 = pneg %p34
      %p41 = scmp.eq.s32.totalorder %s13, 3
      %p42 = por %p40, %p41
      %p43 = scmp.ne.s32.totalorder %s35, %s38
      %p44 = scmp.eq.s32.totalorder %s13, 0
      %p45 = por %p43, %p44
      %p46 = scmp.ne.s32.totalorder %s35, %s38
      %p47 = scmp.eq.s32.totalorder %s18, 3
      %p48 = por %p46, %p47
      %p49 = scmp.ne.s32.totalorder %s38, %s39
      %p50 = scmp.eq.s32.totalorder %s18, 0
      %p51 = por %p49, %p50
      %p52 = scmp.ne.s32.totalorder %s38, %s39
      %p53 = scmp.eq.s32.totalorder %s19, 3
      %p54 = por %p52, %p53
      %p56 = scmp.ne.s32.totalorder %s39, %s55
      %p57 = scmp.eq.s32.totalorder %s19, 0
      %p58 = por %p56, %p57
      %s60 = sadd.s32 %s59, 1
      %p63 = scmp.eq.s32.totalorder %s13, 3
      %p64 = scmp.ne.s32.totalorder %s59, %s61
      %p65 = scmp.eq.s32.totalorder %s13, 0
      %p66 = por %p64, %p65
      %p67 = scmp.ne.s32.totalorder %s59, %s61
      %p68 = scmp.eq.s32.totalorder %s18, 3
      %p69 = por %p67, %p68
      %p70 = scmp.ne.s32.totalorder %s61, %s62
      %p71 = scmp.eq.s32.totalorder %s18, 0
      %p72 = por %p70, %p71
      %p73 = scmp.ne.s32.totalorder %s61, %s62
      %p74 = scmp.eq.s32.totalorder %s19, 3
      %p75 = por %p73, %p74
      %p77 = scmp.ne.s32.totalorder %s62, %s76
      %p78 = scmp.eq.s32.totalorder %s19, 0
      %p79 = por %p77, %p78
      %s81 = sadd.s32 %s80, 1
      %p84 = scmp.eq.s32.totalorder %s13, 3
      %p85 = scmp.ne.s32.totalorder %s80, %s82
      %p86 = scmp.eq.s32.totalorder %s13, 0
      %p87 = por %p85, %p86
      %p88 = scmp.ne.s32.totalorder %s80, %s82
      %p89 = scmp.eq.s32.totalorder %s18, 3
      %p90 = por %p88, %p89
      %p91 = scmp.ne.s32.totalorder %s82, %s83
      %p92 = scmp.eq.s32.totalorder %s18, 0
      %p93 = por %p91, %p92
      %p94 = scmp.ne.s32.totalorder %s82, %s83
      %p95 = scmp.eq.s32.totalorder %s19, 3
      %p96 = por %p94, %p95
      %p98 = scmp.ne.s32.totalorder %s83, %s97
      %p99 = scmp.eq.s32.totalorder %s19, 0
      %p100 = por %p98, %p99
      %s102 = sadd.s32 %s101, 1
      %p105 = scmp.eq.s32.totalorder %s13, 3
      %p106 = scmp.ne.s32.totalorder %s101, %s103
      %p107 = scmp.eq.s32.totalorder %s13, 0
      %p108 = por %p106, %p107
      %p109 = scmp.ne.s32.totalorder %s101, %s103
      %p110 = scmp.eq.s32.totalorder %s18, 3
      %p111 = por %p109, %p110
      %p112 = scmp.ne.s32.totalorder %s103, %s104
      %p113 = scmp.eq.s32.totalorder %s18, 0
      %p114 = por %p112, %p113
      %p115 = scmp.ne.s32.totalorder %s103, %s104
      %p116 = scmp.eq.s32.totalorder %s19, 3
      %p117 = por %p115, %p116
      %p119 = scmp.ne.s32.totalorder %s104, %s118
      %p120 = scmp.eq.s32.totalorder %s19, 0
      %p121 = por %p119, %p120
      %s122 = ssub.s32 %s20, %s32
      %p123 = scmp.eq.s32.totalorder %s122, 0
      %s125 = sadd.s32 %s124, 1
      %s126 = scalar_select %p123, %s124, %s125
      %p129 = pneg %p123
      %p130 = scmp.eq.s32.totalorder %s13, 3
      %p131 = por %p129, %p130
      %p132 = scmp.ne.s32.totalorder %s124, %s127
      %p133 = scmp.eq.s32.totalorder %s13, 0
      %p134 = por %p132, %p133
      %p135 = scmp.ne.s32.totalorder %s124, %s127
      %p136 = scmp.eq.s32.totalorder %s18, 3
      %p137 = por %p135, %p136
      %p138 = scmp.ne.s32.totalorder %s127, %s128
      %p139 = scmp.eq.s32.totalorder %s18, 0
      %p140 = por %p138, %p139
      %p141 = scmp.ne.s32.totalorder %s127, %s128
      %p142 = scmp.eq.s32.totalorder %s19, 3
      %p143 = por %p141, %p142
      %p145 = scmp.ne.s32.totalorder %s128, %s144
      %p146 = scmp.eq.s32.totalorder %s19, 0
      %p147 = por %p145, %p146
      %s148 = ssub.s32 %s20, %s32
      %p149 = scmp.eq.s32.totalorder %s148, 0
      %s151 = sadd.s32 %s150, 1
      %s152 = scalar_select %p149, %s150, %s151
      %p155 = pneg %p149
      %p156 = scmp.eq.s32.totalorder %s13, 3
      %p157 = por %p155, %p156
      %p158 = scmp.ne.s32.totalorder %s150, %s153
      %p159 = scmp.eq.s32.totalorder %s13, 0
      %p160 = por %p158, %p159
      %p161 = scmp.ne.s32.totalorder %s150, %s153
      %p162 = scmp.eq.s32.totalorder %s18, 3
      %p163 = por %p161, %p162
      %p164 = scmp.ne.s32.totalorder %s153, %s154
      %p165 = scmp.eq.s32.totalorder %s18, 0
      %p166 = por %p164, %p165
      %p167 = scmp.ne.s32.totalorder %s153, %s154
      %p168 = scmp.eq.s32.totalorder %s19, 3
      %p169 = por %p167, %p168
      %p171 = scmp.ne.s32.totalorder %s154, %s170
      %p172 = scmp.eq.s32.totalorder %s19, 0
      %p173 = por %p171, %p172
      %s174 = ssub.s32 %s20, %s32
      %p175 = scmp.eq.s32.totalorder %s174, 0
      %s177 = sadd.s32 %s176, 1
      %s178 = scalar_select %p175, %s176, %s177
      %p181 = pneg %p175
      %p182 = scmp.eq.s32.totalorder %s13, 3
      %p183 = por %p181, %p182
      %p184 = scmp.ne.s32.totalorder %s176, %s179
      %p185 = scmp.eq.s32.totalorder %s13, 0
      %p186 = por %p184, %p185
      %p187 = scmp.ne.s32.totalorder %s176, %s179
      %p188 = scmp.eq.s32.totalorder %s18, 3
      %p189 = por %p187, %p188
      %p190 = scmp.ne.s32.totalorder %s179, %s180
      %p191 = scmp.eq.s32.totalorder %s18, 0
      %p192 = por %p190, %p191
      %p193 = scmp.ne.s32.totalorder %s179, %s180
      %p194 = scmp.eq.s32.totalorder %s19, 3
      %p195 = por %p193, %p194
      %p197 = scmp.ne.s32.totalorder %s180, %s196
      %p198 = scmp.eq.s32.totalorder %s19, 0
      %p199 = por %p197, %p198
      %s200 = ssub.s32 %s20, %s32
      %p201 = scmp.eq.s32.totalorder %s200, 0
      %s203 = sadd.s32 %s202, 1
      %s204 = scalar_select %p201, %s202, %s203
      %p207 = pneg %p201
      %p208 = scmp.eq.s32.totalorder %s13, 3
      %p209 = por %p207, %p208
      %p210 = scmp.ne.s32.totalorder %s202, %s205
      %p211 = scmp.eq.s32.totalorder %s13, 0
      %p212 = por %p210, %p211
      %p213 = scmp.ne.s32.totalorder %s202, %s205
      %p214 = scmp.eq.s32.totalorder %s18, 3
      %p215 = por %p213, %p214
      %p216 = scmp.ne.s32.totalorder %s205, %s206
      %p217 = scmp.eq.s32.totalorder %s18, 0
      %p218 = por %p216, %p217
      %p219 = scmp.ne.s32.totalorder %s205, %s206
      %p220 = scmp.eq.s32.totalorder %s19, 3
      %p221 = por %p219, %p220
      %p223 = scmp.ne.s32.totalorder %s206, %s222
      %p224 = scmp.eq.s32.totalorder %s19, 0
      %p225 = por %p223, %p224
      %p226 = scmp.le.s32.totalorder 1, %s13
      %p227 = scmp.lt.s32.totalorder %s13, 5
      %p228 = pnand %p226, %p227
      %p229 = pneg %p228
      // Predicated region
      $region9: #{geolocation_cnn_forward.2} parent=5 // pred_check
        _
      $region10: #{geolocation_cnn_forward.2} parent=5 // pred_check_branch
        %231 = sbr.rel (%p228) target = $region12
      $region11: #{geolocation_cnn_forward.2} parent=5 // pred_region
        %s232 = ssub.s32 %s13, 1
        // Predicated region
        $region13: #{geolocation_cnn_forward.2} parent=11 // pred_check
          %p233 = pneg %p72
        $region14: #{geolocation_cnn_forward.2} parent=11 // pred_check_branch
          %235 = sbr.rel (%p233) target = $region16
        $region15: #{geolocation_cnn_forward.2} parent=11 // pred_region
          _
        $region16: #{geolocation_cnn_forward.2} parent=11 // pred_fallthru
          _
        // Predicated region
        $region17: #{geolocation_cnn_forward.2} parent=11 // pred_check
          %p236 = pneg %p93
        $region18: #{geolocation_cnn_forward.2} parent=11 // pred_check_branch
          %238 = sbr.rel (%p236) target = $region20
        $region19: #{geolocation_cnn_forward.2} parent=11 // pred_region
          _
        $region20: #{geolocation_cnn_forward.2} parent=11 // pred_fallthru
          _
        // Predicated region
        $region21: #{geolocation_cnn_forward.2} parent=11 // pred_check
          %p239 = pneg %p114
        $region22: #{geolocation_cnn_forward.2} parent=11 // pred_check_branch
          %241 = sbr.rel (%p239) target = $region24
        $region23: #{geolocation_cnn_forward.2} parent=11 // pred_region
          _
        $region24: #{geolocation_cnn_forward.2} parent=11 // pred_fallthru
          _
        // Predicated region
        $region25: #{geolocation_cnn_forward.2} parent=11 // pred_check
          %p242 = pneg %p140
        $region26: #{geolocation_cnn_forward.2} parent=11 // pred_check_branch
          %244 = sbr.rel (%p242) target = $region28
        $region27: #{geolocation_cnn_forward.2} parent=11 // pred_region
          %s245 = smul.u32 10, %s22
          %p246 = scmp.lt.s32.totalorder %s245, 9
          %s247 = scalar_select %p246, %s245, 9
          %s248 = smul.addr %s247, 4
          %s249 = scalar_lea.vmem %s4, %s248
          %s250 = smul.u32 10, %s22
        $region28: #{geolocation_cnn_forward.2} parent=11 // pred_fallthru
          _
        // Predicated region
        $region29: #{geolocation_cnn_forward.2} parent=11 // pred_check
          %p251 = pneg %p166
        $region30: #{geolocation_cnn_forward.2} parent=11 // pred_check_branch
          %253 = sbr.rel (%p251) target = $region32
        $region31: #{geolocation_cnn_forward.2} parent=11 // pred_region
          %s254 = smul.u32 10, %s22
          %p255 = scmp.lt.s32.totalorder %s254, 9
          %s256 = scalar_select %p255, %s254, 9
          %s257 = scalar_lea.vmem %s5, %s256
          %s258 = smul.u32 10, %s22
        $region32: #{geolocation_cnn_forward.2} parent=11 // pred_fallthru
          _
        // Predicated region
        $region33: #{geolocation_cnn_forward.2} parent=11 // pred_check
          %p259 = pneg %p192
        $region34: #{geolocation_cnn_forward.2} parent=11 // pred_check_branch
          %261 = sbr.rel (%p259) target = $region36
        $region35: #{geolocation_cnn_forward.2} parent=11 // pred_region
          %s262 = smul.u32 10, %s22
          %p263 = scmp.lt.s32.totalorder %s262, 9
          %s264 = scalar_select %p263, %s262, 9
          %s265 = scalar_lea.vmem %s6, %s264
          %s266 = smul.u32 10, %s22
        $region36: #{geolocation_cnn_forward.2} parent=11 // pred_fallthru
          _
      $region12: #{geolocation_cnn_forward.2} parent=5 // pred_fallthru
        _
      %p267 = scmp.lt.s32.totalorder %s13, 4
      // Predicated region
      $region37: #{geolocation_cnn_forward.2} parent=5 // pred_check
        %p268 = pneg %p267
      $region38: #{geolocation_cnn_forward.2} parent=5 // pred_check_branch
        %270 = sbr.rel (%p268) target = $region40
      $region39: #{geolocation_cnn_forward.2} parent=5 // pred_region
        // Predicated region
        $region41: #{geolocation_cnn_forward.2} parent=39 // pred_check
          %p271 = pneg %p45
        $region42: #{geolocation_cnn_forward.2} parent=39 // pred_check_branch
          %273 = sbr.rel (%p271) target = $region44
        $region43: #{geolocation_cnn_forward.2} parent=39 // pred_region
          %s274 = sand.u32 %s35, 1
          %s275 = sand.u32 %s35, 1
          %s276 = smul.addr %s275, 64
          %s277 = scalar_lea.vmem [#allocation3], %s276
          %s278 = smul.u32 8, %s21
          %s279 = smul.addr %s278, 4
          %s280 = scalar_lea.vmem %s0, %s279
          // Predicated region
          $region45: #{geolocation_cnn_forward.2} parent=43 // pred_check
            _
          $region46: #{geolocation_cnn_forward.2} parent=43 // pred_check_branch
            %282 = sbr.rel (0) target = $region48
          $region47: #{geolocation_cnn_forward.2} parent=43 // pred_region
            // Predicated region
            $region49: #{geolocation_cnn_forward.2} parent=47 // pred_check
              _
            $region50: #{geolocation_cnn_forward.2} parent=47 // pred_check_branch
              %284 = sbr.rel target = $region52
            $region51: #{geolocation_cnn_forward.2} parent=47 // pred_region
              // Predicated region
              $region64: #{geolocation_cnn_forward.2} parent=51 // pred_check
                _
              $region65: #{geolocation_cnn_forward.2} parent=51 // pred_check_branch
                %330 = sbr.rel (0) target = $region67
              $region66: #{geolocation_cnn_forward.2} parent=51 // pred_region
                loop: start=0, step=1, limit=1
                $region68: #{geolocation_cnn_forward.2} parent=66 // loop_pre_header
                  _
                $region69: #{geolocation_cnn_forward.2} parent=66 // loop_header
                  %s332 = sphi 0, %s336
                  %p333 = scmp.ge.s32.totalorder %s332, 1
                  %s337 = sphi %s280, %s280
                  %s338 = sphi %s277, %s277
                $region70: #{geolocation_cnn_forward.2} parent=66 // loop_header_branch
                  %335 = sbr.rel (%p333) target = $region74
                $region71: #{geolocation_cnn_forward.2} parent=66 // loop_body
                  _
                $region72: #{geolocation_cnn_forward.2} parent=66 // loop_footer
                  %s336 = sadd.s32 1, %s332
                $region73: #{geolocation_cnn_forward.2} parent=66 // loop_footer_branch
                  %331 = sbr.rel target = $region69
                $region74: #{geolocation_cnn_forward.2} parent=66 // loop_exit
                  _
                %s340 = ssub.s32 16, 1
                loop: start=0, step=1, limit=1
                $region75: #{geolocation_cnn_forward.2} parent=66 // loop_pre_header
                  _
                $region76: #{geolocation_cnn_forward.2} parent=66 // loop_header
                  %s342 = sphi 0, %s346
                  %p343 = scmp.ge.s32.totalorder %s342, 1
                  %s347 = sphi %s280, %s280
                  %s348 = sphi %s277, %s277
                $region77: #{geolocation_cnn_forward.2} parent=66 // loop_header_branch
                  %345 = sbr.rel (%p343) target = $region81
                $region78: #{geolocation_cnn_forward.2} parent=66 // loop_body
                  %v349 = vld [vmem:[%s347] sm:%s340]
                  %350 = vst [vmem:[%s348] sm:%s340] %v349
                  %v351 = vld [vmem:[%s347 + $0x4] sm:%s340]
                  %352 = vst [vmem:[%s348 + $0x4] sm:%s340] %v351
                  %v353 = vld [vmem:[%s347 + $0x8] sm:%s340]
                  %354 = vst [vmem:[%s348 + $0x8] sm:%s340] %v353
                  %v355 = vld [vmem:[%s347 + $0xc] sm:%s340]
                  %356 = vst [vmem:[%s348 + $0xc] sm:%s340] %v355
                  %v357 = vld [vmem:[%s347 + $0x10] sm:%s340]
                  %358 = vst [vmem:[%s348 + $0x10] sm:%s340] %v357
                  %v359 = vld [vmem:[%s347 + $0x14] sm:%s340]
                  %360 = vst [vmem:[%s348 + $0x14] sm:%s340] %v359
                  %v361 = vld [vmem:[%s347 + $0x18] sm:%s340]
                  %362 = vst [vmem:[%s348 + $0x18] sm:%s340] %v361
                  %v363 = vld [vmem:[%s347 + $0x1c] sm:%s340]
                  %364 = vst [vmem:[%s348 + $0x1c] sm:%s340] %v363
                  %v365 = vld [vmem:[%s347 + $0x80] sm:%s340]
                  %366 = vst [vmem:[%s348 + $0x20] sm:%s340] %v365
                  %v367 = vld [vmem:[%s347 + $0x84] sm:%s340]
                  %368 = vst [vmem:[%s348 + $0x24] sm:%s340] %v367
                  %v369 = vld [vmem:[%s347 + $0x88] sm:%s340]
                  %370 = vst [vmem:[%s348 + $0x28] sm:%s340] %v369
                  %v371 = vld [vmem:[%s347 + $0x8c] sm:%s340]
                  %372 = vst [vmem:[%s348 + $0x2c] sm:%s340] %v371
                  %v373 = vld [vmem:[%s347 + $0x90] sm:%s340]
                  %374 = vst [vmem:[%s348 + $0x30] sm:%s340] %v373
                  %v375 = vld [vmem:[%s347 + $0x94] sm:%s340]
                  %376 = vst [vmem:[%s348 + $0x34] sm:%s340] %v375
                  %v377 = vld [vmem:[%s347 + $0x98] sm:%s340]
                  %378 = vst [vmem:[%s348 + $0x38] sm:%s340] %v377
                  %v379 = vld [vmem:[%s347 + $0x9c] sm:%s340]
                  %380 = vst [vmem:[%s348 + $0x3c] sm:%s340] %v379
                $region79: #{geolocation_cnn_forward.2} parent=66 // loop_footer
                  %s346 = sadd.s32 1, %s342
                $region80: #{geolocation_cnn_forward.2} parent=66 // loop_footer_branch
                  %341 = sbr.rel target = $region76
                $region81: #{geolocation_cnn_forward.2} parent=66 // loop_exit
                  _
              $region67: #{geolocation_cnn_forward.2} parent=51 // pred_fallthru
                _
            $region52: #{geolocation_cnn_forward.2} parent=47 // pred_fallthru
              _
            // Predicated region
            $region53: #{geolocation_cnn_forward.2} parent=47 // pred_check
              _
            $region54: #{geolocation_cnn_forward.2} parent=47 // pred_check_branch
              %286 = sbr.rel (0) target = $region56
            $region55: #{geolocation_cnn_forward.2} parent=47 // pred_region
              %s288 = ssub.s32 16, 1
              loop: start=0, step=1, limit=1
              $region57: #{geolocation_cnn_forward.2} parent=55 // loop_pre_header
                _
              $region58: #{geolocation_cnn_forward.2} parent=55 // loop_header
                %s290 = sphi 0, %s294
                %p291 = scmp.ge.s32.totalorder %s290, 1
                %s295 = sphi %s280, %s280
                %s296 = sphi %s277, %s277
              $region59: #{geolocation_cnn_forward.2} parent=55 // loop_header_branch
                %293 = sbr.rel (%p291) target = $region63
              $region60: #{geolocation_cnn_forward.2} parent=55 // loop_body
                %v297 = vld [vmem:[%s295] sm:%s288]
                %298 = vst [vmem:[%s296] sm:%s288] %v297
                %v299 = vld [vmem:[%s295 + $0x4] sm:%s288]
                %300 = vst [vmem:[%s296 + $0x4] sm:%s288] %v299
                %v301 = vld [vmem:[%s295 + $0x8] sm:%s288]
                %302 = vst [vmem:[%s296 + $0x8] sm:%s288] %v301
                %v303 = vld [vmem:[%s295 + $0xc] sm:%s288]
                %304 = vst [vmem:[%s296 + $0xc] sm:%s288] %v303
                %v305 = vld [vmem:[%s295 + $0x10] sm:%s288]
                %306 = vst [vmem:[%s296 + $0x10] sm:%s288] %v305
                %v307 = vld [vmem:[%s295 + $0x14] sm:%s288]
                %308 = vst [vmem:[%s296 + $0x14] sm:%s288] %v307
                %v309 = vld [vmem:[%s295 + $0x18] sm:%s288]
                %310 = vst [vmem:[%s296 + $0x18] sm:%s288] %v309
                %v311 = vld [vmem:[%s295 + $0x1c] sm:%s288]
                %312 = vst [vmem:[%s296 + $0x1c] sm:%s288] %v311
                %v313 = vld [vmem:[%s295 + $0x80] sm:%s288]
                %314 = vst [vmem:[%s296 + $0x20] sm:%s288] %v313
                %v315 = vld [vmem:[%s295 + $0x84] sm:%s288]
                %316 = vst [vmem:[%s296 + $0x24] sm:%s288] %v315
                %v317 = vld [vmem:[%s295 + $0x88] sm:%s288]
                %318 = vst [vmem:[%s296 + $0x28] sm:%s288] %v317
                %v319 = vld [vmem:[%s295 + $0x8c] sm:%s288]
                %320 = vst [vmem:[%s296 + $0x2c] sm:%s288] %v319
                %v321 = vld [vmem:[%s295 + $0x90] sm:%s288]
                %322 = vst [vmem:[%s296 + $0x30] sm:%s288] %v321
                %v323 = vld [vmem:[%s295 + $0x94] sm:%s288]
                %324 = vst [vmem:[%s296 + $0x34] sm:%s288] %v323
                %v325 = vld [vmem:[%s295 + $0x98] sm:%s288]
                %326 = vst [vmem:[%s296 + $0x38] sm:%s288] %v325
                %v327 = vld [vmem:[%s295 + $0x9c] sm:%s288]
                %328 = vst [vmem:[%s296 + $0x3c] sm:%s288] %v327
              $region61: #{geolocation_cnn_forward.2} parent=55 // loop_footer
                %s294 = sadd.s32 1, %s290
              $region62: #{geolocation_cnn_forward.2} parent=55 // loop_footer_branch
                %289 = sbr.rel target = $region58
              $region63: #{geolocation_cnn_forward.2} parent=55 // loop_exit
                _
            $region56: #{geolocation_cnn_forward.2} parent=47 // pred_fallthru
              _
          $region48: #{geolocation_cnn_forward.2} parent=43 // pred_fallthru
            _
          %381 = vnop
        $region44: #{geolocation_cnn_forward.2} parent=39 // pred_fallthru
          _
      $region40: #{geolocation_cnn_forward.2} parent=5 // pred_fallthru
        _
      %p382 = scmp.le.s32.totalorder 1, %s13
      %p383 = scmp.lt.s32.totalorder %s13, 5
      %p384 = pnand %p382, %p383
      %p385 = pneg %p384
      // Predicated region
      $region82: #{geolocation_cnn_forward.2} parent=5 // pred_check
        _
      $region83: #{geolocation_cnn_forward.2} parent=5 // pred_check_branch
        %387 = sbr.rel (%p384) target = $region85
      $region84: #{geolocation_cnn_forward.2} parent=5 // pred_region
        %s388 = ssub.s32 %s13, 1
        %s389 = sand.u32 %s38, 1
        %s390 = sand.u32 %s38, 1
        %s391 = smul.addr %s390, 64
        %s392 = scalar_lea.vmem [#allocation3], %s391
        // Predicated region
        $region86: #{geolocation_cnn_forward.2} parent=84 // pred_check
          %p393 = pneg %p51
        $region87: #{geolocation_cnn_forward.2} parent=84 // pred_check_branch
          %395 = sbr.rel (%p393) target = $region89
        $region88: #{geolocation_cnn_forward.2} parent=84 // pred_region
          _
        $region89: #{geolocation_cnn_forward.2} parent=84 // pred_fallthru
          _
        %s396 = sand.u32 %s38, 1
        %s397 = sand.u32 %s38, 1
        %s398 = smul.addr %s397, 64
        %s399 = scalar_lea.vmem [#allocation3], %s398
        %p400 = pneg %p51
        %p401 = pneg %p48
        %p402 = pneg %p72
        %p403 = pneg %p69
        %p404 = pneg %p93
        %p405 = pneg %p90
        %p406 = pneg %p114
        %p407 = pneg %p111
        %s408 = smul.u32 10, %s22
        %p409 = scmp.lt.s32.totalorder %s408, 9
        %s410 = scalar_select %p409, %s408, 9
        %s411 = smul.addr %s410, 4
        %s412 = scalar_lea.vmem %s4, %s411
        %p413 = pneg %p140
        %p414 = pneg %p137
        %s415 = smul.u32 10, %s22
        %p416 = scmp.lt.s32.totalorder %s415, 9
        %s417 = scalar_select %p416, %s415, 9
        %s418 = scalar_lea.vmem %s5, %s417
        %p419 = pneg %p166
        %p420 = pneg %p163
        %s421 = smul.u32 10, %s22
        %p422 = scmp.lt.s32.totalorder %s421, 9
        %s423 = scalar_select %p422, %s421, 9
        %s424 = scalar_lea.vmem %s6, %s423
        %p425 = pneg %p192
        %p426 = pneg %p189
        %p427 = pneg %p218
        %p428 = pneg %p215
        %s429 = smul.u32 10, %s22
        %p430 = scmp.lt.s32.totalorder %s429, 9
        %s431 = scalar_select %p430, %s429, 9
        %s432 = smul.addr %s431, 2
        %s433 = scalar_lea.vmem %s7, %s432
        %s434 = smul.u32 8, %s23
        %s435 = smul.u32 10, %s22
        %p436 = scmp.lt.s32.totalorder %s435, 9
        %s437 = scalar_select %p436, %s435, 9
        %s438 = smul.addr %s437, 4
        %s439 = scalar_lea.vmem %s4, %s438
        %s440 = smul.u32 10, %s22
        %s441 = smul.u32 10, %s22
        %p442 = scmp.lt.s32.totalorder %s441, 9
        %s443 = scalar_select %p442, %s441, 9
        %s444 = scalar_lea.vmem %s5, %s443
        %s445 = smul.u32 10, %s22
        %s446 = smul.u32 10, %s22
        %p447 = scmp.lt.s32.totalorder %s446, 9
        %s448 = scalar_select %p447, %s446, 9
        %s449 = scalar_lea.vmem %s6, %s448
        %s450 = smul.u32 10, %s22
        %s451 = smul.u32 10, %s22
        %p452 = scmp.lt.s32.totalorder %s451, 9
        %s453 = scalar_select %p452, %s451, 9
        %s454 = smul.addr %s453, 2
        %s455 = scalar_lea.vmem %s7, %s454
        %s456 = smul.u32 10, %s22
        %p458 = scmp.eq.s32.totalorder %s23, 0
        // Predicated region
        $region90: #{geolocation_cnn_forward.2} parent=84 // pred_check
          %p459 = pneg %p458
        $region91: #{geolocation_cnn_forward.2} parent=84 // pred_check_branch
          %461 = sbr.rel (%p459) target = $region93
        $region92: #{geolocation_cnn_forward.2} parent=84 // pred_region
          %462 = vst [vmem:[#allocation2] sm:$0xff] 0.0
          %463 = vst [vmem:[#allocation2 + $0x8] sm:$0xff] 0.0
          %464 = vst [vmem:[#allocation2 + $0x10] sm:$0xf] 0.0
        $region93: #{geolocation_cnn_forward.2} parent=84 // pred_fallthru
          _
        %v465 = vld [vmem:[%s392] sm:$0xf]
        %v466 = vld [vmem:[%s392 + $0x4] sm:$0xf]
        %v467 = vld [vmem:[%s392 + $0x8] sm:$0xf]
        %v468 = vld [vmem:[%s392 + $0xc] sm:$0xf]
        %v469 = vld [vmem:[%s392 + $0x10] sm:$0xf]
        %v470 = vld [vmem:[%s392 + $0x14] sm:$0xf]
        %v471 = vld [vmem:[%s392 + $0x18] sm:$0xf]
        %v472 = vld [vmem:[%s392 + $0x1c] sm:$0xf]
        %v473 = vld [vmem:[%s392 + $0x20] sm:$0xf]
        %v474 = vld [vmem:[%s392 + $0x24] sm:$0xf]
        %v475 = vld [vmem:[%s392 + $0x28] sm:$0xf]
        %v476 = vld [vmem:[%s392 + $0x2c] sm:$0xf]
        %v477 = vld [vmem:[%s392 + $0x30] sm:$0xf]
        %v478 = vld [vmem:[%s392 + $0x34] sm:$0xf]
        %v479 = vld [vmem:[%s392 + $0x38] sm:$0xf]
        %v480 = vld [vmem:[%s392 + $0x3c] sm:$0xf]
        %v481 = vld [vmem:[%s1] sm:$0xf]
        %v482 = vld [vmem:[%s1 + $0x4] sm:$0xf]
        %v483 = vld [vmem:[%s1 + $0x8] sm:$0xf]
        %v484 = vld [vmem:[%s1 + $0xc] sm:$0xf]
        %v501 = vunpack.c.l.b16 %v465
        %v502 = vunpack.c.l.b16 %v466
        %v503 = vunpack.c.l.b16 %v467
        %v504 = vunpack.c.l.b16 %v468
        %v505 = vunpack.c.l.b16 %v469
        %v506 = vunpack.c.l.b16 %v470
        %v507 = vunpack.c.l.b16 %v471
        %v508 = vunpack.c.l.b16 %v472
        %v509 = vunpack.c.l.b16 %v473
        %v510 = vunpack.c.l.b16 %v474
        %v511 = vunpack.c.l.b16 %v475
        %v512 = vunpack.c.l.b16 %v476
        %v513 = vunpack.c.l.b16 %v477
        %v514 = vunpack.c.l.b16 %v478
        %v515 = vunpack.c.l.b16 %v479
        %v516 = vunpack.c.l.b16 %v480
        %v517 = vpack.c.b16 %v502, %v501
        %v518 = vpack.c.b16 %v504, %v503
        %v519 = vpack.c.b16 %v506, %v505
        %v520 = vpack.c.b16 %v508, %v507
        %v521 = vpack.c.b16 %v510, %v509
        %v522 = vpack.c.b16 %v512, %v511
        %v523 = vpack.c.b16 %v514, %v513
        %v524 = vpack.c.b16 %v516, %v515
        %v529 = vunpack.c.l.b16 %v481
        %v530 = vunpack.c.l.b16 %v482
        %v531 = vunpack.c.l.b16 %v483
        %v532 = vunpack.c.l.b16 %v484
        %v533 = vpack.c.b16 %v530, %v529
        %v534 = vpack.c.b16 %v532, %v531
        %vm537 = vcmask 261120
        %v539 = vsel %vm537, %v517, 0
        %v542 = vsel %vm537, %v518, 0
        %v545 = vsel %vm537, %v519, 0
        %v548 = vsel %vm537, %v520, 0
        %v551 = vsel %vm537, %v521, 0
        %v554 = vsel %vm537, %v522, 0
        %v557 = vsel %vm537, %v523, 0
        %v560 = vsel %vm537, %v524, 0
        %562 = vmatpush.bf16.msra.mxu0 0
        %563 = vmatpush.bf16.msra.mxu0 0
        %564 = vmatpush.bf16.msra.mxu0 0
        %565 = vmatpush.bf16.msra.mxu0 0
        %566 = vmatpush.bf16.msra.mxu0 0
        %567 = vmatpush.bf16.msra.mxu0 0
        %568 = vmatpush.bf16.msra.mxu0 %v534
        %569 = vmatpush.bf16.msra.mxu0 %v533
        %570 = vmatmul.bf16.gmra.mxu0 %v539
        %v571 = vpop.f32.mrf.mxu0
        %v572 = vadd.f32 0.0, %v571
        %v573 = vpop.f32.mrf.mxu0
        %v574 = vadd.f32 0.0, %v573
        %575 = vmatmul.bf16.gmra.mxu0 %v542
        %v576 = vpop.f32.mrf.mxu0
        %v577 = vadd.f32 0.0, %v576
        %v578 = vpop.f32.mrf.mxu0
        %v579 = vadd.f32 0.0, %v578
        %580 = vmatmul.bf16.gmra.mxu0 %v545
        %v581 = vpop.f32.mrf.mxu0
        %v582 = vadd.f32 0.0, %v581
        %v583 = vpop.f32.mrf.mxu0
        %v584 = vadd.f32 0.0, %v583
        %585 = vmatmul.bf16.gmra.mxu0 %v548
        %v586 = vpop.f32.mrf.mxu0
        %v587 = vadd.f32 0.0, %v586
        %v588 = vpop.f32.mrf.mxu0
        %v589 = vadd.f32 0.0, %v588
        %590 = vmatmul.bf16.gmra.mxu0 %v551
        %v591 = vpop.f32.mrf.mxu0
        %v592 = vadd.f32 0.0, %v591
        %v593 = vpop.f32.mrf.mxu0
        %v594 = vadd.f32 0.0, %v593
        %595 = vmatmul.bf16.gmra.mxu0 %v554
        %v596 = vpop.f32.mrf.mxu0
        %v597 = vadd.f32 0.0, %v596
        %v598 = vpop.f32.mrf.mxu0
        %v599 = vadd.f32 0.0, %v598
        %600 = vmatmul.bf16.gmra.mxu0 %v557
        %v601 = vpop.f32.mrf.mxu0
        %v602 = vadd.f32 0.0, %v601
        %v603 = vpop.f32.mrf.mxu0
        %v604 = vadd.f32 0.0, %v603
        %605 = vmatmul.bf16.gmra.mxu0 %v560
        %v606 = vpop.f32.mrf.mxu0
        %v607 = vadd.f32 0.0, %v606
        %v608 = vpop.f32.mrf.mxu0
        %v609 = vadd.f32 0.0, %v608
        %610 = vdwg.mxu0
        %v611 = vld [vmem:[%s2] sm:$0x1]
        %v613 = vperm.slane %v611, 0
        %v615 = vmul.f32 %v572, %v613
        %v616 = vmul.f32 %v574, %v613
        %v617 = vmul.f32 %v577, %v613
        %v618 = vmul.f32 %v579, %v613
        %v619 = vmul.f32 %v582, %v613
        %v620 = vmul.f32 %v584, %v613
        %v621 = vmul.f32 %v587, %v613
        %v622 = vmul.f32 %v589, %v613
        %v623 = vmul.f32 %v592, %v613
        %v624 = vmul.f32 %v594, %v613
        %v625 = vmul.f32 %v597, %v613
        %v626 = vmul.f32 %v599, %v613
        %v627 = vmul.f32 %v602, %v613
        %v628 = vmul.f32 %v604, %v613
        %v629 = vmul.f32 %v607, %v613
        %v630 = vmul.f32 %v609, %v613
        %v631 = vld [vmem:[%s3] sm:$0x1]
        %v633 = vperm.slane %v631, 0
        %v635 = vadd.f32 %v615, %v633
        %v636 = vadd.f32 %v616, %v633
        %v637 = vadd.f32 %v617, %v633
        %v638 = vadd.f32 %v618, %v633
        %v639 = vadd.f32 %v619, %v633
        %v640 = vadd.f32 %v620, %v633
        %v641 = vadd.f32 %v621, %v633
        %v642 = vadd.f32 %v622, %v633
        %v643 = vadd.f32 %v623, %v633
        %v644 = vadd.f32 %v624, %v633
        %v645 = vadd.f32 %v625, %v633
        %v646 = vadd.f32 %v626, %v633
        %v647 = vadd.f32 %v627, %v633
        %v648 = vadd.f32 %v628, %v633
        %v649 = vadd.f32 %v629, %v633
        %v650 = vadd.f32 %v630, %v633
        %v651 = vxor.u32 %v635, 2147483648
        %v652 = vxor.u32 %v636, 2147483648
        %v653 = vxor.u32 %v637, 2147483648
        %v654 = vxor.u32 %v638, 2147483648
        %v655 = vxor.u32 %v639, 2147483648
        %v656 = vxor.u32 %v640, 2147483648
        %v657 = vxor.u32 %v641, 2147483648
        %v658 = vxor.u32 %v642, 2147483648
        %v659 = vxor.u32 %v643, 2147483648
        %v660 = vxor.u32 %v644, 2147483648
        %v661 = vxor.u32 %v645, 2147483648
        %v662 = vxor.u32 %v646, 2147483648
        %v663 = vxor.u32 %v647, 2147483648
        %v664 = vxor.u32 %v648, 2147483648
        %v665 = vxor.u32 %v649, 2147483648
        %v666 = vxor.u32 %v650, 2147483648
        %v667 = vmul.f32 %v651, 1.442695
        %v668 = vpow.pop %v667
        %v669 = vmul.f32 %v652, 1.442695
        %v670 = vpow.pop %v669
        %v671 = vmul.f32 %v653, 1.442695
        %v672 = vpow.pop %v671
        %v673 = vmul.f32 %v654, 1.442695
        %v674 = vpow.pop %v673
        %v675 = vmul.f32 %v655, 1.442695
        %v676 = vpow.pop %v675
        %v677 = vmul.f32 %v656, 1.442695
        %v678 = vpow.pop %v677
        %v679 = vmul.f32 %v657, 1.442695
        %v680 = vpow.pop %v679
        %v681 = vmul.f32 %v658, 1.442695
        %v682 = vpow.pop %v681
        %v683 = vmul.f32 %v659, 1.442695
        %v684 = vpow.pop %v683
        %v685 = vmul.f32 %v660, 1.442695
        %v686 = vpow.pop %v685
        %v687 = vmul.f32 %v661, 1.442695
        %v688 = vpow.pop %v687
        %v689 = vmul.f32 %v662, 1.442695
        %v690 = vpow.pop %v689
        %v691 = vmul.f32 %v663, 1.442695
        %v692 = vpow.pop %v691
        %v693 = vmul.f32 %v664, 1.442695
        %v694 = vpow.pop %v693
        %v695 = vmul.f32 %v665, 1.442695
        %v696 = vpow.pop %v695
        %v697 = vmul.f32 %v666, 1.442695
        %v698 = vpow.pop %v697
        %v699 = vadd.f32 %v668, 1.0
        %v700 = vadd.f32 %v670, 1.0
        %v701 = vadd.f32 %v672, 1.0
        %v702 = vadd.f32 %v674, 1.0
        %v703 = vadd.f32 %v676, 1.0
        %v704 = vadd.f32 %v678, 1.0
        %v705 = vadd.f32 %v680, 1.0
        %v706 = vadd.f32 %v682, 1.0
        %v707 = vadd.f32 %v684, 1.0
        %v708 = vadd.f32 %v686, 1.0
        %v709 = vadd.f32 %v688, 1.0
        %v710 = vadd.f32 %v690, 1.0
        %v711 = vadd.f32 %v692, 1.0
        %v712 = vadd.f32 %v694, 1.0
        %v713 = vadd.f32 %v696, 1.0
        %v714 = vadd.f32 %v698, 1.0
        %v715 = vrcp.pop %v699
        %v716 = vmul.f32 %v699, %v715
        %v717 = vsub.f32 1.0, %v716
        %v718 = vmul.f32 %v715, %v717
        %v719 = vadd.f32 %v715, %v718
        %vm720 = vweird.f32 %v699
        %vm721 = vweird.f32 %v715
        %vm722 = vmor %vm720, %vm721
        %v723 = vsel %vm722, %v715, %v719
        %v724 = vand.u32 2147483647, %v699
        %vm725 = vcmp.eq.f32.partialorder %v724, 8.507059e+37
        %v726 = vand.u32 %v699, 2147483648
        %v727 = vor.u32 1.1754944e-38, %v726
        %v728 = vsel %vm725, %v727, %v723
        %v729 = vmul.f32 1.0, %v728
        %v730 = vrcp.pop %v700
        %v731 = vmul.f32 %v700, %v730
        %v732 = vsub.f32 1.0, %v731
        %v733 = vmul.f32 %v730, %v732
        %v734 = vadd.f32 %v730, %v733
        %vm735 = vweird.f32 %v700
        %vm736 = vweird.f32 %v730
        %vm737 = vmor %vm735, %vm736
        %v738 = vsel %vm737, %v730, %v734
        %v739 = vand.u32 2147483647, %v700
        %vm740 = vcmp.eq.f32.partialorder %v739, 8.507059e+37
        %v741 = vand.u32 %v700, 2147483648
        %v742 = vor.u32 1.1754944e-38, %v741
        %v743 = vsel %vm740, %v742, %v738
        %v744 = vmul.f32 1.0, %v743
        %v745 = vrcp.pop %v701
        %v746 = vmul.f32 %v701, %v745
        %v747 = vsub.f32 1.0, %v746
        %v748 = vmul.f32 %v745, %v747
        %v749 = vadd.f32 %v745, %v748
        %vm750 = vweird.f32 %v701
        %vm751 = vweird.f32 %v745
        %vm752 = vmor %vm750, %vm751
        %v753 = vsel %vm752, %v745, %v749
        %v754 = vand.u32 2147483647, %v701
        %vm755 = vcmp.eq.f32.partialorder %v754, 8.507059e+37
        %v756 = vand.u32 %v701, 2147483648
        %v757 = vor.u32 1.1754944e-38, %v756
        %v758 = vsel %vm755, %v757, %v753
        %v759 = vmul.f32 1.0, %v758
        %v760 = vrcp.pop %v702
        %v761 = vmul.f32 %v702, %v760
        %v762 = vsub.f32 1.0, %v761
        %v763 = vmul.f32 %v760, %v762
        %v764 = vadd.f32 %v760, %v763
        %vm765 = vweird.f32 %v702
        %vm766 = vweird.f32 %v760
        %vm767 = vmor %vm765, %vm766
        %v768 = vsel %vm767, %v760, %v764
        %v769 = vand.u32 2147483647, %v702
        %vm770 = vcmp.eq.f32.partialorder %v769, 8.507059e+37
        %v771 = vand.u32 %v702, 2147483648
        %v772 = vor.u32 1.1754944e-38, %v771
        %v773 = vsel %vm770, %v772, %v768
        %v774 = vmul.f32 1.0, %v773
        %v775 = vrcp.pop %v703
        %v776 = vmul.f32 %v703, %v775
        %v777 = vsub.f32 1.0, %v776
        %v778 = vmul.f32 %v775, %v777
        %v779 = vadd.f32 %v775, %v778
        %vm780 = vweird.f32 %v703
        %vm781 = vweird.f32 %v775
        %vm782 = vmor %vm780, %vm781
        %v783 = vsel %vm782, %v775, %v779
        %v784 = vand.u32 2147483647, %v703
        %vm785 = vcmp.eq.f32.partialorder %v784, 8.507059e+37
        %v786 = vand.u32 %v703, 2147483648
        %v787 = vor.u32 1.1754944e-38, %v786
        %v788 = vsel %vm785, %v787, %v783
        %v789 = vmul.f32 1.0, %v788
        %v790 = vrcp.pop %v704
        %v791 = vmul.f32 %v704, %v790
        %v792 = vsub.f32 1.0, %v791
        %v793 = vmul.f32 %v790, %v792
        %v794 = vadd.f32 %v790, %v793
        %vm795 = vweird.f32 %v704
        %vm796 = vweird.f32 %v790
        %vm797 = vmor %vm795, %vm796
        %v798 = vsel %vm797, %v790, %v794
        %v799 = vand.u32 2147483647, %v704
        %vm800 = vcmp.eq.f32.partialorder %v799, 8.507059e+37
        %v801 = vand.u32 %v704, 2147483648
        %v802 = vor.u32 1.1754944e-38, %v801
        %v803 = vsel %vm800, %v802, %v798
        %v804 = vmul.f32 1.0, %v803
        %v805 = vrcp.pop %v705
        %v806 = vmul.f32 %v705, %v805
        %v807 = vsub.f32 1.0, %v806
        %v808 = vmul.f32 %v805, %v807
        %v809 = vadd.f32 %v805, %v808
        %vm810 = vweird.f32 %v705
        %vm811 = vweird.f32 %v805
        %vm812 = vmor %vm810, %vm811
        %v813 = vsel %vm812, %v805, %v809
        %v814 = vand.u32 2147483647, %v705
        %vm815 = vcmp.eq.f32.partialorder %v814, 8.507059e+37
        %v816 = vand.u32 %v705, 2147483648
        %v817 = vor.u32 1.1754944e-38, %v816
        %v818 = vsel %vm815, %v817, %v813
        %v819 = vmul.f32 1.0, %v818
        %v820 = vrcp.pop %v706
        %v821 = vmul.f32 %v706, %v820
        %v822 = vsub.f32 1.0, %v821
        %v823 = vmul.f32 %v820, %v822
        %v824 = vadd.f32 %v820, %v823
        %vm825 = vweird.f32 %v706
        %vm826 = vweird.f32 %v820
        %vm827 = vmor %vm825, %vm826
        %v828 = vsel %vm827, %v820, %v824
        %v829 = vand.u32 2147483647, %v706
        %vm830 = vcmp.eq.f32.partialorder %v829, 8.507059e+37
        %v831 = vand.u32 %v706, 2147483648
        %v832 = vor.u32 1.1754944e-38, %v831
        %v833 = vsel %vm830, %v832, %v828
        %v834 = vmul.f32 1.0, %v833
        %v835 = vrcp.pop %v707
        %v836 = vmul.f32 %v707, %v835
        %v837 = vsub.f32 1.0, %v836
        %v838 = vmul.f32 %v835, %v837
        %v839 = vadd.f32 %v835, %v838
        %vm840 = vweird.f32 %v707
        %vm841 = vweird.f32 %v835
        %vm842 = vmor %vm840, %vm841
        %v843 = vsel %vm842, %v835, %v839
        %v844 = vand.u32 2147483647, %v707
        %vm845 = vcmp.eq.f32.partialorder %v844, 8.507059e+37
        %v846 = vand.u32 %v707, 2147483648
        %v847 = vor.u32 1.1754944e-38, %v846
        %v848 = vsel %vm845, %v847, %v843
        %v849 = vmul.f32 1.0, %v848
        %v850 = vrcp.pop %v708
        %v851 = vmul.f32 %v708, %v850
        %v852 = vsub.f32 1.0, %v851
        %v853 = vmul.f32 %v850, %v852
        %v854 = vadd.f32 %v850, %v853
        %vm855 = vweird.f32 %v708
        %vm856 = vweird.f32 %v850
        %vm857 = vmor %vm855, %vm856
        %v858 = vsel %vm857, %v850, %v854
        %v859 = vand.u32 2147483647, %v708
        %vm860 = vcmp.eq.f32.partialorder %v859, 8.507059e+37
        %v861 = vand.u32 %v708, 2147483648
        %v862 = vor.u32 1.1754944e-38, %v861
        %v863 = vsel %vm860, %v862, %v858
        %v864 = vmul.f32 1.0, %v863
        %v865 = vrcp.pop %v709
        %v866 = vmul.f32 %v709, %v865
        %v867 = vsub.f32 1.0, %v866
        %v868 = vmul.f32 %v865, %v867
        %v869 = vadd.f32 %v865, %v868
        %vm870 = vweird.f32 %v709
        %vm871 = vweird.f32 %v865
        %vm872 = vmor %vm870, %vm871
        %v873 = vsel %vm872, %v865, %v869
        %v874 = vand.u32 2147483647, %v709
        %vm875 = vcmp.eq.f32.partialorder %v874, 8.507059e+37
        %v876 = vand.u32 %v709, 2147483648
        %v877 = vor.u32 1.1754944e-38, %v876
        %v878 = vsel %vm875, %v877, %v873
        %v879 = vmul.f32 1.0, %v878
        %v880 = vrcp.pop %v710
        %v881 = vmul.f32 %v710, %v880
        %v882 = vsub.f32 1.0, %v881
        %v883 = vmul.f32 %v880, %v882
        %v884 = vadd.f32 %v880, %v883
        %vm885 = vweird.f32 %v710
        %vm886 = vweird.f32 %v880
        %vm887 = vmor %vm885, %vm886
        %v888 = vsel %vm887, %v880, %v884
        %v889 = vand.u32 2147483647, %v710
        %vm890 = vcmp.eq.f32.partialorder %v889, 8.507059e+37
        %v891 = vand.u32 %v710, 2147483648
        %v892 = vor.u32 1.1754944e-38, %v891
        %v893 = vsel %vm890, %v892, %v888
        %v894 = vmul.f32 1.0, %v893
        %v895 = vrcp.pop %v711
        %v896 = vmul.f32 %v711, %v895
        %v897 = vsub.f32 1.0, %v896
        %v898 = vmul.f32 %v895, %v897
        %v899 = vadd.f32 %v895, %v898
        %vm900 = vweird.f32 %v711
        %vm901 = vweird.f32 %v895
        %vm902 = vmor %vm900, %vm901
        %v903 = vsel %vm902, %v895, %v899
        %v904 = vand.u32 2147483647, %v711
        %vm905 = vcmp.eq.f32.partialorder %v904, 8.507059e+37
        %v906 = vand.u32 %v711, 2147483648
        %v907 = vor.u32 1.1754944e-38, %v906
        %v908 = vsel %vm905, %v907, %v903
        %v909 = vmul.f32 1.0, %v908
        %v910 = vrcp.pop %v712
        %v911 = vmul.f32 %v712, %v910
        %v912 = vsub.f32 1.0, %v911
        %v913 = vmul.f32 %v910, %v912
        %v914 = vadd.f32 %v910, %v913
        %vm915 = vweird.f32 %v712
        %vm916 = vweird.f32 %v910
        %vm917 = vmor %vm915, %vm916
        %v918 = vsel %vm917, %v910, %v914
        %v919 = vand.u32 2147483647, %v712
        %vm920 = vcmp.eq.f32.partialorder %v919, 8.507059e+37
        %v921 = vand.u32 %v712, 2147483648
        %v922 = vor.u32 1.1754944e-38, %v921
        %v923 = vsel %vm920, %v922, %v918
        %v924 = vmul.f32 1.0, %v923
        %v925 = vrcp.pop %v713
        %v926 = vmul.f32 %v713, %v925
        %v927 = vsub.f32 1.0, %v926
        %v928 = vmul.f32 %v925, %v927
        %v929 = vadd.f32 %v925, %v928
        %vm930 = vweird.f32 %v713
        %vm931 = vweird.f32 %v925
        %vm932 = vmor %vm930, %vm931
        %v933 = vsel %vm932, %v925, %v929
        %v934 = vand.u32 2147483647, %v713
        %vm935 = vcmp.eq.f32.partialorder %v934, 8.507059e+37
        %v936 = vand.u32 %v713, 2147483648
        %v937 = vor.u32 1.1754944e-38, %v936
        %v938 = vsel %vm935, %v937, %v933
        %v939 = vmul.f32 1.0, %v938
        %v940 = vrcp.pop %v714
        %v941 = vmul.f32 %v714, %v940
        %v942 = vsub.f32 1.0, %v941
        %v943 = vmul.f32 %v940, %v942
        %v944 = vadd.f32 %v940, %v943
        %vm945 = vweird.f32 %v714
        %vm946 = vweird.f32 %v940
        %vm947 = vmor %vm945, %vm946
        %v948 = vsel %vm947, %v940, %v944
        %v949 = vand.u32 2147483647, %v714
        %vm950 = vcmp.eq.f32.partialorder %v949, 8.507059e+37
        %v951 = vand.u32 %v714, 2147483648
        %v952 = vor.u32 1.1754944e-38, %v951
        %v953 = vsel %vm950, %v952, %v948
        %v954 = vmul.f32 1.0, %v953
        %v955 = vmul.f32 %v635, %v729
        %v956 = vmul.f32 %v636, %v744
        %v957 = vmul.f32 %v637, %v759
        %v958 = vmul.f32 %v638, %v774
        %v959 = vmul.f32 %v639, %v789
        %v960 = vmul.f32 %v640, %v804
        %v961 = vmul.f32 %v641, %v819
        %v962 = vmul.f32 %v642, %v834
        %v963 = vmul.f32 %v643, %v849
        %v964 = vmul.f32 %v644, %v864
        %v965 = vmul.f32 %v645, %v879
        %v966 = vmul.f32 %v646, %v894
        %v967 = vmul.f32 %v647, %v909
        %v968 = vmul.f32 %v648, %v924
        %v969 = vmul.f32 %v649, %v939
        %v970 = vmul.f32 %v650, %v954
        %v971 = vpack.c.bf16 %v956, %v955
        %v972 = vpack.c.bf16 %v958, %v957
        %v973 = vpack.c.bf16 %v960, %v959
        %v974 = vpack.c.bf16 %v962, %v961
        %v975 = vpack.c.bf16 %v964, %v963
        %v976 = vpack.c.bf16 %v966, %v965
        %v977 = vpack.c.bf16 %v968, %v967
        %v978 = vpack.c.bf16 %v970, %v969
        %v979 = vld [vmem:[%s439] sm:$0xff]
        %v980 = vld [vmem:[%s439 + $0x8] sm:$0xff]
        %v981 = vld [vmem:[%s439 + $0x10] sm:$0xff]
        %v982 = vld [vmem:[%s439 + $0x18] sm:$0xff]
        %v983 = vld [vmem:[%s439 + $0x20] sm:$0xff]
        %v984 = vld [vmem:[%s439 + $0x28] sm:$0xff]
        %v985 = vld [vmem:[%s439 + $0x30] sm:$0xff]
        %v986 = vld [vmem:[%s439 + $0x38] sm:$0xff]
        %v987 = vld [vmem:[%s439 + $0x40] sm:$0xff]
        %v988 = vld [vmem:[%s439 + $0x48] sm:$0xff]
        %v989 = vld [vmem:[%s439 + $0x50] sm:$0xff]
        %v990 = vld [vmem:[%s439 + $0x58] sm:$0xff]
        %v991 = vld [vmem:[%s439 + $0x60] sm:$0xff]
        %v992 = vld [vmem:[%s439 + $0x68] sm:$0xff]
        %v993 = vld [vmem:[%s439 + $0x70] sm:$0xff]
        %v994 = vld [vmem:[%s439 + $0x78] sm:$0xff]
        %v995 = vld [vmem:[%s439 + $0x80] sm:$0xff]
        %v996 = vld [vmem:[%s439 + $0x88] sm:$0xff]
        %v997 = vld [vmem:[%s439 + $0x90] sm:$0xff]
        %v998 = vld [vmem:[%s439 + $0x98] sm:$0xff]
        %v1019 = vunpack.c.l.b16 %v979
        %v1020 = vunpack.c.h.b16 %v979
        %v1021 = vunpack.c.l.b16 %v980
        %v1022 = vunpack.c.h.b16 %v980
        %v1023 = vunpack.c.l.b16 %v981
        %v1024 = vunpack.c.h.b16 %v981
        %v1025 = vunpack.c.l.b16 %v982
        %v1026 = vunpack.c.h.b16 %v982
        %v1027 = vunpack.c.l.b16 %v983
        %v1028 = vunpack.c.h.b16 %v983
        %v1029 = vunpack.c.l.b16 %v984
        %v1030 = vunpack.c.h.b16 %v984
        %v1031 = vunpack.c.l.b16 %v985
        %v1032 = vunpack.c.h.b16 %v985
        %v1033 = vunpack.c.l.b16 %v986
        %v1034 = vunpack.c.h.b16 %v986
        %v1035 = vunpack.c.l.b16 %v987
        %v1036 = vunpack.c.h.b16 %v987
        %v1037 = vunpack.c.l.b16 %v988
        %v1038 = vunpack.c.h.b16 %v988
        %v1039 = vunpack.c.l.b16 %v989
        %v1040 = vunpack.c.h.b16 %v989
        %v1041 = vunpack.c.l.b16 %v990
        %v1042 = vunpack.c.h.b16 %v990
        %v1043 = vunpack.c.l.b16 %v991
        %v1044 = vunpack.c.h.b16 %v991
        %v1045 = vunpack.c.l.b16 %v992
        %v1046 = vunpack.c.h.b16 %v992
        %v1047 = vunpack.c.l.b16 %v993
        %v1048 = vunpack.c.h.b16 %v993
        %v1049 = vunpack.c.l.b16 %v994
        %v1050 = vunpack.c.h.b16 %v994
        %v1051 = vunpack.c.l.b16 %v995
        %v1052 = vunpack.c.h.b16 %v995
        %v1053 = vunpack.c.l.b16 %v996
        %v1054 = vunpack.c.h.b16 %v996
        %v1055 = vunpack.c.l.b16 %v997
        %v1056 = vunpack.c.h.b16 %v997
        %v1057 = vunpack.c.l.b16 %v998
        %v1058 = vunpack.c.h.b16 %v998
        %v1059 = vpack.c.b16 %v1029, %v1019
        %v1060 = vpack.c.b16 %v1030, %v1020
        %v1061 = vpack.c.b16 %v1031, %v1021
        %v1062 = vpack.c.b16 %v1032, %v1022
        %v1063 = vpack.c.b16 %v1033, %v1023
        %v1064 = vpack.c.b16 %v1034, %v1024
        %v1065 = vpack.c.b16 %v1035, %v1025
        %v1066 = vpack.c.b16 %v1036, %v1026
        %v1067 = vpack.c.b16 %v1037, %v1027
        %v1068 = vpack.c.b16 %v1038, %v1028
        %v1069 = vpack.c.b16 %v1049, %v1039
        %v1070 = vpack.c.b16 %v1050, %v1040
        %v1071 = vpack.c.b16 %v1051, %v1041
        %v1072 = vpack.c.b16 %v1052, %v1042
        %v1073 = vpack.c.b16 %v1053, %v1043
        %v1074 = vpack.c.b16 %v1054, %v1044
        %v1075 = vpack.c.b16 %v1055, %v1045
        %v1076 = vpack.c.b16 %v1056, %v1046
        %v1077 = vpack.c.b16 %v1057, %v1047
        %v1078 = vpack.c.b16 %v1058, %v1048
        %v1100 = vsel %vm537, %v971, 0
        %v1103 = vsel %vm537, %v972, 0
        %v1106 = vsel %vm537, %v973, 0
        %v1109 = vsel %vm537, %v974, 0
        %v1112 = vsel %vm537, %v975, 0
        %v1115 = vsel %vm537, %v976, 0
        %v1118 = vsel %vm537, %v977, 0
        %v1121 = vsel %vm537, %v978, 0
        %1123 = vmatpush.bf16.msra.mxu0 0
        %1124 = vmatpush.bf16.msra.mxu0 0
        %1125 = vmatpush.bf16.msra.mxu0 0
        %1126 = vmatpush.bf16.msra.mxu0 0
        %1127 = vmatpush.bf16.msra.mxu0 0
        %1128 = vmatpush.bf16.msra.mxu0 0
        %1129 = vmatpush.bf16.msra.mxu0 %v1069
        %1130 = vmatpush.bf16.msra.mxu0 %v1059
        %1131 = vmatmul.bf16.gmra.mxu0 %v1100
        %v1132 = vpop.f32.mrf.mxu0
        %v1133 = vadd.f32 0.0, %v1132
        %v1134 = vpop.f32.mrf.mxu0
        %v1135 = vadd.f32 0.0, %v1134
        %1136 = vmatmul.bf16.gmra.mxu0 %v1103
        %v1137 = vpop.f32.mrf.mxu0
        %v1138 = vadd.f32 0.0, %v1137
        %v1139 = vpop.f32.mrf.mxu0
        %v1140 = vadd.f32 0.0, %v1139
        %1141 = vmatmul.bf16.gmra.mxu0 %v1106
        %v1142 = vpop.f32.mrf.mxu0
        %v1143 = vadd.f32 0.0, %v1142
        %v1144 = vpop.f32.mrf.mxu0
        %v1145 = vadd.f32 0.0, %v1144
        %1146 = vmatmul.bf16.gmra.mxu0 %v1109
        %v1147 = vpop.f32.mrf.mxu0
        %v1148 = vadd.f32 0.0, %v1147
        %v1149 = vpop.f32.mrf.mxu0
        %v1150 = vadd.f32 0.0, %v1149
        %1151 = vmatmul.bf16.gmra.mxu0 %v1112
        %v1152 = vpop.f32.mrf.mxu0
        %v1153 = vadd.f32 0.0, %v1152
        %v1154 = vpop.f32.mrf.mxu0
        %v1155 = vadd.f32 0.0, %v1154
        %1156 = vmatmul.bf16.gmra.mxu0 %v1115
        %v1157 = vpop.f32.mrf.mxu0
        %v1158 = vadd.f32 0.0, %v1157
        %v1159 = vpop.f32.mrf.mxu0
        %v1160 = vadd.f32 0.0, %v1159
        %1161 = vmatmul.bf16.gmra.mxu0 %v1118
        %v1162 = vpop.f32.mrf.mxu0
        %v1163 = vadd.f32 0.0, %v1162
        %v1164 = vpop.f32.mrf.mxu0
        %v1165 = vadd.f32 0.0, %v1164
        %1166 = vmatmul.bf16.gmra.mxu0 %v1121
        %v1167 = vpop.f32.mrf.mxu0
        %v1168 = vadd.f32 0.0, %v1167
        %v1169 = vpop.f32.mrf.mxu0
        %v1170 = vadd.f32 0.0, %v1169
        %1171 = vdwg.mxu0
        %1172 = vmatpush.bf16.msra.mxu0 0
        %1173 = vmatpush.bf16.msra.mxu0 0
        %1174 = vmatpush.bf16.msra.mxu0 0
        %1175 = vmatpush.bf16.msra.mxu0 0
        %1176 = vmatpush.bf16.msra.mxu0 0
        %1177 = vmatpush.bf16.msra.mxu0 0
        %1178 = vmatpush.bf16.msra.mxu0 %v1070
        %1179 = vmatpush.bf16.msra.mxu0 %v1060
        %1180 = vmatmul.bf16.gmra.mxu0 %v1100
        %v1181 = vpop.f32.mrf.mxu0
        %v1182 = vadd.f32 0.0, %v1181
        %v1183 = vpop.f32.mrf.mxu0
        %v1184 = vadd.f32 0.0, %v1183
        %1185 = vmatmul.bf16.gmra.mxu0 %v1103
        %v1186 = vpop.f32.mrf.mxu0
        %v1187 = vadd.f32 0.0, %v1186
        %v1188 = vpop.f32.mrf.mxu0
        %v1189 = vadd.f32 0.0, %v1188
        %1190 = vmatmul.bf16.gmra.mxu0 %v1106
        %v1191 = vpop.f32.mrf.mxu0
        %v1192 = vadd.f32 0.0, %v1191
        %v1193 = vpop.f32.mrf.mxu0
        %v1194 = vadd.f32 0.0, %v1193
        %1195 = vmatmul.bf16.gmra.mxu0 %v1109
        %v1196 = vpop.f32.mrf.mxu0
        %v1197 = vadd.f32 0.0, %v1196
        %v1198 = vpop.f32.mrf.mxu0
        %v1199 = vadd.f32 0.0, %v1198
        %1200 = vmatmul.bf16.gmra.mxu0 %v1112
        %v1201 = vpop.f32.mrf.mxu0
        %v1202 = vadd.f32 0.0, %v1201
        %v1203 = vpop.f32.mrf.mxu0
        %v1204 = vadd.f32 0.0, %v1203
        %1205 = vmatmul.bf16.gmra.mxu0 %v1115
        %v1206 = vpop.f32.mrf.mxu0
        %v1207 = vadd.f32 0.0, %v1206
        %v1208 = vpop.f32.mrf.mxu0
        %v1209 = vadd.f32 0.0, %v1208
        %1210 = vmatmul.bf16.gmra.mxu0 %v1118
        %v1211 = vpop.f32.mrf.mxu0
        %v1212 = vadd.f32 0.0, %v1211
        %v1213 = vpop.f32.mrf.mxu0
        %v1214 = vadd.f32 0.0, %v1213
        %1215 = vmatmul.bf16.gmra.mxu0 %v1121
        %v1216 = vpop.f32.mrf.mxu0
        %v1217 = vadd.f32 0.0, %v1216
        %v1218 = vpop.f32.mrf.mxu0
        %v1219 = vadd.f32 0.0, %v1218
        %1220 = vdwg.mxu0
        %1221 = vmatpush.bf16.msra.mxu0 0
        %1222 = vmatpush.bf16.msra.mxu0 0
        %1223 = vmatpush.bf16.msra.mxu0 0
        %1224 = vmatpush.bf16.msra.mxu0 0
        %1225 = vmatpush.bf16.msra.mxu0 0
        %1226 = vmatpush.bf16.msra.mxu0 0
        %1227 = vmatpush.bf16.msra.mxu0 %v1071
        %1228 = vmatpush.bf16.msra.mxu0 %v1061
        %1229 = vmatmul.bf16.gmra.mxu0 %v1100
        %v1230 = vpop.f32.mrf.mxu0
        %v1231 = vadd.f32 0.0, %v1230
        %v1232 = vpop.f32.mrf.mxu0
        %v1233 = vadd.f32 0.0, %v1232
        %1234 = vmatmul.bf16.gmra.mxu0 %v1103
        %v1235 = vpop.f32.mrf.mxu0
        %v1236 = vadd.f32 0.0, %v1235
        %v1237 = vpop.f32.mrf.mxu0
        %v1238 = vadd.f32 0.0, %v1237
        %1239 = vmatmul.bf16.gmra.mxu0 %v1106
        %v1240 = vpop.f32.mrf.mxu0
        %v1241 = vadd.f32 0.0, %v1240
        %v1242 = vpop.f32.mrf.mxu0
        %v1243 = vadd.f32 0.0, %v1242
        %1244 = vmatmul.bf16.gmra.mxu0 %v1109
        %v1245 = vpop.f32.mrf.mxu0
        %v1246 = vadd.f32 0.0, %v1245
        %v1247 = vpop.f32.mrf.mxu0
        %v1248 = vadd.f32 0.0, %v1247
        %1249 = vmatmul.bf16.gmra.mxu0 %v1112
        %v1250 = vpop.f32.mrf.mxu0
        %v1251 = vadd.f32 0.0, %v1250
        %v1252 = vpop.f32.mrf.mxu0
        %v1253 = vadd.f32 0.0, %v1252
        %1254 = vmatmul.bf16.gmra.mxu0 %v1115
        %v1255 = vpop.f32.mrf.mxu0
        %v1256 = vadd.f32 0.0, %v1255
        %v1257 = vpop.f32.mrf.mxu0
        %v1258 = vadd.f32 0.0, %v1257
        %1259 = vmatmul.bf16.gmra.mxu0 %v1118
        %v1260 = vpop.f32.mrf.mxu0
        %v1261 = vadd.f32 0.0, %v1260
        %v1262 = vpop.f32.mrf.mxu0
        %v1263 = vadd.f32 0.0, %v1262
        %1264 = vmatmul.bf16.gmra.mxu0 %v1121
        %v1265 = vpop.f32.mrf.mxu0
        %v1266 = vadd.f32 0.0, %v1265
        %v1267 = vpop.f32.mrf.mxu0
        %v1268 = vadd.f32 0.0, %v1267
        %1269 = vdwg.mxu0
        %1270 = vmatpush.bf16.msra.mxu0 0
        %1271 = vmatpush.bf16.msra.mxu0 0
        %1272 = vmatpush.bf16.msra.mxu0 0
        %1273 = vmatpush.bf16.msra.mxu0 0
        %1274 = vmatpush.bf16.msra.mxu0 0
        %1275 = vmatpush.bf16.msra.mxu0 0
        %1276 = vmatpush.bf16.msra.mxu0 %v1072
        %1277 = vmatpush.bf16.msra.mxu0 %v1062
        %1278 = vmatmul.bf16.gmra.mxu0 %v1100
        %v1279 = vpop.f32.mrf.mxu0
        %v1280 = vadd.f32 0.0, %v1279
        %v1281 = vpop.f32.mrf.mxu0
        %v1282 = vadd.f32 0.0, %v1281
        %1283 = vmatmul.bf16.gmra.mxu0 %v1103
        %v1284 = vpop.f32.mrf.mxu0
        %v1285 = vadd.f32 0.0, %v1284
        %v1286 = vpop.f32.mrf.mxu0
        %v1287 = vadd.f32 0.0, %v1286
        %1288 = vmatmul.bf16.gmra.mxu0 %v1106
        %v1289 = vpop.f32.mrf.mxu0
        %v1290 = vadd.f32 0.0, %v1289
        %v1291 = vpop.f32.mrf.mxu0
        %v1292 = vadd.f32 0.0, %v1291
        %1293 = vmatmul.bf16.gmra.mxu0 %v1109
        %v1294 = vpop.f32.mrf.mxu0
        %v1295 = vadd.f32 0.0, %v1294
        %v1296 = vpop.f32.mrf.mxu0
        %v1297 = vadd.f32 0.0, %v1296
        %1298 = vmatmul.bf16.gmra.mxu0 %v1112
        %v1299 = vpop.f32.mrf.mxu0
        %v1300 = vadd.f32 0.0, %v1299
        %v1301 = vpop.f32.mrf.mxu0
        %v1302 = vadd.f32 0.0, %v1301
        %1303 = vmatmul.bf16.gmra.mxu0 %v1115
        %v1304 = vpop.f32.mrf.mxu0
        %v1305 = vadd.f32 0.0, %v1304
        %v1306 = vpop.f32.mrf.mxu0
        %v1307 = vadd.f32 0.0, %v1306
        %1308 = vmatmul.bf16.gmra.mxu0 %v1118
        %v1309 = vpop.f32.mrf.mxu0
        %v1310 = vadd.f32 0.0, %v1309
        %v1311 = vpop.f32.mrf.mxu0
        %v1312 = vadd.f32 0.0, %v1311
        %1313 = vmatmul.bf16.gmra.mxu0 %v1121
        %v1314 = vpop.f32.mrf.mxu0
        %v1315 = vadd.f32 0.0, %v1314
        %v1316 = vpop.f32.mrf.mxu0
        %v1317 = vadd.f32 0.0, %v1316
        %1318 = vdwg.mxu0
        %1319 = vmatpush.bf16.msra.mxu0 0
        %1320 = vmatpush.bf16.msra.mxu0 0
        %1321 = vmatpush.bf16.msra.mxu0 0
        %1322 = vmatpush.bf16.msra.mxu0 0
        %1323 = vmatpush.bf16.msra.mxu0 0
        %1324 = vmatpush.bf16.msra.mxu0 0
        %1325 = vmatpush.bf16.msra.mxu0 %v1073
        %1326 = vmatpush.bf16.msra.mxu0 %v1063
        %1327 = vmatmul.bf16.gmra.mxu0 %v1100
        %v1328 = vpop.f32.mrf.mxu0
        %v1329 = vadd.f32 0.0, %v1328
        %v1330 = vpop.f32.mrf.mxu0
        %v1331 = vadd.f32 0.0, %v1330
        %1332 = vmatmul.bf16.gmra.mxu0 %v1103
        %v1333 = vpop.f32.mrf.mxu0
        %v1334 = vadd.f32 0.0, %v1333
        %v1335 = vpop.f32.mrf.mxu0
        %v1336 = vadd.f32 0.0, %v1335
        %1337 = vmatmul.bf16.gmra.mxu0 %v1106
        %v1338 = vpop.f32.mrf.mxu0
        %v1339 = vadd.f32 0.0, %v1338
        %v1340 = vpop.f32.mrf.mxu0
        %v1341 = vadd.f32 0.0, %v1340
        %1342 = vmatmul.bf16.gmra.mxu0 %v1109
        %v1343 = vpop.f32.mrf.mxu0
        %v1344 = vadd.f32 0.0, %v1343
        %v1345 = vpop.f32.mrf.mxu0
        %v1346 = vadd.f32 0.0, %v1345
        %1347 = vmatmul.bf16.gmra.mxu0 %v1112
        %v1348 = vpop.f32.mrf.mxu0
        %v1349 = vadd.f32 0.0, %v1348
        %v1350 = vpop.f32.mrf.mxu0
        %v1351 = vadd.f32 0.0, %v1350
        %1352 = vmatmul.bf16.gmra.mxu0 %v1115
        %v1353 = vpop.f32.mrf.mxu0
        %v1354 = vadd.f32 0.0, %v1353
        %v1355 = vpop.f32.mrf.mxu0
        %v1356 = vadd.f32 0.0, %v1355
        %1357 = vmatmul.bf16.gmra.mxu0 %v1118
        %v1358 = vpop.f32.mrf.mxu0
        %v1359 = vadd.f32 0.0, %v1358
        %v1360 = vpop.f32.mrf.mxu0
        %v1361 = vadd.f32 0.0, %v1360
        %1362 = vmatmul.bf16.gmra.mxu0 %v1121
        %v1363 = vpop.f32.mrf.mxu0
        %v1364 = vadd.f32 0.0, %v1363
        %v1365 = vpop.f32.mrf.mxu0
        %v1366 = vadd.f32 0.0, %v1365
        %1367 = vdwg.mxu0
        %1368 = vmatpush.bf16.msra.mxu0 0
        %1369 = vmatpush.bf16.msra.mxu0 0
        %1370 = vmatpush.bf16.msra.mxu0 0
        %1371 = vmatpush.bf16.msra.mxu0 0
        %1372 = vmatpush.bf16.msra.mxu0 0
        %1373 = vmatpush.bf16.msra.mxu0 0
        %1374 = vmatpush.bf16.msra.mxu0 %v1074
        %1375 = vmatpush.bf16.msra.mxu0 %v1064
        %1376 = vmatmul.bf16.gmra.mxu0 %v1100
        %v1377 = vpop.f32.mrf.mxu0
        %v1378 = vadd.f32 0.0, %v1377
        %v1379 = vpop.f32.mrf.mxu0
        %v1380 = vadd.f32 0.0, %v1379
        %1381 = vmatmul.bf16.gmra.mxu0 %v1103
        %v1382 = vpop.f32.mrf.mxu0
        %v1383 = vadd.f32 0.0, %v1382
        %v1384 = vpop.f32.mrf.mxu0
        %v1385 = vadd.f32 0.0, %v1384
        %1386 = vmatmul.bf16.gmra.mxu0 %v1106
        %v1387 = vpop.f32.mrf.mxu0
        %v1388 = vadd.f32 0.0, %v1387
        %v1389 = vpop.f32.mrf.mxu0
        %v1390 = vadd.f32 0.0, %v1389
        %1391 = vmatmul.bf16.gmra.mxu0 %v1109
        %v1392 = vpop.f32.mrf.mxu0
        %v1393 = vadd.f32 0.0, %v1392
        %v1394 = vpop.f32.mrf.mxu0
        %v1395 = vadd.f32 0.0, %v1394
        %1396 = vmatmul.bf16.gmra.mxu0 %v1112
        %v1397 = vpop.f32.mrf.mxu0
        %v1398 = vadd.f32 0.0, %v1397
        %v1399 = vpop.f32.mrf.mxu0
        %v1400 = vadd.f32 0.0, %v1399
        %1401 = vmatmul.bf16.gmra.mxu0 %v1115
        %v1402 = vpop.f32.mrf.mxu0
        %v1403 = vadd.f32 0.0, %v1402
        %v1404 = vpop.f32.mrf.mxu0
        %v1405 = vadd.f32 0.0, %v1404
        %1406 = vmatmul.bf16.gmra.mxu0 %v1118
        %v1407 = vpop.f32.mrf.mxu0
        %v1408 = vadd.f32 0.0, %v1407
        %v1409 = vpop.f32.mrf.mxu0
        %v1410 = vadd.f32 0.0, %v1409
        %1411 = vmatmul.bf16.gmra.mxu0 %v1121
        %v1412 = vpop.f32.mrf.mxu0
        %v1413 = vadd.f32 0.0, %v1412
        %v1414 = vpop.f32.mrf.mxu0
        %v1415 = vadd.f32 0.0, %v1414
        %1416 = vdwg.mxu0
        %1417 = vmatpush.bf16.msra.mxu0 0
        %1418 = vmatpush.bf16.msra.mxu0 0
        %1419 = vmatpush.bf16.msra.mxu0 0
        %1420 = vmatpush.bf16.msra.mxu0 0
        %1421 = vmatpush.bf16.msra.mxu0 0
        %1422 = vmatpush.bf16.msra.mxu0 0
        %1423 = vmatpush.bf16.msra.mxu0 %v1075
        %1424 = vmatpush.bf16.msra.mxu0 %v1065
        %1425 = vmatmul.bf16.gmra.mxu0 %v1100
        %v1426 = vpop.f32.mrf.mxu0
        %v1427 = vadd.f32 0.0, %v1426
        %v1428 = vpop.f32.mrf.mxu0
        %v1429 = vadd.f32 0.0, %v1428
        %1430 = vmatmul.bf16.gmra.mxu0 %v1103
        %v1431 = vpop.f32.mrf.mxu0
        %v1432 = vadd.f32 0.0, %v1431
        %v1433 = vpop.f32.mrf.mxu0
        %v1434 = vadd.f32 0.0, %v1433
        %1435 = vmatmul.bf16.gmra.mxu0 %v1106
        %v1436 = vpop.f32.mrf.mxu0
        %v1437 = vadd.f32 0.0, %v1436
        %v1438 = vpop.f32.mrf.mxu0
        %v1439 = vadd.f32 0.0, %v1438
        %1440 = vmatmul.bf16.gmra.mxu0 %v1109
        %v1441 = vpop.f32.mrf.mxu0
        %v1442 = vadd.f32 0.0, %v1441
        %v1443 = vpop.f32.mrf.mxu0
        %v1444 = vadd.f32 0.0, %v1443
        %1445 = vmatmul.bf16.gmra.mxu0 %v1112
        %v1446 = vpop.f32.mrf.mxu0
        %v1447 = vadd.f32 0.0, %v1446
        %v1448 = vpop.f32.mrf.mxu0
        %v1449 = vadd.f32 0.0, %v1448
        %1450 = vmatmul.bf16.gmra.mxu0 %v1115
        %v1451 = vpop.f32.mrf.mxu0
        %v1452 = vadd.f32 0.0, %v1451
        %v1453 = vpop.f32.mrf.mxu0
        %v1454 = vadd.f32 0.0, %v1453
        %1455 = vmatmul.bf16.gmra.mxu0 %v1118
        %v1456 = vpop.f32.mrf.mxu0
        %v1457 = vadd.f32 0.0, %v1456
        %v1458 = vpop.f32.mrf.mxu0
        %v1459 = vadd.f32 0.0, %v1458
        %1460 = vmatmul.bf16.gmra.mxu0 %v1121
        %v1461 = vpop.f32.mrf.mxu0
        %v1462 = vadd.f32 0.0, %v1461
        %v1463 = vpop.f32.mrf.mxu0
        %v1464 = vadd.f32 0.0, %v1463
        %1465 = vdwg.mxu0
        %1466 = vmatpush.bf16.msra.mxu0 0
        %1467 = vmatpush.bf16.msra.mxu0 0
        %1468 = vmatpush.bf16.msra.mxu0 0
        %1469 = vmatpush.bf16.msra.mxu0 0
        %1470 = vmatpush.bf16.msra.mxu0 0
        %1471 = vmatpush.bf16.msra.mxu0 0
        %1472 = vmatpush.bf16.msra.mxu0 %v1076
        %1473 = vmatpush.bf16.msra.mxu0 %v1066
        %1474 = vmatmul.bf16.gmra.mxu0 %v1100
        %v1475 = vpop.f32.mrf.mxu0
        %v1476 = vadd.f32 0.0, %v1475
        %v1477 = vpop.f32.mrf.mxu0
        %v1478 = vadd.f32 0.0, %v1477
        %1479 = vmatmul.bf16.gmra.mxu0 %v1103
        %v1480 = vpop.f32.mrf.mxu0
        %v1481 = vadd.f32 0.0, %v1480
        %v1482 = vpop.f32.mrf.mxu0
        %v1483 = vadd.f32 0.0, %v1482
        %1484 = vmatmul.bf16.gmra.mxu0 %v1106
        %v1485 = vpop.f32.mrf.mxu0
        %v1486 = vadd.f32 0.0, %v1485
        %v1487 = vpop.f32.mrf.mxu0
        %v1488 = vadd.f32 0.0, %v1487
        %1489 = vmatmul.bf16.gmra.mxu0 %v1109
        %v1490 = vpop.f32.mrf.mxu0
        %v1491 = vadd.f32 0.0, %v1490
        %v1492 = vpop.f32.mrf.mxu0
        %v1493 = vadd.f32 0.0, %v1492
        %1494 = vmatmul.bf16.gmra.mxu0 %v1112
        %v1495 = vpop.f32.mrf.mxu0
        %v1496 = vadd.f32 0.0, %v1495
        %v1497 = vpop.f32.mrf.mxu0
        %v1498 = vadd.f32 0.0, %v1497
        %1499 = vmatmul.bf16.gmra.mxu0 %v1115
        %v1500 = vpop.f32.mrf.mxu0
        %v1501 = vadd.f32 0.0, %v1500
        %v1502 = vpop.f32.mrf.mxu0
        %v1503 = vadd.f32 0.0, %v1502
        %1504 = vmatmul.bf16.gmra.mxu0 %v1118
        %v1505 = vpop.f32.mrf.mxu0
        %v1506 = vadd.f32 0.0, %v1505
        %v1507 = vpop.f32.mrf.mxu0
        %v1508 = vadd.f32 0.0, %v1507
        %1509 = vmatmul.bf16.gmra.mxu0 %v1121
        %v1510 = vpop.f32.mrf.mxu0
        %v1511 = vadd.f32 0.0, %v1510
        %v1512 = vpop.f32.mrf.mxu0
        %v1513 = vadd.f32 0.0, %v1512
        %1514 = vdwg.mxu0
        %1515 = vmatpush.bf16.msra.mxu0 0
        %1516 = vmatpush.bf16.msra.mxu0 0
        %1517 = vmatpush.bf16.msra.mxu0 0
        %1518 = vmatpush.bf16.msra.mxu0 0
        %1519 = vmatpush.bf16.msra.mxu0 0
        %1520 = vmatpush.bf16.msra.mxu0 0
        %1521 = vmatpush.bf16.msra.mxu0 %v1077
        %1522 = vmatpush.bf16.msra.mxu0 %v1067
        %1523 = vmatmul.bf16.gmra.mxu0 %v1100
        %v1524 = vpop.f32.mrf.mxu0
        %v1525 = vadd.f32 0.0, %v1524
        %v1526 = vpop.f32.mrf.mxu0
        %v1527 = vadd.f32 0.0, %v1526
        %1528 = vmatmul.bf16.gmra.mxu0 %v1103
        %v1529 = vpop.f32.mrf.mxu0
        %v1530 = vadd.f32 0.0, %v1529
        %v1531 = vpop.f32.mrf.mxu0
        %v1532 = vadd.f32 0.0, %v1531
        %1533 = vmatmul.bf16.gmra.mxu0 %v1106
        %v1534 = vpop.f32.mrf.mxu0
        %v1535 = vadd.f32 0.0, %v1534
        %v1536 = vpop.f32.mrf.mxu0
        %v1537 = vadd.f32 0.0, %v1536
        %1538 = vmatmul.bf16.gmra.mxu0 %v1109
        %v1539 = vpop.f32.mrf.mxu0
        %v1540 = vadd.f32 0.0, %v1539
        %v1541 = vpop.f32.mrf.mxu0
        %v1542 = vadd.f32 0.0, %v1541
        %1543 = vmatmul.bf16.gmra.mxu0 %v1112
        %v1544 = vpop.f32.mrf.mxu0
        %v1545 = vadd.f32 0.0, %v1544
        %v1546 = vpop.f32.mrf.mxu0
        %v1547 = vadd.f32 0.0, %v1546
        %1548 = vmatmul.bf16.gmra.mxu0 %v1115
        %v1549 = vpop.f32.mrf.mxu0
        %v1550 = vadd.f32 0.0, %v1549
        %v1551 = vpop.f32.mrf.mxu0
        %v1552 = vadd.f32 0.0, %v1551
        %1553 = vmatmul.bf16.gmra.mxu0 %v1118
        %v1554 = vpop.f32.mrf.mxu0
        %v1555 = vadd.f32 0.0, %v1554
        %v1556 = vpop.f32.mrf.mxu0
        %v1557 = vadd.f32 0.0, %v1556
        %1558 = vmatmul.bf16.gmra.mxu0 %v1121
        %v1559 = vpop.f32.mrf.mxu0
        %v1560 = vadd.f32 0.0, %v1559
        %v1561 = vpop.f32.mrf.mxu0
        %v1562 = vadd.f32 0.0, %v1561
        %1563 = vdwg.mxu0
        %1564 = vmatpush.bf16.msra.mxu0 0
        %1565 = vmatpush.bf16.msra.mxu0 0
        %1566 = vmatpush.bf16.msra.mxu0 0
        %1567 = vmatpush.bf16.msra.mxu0 0
        %1568 = vmatpush.bf16.msra.mxu0 0
        %1569 = vmatpush.bf16.msra.mxu0 0
        %1570 = vmatpush.bf16.msra.mxu0 %v1078
        %1571 = vmatpush.bf16.msra.mxu0 %v1068
        %1572 = vmatmul.bf16.gmra.mxu0 %v1100
        %v1573 = vpop.f32.mrf.mxu0
        %v1574 = vadd.f32 0.0, %v1573
        %v1575 = vpop.f32.mrf.mxu0
        %v1576 = vadd.f32 0.0, %v1575
        %1577 = vmatmul.bf16.gmra.mxu0 %v1103
        %v1578 = vpop.f32.mrf.mxu0
        %v1579 = vadd.f32 0.0, %v1578
        %v1580 = vpop.f32.mrf.mxu0
        %v1581 = vadd.f32 0.0, %v1580
        %1582 = vmatmul.bf16.gmra.mxu0 %v1106
        %v1583 = vpop.f32.mrf.mxu0
        %v1584 = vadd.f32 0.0, %v1583
        %v1585 = vpop.f32.mrf.mxu0
        %v1586 = vadd.f32 0.0, %v1585
        %1587 = vmatmul.bf16.gmra.mxu0 %v1109
        %v1588 = vpop.f32.mrf.mxu0
        %v1589 = vadd.f32 0.0, %v1588
        %v1590 = vpop.f32.mrf.mxu0
        %v1591 = vadd.f32 0.0, %v1590
        %1592 = vmatmul.bf16.gmra.mxu0 %v1112
        %v1593 = vpop.f32.mrf.mxu0
        %v1594 = vadd.f32 0.0, %v1593
        %v1595 = vpop.f32.mrf.mxu0
        %v1596 = vadd.f32 0.0, %v1595
        %1597 = vmatmul.bf16.gmra.mxu0 %v1115
        %v1598 = vpop.f32.mrf.mxu0
        %v1599 = vadd.f32 0.0, %v1598
        %v1600 = vpop.f32.mrf.mxu0
        %v1601 = vadd.f32 0.0, %v1600
        %1602 = vmatmul.bf16.gmra.mxu0 %v1118
        %v1603 = vpop.f32.mrf.mxu0
        %v1604 = vadd.f32 0.0, %v1603
        %v1605 = vpop.f32.mrf.mxu0
        %v1606 = vadd.f32 0.0, %v1605
        %1607 = vmatmul.bf16.gmra.mxu0 %v1121
        %v1608 = vpop.f32.mrf.mxu0
        %v1609 = vadd.f32 0.0, %v1608
        %v1610 = vpop.f32.mrf.mxu0
        %v1611 = vadd.f32 0.0, %v1610
        %1612 = vdwg.mxu0
        %v1613 = vld [vmem:[%s444] sm:$0xff]
        %v1614 = vld [vmem:[%s444 + $0x8] sm:$0x3]
        %v1617 = vperm.slane %v1613, 0
        %v1618 = vperm.slane %v1613, 1
        %v1619 = vperm.slane %v1613, 2
        %v1620 = vperm.slane %v1613, 3
        %v1621 = vperm.slane %v1613, 4
        %v1622 = vperm.slane %v1613, 5
        %v1623 = vperm.slane %v1613, 6
        %v1624 = vperm.slane %v1613, 7
        %v1625 = vperm.slane %v1614, 0
        %v1626 = vperm.slane %v1614, 1
        %v1637 = vmul.f32 %v1133, %v1617
        %v1638 = vmul.f32 %v1182, %v1618
        %v1639 = vmul.f32 %v1231, %v1619
        %v1640 = vmul.f32 %v1280, %v1620
        %v1641 = vmul.f32 %v1329, %v1621
        %v1642 = vmul.f32 %v1378, %v1622
        %v1643 = vmul.f32 %v1427, %v1623
        %v1644 = vmul.f32 %v1476, %v1624
        %v1645 = vmul.f32 %v1525, %v1625
        %v1646 = vmul.f32 %v1574, %v1626
        %v1647 = vmul.f32 %v1135, %v1617
        %v1648 = vmul.f32 %v1184, %v1618
        %v1649 = vmul.f32 %v1233, %v1619
        %v1650 = vmul.f32 %v1282, %v1620
        %v1651 = vmul.f32 %v1331, %v1621
        %v1652 = vmul.f32 %v1380, %v1622
        %v1653 = vmul.f32 %v1429, %v1623
        %v1654 = vmul.f32 %v1478, %v1624
        %v1655 = vmul.f32 %v1527, %v1625
        %v1656 = vmul.f32 %v1576, %v1626
        %v1657 = vmul.f32 %v1138, %v1617
        %v1658 = vmul.f32 %v1187, %v1618
        %v1659 = vmul.f32 %v1236, %v1619
        %v1660 = vmul.f32 %v1285, %v1620
        %v1661 = vmul.f32 %v1334, %v1621
        %v1662 = vmul.f32 %v1383, %v1622
        %v1663 = vmul.f32 %v1432, %v1623
        %v1664 = vmul.f32 %v1481, %v1624
        %v1665 = vmul.f32 %v1530, %v1625
        %v1666 = vmul.f32 %v1579, %v1626
        %v1667 = vmul.f32 %v1140, %v1617
        %v1668 = vmul.f32 %v1189, %v1618
        %v1669 = vmul.f32 %v1238, %v1619
        %v1670 = vmul.f32 %v1287, %v1620
        %v1671 = vmul.f32 %v1336, %v1621
        %v1672 = vmul.f32 %v1385, %v1622
        %v1673 = vmul.f32 %v1434, %v1623
        %v1674 = vmul.f32 %v1483, %v1624
        %v1675 = vmul.f32 %v1532, %v1625
        %v1676 = vmul.f32 %v1581, %v1626
        %v1677 = vmul.f32 %v1143, %v1617
        %v1678 = vmul.f32 %v1192, %v1618
        %v1679 = vmul.f32 %v1241, %v1619
        %v1680 = vmul.f32 %v1290, %v1620
        %v1681 = vmul.f32 %v1339, %v1621
        %v1682 = vmul.f32 %v1388, %v1622
        %v1683 = vmul.f32 %v1437, %v1623
        %v1684 = vmul.f32 %v1486, %v1624
        %v1685 = vmul.f32 %v1535, %v1625
        %v1686 = vmul.f32 %v1584, %v1626
        %v1687 = vmul.f32 %v1145, %v1617
        %v1688 = vmul.f32 %v1194, %v1618
        %v1689 = vmul.f32 %v1243, %v1619
        %v1690 = vmul.f32 %v1292, %v1620
        %v1691 = vmul.f32 %v1341, %v1621
        %v1692 = vmul.f32 %v1390, %v1622
        %v1693 = vmul.f32 %v1439, %v1623
        %v1694 = vmul.f32 %v1488, %v1624
        %v1695 = vmul.f32 %v1537, %v1625
        %v1696 = vmul.f32 %v1586, %v1626
        %v1697 = vmul.f32 %v1148, %v1617
        %v1698 = vmul.f32 %v1197, %v1618
        %v1699 = vmul.f32 %v1246, %v1619
        %v1700 = vmul.f32 %v1295, %v1620
        %v1701 = vmul.f32 %v1344, %v1621
        %v1702 = vmul.f32 %v1393, %v1622
        %v1703 = vmul.f32 %v1442, %v1623
        %v1704 = vmul.f32 %v1491, %v1624
        %v1705 = vmul.f32 %v1540, %v1625
        %v1706 = vmul.f32 %v1589, %v1626
        %v1707 = vmul.f32 %v1150, %v1617
        %v1708 = vmul.f32 %v1199, %v1618
        %v1709 = vmul.f32 %v1248, %v1619
        %v1710 = vmul.f32 %v1297, %v1620
        %v1711 = vmul.f32 %v1346, %v1621
        %v1712 = vmul.f32 %v1395, %v1622
        %v1713 = vmul.f32 %v1444, %v1623
        %v1714 = vmul.f32 %v1493, %v1624
        %v1715 = vmul.f32 %v1542, %v1625
        %v1716 = vmul.f32 %v1591, %v1626
        %v1717 = vmul.f32 %v1153, %v1617
        %v1718 = vmul.f32 %v1202, %v1618
        %v1719 = vmul.f32 %v1251, %v1619
        %v1720 = vmul.f32 %v1300, %v1620
        %v1721 = vmul.f32 %v1349, %v1621
        %v1722 = vmul.f32 %v1398, %v1622
        %v1723 = vmul.f32 %v1447, %v1623
        %v1724 = vmul.f32 %v1496, %v1624
        %v1725 = vmul.f32 %v1545, %v1625
        %v1726 = vmul.f32 %v1594, %v1626
        %v1727 = vmul.f32 %v1155, %v1617
        %v1728 = vmul.f32 %v1204, %v1618
        %v1729 = vmul.f32 %v1253, %v1619
        %v1730 = vmul.f32 %v1302, %v1620
        %v1731 = vmul.f32 %v1351, %v1621
        %v1732 = vmul.f32 %v1400, %v1622
        %v1733 = vmul.f32 %v1449, %v1623
        %v1734 = vmul.f32 %v1498, %v1624
        %v1735 = vmul.f32 %v1547, %v1625
        %v1736 = vmul.f32 %v1596, %v1626
        %v1737 = vmul.f32 %v1158, %v1617
        %v1738 = vmul.f32 %v1207, %v1618
        %v1739 = vmul.f32 %v1256, %v1619
        %v1740 = vmul.f32 %v1305, %v1620
        %v1741 = vmul.f32 %v1354, %v1621
        %v1742 = vmul.f32 %v1403, %v1622
        %v1743 = vmul.f32 %v1452, %v1623
        %v1744 = vmul.f32 %v1501, %v1624
        %v1745 = vmul.f32 %v1550, %v1625
        %v1746 = vmul.f32 %v1599, %v1626
        %v1747 = vmul.f32 %v1160, %v1617
        %v1748 = vmul.f32 %v1209, %v1618
        %v1749 = vmul.f32 %v1258, %v1619
        %v1750 = vmul.f32 %v1307, %v1620
        %v1751 = vmul.f32 %v1356, %v1621
        %v1752 = vmul.f32 %v1405, %v1622
        %v1753 = vmul.f32 %v1454, %v1623
        %v1754 = vmul.f32 %v1503, %v1624
        %v1755 = vmul.f32 %v1552, %v1625
        %v1756 = vmul.f32 %v1601, %v1626
        %v1757 = vmul.f32 %v1163, %v1617
        %v1758 = vmul.f32 %v1212, %v1618
        %v1759 = vmul.f32 %v1261, %v1619
        %v1760 = vmul.f32 %v1310, %v1620
        %v1761 = vmul.f32 %v1359, %v1621
        %v1762 = vmul.f32 %v1408, %v1622
        %v1763 = vmul.f32 %v1457, %v1623
        %v1764 = vmul.f32 %v1506, %v1624
        %v1765 = vmul.f32 %v1555, %v1625
        %v1766 = vmul.f32 %v1604, %v1626
        %v1767 = vmul.f32 %v1165, %v1617
        %v1768 = vmul.f32 %v1214, %v1618
        %v1769 = vmul.f32 %v1263, %v1619
        %v1770 = vmul.f32 %v1312, %v1620
        %v1771 = vmul.f32 %v1361, %v1621
        %v1772 = vmul.f32 %v1410, %v1622
        %v1773 = vmul.f32 %v1459, %v1623
        %v1774 = vmul.f32 %v1508, %v1624
        %v1775 = vmul.f32 %v1557, %v1625
        %v1776 = vmul.f32 %v1606, %v1626
        %v1777 = vmul.f32 %v1168, %v1617
        %v1778 = vmul.f32 %v1217, %v1618
        %v1779 = vmul.f32 %v1266, %v1619
        %v1780 = vmul.f32 %v1315, %v1620
        %v1781 = vmul.f32 %v1364, %v1621
        %v1782 = vmul.f32 %v1413, %v1622
        %v1783 = vmul.f32 %v1462, %v1623
        %v1784 = vmul.f32 %v1511, %v1624
        %v1785 = vmul.f32 %v1560, %v1625
        %v1786 = vmul.f32 %v1609, %v1626
        %v1787 = vmul.f32 %v1170, %v1617
        %v1788 = vmul.f32 %v1219, %v1618
        %v1789 = vmul.f32 %v1268, %v1619
        %v1790 = vmul.f32 %v1317, %v1620
        %v1791 = vmul.f32 %v1366, %v1621
        %v1792 = vmul.f32 %v1415, %v1622
        %v1793 = vmul.f32 %v1464, %v1623
        %v1794 = vmul.f32 %v1513, %v1624
        %v1795 = vmul.f32 %v1562, %v1625
        %v1796 = vmul.f32 %v1611, %v1626
        %v1797 = vld [vmem:[%s449] sm:$0xff]
        %v1798 = vld [vmem:[%s449 + $0x8] sm:$0x3]
        %v1801 = vperm.slane %v1797, 0
        %v1802 = vperm.slane %v1797, 1
        %v1803 = vperm.slane %v1797, 2
        %v1804 = vperm.slane %v1797, 3
        %v1805 = vperm.slane %v1797, 4
        %v1806 = vperm.slane %v1797, 5
        %v1807 = vperm.slane %v1797, 6
        %v1808 = vperm.slane %v1797, 7
        %v1809 = vperm.slane %v1798, 0
        %v1810 = vperm.slane %v1798, 1
        %v1821 = vadd.f32 %v1637, %v1801
        %v1822 = vadd.f32 %v1638, %v1802
        %v1823 = vadd.f32 %v1639, %v1803
        %v1824 = vadd.f32 %v1640, %v1804
        %v1825 = vadd.f32 %v1641, %v1805
        %v1826 = vadd.f32 %v1642, %v1806
        %v1827 = vadd.f32 %v1643, %v1807
        %v1828 = vadd.f32 %v1644, %v1808
        %v1829 = vadd.f32 %v1645, %v1809
        %v1830 = vadd.f32 %v1646, %v1810
        %v1831 = vadd.f32 %v1647, %v1801
        %v1832 = vadd.f32 %v1648, %v1802
        %v1833 = vadd.f32 %v1649, %v1803
        %v1834 = vadd.f32 %v1650, %v1804
        %v1835 = vadd.f32 %v1651, %v1805
        %v1836 = vadd.f32 %v1652, %v1806
        %v1837 = vadd.f32 %v1653, %v1807
        %v1838 = vadd.f32 %v1654, %v1808
        %v1839 = vadd.f32 %v1655, %v1809
        %v1840 = vadd.f32 %v1656, %v1810
        %v1841 = vadd.f32 %v1657, %v1801
        %v1842 = vadd.f32 %v1658, %v1802
        %v1843 = vadd.f32 %v1659, %v1803
        %v1844 = vadd.f32 %v1660, %v1804
        %v1845 = vadd.f32 %v1661, %v1805
        %v1846 = vadd.f32 %v1662, %v1806
        %v1847 = vadd.f32 %v1663, %v1807
        %v1848 = vadd.f32 %v1664, %v1808
        %v1849 = vadd.f32 %v1665, %v1809
        %v1850 = vadd.f32 %v1666, %v1810
        %v1851 = vadd.f32 %v1667, %v1801
        %v1852 = vadd.f32 %v1668, %v1802
        %v1853 = vadd.f32 %v1669, %v1803
        %v1854 = vadd.f32 %v1670, %v1804
        %v1855 = vadd.f32 %v1671, %v1805
        %v1856 = vadd.f32 %v1672, %v1806
        %v1857 = vadd.f32 %v1673, %v1807
        %v1858 = vadd.f32 %v1674, %v1808
        %v1859 = vadd.f32 %v1675, %v1809
        %v1860 = vadd.f32 %v1676, %v1810
        %v1861 = vadd.f32 %v1677, %v1801
        %v1862 = vadd.f32 %v1678, %v1802
        %v1863 = vadd.f32 %v1679, %v1803
        %v1864 = vadd.f32 %v1680, %v1804
        %v1865 = vadd.f32 %v1681, %v1805
        %v1866 = vadd.f32 %v1682, %v1806
        %v1867 = vadd.f32 %v1683, %v1807
        %v1868 = vadd.f32 %v1684, %v1808
        %v1869 = vadd.f32 %v1685, %v1809
        %v1870 = vadd.f32 %v1686, %v1810
        %v1871 = vadd.f32 %v1687, %v1801
        %v1872 = vadd.f32 %v1688, %v1802
        %v1873 = vadd.f32 %v1689, %v1803
        %v1874 = vadd.f32 %v1690, %v1804
        %v1875 = vadd.f32 %v1691, %v1805
        %v1876 = vadd.f32 %v1692, %v1806
        %v1877 = vadd.f32 %v1693, %v1807
        %v1878 = vadd.f32 %v1694, %v1808
        %v1879 = vadd.f32 %v1695, %v1809
        %v1880 = vadd.f32 %v1696, %v1810
        %v1881 = vadd.f32 %v1697, %v1801
        %v1882 = vadd.f32 %v1698, %v1802
        %v1883 = vadd.f32 %v1699, %v1803
        %v1884 = vadd.f32 %v1700, %v1804
        %v1885 = vadd.f32 %v1701, %v1805
        %v1886 = vadd.f32 %v1702, %v1806
        %v1887 = vadd.f32 %v1703, %v1807
        %v1888 = vadd.f32 %v1704, %v1808
        %v1889 = vadd.f32 %v1705, %v1809
        %v1890 = vadd.f32 %v1706, %v1810
        %v1891 = vadd.f32 %v1707, %v1801
        %v1892 = vadd.f32 %v1708, %v1802
        %v1893 = vadd.f32 %v1709, %v1803
        %v1894 = vadd.f32 %v1710, %v1804
        %v1895 = vadd.f32 %v1711, %v1805
        %v1896 = vadd.f32 %v1712, %v1806
        %v1897 = vadd.f32 %v1713, %v1807
        %v1898 = vadd.f32 %v1714, %v1808
        %v1899 = vadd.f32 %v1715, %v1809
        %v1900 = vadd.f32 %v1716, %v1810
        %v1901 = vadd.f32 %v1717, %v1801
        %v1902 = vadd.f32 %v1718, %v1802
        %v1903 = vadd.f32 %v1719, %v1803
        %v1904 = vadd.f32 %v1720, %v1804
        %v1905 = vadd.f32 %v1721, %v1805
        %v1906 = vadd.f32 %v1722, %v1806
        %v1907 = vadd.f32 %v1723, %v1807
        %v1908 = vadd.f32 %v1724, %v1808
        %v1909 = vadd.f32 %v1725, %v1809
        %v1910 = vadd.f32 %v1726, %v1810
        %v1911 = vadd.f32 %v1727, %v1801
        %v1912 = vadd.f32 %v1728, %v1802
        %v1913 = vadd.f32 %v1729, %v1803
        %v1914 = vadd.f32 %v1730, %v1804
        %v1915 = vadd.f32 %v1731, %v1805
        %v1916 = vadd.f32 %v1732, %v1806
        %v1917 = vadd.f32 %v1733, %v1807
        %v1918 = vadd.f32 %v1734, %v1808
        %v1919 = vadd.f32 %v1735, %v1809
        %v1920 = vadd.f32 %v1736, %v1810
        %v1921 = vadd.f32 %v1737, %v1801
        %v1922 = vadd.f32 %v1738, %v1802
        %v1923 = vadd.f32 %v1739, %v1803
        %v1924 = vadd.f32 %v1740, %v1804
        %v1925 = vadd.f32 %v1741, %v1805
        %v1926 = vadd.f32 %v1742, %v1806
        %v1927 = vadd.f32 %v1743, %v1807
        %v1928 = vadd.f32 %v1744, %v1808
        %v1929 = vadd.f32 %v1745, %v1809
        %v1930 = vadd.f32 %v1746, %v1810
        %v1931 = vadd.f32 %v1747, %v1801
        %v1932 = vadd.f32 %v1748, %v1802
        %v1933 = vadd.f32 %v1749, %v1803
        %v1934 = vadd.f32 %v1750, %v1804
        %v1935 = vadd.f32 %v1751, %v1805
        %v1936 = vadd.f32 %v1752, %v1806
        %v1937 = vadd.f32 %v1753, %v1807
        %v1938 = vadd.f32 %v1754, %v1808
        %v1939 = vadd.f32 %v1755, %v1809
        %v1940 = vadd.f32 %v1756, %v1810
        %v1941 = vadd.f32 %v1757, %v1801
        %v1942 = vadd.f32 %v1758, %v1802
        %v1943 = vadd.f32 %v1759, %v1803
        %v1944 = vadd.f32 %v1760, %v1804
        %v1945 = vadd.f32 %v1761, %v1805
        %v1946 = vadd.f32 %v1762, %v1806
        %v1947 = vadd.f32 %v1763, %v1807
        %v1948 = vadd.f32 %v1764, %v1808
        %v1949 = vadd.f32 %v1765, %v1809
        %v1950 = vadd.f32 %v1766, %v1810
        %v1951 = vadd.f32 %v1767, %v1801
        %v1952 = vadd.f32 %v1768, %v1802
        %v1953 = vadd.f32 %v1769, %v1803
        %v1954 = vadd.f32 %v1770, %v1804
        %v1955 = vadd.f32 %v1771, %v1805
        %v1956 = vadd.f32 %v1772, %v1806
        %v1957 = vadd.f32 %v1773, %v1807
        %v1958 = vadd.f32 %v1774, %v1808
        %v1959 = vadd.f32 %v1775, %v1809
        %v1960 = vadd.f32 %v1776, %v1810
        %v1961 = vadd.f32 %v1777, %v1801
        %v1962 = vadd.f32 %v1778, %v1802
        %v1963 = vadd.f32 %v1779, %v1803
        %v1964 = vadd.f32 %v1780, %v1804
        %v1965 = vadd.f32 %v1781, %v1805
        %v1966 = vadd.f32 %v1782, %v1806
        %v1967 = vadd.f32 %v1783, %v1807
        %v1968 = vadd.f32 %v1784, %v1808
        %v1969 = vadd.f32 %v1785, %v1809
        %v1970 = vadd.f32 %v1786, %v1810
        %v1971 = vadd.f32 %v1787, %v1801
        %v1972 = vadd.f32 %v1788, %v1802
        %v1973 = vadd.f32 %v1789, %v1803
        %v1974 = vadd.f32 %v1790, %v1804
        %v1975 = vadd.f32 %v1791, %v1805
        %v1976 = vadd.f32 %v1792, %v1806
        %v1977 = vadd.f32 %v1793, %v1807
        %v1978 = vadd.f32 %v1794, %v1808
        %v1979 = vadd.f32 %v1795, %v1809
        %v1980 = vadd.f32 %v1796, %v1810
        %v1981 = vxor.u32 %v1821, 2147483648
        %v1982 = vxor.u32 %v1822, 2147483648
        %v1983 = vxor.u32 %v1823, 2147483648
        %v1984 = vxor.u32 %v1824, 2147483648
        %v1985 = vxor.u32 %v1825, 2147483648
        %v1986 = vxor.u32 %v1826, 2147483648
        %v1987 = vxor.u32 %v1827, 2147483648
        %v1988 = vxor.u32 %v1828, 2147483648
        %v1989 = vxor.u32 %v1829, 2147483648
        %v1990 = vxor.u32 %v1830, 2147483648
        %v1991 = vxor.u32 %v1831, 2147483648
        %v1992 = vxor.u32 %v1832, 2147483648
        %v1993 = vxor.u32 %v1833, 2147483648
        %v1994 = vxor.u32 %v1834, 2147483648
        %v1995 = vxor.u32 %v1835, 2147483648
        %v1996 = vxor.u32 %v1836, 2147483648
        %v1997 = vxor.u32 %v1837, 2147483648
        %v1998 = vxor.u32 %v1838, 2147483648
        %v1999 = vxor.u32 %v1839, 2147483648
        %v2000 = vxor.u32 %v1840, 2147483648
        %v2001 = vxor.u32 %v1841, 2147483648
        %v2002 = vxor.u32 %v1842, 2147483648
        %v2003 = vxor.u32 %v1843, 2147483648
        %v2004 = vxor.u32 %v1844, 2147483648
        %v2005 = vxor.u32 %v1845, 2147483648
        %v2006 = vxor.u32 %v1846, 2147483648
        %v2007 = vxor.u32 %v1847, 2147483648
        %v2008 = vxor.u32 %v1848, 2147483648
        %v2009 = vxor.u32 %v1849, 2147483648
        %v2010 = vxor.u32 %v1850, 2147483648
        %v2011 = vxor.u32 %v1851, 2147483648
        %v2012 = vxor.u32 %v1852, 2147483648
        %v2013 = vxor.u32 %v1853, 2147483648
        %v2014 = vxor.u32 %v1854, 2147483648
        %v2015 = vxor.u32 %v1855, 2147483648
        %v2016 = vxor.u32 %v1856, 2147483648
        %v2017 = vxor.u32 %v1857, 2147483648
        %v2018 = vxor.u32 %v1858, 2147483648
        %v2019 = vxor.u32 %v1859, 2147483648
        %v2020 = vxor.u32 %v1860, 2147483648
        %v2021 = vxor.u32 %v1861, 2147483648
        %v2022 = vxor.u32 %v1862, 2147483648
        %v2023 = vxor.u32 %v1863, 2147483648
        %v2024 = vxor.u32 %v1864, 2147483648
        %v2025 = vxor.u32 %v1865, 2147483648
        %v2026 = vxor.u32 %v1866, 2147483648
        %v2027 = vxor.u32 %v1867, 2147483648
        %v2028 = vxor.u32 %v1868, 2147483648
        %v2029 = vxor.u32 %v1869, 2147483648
        %v2030 = vxor.u32 %v1870, 2147483648
        %v2031 = vxor.u32 %v1871, 2147483648
        %v2032 = vxor.u32 %v1872, 2147483648
        %v2033 = vxor.u32 %v1873, 2147483648
        %v2034 = vxor.u32 %v1874, 2147483648
        %v2035 = vxor.u32 %v1875, 2147483648
        %v2036 = vxor.u32 %v1876, 2147483648
        %v2037 = vxor.u32 %v1877, 2147483648
        %v2038 = vxor.u32 %v1878, 2147483648
        %v2039 = vxor.u32 %v1879, 2147483648
        %v2040 = vxor.u32 %v1880, 2147483648
        %v2041 = vxor.u32 %v1881, 2147483648
        %v2042 = vxor.u32 %v1882, 2147483648
        %v2043 = vxor.u32 %v1883, 2147483648
        %v2044 = vxor.u32 %v1884, 2147483648
        %v2045 = vxor.u32 %v1885, 2147483648
        %v2046 = vxor.u32 %v1886, 2147483648
        %v2047 = vxor.u32 %v1887, 2147483648
        %v2048 = vxor.u32 %v1888, 2147483648
        %v2049 = vxor.u32 %v1889, 2147483648
        %v2050 = vxor.u32 %v1890, 2147483648
        %v2051 = vxor.u32 %v1891, 2147483648
        %v2052 = vxor.u32 %v1892, 2147483648
        %v2053 = vxor.u32 %v1893, 2147483648
        %v2054 = vxor.u32 %v1894, 2147483648
        %v2055 = vxor.u32 %v1895, 2147483648
        %v2056 = vxor.u32 %v1896, 2147483648
        %v2057 = vxor.u32 %v1897, 2147483648
        %v2058 = vxor.u32 %v1898, 2147483648
        %v2059 = vxor.u32 %v1899, 2147483648
        %v2060 = vxor.u32 %v1900, 2147483648
        %v2061 = vxor.u32 %v1901, 2147483648
        %v2062 = vxor.u32 %v1902, 2147483648
        %v2063 = vxor.u32 %v1903, 2147483648
        %v2064 = vxor.u32 %v1904, 2147483648
        %v2065 = vxor.u32 %v1905, 2147483648
        %v2066 = vxor.u32 %v1906, 2147483648
        %v2067 = vxor.u32 %v1907, 2147483648
        %v2068 = vxor.u32 %v1908, 2147483648
        %v2069 = vxor.u32 %v1909, 2147483648
        %v2070 = vxor.u32 %v1910, 2147483648
        %v2071 = vxor.u32 %v1911, 2147483648
        %v2072 = vxor.u32 %v1912, 2147483648
        %v2073 = vxor.u32 %v1913, 2147483648
        %v2074 = vxor.u32 %v1914, 2147483648
        %v2075 = vxor.u32 %v1915, 2147483648
        %v2076 = vxor.u32 %v1916, 2147483648
        %v2077 = vxor.u32 %v1917, 2147483648
        %v2078 = vxor.u32 %v1918, 2147483648
        %v2079 = vxor.u32 %v1919, 2147483648
        %v2080 = vxor.u32 %v1920, 2147483648
        %v2081 = vxor.u32 %v1921, 2147483648
        %v2082 = vxor.u32 %v1922, 2147483648
        %v2083 = vxor.u32 %v1923, 2147483648
        %v2084 = vxor.u32 %v1924, 2147483648
        %v2085 = vxor.u32 %v1925, 2147483648
        %v2086 = vxor.u32 %v1926, 2147483648
        %v2087 = vxor.u32 %v1927, 2147483648
        %v2088 = vxor.u32 %v1928, 2147483648
        %v2089 = vxor.u32 %v1929, 2147483648
        %v2090 = vxor.u32 %v1930, 2147483648
        %v2091 = vxor.u32 %v1931, 2147483648
        %v2092 = vxor.u32 %v1932, 2147483648
        %v2093 = vxor.u32 %v1933, 2147483648
        %v2094 = vxor.u32 %v1934, 2147483648
        %v2095 = vxor.u32 %v1935, 2147483648
        %v2096 = vxor.u32 %v1936, 2147483648
        %v2097 = vxor.u32 %v1937, 2147483648
        %v2098 = vxor.u32 %v1938, 2147483648
        %v2099 = vxor.u32 %v1939, 2147483648
        %v2100 = vxor.u32 %v1940, 2147483648
        %v2101 = vxor.u32 %v1941, 2147483648
        %v2102 = vxor.u32 %v1942, 2147483648
        %v2103 = vxor.u32 %v1943, 2147483648
        %v2104 = vxor.u32 %v1944, 2147483648
        %v2105 = vxor.u32 %v1945, 2147483648
        %v2106 = vxor.u32 %v1946, 2147483648
        %v2107 = vxor.u32 %v1947, 2147483648
        %v2108 = vxor.u32 %v1948, 2147483648
        %v2109 = vxor.u32 %v1949, 2147483648
        %v2110 = vxor.u32 %v1950, 2147483648
        %v2111 = vxor.u32 %v1951, 2147483648
        %v2112 = vxor.u32 %v1952, 2147483648
        %v2113 = vxor.u32 %v1953, 2147483648
        %v2114 = vxor.u32 %v1954, 2147483648
        %v2115 = vxor.u32 %v1955, 2147483648
        %v2116 = vxor.u32 %v1956, 2147483648
        %v2117 = vxor.u32 %v1957, 2147483648
        %v2118 = vxor.u32 %v1958, 2147483648
        %v2119 = vxor.u32 %v1959, 2147483648
        %v2120 = vxor.u32 %v1960, 2147483648
        %v2121 = vxor.u32 %v1961, 2147483648
        %v2122 = vxor.u32 %v1962, 2147483648
        %v2123 = vxor.u32 %v1963, 2147483648
        %v2124 = vxor.u32 %v1964, 2147483648
        %v2125 = vxor.u32 %v1965, 2147483648
        %v2126 = vxor.u32 %v1966, 2147483648
        %v2127 = vxor.u32 %v1967, 2147483648
        %v2128 = vxor.u32 %v1968, 2147483648
        %v2129 = vxor.u32 %v1969, 2147483648
        %v2130 = vxor.u32 %v1970, 2147483648
        %v2131 = vxor.u32 %v1971, 2147483648
        %v2132 = vxor.u32 %v1972, 2147483648
        %v2133 = vxor.u32 %v1973, 2147483648
        %v2134 = vxor.u32 %v1974, 2147483648
        %v2135 = vxor.u32 %v1975, 2147483648
        %v2136 = vxor.u32 %v1976, 2147483648
        %v2137 = vxor.u32 %v1977, 2147483648
        %v2138 = vxor.u32 %v1978, 2147483648
        %v2139 = vxor.u32 %v1979, 2147483648
        %v2140 = vxor.u32 %v1980, 2147483648
        %v2141 = vmul.f32 %v1981, 1.442695
        %v2142 = vpow.pop %v2141
        %v2143 = vmul.f32 %v1982, 1.442695
        %v2144 = vpow.pop %v2143
        %v2145 = vmul.f32 %v1983, 1.442695
        %v2146 = vpow.pop %v2145
        %v2147 = vmul.f32 %v1984, 1.442695
        %v2148 = vpow.pop %v2147
        %v2149 = vmul.f32 %v1985, 1.442695
        %v2150 = vpow.pop %v2149
        %v2151 = vmul.f32 %v1986, 1.442695
        %v2152 = vpow.pop %v2151
        %v2153 = vmul.f32 %v1987, 1.442695
        %v2154 = vpow.pop %v2153
        %v2155 = vmul.f32 %v1988, 1.442695
        %v2156 = vpow.pop %v2155
        %v2157 = vmul.f32 %v1989, 1.442695
        %v2158 = vpow.pop %v2157
        %v2159 = vmul.f32 %v1990, 1.442695
        %v2160 = vpow.pop %v2159
        %v2161 = vmul.f32 %v1991, 1.442695
        %v2162 = vpow.pop %v2161
        %v2163 = vmul.f32 %v1992, 1.442695
        %v2164 = vpow.pop %v2163
        %v2165 = vmul.f32 %v1993, 1.442695
        %v2166 = vpow.pop %v2165
        %v2167 = vmul.f32 %v1994, 1.442695
        %v2168 = vpow.pop %v2167
        %v2169 = vmul.f32 %v1995, 1.442695
        %v2170 = vpow.pop %v2169
        %v2171 = vmul.f32 %v1996, 1.442695
        %v2172 = vpow.pop %v2171
        %v2173 = vmul.f32 %v1997, 1.442695
        %v2174 = vpow.pop %v2173
        %v2175 = vmul.f32 %v1998, 1.442695
        %v2176 = vpow.pop %v2175
        %v2177 = vmul.f32 %v1999, 1.442695
        %v2178 = vpow.pop %v2177
        %v2179 = vmul.f32 %v2000, 1.442695
        %v2180 = vpow.pop %v2179
        %v2181 = vmul.f32 %v2001, 1.442695
        %v2182 = vpow.pop %v2181
        %v2183 = vmul.f32 %v2002, 1.442695
        %v2184 = vpow.pop %v2183
        %v2185 = vmul.f32 %v2003, 1.442695
        %v2186 = vpow.pop %v2185
        %v2187 = vmul.f32 %v2004, 1.442695
        %v2188 = vpow.pop %v2187
        %v2189 = vmul.f32 %v2005, 1.442695
        %v2190 = vpow.pop %v2189
        %v2191 = vmul.f32 %v2006, 1.442695
        %v2192 = vpow.pop %v2191
        %v2193 = vmul.f32 %v2007, 1.442695
        %v2194 = vpow.pop %v2193
        %v2195 = vmul.f32 %v2008, 1.442695
        %v2196 = vpow.pop %v2195
        %v2197 = vmul.f32 %v2009, 1.442695
        %v2198 = vpow.pop %v2197
        %v2199 = vmul.f32 %v2010, 1.442695
        %v2200 = vpow.pop %v2199
        %v2201 = vmul.f32 %v2011, 1.442695
        %v2202 = vpow.pop %v2201
        %v2203 = vmul.f32 %v2012, 1.442695
        %v2204 = vpow.pop %v2203
        %v2205 = vmul.f32 %v2013, 1.442695
        %v2206 = vpow.pop %v2205
        %v2207 = vmul.f32 %v2014, 1.442695
        %v2208 = vpow.pop %v2207
        %v2209 = vmul.f32 %v2015, 1.442695
        %v2210 = vpow.pop %v2209
        %v2211 = vmul.f32 %v2016, 1.442695
        %v2212 = vpow.pop %v2211
        %v2213 = vmul.f32 %v2017, 1.442695
        %v2214 = vpow.pop %v2213
        %v2215 = vmul.f32 %v2018, 1.442695
        %v2216 = vpow.pop %v2215
        %v2217 = vmul.f32 %v2019, 1.442695
        %v2218 = vpow.pop %v2217
        %v2219 = vmul.f32 %v2020, 1.442695
        %v2220 = vpow.pop %v2219
        %v2221 = vmul.f32 %v2021, 1.442695
        %v2222 = vpow.pop %v2221
        %v2223 = vmul.f32 %v2022, 1.442695
        %v2224 = vpow.pop %v2223
        %v2225 = vmul.f32 %v2023, 1.442695
        %v2226 = vpow.pop %v2225
        %v2227 = vmul.f32 %v2024, 1.442695
        %v2228 = vpow.pop %v2227
        %v2229 = vmul.f32 %v2025, 1.442695
        %v2230 = vpow.pop %v2229
        %v2231 = vmul.f32 %v2026, 1.442695
        %v2232 = vpow.pop %v2231
        %v2233 = vmul.f32 %v2027, 1.442695
        %v2234 = vpow.pop %v2233
        %v2235 = vmul.f32 %v2028, 1.442695
        %v2236 = vpow.pop %v2235
        %v2237 = vmul.f32 %v2029, 1.442695
        %v2238 = vpow.pop %v2237
        %v2239 = vmul.f32 %v2030, 1.442695
        %v2240 = vpow.pop %v2239
        %v2241 = vmul.f32 %v2031, 1.442695
        %v2242 = vpow.pop %v2241
        %v2243 = vmul.f32 %v2032, 1.442695
        %v2244 = vpow.pop %v2243
        %v2245 = vmul.f32 %v2033, 1.442695
        %v2246 = vpow.pop %v2245
        %v2247 = vmul.f32 %v2034, 1.442695
        %v2248 = vpow.pop %v2247
        %v2249 = vmul.f32 %v2035, 1.442695
        %v2250 = vpow.pop %v2249
        %v2251 = vmul.f32 %v2036, 1.442695
        %v2252 = vpow.pop %v2251
        %v2253 = vmul.f32 %v2037, 1.442695
        %v2254 = vpow.pop %v2253
        %v2255 = vmul.f32 %v2038, 1.442695
        %v2256 = vpow.pop %v2255
        %v2257 = vmul.f32 %v2039, 1.442695
        %v2258 = vpow.pop %v2257
        %v2259 = vmul.f32 %v2040, 1.442695
        %v2260 = vpow.pop %v2259
        %v2261 = vmul.f32 %v2041, 1.442695
        %v2262 = vpow.pop %v2261
        %v2263 = vmul.f32 %v2042, 1.442695
        %v2264 = vpow.pop %v2263
        %v2265 = vmul.f32 %v2043, 1.442695
        %v2266 = vpow.pop %v2265
        %v2267 = vmul.f32 %v2044, 1.442695
        %v2268 = vpow.pop %v2267
        %v2269 = vmul.f32 %v2045, 1.442695
        %v2270 = vpow.pop %v2269
        %v2271 = vmul.f32 %v2046, 1.442695
        %v2272 = vpow.pop %v2271
        %v2273 = vmul.f32 %v2047, 1.442695
        %v2274 = vpow.pop %v2273
        %v2275 = vmul.f32 %v2048, 1.442695
        %v2276 = vpow.pop %v2275
        %v2277 = vmul.f32 %v2049, 1.442695
        %v2278 = vpow.pop %v2277
        %v2279 = vmul.f32 %v2050, 1.442695
        %v2280 = vpow.pop %v2279
        %v2281 = vmul.f32 %v2051, 1.442695
        %v2282 = vpow.pop %v2281
        %v2283 = vmul.f32 %v2052, 1.442695
        %v2284 = vpow.pop %v2283
        %v2285 = vmul.f32 %v2053, 1.442695
        %v2286 = vpow.pop %v2285
        %v2287 = vmul.f32 %v2054, 1.442695
        %v2288 = vpow.pop %v2287
        %v2289 = vmul.f32 %v2055, 1.442695
        %v2290 = vpow.pop %v2289
        %v2291 = vmul.f32 %v2056, 1.442695
        %v2292 = vpow.pop %v2291
        %v2293 = vmul.f32 %v2057, 1.442695
        %v2294 = vpow.pop %v2293
        %v2295 = vmul.f32 %v2058, 1.442695
        %v2296 = vpow.pop %v2295
        %v2297 = vmul.f32 %v2059, 1.442695
        %v2298 = vpow.pop %v2297
        %v2299 = vmul.f32 %v2060, 1.442695
        %v2300 = vpow.pop %v2299
        %v2301 = vmul.f32 %v2061, 1.442695
        %v2302 = vpow.pop %v2301
        %v2303 = vmul.f32 %v2062, 1.442695
        %v2304 = vpow.pop %v2303
        %v2305 = vmul.f32 %v2063, 1.442695
        %v2306 = vpow.pop %v2305
        %v2307 = vmul.f32 %v2064, 1.442695
        %v2308 = vpow.pop %v2307
        %v2309 = vmul.f32 %v2065, 1.442695
        %v2310 = vpow.pop %v2309
        %v2311 = vmul.f32 %v2066, 1.442695
        %v2312 = vpow.pop %v2311
        %v2313 = vmul.f32 %v2067, 1.442695
        %v2314 = vpow.pop %v2313
        %v2315 = vmul.f32 %v2068, 1.442695
        %v2316 = vpow.pop %v2315
        %v2317 = vmul.f32 %v2069, 1.442695
        %v2318 = vpow.pop %v2317
        %v2319 = vmul.f32 %v2070, 1.442695
        %v2320 = vpow.pop %v2319
        %v2321 = vmul.f32 %v2071, 1.442695
        %v2322 = vpow.pop %v2321
        %v2323 = vmul.f32 %v2072, 1.442695
        %v2324 = vpow.pop %v2323
        %v2325 = vmul.f32 %v2073, 1.442695
        %v2326 = vpow.pop %v2325
        %v2327 = vmul.f32 %v2074, 1.442695
        %v2328 = vpow.pop %v2327
        %v2329 = vmul.f32 %v2075, 1.442695
        %v2330 = vpow.pop %v2329
        %v2331 = vmul.f32 %v2076, 1.442695
        %v2332 = vpow.pop %v2331
        %v2333 = vmul.f32 %v2077, 1.442695
        %v2334 = vpow.pop %v2333
        %v2335 = vmul.f32 %v2078, 1.442695
        %v2336 = vpow.pop %v2335
        %v2337 = vmul.f32 %v2079, 1.442695
        %v2338 = vpow.pop %v2337
        %v2339 = vmul.f32 %v2080, 1.442695
        %v2340 = vpow.pop %v2339
        %v2341 = vmul.f32 %v2081, 1.442695
        %v2342 = vpow.pop %v2341
        %v2343 = vmul.f32 %v2082, 1.442695
        %v2344 = vpow.pop %v2343
        %v2345 = vmul.f32 %v2083, 1.442695
        %v2346 = vpow.pop %v2345
        %v2347 = vmul.f32 %v2084, 1.442695
        %v2348 = vpow.pop %v2347
        %v2349 = vmul.f32 %v2085, 1.442695
        %v2350 = vpow.pop %v2349
        %v2351 = vmul.f32 %v2086, 1.442695
        %v2352 = vpow.pop %v2351
        %v2353 = vmul.f32 %v2087, 1.442695
        %v2354 = vpow.pop %v2353
        %v2355 = vmul.f32 %v2088, 1.442695
        %v2356 = vpow.pop %v2355
        %v2357 = vmul.f32 %v2089, 1.442695
        %v2358 = vpow.pop %v2357
        %v2359 = vmul.f32 %v2090, 1.442695
        %v2360 = vpow.pop %v2359
        %v2361 = vmul.f32 %v2091, 1.442695
        %v2362 = vpow.pop %v2361
        %v2363 = vmul.f32 %v2092, 1.442695
        %v2364 = vpow.pop %v2363
        %v2365 = vmul.f32 %v2093, 1.442695
        %v2366 = vpow.pop %v2365
        %v2367 = vmul.f32 %v2094, 1.442695
        %v2368 = vpow.pop %v2367
        %v2369 = vmul.f32 %v2095, 1.442695
        %v2370 = vpow.pop %v2369
        %v2371 = vmul.f32 %v2096, 1.442695
        %v2372 = vpow.pop %v2371
        %v2373 = vmul.f32 %v2097, 1.442695
        %v2374 = vpow.pop %v2373
        %v2375 = vmul.f32 %v2098, 1.442695
        %v2376 = vpow.pop %v2375
        %v2377 = vmul.f32 %v2099, 1.442695
        %v2378 = vpow.pop %v2377
        %v2379 = vmul.f32 %v2100, 1.442695
        %v2380 = vpow.pop %v2379
        %v2381 = vmul.f32 %v2101, 1.442695
        %v2382 = vpow.pop %v2381
        %v2383 = vmul.f32 %v2102, 1.442695
        %v2384 = vpow.pop %v2383
        %v2385 = vmul.f32 %v2103, 1.442695
        %v2386 = vpow.pop %v2385
        %v2387 = vmul.f32 %v2104, 1.442695
        %v2388 = vpow.pop %v2387
        %v2389 = vmul.f32 %v2105, 1.442695
        %v2390 = vpow.pop %v2389
        %v2391 = vmul.f32 %v2106, 1.442695
        %v2392 = vpow.pop %v2391
        %v2393 = vmul.f32 %v2107, 1.442695
        %v2394 = vpow.pop %v2393
        %v2395 = vmul.f32 %v2108, 1.442695
        %v2396 = vpow.pop %v2395
        %v2397 = vmul.f32 %v2109, 1.442695
        %v2398 = vpow.pop %v2397
        %v2399 = vmul.f32 %v2110, 1.442695
        %v2400 = vpow.pop %v2399
        %v2401 = vmul.f32 %v2111, 1.442695
        %v2402 = vpow.pop %v2401
        %v2403 = vmul.f32 %v2112, 1.442695
        %v2404 = vpow.pop %v2403
        %v2405 = vmul.f32 %v2113, 1.442695
        %v2406 = vpow.pop %v2405
        %v2407 = vmul.f32 %v2114, 1.442695
        %v2408 = vpow.pop %v2407
        %v2409 = vmul.f32 %v2115, 1.442695
        %v2410 = vpow.pop %v2409
        %v2411 = vmul.f32 %v2116, 1.442695
        %v2412 = vpow.pop %v2411
        %v2413 = vmul.f32 %v2117, 1.442695
        %v2414 = vpow.pop %v2413
        %v2415 = vmul.f32 %v2118, 1.442695
        %v2416 = vpow.pop %v2415
        %v2417 = vmul.f32 %v2119, 1.442695
        %v2418 = vpow.pop %v2417
        %v2419 = vmul.f32 %v2120, 1.442695
        %v2420 = vpow.pop %v2419
        %v2421 = vmul.f32 %v2121, 1.442695
        %v2422 = vpow.pop %v2421
        %v2423 = vmul.f32 %v2122, 1.442695
        %v2424 = vpow.pop %v2423
        %v2425 = vmul.f32 %v2123, 1.442695
        %v2426 = vpow.pop %v2425
        %v2427 = vmul.f32 %v2124, 1.442695
        %v2428 = vpow.pop %v2427
        %v2429 = vmul.f32 %v2125, 1.442695
        %v2430 = vpow.pop %v2429
        %v2431 = vmul.f32 %v2126, 1.442695
        %v2432 = vpow.pop %v2431
        %v2433 = vmul.f32 %v2127, 1.442695
        %v2434 = vpow.pop %v2433
        %v2435 = vmul.f32 %v2128, 1.442695
        %v2436 = vpow.pop %v2435
        %v2437 = vmul.f32 %v2129, 1.442695
        %v2438 = vpow.pop %v2437
        %v2439 = vmul.f32 %v2130, 1.442695
        %v2440 = vpow.pop %v2439
        %v2441 = vmul.f32 %v2131, 1.442695
        %v2442 = vpow.pop %v2441
        %v2443 = vmul.f32 %v2132, 1.442695
        %v2444 = vpow.pop %v2443
        %v2445 = vmul.f32 %v2133, 1.442695
        %v2446 = vpow.pop %v2445
        %v2447 = vmul.f32 %v2134, 1.442695
        %v2448 = vpow.pop %v2447
        %v2449 = vmul.f32 %v2135, 1.442695
        %v2450 = vpow.pop %v2449
        %v2451 = vmul.f32 %v2136, 1.442695
        %v2452 = vpow.pop %v2451
        %v2453 = vmul.f32 %v2137, 1.442695
        %v2454 = vpow.pop %v2453
        %v2455 = vmul.f32 %v2138, 1.442695
        %v2456 = vpow.pop %v2455
        %v2457 = vmul.f32 %v2139, 1.442695
        %v2458 = vpow.pop %v2457
        %v2459 = vmul.f32 %v2140, 1.442695
        %v2460 = vpow.pop %v2459
        %v2461 = vadd.f32 %v2142, 1.0
        %v2462 = vadd.f32 %v2144, 1.0
        %v2463 = vadd.f32 %v2146, 1.0
        %v2464 = vadd.f32 %v2148, 1.0
        %v2465 = vadd.f32 %v2150, 1.0
        %v2466 = vadd.f32 %v2152, 1.0
        %v2467 = vadd.f32 %v2154, 1.0
        %v2468 = vadd.f32 %v2156, 1.0
        %v2469 = vadd.f32 %v2158, 1.0
        %v2470 = vadd.f32 %v2160, 1.0
        %v2471 = vadd.f32 %v2162, 1.0
        %v2472 = vadd.f32 %v2164, 1.0
        %v2473 = vadd.f32 %v2166, 1.0
        %v2474 = vadd.f32 %v2168, 1.0
        %v2475 = vadd.f32 %v2170, 1.0
        %v2476 = vadd.f32 %v2172, 1.0
        %v2477 = vadd.f32 %v2174, 1.0
        %v2478 = vadd.f32 %v2176, 1.0
        %v2479 = vadd.f32 %v2178, 1.0
        %v2480 = vadd.f32 %v2180, 1.0
        %v2481 = vadd.f32 %v2182, 1.0
        %v2482 = vadd.f32 %v2184, 1.0
        %v2483 = vadd.f32 %v2186, 1.0
        %v2484 = vadd.f32 %v2188, 1.0
        %v2485 = vadd.f32 %v2190, 1.0
        %v2486 = vadd.f32 %v2192, 1.0
        %v2487 = vadd.f32 %v2194, 1.0
        %v2488 = vadd.f32 %v2196, 1.0
        %v2489 = vadd.f32 %v2198, 1.0
        %v2490 = vadd.f32 %v2200, 1.0
        %v2491 = vadd.f32 %v2202, 1.0
        %v2492 = vadd.f32 %v2204, 1.0
        %v2493 = vadd.f32 %v2206, 1.0
        %v2494 = vadd.f32 %v2208, 1.0
        %v2495 = vadd.f32 %v2210, 1.0
        %v2496 = vadd.f32 %v2212, 1.0
        %v2497 = vadd.f32 %v2214, 1.0
        %v2498 = vadd.f32 %v2216, 1.0
        %v2499 = vadd.f32 %v2218, 1.0
        %v2500 = vadd.f32 %v2220, 1.0
        %v2501 = vadd.f32 %v2222, 1.0
        %v2502 = vadd.f32 %v2224, 1.0
        %v2503 = vadd.f32 %v2226, 1.0
        %v2504 = vadd.f32 %v2228, 1.0
        %v2505 = vadd.f32 %v2230, 1.0
        %v2506 = vadd.f32 %v2232, 1.0
        %v2507 = vadd.f32 %v2234, 1.0
        %v2508 = vadd.f32 %v2236, 1.0
        %v2509 = vadd.f32 %v2238, 1.0
        %v2510 = vadd.f32 %v2240, 1.0
        %v2511 = vadd.f32 %v2242, 1.0
        %v2512 = vadd.f32 %v2244, 1.0
        %v2513 = vadd.f32 %v2246, 1.0
        %v2514 = vadd.f32 %v2248, 1.0
        %v2515 = vadd.f32 %v2250, 1.0
        %v2516 = vadd.f32 %v2252, 1.0
        %v2517 = vadd.f32 %v2254, 1.0
        %v2518 = vadd.f32 %v2256, 1.0
        %v2519 = vadd.f32 %v2258, 1.0
        %v2520 = vadd.f32 %v2260, 1.0
        %v2521 = vadd.f32 %v2262, 1.0
        %v2522 = vadd.f32 %v2264, 1.0
        %v2523 = vadd.f32 %v2266, 1.0
        %v2524 = vadd.f32 %v2268, 1.0
        %v2525 = vadd.f32 %v2270, 1.0
        %v2526 = vadd.f32 %v2272, 1.0
        %v2527 = vadd.f32 %v2274, 1.0
        %v2528 = vadd.f32 %v2276, 1.0
        %v2529 = vadd.f32 %v2278, 1.0
        %v2530 = vadd.f32 %v2280, 1.0
        %v2531 = vadd.f32 %v2282, 1.0
        %v2532 = vadd.f32 %v2284, 1.0
        %v2533 = vadd.f32 %v2286, 1.0
        %v2534 = vadd.f32 %v2288, 1.0
        %v2535 = vadd.f32 %v2290, 1.0
        %v2536 = vadd.f32 %v2292, 1.0
        %v2537 = vadd.f32 %v2294, 1.0
        %v2538 = vadd.f32 %v2296, 1.0
        %v2539 = vadd.f32 %v2298, 1.0
        %v2540 = vadd.f32 %v2300, 1.0
        %v2541 = vadd.f32 %v2302, 1.0
        %v2542 = vadd.f32 %v2304, 1.0
        %v2543 = vadd.f32 %v2306, 1.0
        %v2544 = vadd.f32 %v2308, 1.0
        %v2545 = vadd.f32 %v2310, 1.0
        %v2546 = vadd.f32 %v2312, 1.0
        %v2547 = vadd.f32 %v2314, 1.0
        %v2548 = vadd.f32 %v2316, 1.0
        %v2549 = vadd.f32 %v2318, 1.0
        %v2550 = vadd.f32 %v2320, 1.0
        %v2551 = vadd.f32 %v2322, 1.0
        %v2552 = vadd.f32 %v2324, 1.0
        %v2553 = vadd.f32 %v2326, 1.0
        %v2554 = vadd.f32 %v2328, 1.0
        %v2555 = vadd.f32 %v2330, 1.0
        %v2556 = vadd.f32 %v2332, 1.0
        %v2557 = vadd.f32 %v2334, 1.0
        %v2558 = vadd.f32 %v2336, 1.0
        %v2559 = vadd.f32 %v2338, 1.0
        %v2560 = vadd.f32 %v2340, 1.0
        %v2561 = vadd.f32 %v2342, 1.0
        %v2562 = vadd.f32 %v2344, 1.0
        %v2563 = vadd.f32 %v2346, 1.0
        %v2564 = vadd.f32 %v2348, 1.0
        %v2565 = vadd.f32 %v2350, 1.0
        %v2566 = vadd.f32 %v2352, 1.0
        %v2567 = vadd.f32 %v2354, 1.0
        %v2568 = vadd.f32 %v2356, 1.0
        %v2569 = vadd.f32 %v2358, 1.0
        %v2570 = vadd.f32 %v2360, 1.0
        %v2571 = vadd.f32 %v2362, 1.0
        %v2572 = vadd.f32 %v2364, 1.0
        %v2573 = vadd.f32 %v2366, 1.0
        %v2574 = vadd.f32 %v2368, 1.0
        %v2575 = vadd.f32 %v2370, 1.0
        %v2576 = vadd.f32 %v2372, 1.0
        %v2577 = vadd.f32 %v2374, 1.0
        %v2578 = vadd.f32 %v2376, 1.0
        %v2579 = vadd.f32 %v2378, 1.0
        %v2580 = vadd.f32 %v2380, 1.0
        %v2581 = vadd.f32 %v2382, 1.0
        %v2582 = vadd.f32 %v2384, 1.0
        %v2583 = vadd.f32 %v2386, 1.0
        %v2584 = vadd.f32 %v2388, 1.0
        %v2585 = vadd.f32 %v2390, 1.0
        %v2586 = vadd.f32 %v2392, 1.0
        %v2587 = vadd.f32 %v2394, 1.0
        %v2588 = vadd.f32 %v2396, 1.0
        %v2589 = vadd.f32 %v2398, 1.0
        %v2590 = vadd.f32 %v2400, 1.0
        %v2591 = vadd.f32 %v2402, 1.0
        %v2592 = vadd.f32 %v2404, 1.0
        %v2593 = vadd.f32 %v2406, 1.0
        %v2594 = vadd.f32 %v2408, 1.0
        %v2595 = vadd.f32 %v2410, 1.0
        %v2596 = vadd.f32 %v2412, 1.0
        %v2597 = vadd.f32 %v2414, 1.0
        %v2598 = vadd.f32 %v2416, 1.0
        %v2599 = vadd.f32 %v2418, 1.0
        %v2600 = vadd.f32 %v2420, 1.0
        %v2601 = vadd.f32 %v2422, 1.0
        %v2602 = vadd.f32 %v2424, 1.0
        %v2603 = vadd.f32 %v2426, 1.0
        %v2604 = vadd.f32 %v2428, 1.0
        %v2605 = vadd.f32 %v2430, 1.0
        %v2606 = vadd.f32 %v2432, 1.0
        %v2607 = vadd.f32 %v2434, 1.0
        %v2608 = vadd.f32 %v2436, 1.0
        %v2609 = vadd.f32 %v2438, 1.0
        %v2610 = vadd.f32 %v2440, 1.0
        %v2611 = vadd.f32 %v2442, 1.0
        %v2612 = vadd.f32 %v2444, 1.0
        %v2613 = vadd.f32 %v2446, 1.0
        %v2614 = vadd.f32 %v2448, 1.0
        %v2615 = vadd.f32 %v2450, 1.0
        %v2616 = vadd.f32 %v2452, 1.0
        %v2617 = vadd.f32 %v2454, 1.0
        %v2618 = vadd.f32 %v2456, 1.0
        %v2619 = vadd.f32 %v2458, 1.0
        %v2620 = vadd.f32 %v2460, 1.0
        %v2621 = vrcp.pop %v2461
        %v2622 = vmul.f32 %v2461, %v2621
        %v2623 = vsub.f32 1.0, %v2622
        %v2624 = vmul.f32 %v2621, %v2623
        %v2625 = vadd.f32 %v2621, %v2624
        %vm2626 = vweird.f32 %v2461
        %vm2627 = vweird.f32 %v2621
        %vm2628 = vmor %vm2626, %vm2627
        %v2629 = vsel %vm2628, %v2621, %v2625
        %v2630 = vand.u32 2147483647, %v2461
        %vm2631 = vcmp.eq.f32.partialorder %v2630, 8.507059e+37
        %v2632 = vand.u32 %v2461, 2147483648
        %v2633 = vor.u32 1.1754944e-38, %v2632
        %v2634 = vsel %vm2631, %v2633, %v2629
        %v2635 = vmul.f32 1.0, %v2634
        %v2636 = vrcp.pop %v2462
        %v2637 = vmul.f32 %v2462, %v2636
        %v2638 = vsub.f32 1.0, %v2637
        %v2639 = vmul.f32 %v2636, %v2638
        %v2640 = vadd.f32 %v2636, %v2639
        %vm2641 = vweird.f32 %v2462
        %vm2642 = vweird.f32 %v2636
        %vm2643 = vmor %vm2641, %vm2642
        %v2644 = vsel %vm2643, %v2636, %v2640
        %v2645 = vand.u32 2147483647, %v2462
        %vm2646 = vcmp.eq.f32.partialorder %v2645, 8.507059e+37
        %v2647 = vand.u32 %v2462, 2147483648
        %v2648 = vor.u32 1.1754944e-38, %v2647
        %v2649 = vsel %vm2646, %v2648, %v2644
        %v2650 = vmul.f32 1.0, %v2649
        %v2651 = vrcp.pop %v2463
        %v2652 = vmul.f32 %v2463, %v2651
        %v2653 = vsub.f32 1.0, %v2652
        %v2654 = vmul.f32 %v2651, %v2653
        %v2655 = vadd.f32 %v2651, %v2654
        %vm2656 = vweird.f32 %v2463
        %vm2657 = vweird.f32 %v2651
        %vm2658 = vmor %vm2656, %vm2657
        %v2659 = vsel %vm2658, %v2651, %v2655
        %v2660 = vand.u32 2147483647, %v2463
        %vm2661 = vcmp.eq.f32.partialorder %v2660, 8.507059e+37
        %v2662 = vand.u32 %v2463, 2147483648
        %v2663 = vor.u32 1.1754944e-38, %v2662
        %v2664 = vsel %vm2661, %v2663, %v2659
        %v2665 = vmul.f32 1.0, %v2664
        %v2666 = vrcp.pop %v2464
        %v2667 = vmul.f32 %v2464, %v2666
        %v2668 = vsub.f32 1.0, %v2667
        %v2669 = vmul.f32 %v2666, %v2668
        %v2670 = vadd.f32 %v2666, %v2669
        %vm2671 = vweird.f32 %v2464
        %vm2672 = vweird.f32 %v2666
        %vm2673 = vmor %vm2671, %vm2672
        %v2674 = vsel %vm2673, %v2666, %v2670
        %v2675 = vand.u32 2147483647, %v2464
        %vm2676 = vcmp.eq.f32.partialorder %v2675, 8.507059e+37
        %v2677 = vand.u32 %v2464, 2147483648
        %v2678 = vor.u32 1.1754944e-38, %v2677
        %v2679 = vsel %vm2676, %v2678, %v2674
        %v2680 = vmul.f32 1.0, %v2679
        %v2681 = vrcp.pop %v2465
        %v2682 = vmul.f32 %v2465, %v2681
        %v2683 = vsub.f32 1.0, %v2682
        %v2684 = vmul.f32 %v2681, %v2683
        %v2685 = vadd.f32 %v2681, %v2684
        %vm2686 = vweird.f32 %v2465
        %vm2687 = vweird.f32 %v2681
        %vm2688 = vmor %vm2686, %vm2687
        %v2689 = vsel %vm2688, %v2681, %v2685
        %v2690 = vand.u32 2147483647, %v2465
        %vm2691 = vcmp.eq.f32.partialorder %v2690, 8.507059e+37
        %v2692 = vand.u32 %v2465, 2147483648
        %v2693 = vor.u32 1.1754944e-38, %v2692
        %v2694 = vsel %vm2691, %v2693, %v2689
        %v2695 = vmul.f32 1.0, %v2694
        %v2696 = vrcp.pop %v2466
        %v2697 = vmul.f32 %v2466, %v2696
        %v2698 = vsub.f32 1.0, %v2697
        %v2699 = vmul.f32 %v2696, %v2698
        %v2700 = vadd.f32 %v2696, %v2699
        %vm2701 = vweird.f32 %v2466
        %vm2702 = vweird.f32 %v2696
        %vm2703 = vmor %vm2701, %vm2702
        %v2704 = vsel %vm2703, %v2696, %v2700
        %v2705 = vand.u32 2147483647, %v2466
        %vm2706 = vcmp.eq.f32.partialorder %v2705, 8.507059e+37
        %v2707 = vand.u32 %v2466, 2147483648
        %v2708 = vor.u32 1.1754944e-38, %v2707
        %v2709 = vsel %vm2706, %v2708, %v2704
        %v2710 = vmul.f32 1.0, %v2709
        %v2711 = vrcp.pop %v2467
        %v2712 = vmul.f32 %v2467, %v2711
        %v2713 = vsub.f32 1.0, %v2712
        %v2714 = vmul.f32 %v2711, %v2713
        %v2715 = vadd.f32 %v2711, %v2714
        %vm2716 = vweird.f32 %v2467
        %vm2717 = vweird.f32 %v2711
        %vm2718 = vmor %vm2716, %vm2717
        %v2719 = vsel %vm2718, %v2711, %v2715
        %v2720 = vand.u32 2147483647, %v2467
        %vm2721 = vcmp.eq.f32.partialorder %v2720, 8.507059e+37
        %v2722 = vand.u32 %v2467, 2147483648
        %v2723 = vor.u32 1.1754944e-38, %v2722
        %v2724 = vsel %vm2721, %v2723, %v2719
        %v2725 = vmul.f32 1.0, %v2724
        %v2726 = vrcp.pop %v2468
        %v2727 = vmul.f32 %v2468, %v2726
        %v2728 = vsub.f32 1.0, %v2727
        %v2729 = vmul.f32 %v2726, %v2728
        %v2730 = vadd.f32 %v2726, %v2729
        %vm2731 = vweird.f32 %v2468
        %vm2732 = vweird.f32 %v2726
        %vm2733 = vmor %vm2731, %vm2732
        %v2734 = vsel %vm2733, %v2726, %v2730
        %v2735 = vand.u32 2147483647, %v2468
        %vm2736 = vcmp.eq.f32.partialorder %v2735, 8.507059e+37
        %v2737 = vand.u32 %v2468, 2147483648
        %v2738 = vor.u32 1.1754944e-38, %v2737
        %v2739 = vsel %vm2736, %v2738, %v2734
        %v2740 = vmul.f32 1.0, %v2739
        %v2741 = vrcp.pop %v2469
        %v2742 = vmul.f32 %v2469, %v2741
        %v2743 = vsub.f32 1.0, %v2742
        %v2744 = vmul.f32 %v2741, %v2743
        %v2745 = vadd.f32 %v2741, %v2744
        %vm2746 = vweird.f32 %v2469
        %vm2747 = vweird.f32 %v2741
        %vm2748 = vmor %vm2746, %vm2747
        %v2749 = vsel %vm2748, %v2741, %v2745
        %v2750 = vand.u32 2147483647, %v2469
        %vm2751 = vcmp.eq.f32.partialorder %v2750, 8.507059e+37
        %v2752 = vand.u32 %v2469, 2147483648
        %v2753 = vor.u32 1.1754944e-38, %v2752
        %v2754 = vsel %vm2751, %v2753, %v2749
        %v2755 = vmul.f32 1.0, %v2754
        %v2756 = vrcp.pop %v2470
        %v2757 = vmul.f32 %v2470, %v2756
        %v2758 = vsub.f32 1.0, %v2757
        %v2759 = vmul.f32 %v2756, %v2758
        %v2760 = vadd.f32 %v2756, %v2759
        %vm2761 = vweird.f32 %v2470
        %vm2762 = vweird.f32 %v2756
        %vm2763 = vmor %vm2761, %vm2762
        %v2764 = vsel %vm2763, %v2756, %v2760
        %v2765 = vand.u32 2147483647, %v2470
        %vm2766 = vcmp.eq.f32.partialorder %v2765, 8.507059e+37
        %v2767 = vand.u32 %v2470, 2147483648
        %v2768 = vor.u32 1.1754944e-38, %v2767
        %v2769 = vsel %vm2766, %v2768, %v2764
        %v2770 = vmul.f32 1.0, %v2769
        %v2771 = vrcp.pop %v2471
        %v2772 = vmul.f32 %v2471, %v2771
        %v2773 = vsub.f32 1.0, %v2772
        %v2774 = vmul.f32 %v2771, %v2773
        %v2775 = vadd.f32 %v2771, %v2774
        %vm2776 = vweird.f32 %v2471
        %vm2777 = vweird.f32 %v2771
        %vm2778 = vmor %vm2776, %vm2777
        %v2779 = vsel %vm2778, %v2771, %v2775
        %v2780 = vand.u32 2147483647, %v2471
        %vm2781 = vcmp.eq.f32.partialorder %v2780, 8.507059e+37
        %v2782 = vand.u32 %v2471, 2147483648
        %v2783 = vor.u32 1.1754944e-38, %v2782
        %v2784 = vsel %vm2781, %v2783, %v2779
        %v2785 = vmul.f32 1.0, %v2784
        %v2786 = vrcp.pop %v2472
        %v2787 = vmul.f32 %v2472, %v2786
        %v2788 = vsub.f32 1.0, %v2787
        %v2789 = vmul.f32 %v2786, %v2788
        %v2790 = vadd.f32 %v2786, %v2789
        %vm2791 = vweird.f32 %v2472
        %vm2792 = vweird.f32 %v2786
        %vm2793 = vmor %vm2791, %vm2792
        %v2794 = vsel %vm2793, %v2786, %v2790
        %v2795 = vand.u32 2147483647, %v2472
        %vm2796 = vcmp.eq.f32.partialorder %v2795, 8.507059e+37
        %v2797 = vand.u32 %v2472, 2147483648
        %v2798 = vor.u32 1.1754944e-38, %v2797
        %v2799 = vsel %vm2796, %v2798, %v2794
        %v2800 = vmul.f32 1.0, %v2799
        %v2801 = vrcp.pop %v2473
        %v2802 = vmul.f32 %v2473, %v2801
        %v2803 = vsub.f32 1.0, %v2802
        %v2804 = vmul.f32 %v2801, %v2803
        %v2805 = vadd.f32 %v2801, %v2804
        %vm2806 = vweird.f32 %v2473
        %vm2807 = vweird.f32 %v2801
        %vm2808 = vmor %vm2806, %vm2807
        %v2809 = vsel %vm2808, %v2801, %v2805
        %v2810 = vand.u32 2147483647, %v2473
        %vm2811 = vcmp.eq.f32.partialorder %v2810, 8.507059e+37
        %v2812 = vand.u32 %v2473, 2147483648
        %v2813 = vor.u32 1.1754944e-38, %v2812
        %v2814 = vsel %vm2811, %v2813, %v2809
        %v2815 = vmul.f32 1.0, %v2814
        %v2816 = vrcp.pop %v2474
        %v2817 = vmul.f32 %v2474, %v2816
        %v2818 = vsub.f32 1.0, %v2817
        %v2819 = vmul.f32 %v2816, %v2818
        %v2820 = vadd.f32 %v2816, %v2819
        %vm2821 = vweird.f32 %v2474
        %vm2822 = vweird.f32 %v2816
        %vm2823 = vmor %vm2821, %vm2822
        %v2824 = vsel %vm2823, %v2816, %v2820
        %v2825 = vand.u32 2147483647, %v2474
        %vm2826 = vcmp.eq.f32.partialorder %v2825, 8.507059e+37
        %v2827 = vand.u32 %v2474, 2147483648
        %v2828 = vor.u32 1.1754944e-38, %v2827
        %v2829 = vsel %vm2826, %v2828, %v2824
        %v2830 = vmul.f32 1.0, %v2829
        %v2831 = vrcp.pop %v2475
        %v2832 = vmul.f32 %v2475, %v2831
        %v2833 = vsub.f32 1.0, %v2832
        %v2834 = vmul.f32 %v2831, %v2833
        %v2835 = vadd.f32 %v2831, %v2834
        %vm2836 = vweird.f32 %v2475
        %vm2837 = vweird.f32 %v2831
        %vm2838 = vmor %vm2836, %vm2837
        %v2839 = vsel %vm2838, %v2831, %v2835
        %v2840 = vand.u32 2147483647, %v2475
        %vm2841 = vcmp.eq.f32.partialorder %v2840, 8.507059e+37
        %v2842 = vand.u32 %v2475, 2147483648
        %v2843 = vor.u32 1.1754944e-38, %v2842
        %v2844 = vsel %vm2841, %v2843, %v2839
        %v2845 = vmul.f32 1.0, %v2844
        %v2846 = vrcp.pop %v2476
        %v2847 = vmul.f32 %v2476, %v2846
        %v2848 = vsub.f32 1.0, %v2847
        %v2849 = vmul.f32 %v2846, %v2848
        %v2850 = vadd.f32 %v2846, %v2849
        %vm2851 = vweird.f32 %v2476
        %vm2852 = vweird.f32 %v2846
        %vm2853 = vmor %vm2851, %vm2852
        %v2854 = vsel %vm2853, %v2846, %v2850
        %v2855 = vand.u32 2147483647, %v2476
        %vm2856 = vcmp.eq.f32.partialorder %v2855, 8.507059e+37
        %v2857 = vand.u32 %v2476, 2147483648
        %v2858 = vor.u32 1.1754944e-38, %v2857
        %v2859 = vsel %vm2856, %v2858, %v2854
        %v2860 = vmul.f32 1.0, %v2859
        %v2861 = vrcp.pop %v2477
        %v2862 = vmul.f32 %v2477, %v2861
        %v2863 = vsub.f32 1.0, %v2862
        %v2864 = vmul.f32 %v2861, %v2863
        %v2865 = vadd.f32 %v2861, %v2864
        %vm2866 = vweird.f32 %v2477
        %vm2867 = vweird.f32 %v2861
        %vm2868 = vmor %vm2866, %vm2867
        %v2869 = vsel %vm2868, %v2861, %v2865
        %v2870 = vand.u32 2147483647, %v2477
        %vm2871 = vcmp.eq.f32.partialorder %v2870, 8.507059e+37
        %v2872 = vand.u32 %v2477, 2147483648
        %v2873 = vor.u32 1.1754944e-38, %v2872
        %v2874 = vsel %vm2871, %v2873, %v2869
        %v2875 = vmul.f32 1.0, %v2874
        %v2876 = vrcp.pop %v2478
        %v2877 = vmul.f32 %v2478, %v2876
        %v2878 = vsub.f32 1.0, %v2877
        %v2879 = vmul.f32 %v2876, %v2878
        %v2880 = vadd.f32 %v2876, %v2879
        %vm2881 = vweird.f32 %v2478
        %vm2882 = vweird.f32 %v2876
        %vm2883 = vmor %vm2881, %vm2882
        %v2884 = vsel %vm2883, %v2876, %v2880
        %v2885 = vand.u32 2147483647, %v2478
        %vm2886 = vcmp.eq.f32.partialorder %v2885, 8.507059e+37
        %v2887 = vand.u32 %v2478, 2147483648
        %v2888 = vor.u32 1.1754944e-38, %v2887
        %v2889 = vsel %vm2886, %v2888, %v2884
        %v2890 = vmul.f32 1.0, %v2889
        %v2891 = vrcp.pop %v2479
        %v2892 = vmul.f32 %v2479, %v2891
        %v2893 = vsub.f32 1.0, %v2892
        %v2894 = vmul.f32 %v2891, %v2893
        %v2895 = vadd.f32 %v2891, %v2894
        %vm2896 = vweird.f32 %v2479
        %vm2897 = vweird.f32 %v2891
        %vm2898 = vmor %vm2896, %vm2897
        %v2899 = vsel %vm2898, %v2891, %v2895
        %v2900 = vand.u32 2147483647, %v2479
        %vm2901 = vcmp.eq.f32.partialorder %v2900, 8.507059e+37
        %v2902 = vand.u32 %v2479, 2147483648
        %v2903 = vor.u32 1.1754944e-38, %v2902
        %v2904 = vsel %vm2901, %v2903, %v2899
        %v2905 = vmul.f32 1.0, %v2904
        %v2906 = vrcp.pop %v2480
        %v2907 = vmul.f32 %v2480, %v2906
        %v2908 = vsub.f32 1.0, %v2907
        %v2909 = vmul.f32 %v2906, %v2908
        %v2910 = vadd.f32 %v2906, %v2909
        %vm2911 = vweird.f32 %v2480
        %vm2912 = vweird.f32 %v2906
        %vm2913 = vmor %vm2911, %vm2912
        %v2914 = vsel %vm2913, %v2906, %v2910
        %v2915 = vand.u32 2147483647, %v2480
        %vm2916 = vcmp.eq.f32.partialorder %v2915, 8.507059e+37
        %v2917 = vand.u32 %v2480, 2147483648
        %v2918 = vor.u32 1.1754944e-38, %v2917
        %v2919 = vsel %vm2916, %v2918, %v2914
        %v2920 = vmul.f32 1.0, %v2919
        %v2921 = vrcp.pop %v2481
        %v2922 = vmul.f32 %v2481, %v2921
        %v2923 = vsub.f32 1.0, %v2922
        %v2924 = vmul.f32 %v2921, %v2923
        %v2925 = vadd.f32 %v2921, %v2924
        %vm2926 = vweird.f32 %v2481
        %vm2927 = vweird.f32 %v2921
        %vm2928 = vmor %vm2926, %vm2927
        %v2929 = vsel %vm2928, %v2921, %v2925
        %v2930 = vand.u32 2147483647, %v2481
        %vm2931 = vcmp.eq.f32.partialorder %v2930, 8.507059e+37
        %v2932 = vand.u32 %v2481, 2147483648
        %v2933 = vor.u32 1.1754944e-38, %v2932
        %v2934 = vsel %vm2931, %v2933, %v2929
        %v2935 = vmul.f32 1.0, %v2934
        %v2936 = vrcp.pop %v2482
        %v2937 = vmul.f32 %v2482, %v2936
        %v2938 = vsub.f32 1.0, %v2937
        %v2939 = vmul.f32 %v2936, %v2938
        %v2940 = vadd.f32 %v2936, %v2939
        %vm2941 = vweird.f32 %v2482
        %vm2942 = vweird.f32 %v2936
        %vm2943 = vmor %vm2941, %vm2942
        %v2944 = vsel %vm2943, %v2936, %v2940
        %v2945 = vand.u32 2147483647, %v2482
        %vm2946 = vcmp.eq.f32.partialorder %v2945, 8.507059e+37
        %v2947 = vand.u32 %v2482, 2147483648
        %v2948 = vor.u32 1.1754944e-38, %v2947
        %v2949 = vsel %vm2946, %v2948, %v2944
        %v2950 = vmul.f32 1.0, %v2949
        %v2951 = vrcp.pop %v2483
        %v2952 = vmul.f32 %v2483, %v2951
        %v2953 = vsub.f32 1.0, %v2952
        %v2954 = vmul.f32 %v2951, %v2953
        %v2955 = vadd.f32 %v2951, %v2954
        %vm2956 = vweird.f32 %v2483
        %vm2957 = vweird.f32 %v2951
        %vm2958 = vmor %vm2956, %vm2957
        %v2959 = vsel %vm2958, %v2951, %v2955
        %v2960 = vand.u32 2147483647, %v2483
        %vm2961 = vcmp.eq.f32.partialorder %v2960, 8.507059e+37
        %v2962 = vand.u32 %v2483, 2147483648
        %v2963 = vor.u32 1.1754944e-38, %v2962
        %v2964 = vsel %vm2961, %v2963, %v2959
        %v2965 = vmul.f32 1.0, %v2964
        %v2966 = vrcp.pop %v2484
        %v2967 = vmul.f32 %v2484, %v2966
        %v2968 = vsub.f32 1.0, %v2967
        %v2969 = vmul.f32 %v2966, %v2968
        %v2970 = vadd.f32 %v2966, %v2969
        %vm2971 = vweird.f32 %v2484
        %vm2972 = vweird.f32 %v2966
        %vm2973 = vmor %vm2971, %vm2972
        %v2974 = vsel %vm2973, %v2966, %v2970
        %v2975 = vand.u32 2147483647, %v2484
        %vm2976 = vcmp.eq.f32.partialorder %v2975, 8.507059e+37
        %v2977 = vand.u32 %v2484, 2147483648
        %v2978 = vor.u32 1.1754944e-38, %v2977
        %v2979 = vsel %vm2976, %v2978, %v2974
        %v2980 = vmul.f32 1.0, %v2979
        %v2981 = vrcp.pop %v2485
        %v2982 = vmul.f32 %v2485, %v2981
        %v2983 = vsub.f32 1.0, %v2982
        %v2984 = vmul.f32 %v2981, %v2983
        %v2985 = vadd.f32 %v2981, %v2984
        %vm2986 = vweird.f32 %v2485
        %vm2987 = vweird.f32 %v2981
        %vm2988 = vmor %vm2986, %vm2987
        %v2989 = vsel %vm2988, %v2981, %v2985
        %v2990 = vand.u32 2147483647, %v2485
        %vm2991 = vcmp.eq.f32.partialorder %v2990, 8.507059e+37
        %v2992 = vand.u32 %v2485, 2147483648
        %v2993 = vor.u32 1.1754944e-38, %v2992
        %v2994 = vsel %vm2991, %v2993, %v2989
        %v2995 = vmul.f32 1.0, %v2994
        %v2996 = vrcp.pop %v2486
        %v2997 = vmul.f32 %v2486, %v2996
        %v2998 = vsub.f32 1.0, %v2997
        %v2999 = vmul.f32 %v2996, %v2998
        %v3000 = vadd.f32 %v2996, %v2999
        %vm3001 = vweird.f32 %v2486
        %vm3002 = vweird.f32 %v2996
        %vm3003 = vmor %vm3001, %vm3002
        %v3004 = vsel %vm3003, %v2996, %v3000
        %v3005 = vand.u32 2147483647, %v2486
        %vm3006 = vcmp.eq.f32.partialorder %v3005, 8.507059e+37
        %v3007 = vand.u32 %v2486, 2147483648
        %v3008 = vor.u32 1.1754944e-38, %v3007
        %v3009 = vsel %vm3006, %v3008, %v3004
        %v3010 = vmul.f32 1.0, %v3009
        %v3011 = vrcp.pop %v2487
        %v3012 = vmul.f32 %v2487, %v3011
        %v3013 = vsub.f32 1.0, %v3012
        %v3014 = vmul.f32 %v3011, %v3013
        %v3015 = vadd.f32 %v3011, %v3014
        %vm3016 = vweird.f32 %v2487
        %vm3017 = vweird.f32 %v3011
        %vm3018 = vmor %vm3016, %vm3017
        %v3019 = vsel %vm3018, %v3011, %v3015
        %v3020 = vand.u32 2147483647, %v2487
        %vm3021 = vcmp.eq.f32.partialorder %v3020, 8.507059e+37
        %v3022 = vand.u32 %v2487, 2147483648
        %v3023 = vor.u32 1.1754944e-38, %v3022
        %v3024 = vsel %vm3021, %v3023, %v3019
        %v3025 = vmul.f32 1.0, %v3024
        %v3026 = vrcp.pop %v2488
        %v3027 = vmul.f32 %v2488, %v3026
        %v3028 = vsub.f32 1.0, %v3027
        %v3029 = vmul.f32 %v3026, %v3028
        %v3030 = vadd.f32 %v3026, %v3029
        %vm3031 = vweird.f32 %v2488
        %vm3032 = vweird.f32 %v3026
        %vm3033 = vmor %vm3031, %vm3032
        %v3034 = vsel %vm3033, %v3026, %v3030
        %v3035 = vand.u32 2147483647, %v2488
        %vm3036 = vcmp.eq.f32.partialorder %v3035, 8.507059e+37
        %v3037 = vand.u32 %v2488, 2147483648
        %v3038 = vor.u32 1.1754944e-38, %v3037
        %v3039 = vsel %vm3036, %v3038, %v3034
        %v3040 = vmul.f32 1.0, %v3039
        %v3041 = vrcp.pop %v2489
        %v3042 = vmul.f32 %v2489, %v3041
        %v3043 = vsub.f32 1.0, %v3042
        %v3044 = vmul.f32 %v3041, %v3043
        %v3045 = vadd.f32 %v3041, %v3044
        %vm3046 = vweird.f32 %v2489
        %vm3047 = vweird.f32 %v3041
        %vm3048 = vmor %vm3046, %vm3047
        %v3049 = vsel %vm3048, %v3041, %v3045
        %v3050 = vand.u32 2147483647, %v2489
        %vm3051 = vcmp.eq.f32.partialorder %v3050, 8.507059e+37
        %v3052 = vand.u32 %v2489, 2147483648
        %v3053 = vor.u32 1.1754944e-38, %v3052
        %v3054 = vsel %vm3051, %v3053, %v3049
        %v3055 = vmul.f32 1.0, %v3054
        %v3056 = vrcp.pop %v2490
        %v3057 = vmul.f32 %v2490, %v3056
        %v3058 = vsub.f32 1.0, %v3057
        %v3059 = vmul.f32 %v3056, %v3058
        %v3060 = vadd.f32 %v3056, %v3059
        %vm3061 = vweird.f32 %v2490
        %vm3062 = vweird.f32 %v3056
        %vm3063 = vmor %vm3061, %vm3062
        %v3064 = vsel %vm3063, %v3056, %v3060
        %v3065 = vand.u32 2147483647, %v2490
        %vm3066 = vcmp.eq.f32.partialorder %v3065, 8.507059e+37
        %v3067 = vand.u32 %v2490, 2147483648
        %v3068 = vor.u32 1.1754944e-38, %v3067
        %v3069 = vsel %vm3066, %v3068, %v3064
        %v3070 = vmul.f32 1.0, %v3069
        %v3071 = vrcp.pop %v2491
        %v3072 = vmul.f32 %v2491, %v3071
        %v3073 = vsub.f32 1.0, %v3072
        %v3074 = vmul.f32 %v3071, %v3073
        %v3075 = vadd.f32 %v3071, %v3074
        %vm3076 = vweird.f32 %v2491
        %vm3077 = vweird.f32 %v3071
        %vm3078 = vmor %vm3076, %vm3077
        %v3079 = vsel %vm3078, %v3071, %v3075
        %v3080 = vand.u32 2147483647, %v2491
        %vm3081 = vcmp.eq.f32.partialorder %v3080, 8.507059e+37
        %v3082 = vand.u32 %v2491, 2147483648
        %v3083 = vor.u32 1.1754944e-38, %v3082
        %v3084 = vsel %vm3081, %v3083, %v3079
        %v3085 = vmul.f32 1.0, %v3084
        %v3086 = vrcp.pop %v2492
        %v3087 = vmul.f32 %v2492, %v3086
        %v3088 = vsub.f32 1.0, %v3087
        %v3089 = vmul.f32 %v3086, %v3088
        %v3090 = vadd.f32 %v3086, %v3089
        %vm3091 = vweird.f32 %v2492
        %vm3092 = vweird.f32 %v3086
        %vm3093 = vmor %vm3091, %vm3092
        %v3094 = vsel %vm3093, %v3086, %v3090
        %v3095 = vand.u32 2147483647, %v2492
        %vm3096 = vcmp.eq.f32.partialorder %v3095, 8.507059e+37
        %v3097 = vand.u32 %v2492, 2147483648
        %v3098 = vor.u32 1.1754944e-38, %v3097
        %v3099 = vsel %vm3096, %v3098, %v3094
        %v3100 = vmul.f32 1.0, %v3099
        %v3101 = vrcp.pop %v2493
        %v3102 = vmul.f32 %v2493, %v3101
        %v3103 = vsub.f32 1.0, %v3102
        %v3104 = vmul.f32 %v3101, %v3103
        %v3105 = vadd.f32 %v3101, %v3104
        %vm3106 = vweird.f32 %v2493
        %vm3107 = vweird.f32 %v3101
        %vm3108 = vmor %vm3106, %vm3107
        %v3109 = vsel %vm3108, %v3101, %v3105
        %v3110 = vand.u32 2147483647, %v2493
        %vm3111 = vcmp.eq.f32.partialorder %v3110, 8.507059e+37
        %v3112 = vand.u32 %v2493, 2147483648
        %v3113 = vor.u32 1.1754944e-38, %v3112
        %v3114 = vsel %vm3111, %v3113, %v3109
        %v3115 = vmul.f32 1.0, %v3114
        %v3116 = vrcp.pop %v2494
        %v3117 = vmul.f32 %v2494, %v3116
        %v3118 = vsub.f32 1.0, %v3117
        %v3119 = vmul.f32 %v3116, %v3118
        %v3120 = vadd.f32 %v3116, %v3119
        %vm3121 = vweird.f32 %v2494
        %vm3122 = vweird.f32 %v3116
        %vm3123 = vmor %vm3121, %vm3122
        %v3124 = vsel %vm3123, %v3116, %v3120
        %v3125 = vand.u32 2147483647, %v2494
        %vm3126 = vcmp.eq.f32.partialorder %v3125, 8.507059e+37
        %v3127 = vand.u32 %v2494, 2147483648
        %v3128 = vor.u32 1.1754944e-38, %v3127
        %v3129 = vsel %vm3126, %v3128, %v3124
        %v3130 = vmul.f32 1.0, %v3129
        %v3131 = vrcp.pop %v2495
        %v3132 = vmul.f32 %v2495, %v3131
        %v3133 = vsub.f32 1.0, %v3132
        %v3134 = vmul.f32 %v3131, %v3133
        %v3135 = vadd.f32 %v3131, %v3134
        %vm3136 = vweird.f32 %v2495
        %vm3137 = vweird.f32 %v3131
        %vm3138 = vmor %vm3136, %vm3137
        %v3139 = vsel %vm3138, %v3131, %v3135
        %v3140 = vand.u32 2147483647, %v2495
        %vm3141 = vcmp.eq.f32.partialorder %v3140, 8.507059e+37
        %v3142 = vand.u32 %v2495, 2147483648
        %v3143 = vor.u32 1.1754944e-38, %v3142
        %v3144 = vsel %vm3141, %v3143, %v3139
        %v3145 = vmul.f32 1.0, %v3144
        %v3146 = vrcp.pop %v2496
        %v3147 = vmul.f32 %v2496, %v3146
        %v3148 = vsub.f32 1.0, %v3147
        %v3149 = vmul.f32 %v3146, %v3148
        %v3150 = vadd.f32 %v3146, %v3149
        %vm3151 = vweird.f32 %v2496
        %vm3152 = vweird.f32 %v3146
        %vm3153 = vmor %vm3151, %vm3152
        %v3154 = vsel %vm3153, %v3146, %v3150
        %v3155 = vand.u32 2147483647, %v2496
        %vm3156 = vcmp.eq.f32.partialorder %v3155, 8.507059e+37
        %v3157 = vand.u32 %v2496, 2147483648
        %v3158 = vor.u32 1.1754944e-38, %v3157
        %v3159 = vsel %vm3156, %v3158, %v3154
        %v3160 = vmul.f32 1.0, %v3159
        %v3161 = vrcp.pop %v2497
        %v3162 = vmul.f32 %v2497, %v3161
        %v3163 = vsub.f32 1.0, %v3162
        %v3164 = vmul.f32 %v3161, %v3163
        %v3165 = vadd.f32 %v3161, %v3164
        %vm3166 = vweird.f32 %v2497
        %vm3167 = vweird.f32 %v3161
        %vm3168 = vmor %vm3166, %vm3167
        %v3169 = vsel %vm3168, %v3161, %v3165
        %v3170 = vand.u32 2147483647, %v2497
        %vm3171 = vcmp.eq.f32.partialorder %v3170, 8.507059e+37
        %v3172 = vand.u32 %v2497, 2147483648
        %v3173 = vor.u32 1.1754944e-38, %v3172
        %v3174 = vsel %vm3171, %v3173, %v3169
        %v3175 = vmul.f32 1.0, %v3174
        %v3176 = vrcp.pop %v2498
        %v3177 = vmul.f32 %v2498, %v3176
        %v3178 = vsub.f32 1.0, %v3177
        %v3179 = vmul.f32 %v3176, %v3178
        %v3180 = vadd.f32 %v3176, %v3179
        %vm3181 = vweird.f32 %v2498
        %vm3182 = vweird.f32 %v3176
        %vm3183 = vmor %vm3181, %vm3182
        %v3184 = vsel %vm3183, %v3176, %v3180
        %v3185 = vand.u32 2147483647, %v2498
        %vm3186 = vcmp.eq.f32.partialorder %v3185, 8.507059e+37
        %v3187 = vand.u32 %v2498, 2147483648
        %v3188 = vor.u32 1.1754944e-38, %v3187
        %v3189 = vsel %vm3186, %v3188, %v3184
        %v3190 = vmul.f32 1.0, %v3189
        %v3191 = vrcp.pop %v2499
        %v3192 = vmul.f32 %v2499, %v3191
        %v3193 = vsub.f32 1.0, %v3192
        %v3194 = vmul.f32 %v3191, %v3193
        %v3195 = vadd.f32 %v3191, %v3194
        %vm3196 = vweird.f32 %v2499
        %vm3197 = vweird.f32 %v3191
        %vm3198 = vmor %vm3196, %vm3197
        %v3199 = vsel %vm3198, %v3191, %v3195
        %v3200 = vand.u32 2147483647, %v2499
        %vm3201 = vcmp.eq.f32.partialorder %v3200, 8.507059e+37
        %v3202 = vand.u32 %v2499, 2147483648
        %v3203 = vor.u32 1.1754944e-38, %v3202
        %v3204 = vsel %vm3201, %v3203, %v3199
        %v3205 = vmul.f32 1.0, %v3204
        %v3206 = vrcp.pop %v2500
        %v3207 = vmul.f32 %v2500, %v3206
        %v3208 = vsub.f32 1.0, %v3207
        %v3209 = vmul.f32 %v3206, %v3208
        %v3210 = vadd.f32 %v3206, %v3209
        %vm3211 = vweird.f32 %v2500
        %vm3212 = vweird.f32 %v3206
        %vm3213 = vmor %vm3211, %vm3212
        %v3214 = vsel %vm3213, %v3206, %v3210
        %v3215 = vand.u32 2147483647, %v2500
        %vm3216 = vcmp.eq.f32.partialorder %v3215, 8.507059e+37
        %v3217 = vand.u32 %v2500, 2147483648
        %v3218 = vor.u32 1.1754944e-38, %v3217
        %v3219 = vsel %vm3216, %v3218, %v3214
        %v3220 = vmul.f32 1.0, %v3219
        %v3221 = vrcp.pop %v2501
        %v3222 = vmul.f32 %v2501, %v3221
        %v3223 = vsub.f32 1.0, %v3222
        %v3224 = vmul.f32 %v3221, %v3223
        %v3225 = vadd.f32 %v3221, %v3224
        %vm3226 = vweird.f32 %v2501
        %vm3227 = vweird.f32 %v3221
        %vm3228 = vmor %vm3226, %vm3227
        %v3229 = vsel %vm3228, %v3221, %v3225
        %v3230 = vand.u32 2147483647, %v2501
        %vm3231 = vcmp.eq.f32.partialorder %v3230, 8.507059e+37
        %v3232 = vand.u32 %v2501, 2147483648
        %v3233 = vor.u32 1.1754944e-38, %v3232
        %v3234 = vsel %vm3231, %v3233, %v3229
        %v3235 = vmul.f32 1.0, %v3234
        %v3236 = vrcp.pop %v2502
        %v3237 = vmul.f32 %v2502, %v3236
        %v3238 = vsub.f32 1.0, %v3237
        %v3239 = vmul.f32 %v3236, %v3238
        %v3240 = vadd.f32 %v3236, %v3239
        %vm3241 = vweird.f32 %v2502
        %vm3242 = vweird.f32 %v3236
        %vm3243 = vmor %vm3241, %vm3242
        %v3244 = vsel %vm3243, %v3236, %v3240
        %v3245 = vand.u32 2147483647, %v2502
        %vm3246 = vcmp.eq.f32.partialorder %v3245, 8.507059e+37
        %v3247 = vand.u32 %v2502, 2147483648
        %v3248 = vor.u32 1.1754944e-38, %v3247
        %v3249 = vsel %vm3246, %v3248, %v3244
        %v3250 = vmul.f32 1.0, %v3249
        %v3251 = vrcp.pop %v2503
        %v3252 = vmul.f32 %v2503, %v3251
        %v3253 = vsub.f32 1.0, %v3252
        %v3254 = vmul.f32 %v3251, %v3253
        %v3255 = vadd.f32 %v3251, %v3254
        %vm3256 = vweird.f32 %v2503
        %vm3257 = vweird.f32 %v3251
        %vm3258 = vmor %vm3256, %vm3257
        %v3259 = vsel %vm3258, %v3251, %v3255
        %v3260 = vand.u32 2147483647, %v2503
        %vm3261 = vcmp.eq.f32.partialorder %v3260, 8.507059e+37
        %v3262 = vand.u32 %v2503, 2147483648
        %v3263 = vor.u32 1.1754944e-38, %v3262
        %v3264 = vsel %vm3261, %v3263, %v3259
        %v3265 = vmul.f32 1.0, %v3264
        %v3266 = vrcp.pop %v2504
        %v3267 = vmul.f32 %v2504, %v3266
        %v3268 = vsub.f32 1.0, %v3267
        %v3269 = vmul.f32 %v3266, %v3268
        %v3270 = vadd.f32 %v3266, %v3269
        %vm3271 = vweird.f32 %v2504
        %vm3272 = vweird.f32 %v3266
        %vm3273 = vmor %vm3271, %vm3272
        %v3274 = vsel %vm3273, %v3266, %v3270
        %v3275 = vand.u32 2147483647, %v2504
        %vm3276 = vcmp.eq.f32.partialorder %v3275, 8.507059e+37
        %v3277 = vand.u32 %v2504, 2147483648
        %v3278 = vor.u32 1.1754944e-38, %v3277
        %v3279 = vsel %vm3276, %v3278, %v3274
        %v3280 = vmul.f32 1.0, %v3279
        %v3281 = vrcp.pop %v2505
        %v3282 = vmul.f32 %v2505, %v3281
        %v3283 = vsub.f32 1.0, %v3282
        %v3284 = vmul.f32 %v3281, %v3283
        %v3285 = vadd.f32 %v3281, %v3284
        %vm3286 = vweird.f32 %v2505
        %vm3287 = vweird.f32 %v3281
        %vm3288 = vmor %vm3286, %vm3287
        %v3289 = vsel %vm3288, %v3281, %v3285
        %v3290 = vand.u32 2147483647, %v2505
        %vm3291 = vcmp.eq.f32.partialorder %v3290, 8.507059e+37
        %v3292 = vand.u32 %v2505, 2147483648
        %v3293 = vor.u32 1.1754944e-38, %v3292
        %v3294 = vsel %vm3291, %v3293, %v3289
        %v3295 = vmul.f32 1.0, %v3294
        %v3296 = vrcp.pop %v2506
        %v3297 = vmul.f32 %v2506, %v3296
        %v3298 = vsub.f32 1.0, %v3297
        %v3299 = vmul.f32 %v3296, %v3298
        %v3300 = vadd.f32 %v3296, %v3299
        %vm3301 = vweird.f32 %v2506
        %vm3302 = vweird.f32 %v3296
        %vm3303 = vmor %vm3301, %vm3302
        %v3304 = vsel %vm3303, %v3296, %v3300
        %v3305 = vand.u32 2147483647, %v2506
        %vm3306 = vcmp.eq.f32.partialorder %v3305, 8.507059e+37
        %v3307 = vand.u32 %v2506, 2147483648
        %v3308 = vor.u32 1.1754944e-38, %v3307
        %v3309 = vsel %vm3306, %v3308, %v3304
        %v3310 = vmul.f32 1.0, %v3309
        %v3311 = vrcp.pop %v2507
        %v3312 = vmul.f32 %v2507, %v3311
        %v3313 = vsub.f32 1.0, %v3312
        %v3314 = vmul.f32 %v3311, %v3313
        %v3315 = vadd.f32 %v3311, %v3314
        %vm3316 = vweird.f32 %v2507
        %vm3317 = vweird.f32 %v3311
        %vm3318 = vmor %vm3316, %vm3317
        %v3319 = vsel %vm3318, %v3311, %v3315
        %v3320 = vand.u32 2147483647, %v2507
        %vm3321 = vcmp.eq.f32.partialorder %v3320, 8.507059e+37
        %v3322 = vand.u32 %v2507, 2147483648
        %v3323 = vor.u32 1.1754944e-38, %v3322
        %v3324 = vsel %vm3321, %v3323, %v3319
        %v3325 = vmul.f32 1.0, %v3324
        %v3326 = vrcp.pop %v2508
        %v3327 = vmul.f32 %v2508, %v3326
        %v3328 = vsub.f32 1.0, %v3327
        %v3329 = vmul.f32 %v3326, %v3328
        %v3330 = vadd.f32 %v3326, %v3329
        %vm3331 = vweird.f32 %v2508
        %vm3332 = vweird.f32 %v3326
        %vm3333 = vmor %vm3331, %vm3332
        %v3334 = vsel %vm3333, %v3326, %v3330
        %v3335 = vand.u32 2147483647, %v2508
        %vm3336 = vcmp.eq.f32.partialorder %v3335, 8.507059e+37
        %v3337 = vand.u32 %v2508, 2147483648
        %v3338 = vor.u32 1.1754944e-38, %v3337
        %v3339 = vsel %vm3336, %v3338, %v3334
        %v3340 = vmul.f32 1.0, %v3339
        %v3341 = vrcp.pop %v2509
        %v3342 = vmul.f32 %v2509, %v3341
        %v3343 = vsub.f32 1.0, %v3342
        %v3344 = vmul.f32 %v3341, %v3343
        %v3345 = vadd.f32 %v3341, %v3344
        %vm3346 = vweird.f32 %v2509
        %vm3347 = vweird.f32 %v3341
        %vm3348 = vmor %vm3346, %vm3347
        %v3349 = vsel %vm3348, %v3341, %v3345
        %v3350 = vand.u32 2147483647, %v2509
        %vm3351 = vcmp.eq.f32.partialorder %v3350, 8.507059e+37
        %v3352 = vand.u32 %v2509, 2147483648
        %v3353 = vor.u32 1.1754944e-38, %v3352
        %v3354 = vsel %vm3351, %v3353, %v3349
        %v3355 = vmul.f32 1.0, %v3354
        %v3356 = vrcp.pop %v2510
        %v3357 = vmul.f32 %v2510, %v3356
        %v3358 = vsub.f32 1.0, %v3357
        %v3359 = vmul.f32 %v3356, %v3358
        %v3360 = vadd.f32 %v3356, %v3359
        %vm3361 = vweird.f32 %v2510
        %vm3362 = vweird.f32 %v3356
        %vm3363 = vmor %vm3361, %vm3362
        %v3364 = vsel %vm3363, %v3356, %v3360
        %v3365 = vand.u32 2147483647, %v2510
        %vm3366 = vcmp.eq.f32.partialorder %v3365, 8.507059e+37
        %v3367 = vand.u32 %v2510, 2147483648
        %v3368 = vor.u32 1.1754944e-38, %v3367
        %v3369 = vsel %vm3366, %v3368, %v3364
        %v3370 = vmul.f32 1.0, %v3369
        %v3371 = vrcp.pop %v2511
        %v3372 = vmul.f32 %v2511, %v3371
        %v3373 = vsub.f32 1.0, %v3372
        %v3374 = vmul.f32 %v3371, %v3373
        %v3375 = vadd.f32 %v3371, %v3374
        %vm3376 = vweird.f32 %v2511
        %vm3377 = vweird.f32 %v3371
        %vm3378 = vmor %vm3376, %vm3377
        %v3379 = vsel %vm3378, %v3371, %v3375
        %v3380 = vand.u32 2147483647, %v2511
        %vm3381 = vcmp.eq.f32.partialorder %v3380, 8.507059e+37
        %v3382 = vand.u32 %v2511, 2147483648
        %v3383 = vor.u32 1.1754944e-38, %v3382
        %v3384 = vsel %vm3381, %v3383, %v3379
        %v3385 = vmul.f32 1.0, %v3384
        %v3386 = vrcp.pop %v2512
        %v3387 = vmul.f32 %v2512, %v3386
        %v3388 = vsub.f32 1.0, %v3387
        %v3389 = vmul.f32 %v3386, %v3388
        %v3390 = vadd.f32 %v3386, %v3389
        %vm3391 = vweird.f32 %v2512
        %vm3392 = vweird.f32 %v3386
        %vm3393 = vmor %vm3391, %vm3392
        %v3394 = vsel %vm3393, %v3386, %v3390
        %v3395 = vand.u32 2147483647, %v2512
        %vm3396 = vcmp.eq.f32.partialorder %v3395, 8.507059e+37
        %v3397 = vand.u32 %v2512, 2147483648
        %v3398 = vor.u32 1.1754944e-38, %v3397
        %v3399 = vsel %vm3396, %v3398, %v3394
        %v3400 = vmul.f32 1.0, %v3399
        %v3401 = vrcp.pop %v2513
        %v3402 = vmul.f32 %v2513, %v3401
        %v3403 = vsub.f32 1.0, %v3402
        %v3404 = vmul.f32 %v3401, %v3403
        %v3405 = vadd.f32 %v3401, %v3404
        %vm3406 = vweird.f32 %v2513
        %vm3407 = vweird.f32 %v3401
        %vm3408 = vmor %vm3406, %vm3407
        %v3409 = vsel %vm3408, %v3401, %v3405
        %v3410 = vand.u32 2147483647, %v2513
        %vm3411 = vcmp.eq.f32.partialorder %v3410, 8.507059e+37
        %v3412 = vand.u32 %v2513, 2147483648
        %v3413 = vor.u32 1.1754944e-38, %v3412
        %v3414 = vsel %vm3411, %v3413, %v3409
        %v3415 = vmul.f32 1.0, %v3414
        %v3416 = vrcp.pop %v2514
        %v3417 = vmul.f32 %v2514, %v3416
        %v3418 = vsub.f32 1.0, %v3417
        %v3419 = vmul.f32 %v3416, %v3418
        %v3420 = vadd.f32 %v3416, %v3419
        %vm3421 = vweird.f32 %v2514
        %vm3422 = vweird.f32 %v3416
        %vm3423 = vmor %vm3421, %vm3422
        %v3424 = vsel %vm3423, %v3416, %v3420
        %v3425 = vand.u32 2147483647, %v2514
        %vm3426 = vcmp.eq.f32.partialorder %v3425, 8.507059e+37
        %v3427 = vand.u32 %v2514, 2147483648
        %v3428 = vor.u32 1.1754944e-38, %v3427
        %v3429 = vsel %vm3426, %v3428, %v3424
        %v3430 = vmul.f32 1.0, %v3429
        %v3431 = vrcp.pop %v2515
        %v3432 = vmul.f32 %v2515, %v3431
        %v3433 = vsub.f32 1.0, %v3432
        %v3434 = vmul.f32 %v3431, %v3433
        %v3435 = vadd.f32 %v3431, %v3434
        %vm3436 = vweird.f32 %v2515
        %vm3437 = vweird.f32 %v3431
        %vm3438 = vmor %vm3436, %vm3437
        %v3439 = vsel %vm3438, %v3431, %v3435
        %v3440 = vand.u32 2147483647, %v2515
        %vm3441 = vcmp.eq.f32.partialorder %v3440, 8.507059e+37
        %v3442 = vand.u32 %v2515, 2147483648
        %v3443 = vor.u32 1.1754944e-38, %v3442
        %v3444 = vsel %vm3441, %v3443, %v3439
        %v3445 = vmul.f32 1.0, %v3444
        %v3446 = vrcp.pop %v2516
        %v3447 = vmul.f32 %v2516, %v3446
        %v3448 = vsub.f32 1.0, %v3447
        %v3449 = vmul.f32 %v3446, %v3448
        %v3450 = vadd.f32 %v3446, %v3449
        %vm3451 = vweird.f32 %v2516
        %vm3452 = vweird.f32 %v3446
        %vm3453 = vmor %vm3451, %vm3452
        %v3454 = vsel %vm3453, %v3446, %v3450
        %v3455 = vand.u32 2147483647, %v2516
        %vm3456 = vcmp.eq.f32.partialorder %v3455, 8.507059e+37
        %v3457 = vand.u32 %v2516, 2147483648
        %v3458 = vor.u32 1.1754944e-38, %v3457
        %v3459 = vsel %vm3456, %v3458, %v3454
        %v3460 = vmul.f32 1.0, %v3459
        %v3461 = vrcp.pop %v2517
        %v3462 = vmul.f32 %v2517, %v3461
        %v3463 = vsub.f32 1.0, %v3462
        %v3464 = vmul.f32 %v3461, %v3463
        %v3465 = vadd.f32 %v3461, %v3464
        %vm3466 = vweird.f32 %v2517
        %vm3467 = vweird.f32 %v3461
        %vm3468 = vmor %vm3466, %vm3467
        %v3469 = vsel %vm3468, %v3461, %v3465
        %v3470 = vand.u32 2147483647, %v2517
        %vm3471 = vcmp.eq.f32.partialorder %v3470, 8.507059e+37
        %v3472 = vand.u32 %v2517, 2147483648
        %v3473 = vor.u32 1.1754944e-38, %v3472
        %v3474 = vsel %vm3471, %v3473, %v3469
        %v3475 = vmul.f32 1.0, %v3474
        %v3476 = vrcp.pop %v2518
        %v3477 = vmul.f32 %v2518, %v3476
        %v3478 = vsub.f32 1.0, %v3477
        %v3479 = vmul.f32 %v3476, %v3478
        %v3480 = vadd.f32 %v3476, %v3479
        %vm3481 = vweird.f32 %v2518
        %vm3482 = vweird.f32 %v3476
        %vm3483 = vmor %vm3481, %vm3482
        %v3484 = vsel %vm3483, %v3476, %v3480
        %v3485 = vand.u32 2147483647, %v2518
        %vm3486 = vcmp.eq.f32.partialorder %v3485, 8.507059e+37
        %v3487 = vand.u32 %v2518, 2147483648
        %v3488 = vor.u32 1.1754944e-38, %v3487
        %v3489 = vsel %vm3486, %v3488, %v3484
        %v3490 = vmul.f32 1.0, %v3489
        %v3491 = vrcp.pop %v2519
        %v3492 = vmul.f32 %v2519, %v3491
        %v3493 = vsub.f32 1.0, %v3492
        %v3494 = vmul.f32 %v3491, %v3493
        %v3495 = vadd.f32 %v3491, %v3494
        %vm3496 = vweird.f32 %v2519
        %vm3497 = vweird.f32 %v3491
        %vm3498 = vmor %vm3496, %vm3497
        %v3499 = vsel %vm3498, %v3491, %v3495
        %v3500 = vand.u32 2147483647, %v2519
        %vm3501 = vcmp.eq.f32.partialorder %v3500, 8.507059e+37
        %v3502 = vand.u32 %v2519, 2147483648
        %v3503 = vor.u32 1.1754944e-38, %v3502
        %v3504 = vsel %vm3501, %v3503, %v3499
        %v3505 = vmul.f32 1.0, %v3504
        %v3506 = vrcp.pop %v2520
        %v3507 = vmul.f32 %v2520, %v3506
        %v3508 = vsub.f32 1.0, %v3507
        %v3509 = vmul.f32 %v3506, %v3508
        %v3510 = vadd.f32 %v3506, %v3509
        %vm3511 = vweird.f32 %v2520
        %vm3512 = vweird.f32 %v3506
        %vm3513 = vmor %vm3511, %vm3512
        %v3514 = vsel %vm3513, %v3506, %v3510
        %v3515 = vand.u32 2147483647, %v2520
        %vm3516 = vcmp.eq.f32.partialorder %v3515, 8.507059e+37
        %v3517 = vand.u32 %v2520, 2147483648
        %v3518 = vor.u32 1.1754944e-38, %v3517
        %v3519 = vsel %vm3516, %v3518, %v3514
        %v3520 = vmul.f32 1.0, %v3519
        %v3521 = vrcp.pop %v2521
        %v3522 = vmul.f32 %v2521, %v3521
        %v3523 = vsub.f32 1.0, %v3522
        %v3524 = vmul.f32 %v3521, %v3523
        %v3525 = vadd.f32 %v3521, %v3524
        %vm3526 = vweird.f32 %v2521
        %vm3527 = vweird.f32 %v3521
        %vm3528 = vmor %vm3526, %vm3527
        %v3529 = vsel %vm3528, %v3521, %v3525
        %v3530 = vand.u32 2147483647, %v2521
        %vm3531 = vcmp.eq.f32.partialorder %v3530, 8.507059e+37
        %v3532 = vand.u32 %v2521, 2147483648
        %v3533 = vor.u32 1.1754944e-38, %v3532
        %v3534 = vsel %vm3531, %v3533, %v3529
        %v3535 = vmul.f32 1.0, %v3534
        %v3536 = vrcp.pop %v2522
        %v3537 = vmul.f32 %v2522, %v3536
        %v3538 = vsub.f32 1.0, %v3537
        %v3539 = vmul.f32 %v3536, %v3538
        %v3540 = vadd.f32 %v3536, %v3539
        %vm3541 = vweird.f32 %v2522
        %vm3542 = vweird.f32 %v3536
        %vm3543 = vmor %vm3541, %vm3542
        %v3544 = vsel %vm3543, %v3536, %v3540
        %v3545 = vand.u32 2147483647, %v2522
        %vm3546 = vcmp.eq.f32.partialorder %v3545, 8.507059e+37
        %v3547 = vand.u32 %v2522, 2147483648
        %v3548 = vor.u32 1.1754944e-38, %v3547
        %v3549 = vsel %vm3546, %v3548, %v3544
        %v3550 = vmul.f32 1.0, %v3549
        %v3551 = vrcp.pop %v2523
        %v3552 = vmul.f32 %v2523, %v3551
        %v3553 = vsub.f32 1.0, %v3552
        %v3554 = vmul.f32 %v3551, %v3553
        %v3555 = vadd.f32 %v3551, %v3554
        %vm3556 = vweird.f32 %v2523
        %vm3557 = vweird.f32 %v3551
        %vm3558 = vmor %vm3556, %vm3557
        %v3559 = vsel %vm3558, %v3551, %v3555
        %v3560 = vand.u32 2147483647, %v2523
        %vm3561 = vcmp.eq.f32.partialorder %v3560, 8.507059e+37
        %v3562 = vand.u32 %v2523, 2147483648
        %v3563 = vor.u32 1.1754944e-38, %v3562
        %v3564 = vsel %vm3561, %v3563, %v3559
        %v3565 = vmul.f32 1.0, %v3564
        %v3566 = vrcp.pop %v2524
        %v3567 = vmul.f32 %v2524, %v3566
        %v3568 = vsub.f32 1.0, %v3567
        %v3569 = vmul.f32 %v3566, %v3568
        %v3570 = vadd.f32 %v3566, %v3569
        %vm3571 = vweird.f32 %v2524
        %vm3572 = vweird.f32 %v3566
        %vm3573 = vmor %vm3571, %vm3572
        %v3574 = vsel %vm3573, %v3566, %v3570
        %v3575 = vand.u32 2147483647, %v2524
        %vm3576 = vcmp.eq.f32.partialorder %v3575, 8.507059e+37
        %v3577 = vand.u32 %v2524, 2147483648
        %v3578 = vor.u32 1.1754944e-38, %v3577
        %v3579 = vsel %vm3576, %v3578, %v3574
        %v3580 = vmul.f32 1.0, %v3579
        %v3581 = vrcp.pop %v2525
        %v3582 = vmul.f32 %v2525, %v3581
        %v3583 = vsub.f32 1.0, %v3582
        %v3584 = vmul.f32 %v3581, %v3583
        %v3585 = vadd.f32 %v3581, %v3584
        %vm3586 = vweird.f32 %v2525
        %vm3587 = vweird.f32 %v3581
        %vm3588 = vmor %vm3586, %vm3587
        %v3589 = vsel %vm3588, %v3581, %v3585
        %v3590 = vand.u32 2147483647, %v2525
        %vm3591 = vcmp.eq.f32.partialorder %v3590, 8.507059e+37
        %v3592 = vand.u32 %v2525, 2147483648
        %v3593 = vor.u32 1.1754944e-38, %v3592
        %v3594 = vsel %vm3591, %v3593, %v3589
        %v3595 = vmul.f32 1.0, %v3594
        %v3596 = vrcp.pop %v2526
        %v3597 = vmul.f32 %v2526, %v3596
        %v3598 = vsub.f32 1.0, %v3597
        %v3599 = vmul.f32 %v3596, %v3598
        %v3600 = vadd.f32 %v3596, %v3599
        %vm3601 = vweird.f32 %v2526
        %vm3602 = vweird.f32 %v3596
        %vm3603 = vmor %vm3601, %vm3602
        %v3604 = vsel %vm3603, %v3596, %v3600
        %v3605 = vand.u32 2147483647, %v2526
        %vm3606 = vcmp.eq.f32.partialorder %v3605, 8.507059e+37
        %v3607 = vand.u32 %v2526, 2147483648
        %v3608 = vor.u32 1.1754944e-38, %v3607
        %v3609 = vsel %vm3606, %v3608, %v3604
        %v3610 = vmul.f32 1.0, %v3609
        %v3611 = vrcp.pop %v2527
        %v3612 = vmul.f32 %v2527, %v3611
        %v3613 = vsub.f32 1.0, %v3612
        %v3614 = vmul.f32 %v3611, %v3613
        %v3615 = vadd.f32 %v3611, %v3614
        %vm3616 = vweird.f32 %v2527
        %vm3617 = vweird.f32 %v3611
        %vm3618 = vmor %vm3616, %vm3617
        %v3619 = vsel %vm3618, %v3611, %v3615
        %v3620 = vand.u32 2147483647, %v2527
        %vm3621 = vcmp.eq.f32.partialorder %v3620, 8.507059e+37
        %v3622 = vand.u32 %v2527, 2147483648
        %v3623 = vor.u32 1.1754944e-38, %v3622
        %v3624 = vsel %vm3621, %v3623, %v3619
        %v3625 = vmul.f32 1.0, %v3624
        %v3626 = vrcp.pop %v2528
        %v3627 = vmul.f32 %v2528, %v3626
        %v3628 = vsub.f32 1.0, %v3627
        %v3629 = vmul.f32 %v3626, %v3628
        %v3630 = vadd.f32 %v3626, %v3629
        %vm3631 = vweird.f32 %v2528
        %vm3632 = vweird.f32 %v3626
        %vm3633 = vmor %vm3631, %vm3632
        %v3634 = vsel %vm3633, %v3626, %v3630
        %v3635 = vand.u32 2147483647, %v2528
        %vm3636 = vcmp.eq.f32.partialorder %v3635, 8.507059e+37
        %v3637 = vand.u32 %v2528, 2147483648
        %v3638 = vor.u32 1.1754944e-38, %v3637
        %v3639 = vsel %vm3636, %v3638, %v3634
        %v3640 = vmul.f32 1.0, %v3639
        %v3641 = vrcp.pop %v2529
        %v3642 = vmul.f32 %v2529, %v3641
        %v3643 = vsub.f32 1.0, %v3642
        %v3644 = vmul.f32 %v3641, %v3643
        %v3645 = vadd.f32 %v3641, %v3644
        %vm3646 = vweird.f32 %v2529
        %vm3647 = vweird.f32 %v3641
        %vm3648 = vmor %vm3646, %vm3647
        %v3649 = vsel %vm3648, %v3641, %v3645
        %v3650 = vand.u32 2147483647, %v2529
        %vm3651 = vcmp.eq.f32.partialorder %v3650, 8.507059e+37
        %v3652 = vand.u32 %v2529, 2147483648
        %v3653 = vor.u32 1.1754944e-38, %v3652
        %v3654 = vsel %vm3651, %v3653, %v3649
        %v3655 = vmul.f32 1.0, %v3654
        %v3656 = vrcp.pop %v2530
        %v3657 = vmul.f32 %v2530, %v3656
        %v3658 = vsub.f32 1.0, %v3657
        %v3659 = vmul.f32 %v3656, %v3658
        %v3660 = vadd.f32 %v3656, %v3659
        %vm3661 = vweird.f32 %v2530
        %vm3662 = vweird.f32 %v3656
        %vm3663 = vmor %vm3661, %vm3662
        %v3664 = vsel %vm3663, %v3656, %v3660
        %v3665 = vand.u32 2147483647, %v2530
        %vm3666 = vcmp.eq.f32.partialorder %v3665, 8.507059e+37
        %v3667 = vand.u32 %v2530, 2147483648
        %v3668 = vor.u32 1.1754944e-38, %v3667
        %v3669 = vsel %vm3666, %v3668, %v3664
        %v3670 = vmul.f32 1.0, %v3669
        %v3671 = vrcp.pop %v2531
        %v3672 = vmul.f32 %v2531, %v3671
        %v3673 = vsub.f32 1.0, %v3672
        %v3674 = vmul.f32 %v3671, %v3673
        %v3675 = vadd.f32 %v3671, %v3674
        %vm3676 = vweird.f32 %v2531
        %vm3677 = vweird.f32 %v3671
        %vm3678 = vmor %vm3676, %vm3677
        %v3679 = vsel %vm3678, %v3671, %v3675
        %v3680 = vand.u32 2147483647, %v2531
        %vm3681 = vcmp.eq.f32.partialorder %v3680, 8.507059e+37
        %v3682 = vand.u32 %v2531, 2147483648
        %v3683 = vor.u32 1.1754944e-38, %v3682
        %v3684 = vsel %vm3681, %v3683, %v3679
        %v3685 = vmul.f32 1.0, %v3684
        %v3686 = vrcp.pop %v2532
        %v3687 = vmul.f32 %v2532, %v3686
        %v3688 = vsub.f32 1.0, %v3687
        %v3689 = vmul.f32 %v3686, %v3688
        %v3690 = vadd.f32 %v3686, %v3689
        %vm3691 = vweird.f32 %v2532
        %vm3692 = vweird.f32 %v3686
        %vm3693 = vmor %vm3691, %vm3692
        %v3694 = vsel %vm3693, %v3686, %v3690
        %v3695 = vand.u32 2147483647, %v2532
        %vm3696 = vcmp.eq.f32.partialorder %v3695, 8.507059e+37
        %v3697 = vand.u32 %v2532, 2147483648
        %v3698 = vor.u32 1.1754944e-38, %v3697
        %v3699 = vsel %vm3696, %v3698, %v3694
        %v3700 = vmul.f32 1.0, %v3699
        %v3701 = vrcp.pop %v2533
        %v3702 = vmul.f32 %v2533, %v3701
        %v3703 = vsub.f32 1.0, %v3702
        %v3704 = vmul.f32 %v3701, %v3703
        %v3705 = vadd.f32 %v3701, %v3704
        %vm3706 = vweird.f32 %v2533
        %vm3707 = vweird.f32 %v3701
        %vm3708 = vmor %vm3706, %vm3707
        %v3709 = vsel %vm3708, %v3701, %v3705
        %v3710 = vand.u32 2147483647, %v2533
        %vm3711 = vcmp.eq.f32.partialorder %v3710, 8.507059e+37
        %v3712 = vand.u32 %v2533, 2147483648
        %v3713 = vor.u32 1.1754944e-38, %v3712
        %v3714 = vsel %vm3711, %v3713, %v3709
        %v3715 = vmul.f32 1.0, %v3714
        %v3716 = vrcp.pop %v2534
        %v3717 = vmul.f32 %v2534, %v3716
        %v3718 = vsub.f32 1.0, %v3717
        %v3719 = vmul.f32 %v3716, %v3718
        %v3720 = vadd.f32 %v3716, %v3719
        %vm3721 = vweird.f32 %v2534
        %vm3722 = vweird.f32 %v3716
        %vm3723 = vmor %vm3721, %vm3722
        %v3724 = vsel %vm3723, %v3716, %v3720
        %v3725 = vand.u32 2147483647, %v2534
        %vm3726 = vcmp.eq.f32.partialorder %v3725, 8.507059e+37
        %v3727 = vand.u32 %v2534, 2147483648
        %v3728 = vor.u32 1.1754944e-38, %v3727
        %v3729 = vsel %vm3726, %v3728, %v3724
        %v3730 = vmul.f32 1.0, %v3729
        %v3731 = vrcp.pop %v2535
        %v3732 = vmul.f32 %v2535, %v3731
        %v3733 = vsub.f32 1.0, %v3732
        %v3734 = vmul.f32 %v3731, %v3733
        %v3735 = vadd.f32 %v3731, %v3734
        %vm3736 = vweird.f32 %v2535
        %vm3737 = vweird.f32 %v3731
        %vm3738 = vmor %vm3736, %vm3737
        %v3739 = vsel %vm3738, %v3731, %v3735
        %v3740 = vand.u32 2147483647, %v2535
        %vm3741 = vcmp.eq.f32.partialorder %v3740, 8.507059e+37
        %v3742 = vand.u32 %v2535, 2147483648
        %v3743 = vor.u32 1.1754944e-38, %v3742
        %v3744 = vsel %vm3741, %v3743, %v3739
        %v3745 = vmul.f32 1.0, %v3744
        %v3746 = vrcp.pop %v2536
        %v3747 = vmul.f32 %v2536, %v3746
        %v3748 = vsub.f32 1.0, %v3747
        %v3749 = vmul.f32 %v3746, %v3748
        %v3750 = vadd.f32 %v3746, %v3749
        %vm3751 = vweird.f32 %v2536
        %vm3752 = vweird.f32 %v3746
        %vm3753 = vmor %vm3751, %vm3752
        %v3754 = vsel %vm3753, %v3746, %v3750
        %v3755 = vand.u32 2147483647, %v2536
        %vm3756 = vcmp.eq.f32.partialorder %v3755, 8.507059e+37
        %v3757 = vand.u32 %v2536, 2147483648
        %v3758 = vor.u32 1.1754944e-38, %v3757
        %v3759 = vsel %vm3756, %v3758, %v3754
        %v3760 = vmul.f32 1.0, %v3759
        %v3761 = vrcp.pop %v2537
        %v3762 = vmul.f32 %v2537, %v3761
        %v3763 = vsub.f32 1.0, %v3762
        %v3764 = vmul.f32 %v3761, %v3763
        %v3765 = vadd.f32 %v3761, %v3764
        %vm3766 = vweird.f32 %v2537
        %vm3767 = vweird.f32 %v3761
        %vm3768 = vmor %vm3766, %vm3767
        %v3769 = vsel %vm3768, %v3761, %v3765
        %v3770 = vand.u32 2147483647, %v2537
        %vm3771 = vcmp.eq.f32.partialorder %v3770, 8.507059e+37
        %v3772 = vand.u32 %v2537, 2147483648
        %v3773 = vor.u32 1.1754944e-38, %v3772
        %v3774 = vsel %vm3771, %v3773, %v3769
        %v3775 = vmul.f32 1.0, %v3774
        %v3776 = vrcp.pop %v2538
        %v3777 = vmul.f32 %v2538, %v3776
        %v3778 = vsub.f32 1.0, %v3777
        %v3779 = vmul.f32 %v3776, %v3778
        %v3780 = vadd.f32 %v3776, %v3779
        %vm3781 = vweird.f32 %v2538
        %vm3782 = vweird.f32 %v3776
        %vm3783 = vmor %vm3781, %vm3782
        %v3784 = vsel %vm3783, %v3776, %v3780
        %v3785 = vand.u32 2147483647, %v2538
        %vm3786 = vcmp.eq.f32.partialorder %v3785, 8.507059e+37
        %v3787 = vand.u32 %v2538, 2147483648
        %v3788 = vor.u32 1.1754944e-38, %v3787
        %v3789 = vsel %vm3786, %v3788, %v3784
        %v3790 = vmul.f32 1.0, %v3789
        %v3791 = vrcp.pop %v2539
        %v3792 = vmul.f32 %v2539, %v3791
        %v3793 = vsub.f32 1.0, %v3792
        %v3794 = vmul.f32 %v3791, %v3793
        %v3795 = vadd.f32 %v3791, %v3794
        %vm3796 = vweird.f32 %v2539
        %vm3797 = vweird.f32 %v3791
        %vm3798 = vmor %vm3796, %vm3797
        %v3799 = vsel %vm3798, %v3791, %v3795
        %v3800 = vand.u32 2147483647, %v2539
        %vm3801 = vcmp.eq.f32.partialorder %v3800, 8.507059e+37
        %v3802 = vand.u32 %v2539, 2147483648
        %v3803 = vor.u32 1.1754944e-38, %v3802
        %v3804 = vsel %vm3801, %v3803, %v3799
        %v3805 = vmul.f32 1.0, %v3804
        %v3806 = vrcp.pop %v2540
        %v3807 = vmul.f32 %v2540, %v3806
        %v3808 = vsub.f32 1.0, %v3807
        %v3809 = vmul.f32 %v3806, %v3808
        %v3810 = vadd.f32 %v3806, %v3809
        %vm3811 = vweird.f32 %v2540
        %vm3812 = vweird.f32 %v3806
        %vm3813 = vmor %vm3811, %vm3812
        %v3814 = vsel %vm3813, %v3806, %v3810
        %v3815 = vand.u32 2147483647, %v2540
        %vm3816 = vcmp.eq.f32.partialorder %v3815, 8.507059e+37
        %v3817 = vand.u32 %v2540, 2147483648
        %v3818 = vor.u32 1.1754944e-38, %v3817
        %v3819 = vsel %vm3816, %v3818, %v3814
        %v3820 = vmul.f32 1.0, %v3819
        %v3821 = vrcp.pop %v2541
        %v3822 = vmul.f32 %v2541, %v3821
        %v3823 = vsub.f32 1.0, %v3822
        %v3824 = vmul.f32 %v3821, %v3823
        %v3825 = vadd.f32 %v3821, %v3824
        %vm3826 = vweird.f32 %v2541
        %vm3827 = vweird.f32 %v3821
        %vm3828 = vmor %vm3826, %vm3827
        %v3829 = vsel %vm3828, %v3821, %v3825
        %v3830 = vand.u32 2147483647, %v2541
        %vm3831 = vcmp.eq.f32.partialorder %v3830, 8.507059e+37
        %v3832 = vand.u32 %v2541, 2147483648
        %v3833 = vor.u32 1.1754944e-38, %v3832
        %v3834 = vsel %vm3831, %v3833, %v3829
        %v3835 = vmul.f32 1.0, %v3834
        %v3836 = vrcp.pop %v2542
        %v3837 = vmul.f32 %v2542, %v3836
        %v3838 = vsub.f32 1.0, %v3837
        %v3839 = vmul.f32 %v3836, %v3838
        %v3840 = vadd.f32 %v3836, %v3839
        %vm3841 = vweird.f32 %v2542
        %vm3842 = vweird.f32 %v3836
        %vm3843 = vmor %vm3841, %vm3842
        %v3844 = vsel %vm3843, %v3836, %v3840
        %v3845 = vand.u32 2147483647, %v2542
        %vm3846 = vcmp.eq.f32.partialorder %v3845, 8.507059e+37
        %v3847 = vand.u32 %v2542, 2147483648
        %v3848 = vor.u32 1.1754944e-38, %v3847
        %v3849 = vsel %vm3846, %v3848, %v3844
        %v3850 = vmul.f32 1.0, %v3849
        %v3851 = vrcp.pop %v2543
        %v3852 = vmul.f32 %v2543, %v3851
        %v3853 = vsub.f32 1.0, %v3852
        %v3854 = vmul.f32 %v3851, %v3853
        %v3855 = vadd.f32 %v3851, %v3854
        %vm3856 = vweird.f32 %v2543
        %vm3857 = vweird.f32 %v3851
        %vm3858 = vmor %vm3856, %vm3857
        %v3859 = vsel %vm3858, %v3851, %v3855
        %v3860 = vand.u32 2147483647, %v2543
        %vm3861 = vcmp.eq.f32.partialorder %v3860, 8.507059e+37
        %v3862 = vand.u32 %v2543, 2147483648
        %v3863 = vor.u32 1.1754944e-38, %v3862
        %v3864 = vsel %vm3861, %v3863, %v3859
        %v3865 = vmul.f32 1.0, %v3864
        %v3866 = vrcp.pop %v2544
        %v3867 = vmul.f32 %v2544, %v3866
        %v3868 = vsub.f32 1.0, %v3867
        %v3869 = vmul.f32 %v3866, %v3868
        %v3870 = vadd.f32 %v3866, %v3869
        %vm3871 = vweird.f32 %v2544
        %vm3872 = vweird.f32 %v3866
        %vm3873 = vmor %vm3871, %vm3872
        %v3874 = vsel %vm3873, %v3866, %v3870
        %v3875 = vand.u32 2147483647, %v2544
        %vm3876 = vcmp.eq.f32.partialorder %v3875, 8.507059e+37
        %v3877 = vand.u32 %v2544, 2147483648
        %v3878 = vor.u32 1.1754944e-38, %v3877
        %v3879 = vsel %vm3876, %v3878, %v3874
        %v3880 = vmul.f32 1.0, %v3879
        %v3881 = vrcp.pop %v2545
        %v3882 = vmul.f32 %v2545, %v3881
        %v3883 = vsub.f32 1.0, %v3882
        %v3884 = vmul.f32 %v3881, %v3883
        %v3885 = vadd.f32 %v3881, %v3884
        %vm3886 = vweird.f32 %v2545
        %vm3887 = vweird.f32 %v3881
        %vm3888 = vmor %vm3886, %vm3887
        %v3889 = vsel %vm3888, %v3881, %v3885
        %v3890 = vand.u32 2147483647, %v2545
        %vm3891 = vcmp.eq.f32.partialorder %v3890, 8.507059e+37
        %v3892 = vand.u32 %v2545, 2147483648
        %v3893 = vor.u32 1.1754944e-38, %v3892
        %v3894 = vsel %vm3891, %v3893, %v3889
        %v3895 = vmul.f32 1.0, %v3894
        %v3896 = vrcp.pop %v2546
        %v3897 = vmul.f32 %v2546, %v3896
        %v3898 = vsub.f32 1.0, %v3897
        %v3899 = vmul.f32 %v3896, %v3898
        %v3900 = vadd.f32 %v3896, %v3899
        %vm3901 = vweird.f32 %v2546
        %vm3902 = vweird.f32 %v3896
        %vm3903 = vmor %vm3901, %vm3902
        %v3904 = vsel %vm3903, %v3896, %v3900
        %v3905 = vand.u32 2147483647, %v2546
        %vm3906 = vcmp.eq.f32.partialorder %v3905, 8.507059e+37
        %v3907 = vand.u32 %v2546, 2147483648
        %v3908 = vor.u32 1.1754944e-38, %v3907
        %v3909 = vsel %vm3906, %v3908, %v3904
        %v3910 = vmul.f32 1.0, %v3909
        %v3911 = vrcp.pop %v2547
        %v3912 = vmul.f32 %v2547, %v3911
        %v3913 = vsub.f32 1.0, %v3912
        %v3914 = vmul.f32 %v3911, %v3913
        %v3915 = vadd.f32 %v3911, %v3914
        %vm3916 = vweird.f32 %v2547
        %vm3917 = vweird.f32 %v3911
        %vm3918 = vmor %vm3916, %vm3917
        %v3919 = vsel %vm3918, %v3911, %v3915
        %v3920 = vand.u32 2147483647, %v2547
        %vm3921 = vcmp.eq.f32.partialorder %v3920, 8.507059e+37
        %v3922 = vand.u32 %v2547, 2147483648
        %v3923 = vor.u32 1.1754944e-38, %v3922
        %v3924 = vsel %vm3921, %v3923, %v3919
        %v3925 = vmul.f32 1.0, %v3924
        %v3926 = vrcp.pop %v2548
        %v3927 = vmul.f32 %v2548, %v3926
        %v3928 = vsub.f32 1.0, %v3927
        %v3929 = vmul.f32 %v3926, %v3928
        %v3930 = vadd.f32 %v3926, %v3929
        %vm3931 = vweird.f32 %v2548
        %vm3932 = vweird.f32 %v3926
        %vm3933 = vmor %vm3931, %vm3932
        %v3934 = vsel %vm3933, %v3926, %v3930
        %v3935 = vand.u32 2147483647, %v2548
        %vm3936 = vcmp.eq.f32.partialorder %v3935, 8.507059e+37
        %v3937 = vand.u32 %v2548, 2147483648
        %v3938 = vor.u32 1.1754944e-38, %v3937
        %v3939 = vsel %vm3936, %v3938, %v3934
        %v3940 = vmul.f32 1.0, %v3939
        %v3941 = vrcp.pop %v2549
        %v3942 = vmul.f32 %v2549, %v3941
        %v3943 = vsub.f32 1.0, %v3942
        %v3944 = vmul.f32 %v3941, %v3943
        %v3945 = vadd.f32 %v3941, %v3944
        %vm3946 = vweird.f32 %v2549
        %vm3947 = vweird.f32 %v3941
        %vm3948 = vmor %vm3946, %vm3947
        %v3949 = vsel %vm3948, %v3941, %v3945
        %v3950 = vand.u32 2147483647, %v2549
        %vm3951 = vcmp.eq.f32.partialorder %v3950, 8.507059e+37
        %v3952 = vand.u32 %v2549, 2147483648
        %v3953 = vor.u32 1.1754944e-38, %v3952
        %v3954 = vsel %vm3951, %v3953, %v3949
        %v3955 = vmul.f32 1.0, %v3954
        %v3956 = vrcp.pop %v2550
        %v3957 = vmul.f32 %v2550, %v3956
        %v3958 = vsub.f32 1.0, %v3957
        %v3959 = vmul.f32 %v3956, %v3958
        %v3960 = vadd.f32 %v3956, %v3959
        %vm3961 = vweird.f32 %v2550
        %vm3962 = vweird.f32 %v3956
        %vm3963 = vmor %vm3961, %vm3962
        %v3964 = vsel %vm3963, %v3956, %v3960
        %v3965 = vand.u32 2147483647, %v2550
        %vm3966 = vcmp.eq.f32.partialorder %v3965, 8.507059e+37
        %v3967 = vand.u32 %v2550, 2147483648
        %v3968 = vor.u32 1.1754944e-38, %v3967
        %v3969 = vsel %vm3966, %v3968, %v3964
        %v3970 = vmul.f32 1.0, %v3969
        %v3971 = vrcp.pop %v2551
        %v3972 = vmul.f32 %v2551, %v3971
        %v3973 = vsub.f32 1.0, %v3972
        %v3974 = vmul.f32 %v3971, %v3973
        %v3975 = vadd.f32 %v3971, %v3974
        %vm3976 = vweird.f32 %v2551
        %vm3977 = vweird.f32 %v3971
        %vm3978 = vmor %vm3976, %vm3977
        %v3979 = vsel %vm3978, %v3971, %v3975
        %v3980 = vand.u32 2147483647, %v2551
        %vm3981 = vcmp.eq.f32.partialorder %v3980, 8.507059e+37
        %v3982 = vand.u32 %v2551, 2147483648
        %v3983 = vor.u32 1.1754944e-38, %v3982
        %v3984 = vsel %vm3981, %v3983, %v3979
        %v3985 = vmul.f32 1.0, %v3984
        %v3986 = vrcp.pop %v2552
        %v3987 = vmul.f32 %v2552, %v3986
        %v3988 = vsub.f32 1.0, %v3987
        %v3989 = vmul.f32 %v3986, %v3988
        %v3990 = vadd.f32 %v3986, %v3989
        %vm3991 = vweird.f32 %v2552
        %vm3992 = vweird.f32 %v3986
        %vm3993 = vmor %vm3991, %vm3992
        %v3994 = vsel %vm3993, %v3986, %v3990
        %v3995 = vand.u32 2147483647, %v2552
        %vm3996 = vcmp.eq.f32.partialorder %v3995, 8.507059e+37
        %v3997 = vand.u32 %v2552, 2147483648
        %v3998 = vor.u32 1.1754944e-38, %v3997
        %v3999 = vsel %vm3996, %v3998, %v3994
        %v4000 = vmul.f32 1.0, %v3999
        %v4001 = vrcp.pop %v2553
        %v4002 = vmul.f32 %v2553, %v4001
        %v4003 = vsub.f32 1.0, %v4002
        %v4004 = vmul.f32 %v4001, %v4003
        %v4005 = vadd.f32 %v4001, %v4004
        %vm4006 = vweird.f32 %v2553
        %vm4007 = vweird.f32 %v4001
        %vm4008 = vmor %vm4006, %vm4007
        %v4009 = vsel %vm4008, %v4001, %v4005
        %v4010 = vand.u32 2147483647, %v2553
        %vm4011 = vcmp.eq.f32.partialorder %v4010, 8.507059e+37
        %v4012 = vand.u32 %v2553, 2147483648
        %v4013 = vor.u32 1.1754944e-38, %v4012
        %v4014 = vsel %vm4011, %v4013, %v4009
        %v4015 = vmul.f32 1.0, %v4014
        %v4016 = vrcp.pop %v2554
        %v4017 = vmul.f32 %v2554, %v4016
        %v4018 = vsub.f32 1.0, %v4017
        %v4019 = vmul.f32 %v4016, %v4018
        %v4020 = vadd.f32 %v4016, %v4019
        %vm4021 = vweird.f32 %v2554
        %vm4022 = vweird.f32 %v4016
        %vm4023 = vmor %vm4021, %vm4022
        %v4024 = vsel %vm4023, %v4016, %v4020
        %v4025 = vand.u32 2147483647, %v2554
        %vm4026 = vcmp.eq.f32.partialorder %v4025, 8.507059e+37
        %v4027 = vand.u32 %v2554, 2147483648
        %v4028 = vor.u32 1.1754944e-38, %v4027
        %v4029 = vsel %vm4026, %v4028, %v4024
        %v4030 = vmul.f32 1.0, %v4029
        %v4031 = vrcp.pop %v2555
        %v4032 = vmul.f32 %v2555, %v4031
        %v4033 = vsub.f32 1.0, %v4032
        %v4034 = vmul.f32 %v4031, %v4033
        %v4035 = vadd.f32 %v4031, %v4034
        %vm4036 = vweird.f32 %v2555
        %vm4037 = vweird.f32 %v4031
        %vm4038 = vmor %vm4036, %vm4037
        %v4039 = vsel %vm4038, %v4031, %v4035
        %v4040 = vand.u32 2147483647, %v2555
        %vm4041 = vcmp.eq.f32.partialorder %v4040, 8.507059e+37
        %v4042 = vand.u32 %v2555, 2147483648
        %v4043 = vor.u32 1.1754944e-38, %v4042
        %v4044 = vsel %vm4041, %v4043, %v4039
        %v4045 = vmul.f32 1.0, %v4044
        %v4046 = vrcp.pop %v2556
        %v4047 = vmul.f32 %v2556, %v4046
        %v4048 = vsub.f32 1.0, %v4047
        %v4049 = vmul.f32 %v4046, %v4048
        %v4050 = vadd.f32 %v4046, %v4049
        %vm4051 = vweird.f32 %v2556
        %vm4052 = vweird.f32 %v4046
        %vm4053 = vmor %vm4051, %vm4052
        %v4054 = vsel %vm4053, %v4046, %v4050
        %v4055 = vand.u32 2147483647, %v2556
        %vm4056 = vcmp.eq.f32.partialorder %v4055, 8.507059e+37
        %v4057 = vand.u32 %v2556, 2147483648
        %v4058 = vor.u32 1.1754944e-38, %v4057
        %v4059 = vsel %vm4056, %v4058, %v4054
        %v4060 = vmul.f32 1.0, %v4059
        %v4061 = vrcp.pop %v2557
        %v4062 = vmul.f32 %v2557, %v4061
        %v4063 = vsub.f32 1.0, %v4062
        %v4064 = vmul.f32 %v4061, %v4063
        %v4065 = vadd.f32 %v4061, %v4064
        %vm4066 = vweird.f32 %v2557
        %vm4067 = vweird.f32 %v4061
        %vm4068 = vmor %vm4066, %vm4067
        %v4069 = vsel %vm4068, %v4061, %v4065
        %v4070 = vand.u32 2147483647, %v2557
        %vm4071 = vcmp.eq.f32.partialorder %v4070, 8.507059e+37
        %v4072 = vand.u32 %v2557, 2147483648
        %v4073 = vor.u32 1.1754944e-38, %v4072
        %v4074 = vsel %vm4071, %v4073, %v4069
        %v4075 = vmul.f32 1.0, %v4074
        %v4076 = vrcp.pop %v2558
        %v4077 = vmul.f32 %v2558, %v4076
        %v4078 = vsub.f32 1.0, %v4077
        %v4079 = vmul.f32 %v4076, %v4078
        %v4080 = vadd.f32 %v4076, %v4079
        %vm4081 = vweird.f32 %v2558
        %vm4082 = vweird.f32 %v4076
        %vm4083 = vmor %vm4081, %vm4082
        %v4084 = vsel %vm4083, %v4076, %v4080
        %v4085 = vand.u32 2147483647, %v2558
        %vm4086 = vcmp.eq.f32.partialorder %v4085, 8.507059e+37
        %v4087 = vand.u32 %v2558, 2147483648
        %v4088 = vor.u32 1.1754944e-38, %v4087
        %v4089 = vsel %vm4086, %v4088, %v4084
        %v4090 = vmul.f32 1.0, %v4089
        %v4091 = vrcp.pop %v2559
        %v4092 = vmul.f32 %v2559, %v4091
        %v4093 = vsub.f32 1.0, %v4092
        %v4094 = vmul.f32 %v4091, %v4093
        %v4095 = vadd.f32 %v4091, %v4094
        %vm4096 = vweird.f32 %v2559
        %vm4097 = vweird.f32 %v4091
        %vm4098 = vmor %vm4096, %vm4097
        %v4099 = vsel %vm4098, %v4091, %v4095
        %v4100 = vand.u32 2147483647, %v2559
        %vm4101 = vcmp.eq.f32.partialorder %v4100, 8.507059e+37
        %v4102 = vand.u32 %v2559, 2147483648
        %v4103 = vor.u32 1.1754944e-38, %v4102
        %v4104 = vsel %vm4101, %v4103, %v4099
        %v4105 = vmul.f32 1.0, %v4104
        %v4106 = vrcp.pop %v2560
        %v4107 = vmul.f32 %v2560, %v4106
        %v4108 = vsub.f32 1.0, %v4107
        %v4109 = vmul.f32 %v4106, %v4108
        %v4110 = vadd.f32 %v4106, %v4109
        %vm4111 = vweird.f32 %v2560
        %vm4112 = vweird.f32 %v4106
        %vm4113 = vmor %vm4111, %vm4112
        %v4114 = vsel %vm4113, %v4106, %v4110
        %v4115 = vand.u32 2147483647, %v2560
        %vm4116 = vcmp.eq.f32.partialorder %v4115, 8.507059e+37
        %v4117 = vand.u32 %v2560, 2147483648
        %v4118 = vor.u32 1.1754944e-38, %v4117
        %v4119 = vsel %vm4116, %v4118, %v4114
        %v4120 = vmul.f32 1.0, %v4119
        %v4121 = vrcp.pop %v2561
        %v4122 = vmul.f32 %v2561, %v4121
        %v4123 = vsub.f32 1.0, %v4122
        %v4124 = vmul.f32 %v4121, %v4123
        %v4125 = vadd.f32 %v4121, %v4124
        %vm4126 = vweird.f32 %v2561
        %vm4127 = vweird.f32 %v4121
        %vm4128 = vmor %vm4126, %vm4127
        %v4129 = vsel %vm4128, %v4121, %v4125
        %v4130 = vand.u32 2147483647, %v2561
        %vm4131 = vcmp.eq.f32.partialorder %v4130, 8.507059e+37
        %v4132 = vand.u32 %v2561, 2147483648
        %v4133 = vor.u32 1.1754944e-38, %v4132
        %v4134 = vsel %vm4131, %v4133, %v4129
        %v4135 = vmul.f32 1.0, %v4134
        %v4136 = vrcp.pop %v2562
        %v4137 = vmul.f32 %v2562, %v4136
        %v4138 = vsub.f32 1.0, %v4137
        %v4139 = vmul.f32 %v4136, %v4138
        %v4140 = vadd.f32 %v4136, %v4139
        %vm4141 = vweird.f32 %v2562
        %vm4142 = vweird.f32 %v4136
        %vm4143 = vmor %vm4141, %vm4142
        %v4144 = vsel %vm4143, %v4136, %v4140
        %v4145 = vand.u32 2147483647, %v2562
        %vm4146 = vcmp.eq.f32.partialorder %v4145, 8.507059e+37
        %v4147 = vand.u32 %v2562, 2147483648
        %v4148 = vor.u32 1.1754944e-38, %v4147
        %v4149 = vsel %vm4146, %v4148, %v4144
        %v4150 = vmul.f32 1.0, %v4149
        %v4151 = vrcp.pop %v2563
        %v4152 = vmul.f32 %v2563, %v4151
        %v4153 = vsub.f32 1.0, %v4152
        %v4154 = vmul.f32 %v4151, %v4153
        %v4155 = vadd.f32 %v4151, %v4154
        %vm4156 = vweird.f32 %v2563
        %vm4157 = vweird.f32 %v4151
        %vm4158 = vmor %vm4156, %vm4157
        %v4159 = vsel %vm4158, %v4151, %v4155
        %v4160 = vand.u32 2147483647, %v2563
        %vm4161 = vcmp.eq.f32.partialorder %v4160, 8.507059e+37
        %v4162 = vand.u32 %v2563, 2147483648
        %v4163 = vor.u32 1.1754944e-38, %v4162
        %v4164 = vsel %vm4161, %v4163, %v4159
        %v4165 = vmul.f32 1.0, %v4164
        %v4166 = vrcp.pop %v2564
        %v4167 = vmul.f32 %v2564, %v4166
        %v4168 = vsub.f32 1.0, %v4167
        %v4169 = vmul.f32 %v4166, %v4168
        %v4170 = vadd.f32 %v4166, %v4169
        %vm4171 = vweird.f32 %v2564
        %vm4172 = vweird.f32 %v4166
        %vm4173 = vmor %vm4171, %vm4172
        %v4174 = vsel %vm4173, %v4166, %v4170
        %v4175 = vand.u32 2147483647, %v2564
        %vm4176 = vcmp.eq.f32.partialorder %v4175, 8.507059e+37
        %v4177 = vand.u32 %v2564, 2147483648
        %v4178 = vor.u32 1.1754944e-38, %v4177
        %v4179 = vsel %vm4176, %v4178, %v4174
        %v4180 = vmul.f32 1.0, %v4179
        %v4181 = vrcp.pop %v2565
        %v4182 = vmul.f32 %v2565, %v4181
        %v4183 = vsub.f32 1.0, %v4182
        %v4184 = vmul.f32 %v4181, %v4183
        %v4185 = vadd.f32 %v4181, %v4184
        %vm4186 = vweird.f32 %v2565
        %vm4187 = vweird.f32 %v4181
        %vm4188 = vmor %vm4186, %vm4187
        %v4189 = vsel %vm4188, %v4181, %v4185
        %v4190 = vand.u32 2147483647, %v2565
        %vm4191 = vcmp.eq.f32.partialorder %v4190, 8.507059e+37
        %v4192 = vand.u32 %v2565, 2147483648
        %v4193 = vor.u32 1.1754944e-38, %v4192
        %v4194 = vsel %vm4191, %v4193, %v4189
        %v4195 = vmul.f32 1.0, %v4194
        %v4196 = vrcp.pop %v2566
        %v4197 = vmul.f32 %v2566, %v4196
        %v4198 = vsub.f32 1.0, %v4197
        %v4199 = vmul.f32 %v4196, %v4198
        %v4200 = vadd.f32 %v4196, %v4199
        %vm4201 = vweird.f32 %v2566
        %vm4202 = vweird.f32 %v4196
        %vm4203 = vmor %vm4201, %vm4202
        %v4204 = vsel %vm4203, %v4196, %v4200
        %v4205 = vand.u32 2147483647, %v2566
        %vm4206 = vcmp.eq.f32.partialorder %v4205, 8.507059e+37
        %v4207 = vand.u32 %v2566, 2147483648
        %v4208 = vor.u32 1.1754944e-38, %v4207
        %v4209 = vsel %vm4206, %v4208, %v4204
        %v4210 = vmul.f32 1.0, %v4209
        %v4211 = vrcp.pop %v2567
        %v4212 = vmul.f32 %v2567, %v4211
        %v4213 = vsub.f32 1.0, %v4212
        %v4214 = vmul.f32 %v4211, %v4213
        %v4215 = vadd.f32 %v4211, %v4214
        %vm4216 = vweird.f32 %v2567
        %vm4217 = vweird.f32 %v4211
        %vm4218 = vmor %vm4216, %vm4217
        %v4219 = vsel %vm4218, %v4211, %v4215
        %v4220 = vand.u32 2147483647, %v2567
        %vm4221 = vcmp.eq.f32.partialorder %v4220, 8.507059e+37
        %v4222 = vand.u32 %v2567, 2147483648
        %v4223 = vor.u32 1.1754944e-38, %v4222
        %v4224 = vsel %vm4221, %v4223, %v4219
        %v4225 = vmul.f32 1.0, %v4224
        %v4226 = vrcp.pop %v2568
        %v4227 = vmul.f32 %v2568, %v4226
        %v4228 = vsub.f32 1.0, %v4227
        %v4229 = vmul.f32 %v4226, %v4228
        %v4230 = vadd.f32 %v4226, %v4229
        %vm4231 = vweird.f32 %v2568
        %vm4232 = vweird.f32 %v4226
        %vm4233 = vmor %vm4231, %vm4232
        %v4234 = vsel %vm4233, %v4226, %v4230
        %v4235 = vand.u32 2147483647, %v2568
        %vm4236 = vcmp.eq.f32.partialorder %v4235, 8.507059e+37
        %v4237 = vand.u32 %v2568, 2147483648
        %v4238 = vor.u32 1.1754944e-38, %v4237
        %v4239 = vsel %vm4236, %v4238, %v4234
        %v4240 = vmul.f32 1.0, %v4239
        %v4241 = vrcp.pop %v2569
        %v4242 = vmul.f32 %v2569, %v4241
        %v4243 = vsub.f32 1.0, %v4242
        %v4244 = vmul.f32 %v4241, %v4243
        %v4245 = vadd.f32 %v4241, %v4244
        %vm4246 = vweird.f32 %v2569
        %vm4247 = vweird.f32 %v4241
        %vm4248 = vmor %vm4246, %vm4247
        %v4249 = vsel %vm4248, %v4241, %v4245
        %v4250 = vand.u32 2147483647, %v2569
        %vm4251 = vcmp.eq.f32.partialorder %v4250, 8.507059e+37
        %v4252 = vand.u32 %v2569, 2147483648
        %v4253 = vor.u32 1.1754944e-38, %v4252
        %v4254 = vsel %vm4251, %v4253, %v4249
        %v4255 = vmul.f32 1.0, %v4254
        %v4256 = vrcp.pop %v2570
        %v4257 = vmul.f32 %v2570, %v4256
        %v4258 = vsub.f32 1.0, %v4257
        %v4259 = vmul.f32 %v4256, %v4258
        %v4260 = vadd.f32 %v4256, %v4259
        %vm4261 = vweird.f32 %v2570
        %vm4262 = vweird.f32 %v4256
        %vm4263 = vmor %vm4261, %vm4262
        %v4264 = vsel %vm4263, %v4256, %v4260
        %v4265 = vand.u32 2147483647, %v2570
        %vm4266 = vcmp.eq.f32.partialorder %v4265, 8.507059e+37
        %v4267 = vand.u32 %v2570, 2147483648
        %v4268 = vor.u32 1.1754944e-38, %v4267
        %v4269 = vsel %vm4266, %v4268, %v4264
        %v4270 = vmul.f32 1.0, %v4269
        %v4271 = vrcp.pop %v2571
        %v4272 = vmul.f32 %v2571, %v4271
        %v4273 = vsub.f32 1.0, %v4272
        %v4274 = vmul.f32 %v4271, %v4273
        %v4275 = vadd.f32 %v4271, %v4274
        %vm4276 = vweird.f32 %v2571
        %vm4277 = vweird.f32 %v4271
        %vm4278 = vmor %vm4276, %vm4277
        %v4279 = vsel %vm4278, %v4271, %v4275
        %v4280 = vand.u32 2147483647, %v2571
        %vm4281 = vcmp.eq.f32.partialorder %v4280, 8.507059e+37
        %v4282 = vand.u32 %v2571, 2147483648
        %v4283 = vor.u32 1.1754944e-38, %v4282
        %v4284 = vsel %vm4281, %v4283, %v4279
        %v4285 = vmul.f32 1.0, %v4284
        %v4286 = vrcp.pop %v2572
        %v4287 = vmul.f32 %v2572, %v4286
        %v4288 = vsub.f32 1.0, %v4287
        %v4289 = vmul.f32 %v4286, %v4288
        %v4290 = vadd.f32 %v4286, %v4289
        %vm4291 = vweird.f32 %v2572
        %vm4292 = vweird.f32 %v4286
        %vm4293 = vmor %vm4291, %vm4292
        %v4294 = vsel %vm4293, %v4286, %v4290
        %v4295 = vand.u32 2147483647, %v2572
        %vm4296 = vcmp.eq.f32.partialorder %v4295, 8.507059e+37
        %v4297 = vand.u32 %v2572, 2147483648
        %v4298 = vor.u32 1.1754944e-38, %v4297
        %v4299 = vsel %vm4296, %v4298, %v4294
        %v4300 = vmul.f32 1.0, %v4299
        %v4301 = vrcp.pop %v2573
        %v4302 = vmul.f32 %v2573, %v4301
        %v4303 = vsub.f32 1.0, %v4302
        %v4304 = vmul.f32 %v4301, %v4303
        %v4305 = vadd.f32 %v4301, %v4304
        %vm4306 = vweird.f32 %v2573
        %vm4307 = vweird.f32 %v4301
        %vm4308 = vmor %vm4306, %vm4307
        %v4309 = vsel %vm4308, %v4301, %v4305
        %v4310 = vand.u32 2147483647, %v2573
        %vm4311 = vcmp.eq.f32.partialorder %v4310, 8.507059e+37
        %v4312 = vand.u32 %v2573, 2147483648
        %v4313 = vor.u32 1.1754944e-38, %v4312
        %v4314 = vsel %vm4311, %v4313, %v4309
        %v4315 = vmul.f32 1.0, %v4314
        %v4316 = vrcp.pop %v2574
        %v4317 = vmul.f32 %v2574, %v4316
        %v4318 = vsub.f32 1.0, %v4317
        %v4319 = vmul.f32 %v4316, %v4318
        %v4320 = vadd.f32 %v4316, %v4319
        %vm4321 = vweird.f32 %v2574
        %vm4322 = vweird.f32 %v4316
        %vm4323 = vmor %vm4321, %vm4322
        %v4324 = vsel %vm4323, %v4316, %v4320
        %v4325 = vand.u32 2147483647, %v2574
        %vm4326 = vcmp.eq.f32.partialorder %v4325, 8.507059e+37
        %v4327 = vand.u32 %v2574, 2147483648
        %v4328 = vor.u32 1.1754944e-38, %v4327
        %v4329 = vsel %vm4326, %v4328, %v4324
        %v4330 = vmul.f32 1.0, %v4329
        %v4331 = vrcp.pop %v2575
        %v4332 = vmul.f32 %v2575, %v4331
        %v4333 = vsub.f32 1.0, %v4332
        %v4334 = vmul.f32 %v4331, %v4333
        %v4335 = vadd.f32 %v4331, %v4334
        %vm4336 = vweird.f32 %v2575
        %vm4337 = vweird.f32 %v4331
        %vm4338 = vmor %vm4336, %vm4337
        %v4339 = vsel %vm4338, %v4331, %v4335
        %v4340 = vand.u32 2147483647, %v2575
        %vm4341 = vcmp.eq.f32.partialorder %v4340, 8.507059e+37
        %v4342 = vand.u32 %v2575, 2147483648
        %v4343 = vor.u32 1.1754944e-38, %v4342
        %v4344 = vsel %vm4341, %v4343, %v4339
        %v4345 = vmul.f32 1.0, %v4344
        %v4346 = vrcp.pop %v2576
        %v4347 = vmul.f32 %v2576, %v4346
        %v4348 = vsub.f32 1.0, %v4347
        %v4349 = vmul.f32 %v4346, %v4348
        %v4350 = vadd.f32 %v4346, %v4349
        %vm4351 = vweird.f32 %v2576
        %vm4352 = vweird.f32 %v4346
        %vm4353 = vmor %vm4351, %vm4352
        %v4354 = vsel %vm4353, %v4346, %v4350
        %v4355 = vand.u32 2147483647, %v2576
        %vm4356 = vcmp.eq.f32.partialorder %v4355, 8.507059e+37
        %v4357 = vand.u32 %v2576, 2147483648
        %v4358 = vor.u32 1.1754944e-38, %v4357
        %v4359 = vsel %vm4356, %v4358, %v4354
        %v4360 = vmul.f32 1.0, %v4359
        %v4361 = vrcp.pop %v2577
        %v4362 = vmul.f32 %v2577, %v4361
        %v4363 = vsub.f32 1.0, %v4362
        %v4364 = vmul.f32 %v4361, %v4363
        %v4365 = vadd.f32 %v4361, %v4364
        %vm4366 = vweird.f32 %v2577
        %vm4367 = vweird.f32 %v4361
        %vm4368 = vmor %vm4366, %vm4367
        %v4369 = vsel %vm4368, %v4361, %v4365
        %v4370 = vand.u32 2147483647, %v2577
        %vm4371 = vcmp.eq.f32.partialorder %v4370, 8.507059e+37
        %v4372 = vand.u32 %v2577, 2147483648
        %v4373 = vor.u32 1.1754944e-38, %v4372
        %v4374 = vsel %vm4371, %v4373, %v4369
        %v4375 = vmul.f32 1.0, %v4374
        %v4376 = vrcp.pop %v2578
        %v4377 = vmul.f32 %v2578, %v4376
        %v4378 = vsub.f32 1.0, %v4377
        %v4379 = vmul.f32 %v4376, %v4378
        %v4380 = vadd.f32 %v4376, %v4379
        %vm4381 = vweird.f32 %v2578
        %vm4382 = vweird.f32 %v4376
        %vm4383 = vmor %vm4381, %vm4382
        %v4384 = vsel %vm4383, %v4376, %v4380
        %v4385 = vand.u32 2147483647, %v2578
        %vm4386 = vcmp.eq.f32.partialorder %v4385, 8.507059e+37
        %v4387 = vand.u32 %v2578, 2147483648
        %v4388 = vor.u32 1.1754944e-38, %v4387
        %v4389 = vsel %vm4386, %v4388, %v4384
        %v4390 = vmul.f32 1.0, %v4389
        %v4391 = vrcp.pop %v2579
        %v4392 = vmul.f32 %v2579, %v4391
        %v4393 = vsub.f32 1.0, %v4392
        %v4394 = vmul.f32 %v4391, %v4393
        %v4395 = vadd.f32 %v4391, %v4394
        %vm4396 = vweird.f32 %v2579
        %vm4397 = vweird.f32 %v4391
        %vm4398 = vmor %vm4396, %vm4397
        %v4399 = vsel %vm4398, %v4391, %v4395
        %v4400 = vand.u32 2147483647, %v2579
        %vm4401 = vcmp.eq.f32.partialorder %v4400, 8.507059e+37
        %v4402 = vand.u32 %v2579, 2147483648
        %v4403 = vor.u32 1.1754944e-38, %v4402
        %v4404 = vsel %vm4401, %v4403, %v4399
        %v4405 = vmul.f32 1.0, %v4404
        %v4406 = vrcp.pop %v2580
        %v4407 = vmul.f32 %v2580, %v4406
        %v4408 = vsub.f32 1.0, %v4407
        %v4409 = vmul.f32 %v4406, %v4408
        %v4410 = vadd.f32 %v4406, %v4409
        %vm4411 = vweird.f32 %v2580
        %vm4412 = vweird.f32 %v4406
        %vm4413 = vmor %vm4411, %vm4412
        %v4414 = vsel %vm4413, %v4406, %v4410
        %v4415 = vand.u32 2147483647, %v2580
        %vm4416 = vcmp.eq.f32.partialorder %v4415, 8.507059e+37
        %v4417 = vand.u32 %v2580, 2147483648
        %v4418 = vor.u32 1.1754944e-38, %v4417
        %v4419 = vsel %vm4416, %v4418, %v4414
        %v4420 = vmul.f32 1.0, %v4419
        %v4421 = vrcp.pop %v2581
        %v4422 = vmul.f32 %v2581, %v4421
        %v4423 = vsub.f32 1.0, %v4422
        %v4424 = vmul.f32 %v4421, %v4423
        %v4425 = vadd.f32 %v4421, %v4424
        %vm4426 = vweird.f32 %v2581
        %vm4427 = vweird.f32 %v4421
        %vm4428 = vmor %vm4426, %vm4427
        %v4429 = vsel %vm4428, %v4421, %v4425
        %v4430 = vand.u32 2147483647, %v2581
        %vm4431 = vcmp.eq.f32.partialorder %v4430, 8.507059e+37
        %v4432 = vand.u32 %v2581, 2147483648
        %v4433 = vor.u32 1.1754944e-38, %v4432
        %v4434 = vsel %vm4431, %v4433, %v4429
        %v4435 = vmul.f32 1.0, %v4434
        %v4436 = vrcp.pop %v2582
        %v4437 = vmul.f32 %v2582, %v4436
        %v4438 = vsub.f32 1.0, %v4437
        %v4439 = vmul.f32 %v4436, %v4438
        %v4440 = vadd.f32 %v4436, %v4439
        %vm4441 = vweird.f32 %v2582
        %vm4442 = vweird.f32 %v4436
        %vm4443 = vmor %vm4441, %vm4442
        %v4444 = vsel %vm4443, %v4436, %v4440
        %v4445 = vand.u32 2147483647, %v2582
        %vm4446 = vcmp.eq.f32.partialorder %v4445, 8.507059e+37
        %v4447 = vand.u32 %v2582, 2147483648
        %v4448 = vor.u32 1.1754944e-38, %v4447
        %v4449 = vsel %vm4446, %v4448, %v4444
        %v4450 = vmul.f32 1.0, %v4449
        %v4451 = vrcp.pop %v2583
        %v4452 = vmul.f32 %v2583, %v4451
        %v4453 = vsub.f32 1.0, %v4452
        %v4454 = vmul.f32 %v4451, %v4453
        %v4455 = vadd.f32 %v4451, %v4454
        %vm4456 = vweird.f32 %v2583
        %vm4457 = vweird.f32 %v4451
        %vm4458 = vmor %vm4456, %vm4457
        %v4459 = vsel %vm4458, %v4451, %v4455
        %v4460 = vand.u32 2147483647, %v2583
        %vm4461 = vcmp.eq.f32.partialorder %v4460, 8.507059e+37
        %v4462 = vand.u32 %v2583, 2147483648
        %v4463 = vor.u32 1.1754944e-38, %v4462
        %v4464 = vsel %vm4461, %v4463, %v4459
        %v4465 = vmul.f32 1.0, %v4464
        %v4466 = vrcp.pop %v2584
        %v4467 = vmul.f32 %v2584, %v4466
        %v4468 = vsub.f32 1.0, %v4467
        %v4469 = vmul.f32 %v4466, %v4468
        %v4470 = vadd.f32 %v4466, %v4469
        %vm4471 = vweird.f32 %v2584
        %vm4472 = vweird.f32 %v4466
        %vm4473 = vmor %vm4471, %vm4472
        %v4474 = vsel %vm4473, %v4466, %v4470
        %v4475 = vand.u32 2147483647, %v2584
        %vm4476 = vcmp.eq.f32.partialorder %v4475, 8.507059e+37
        %v4477 = vand.u32 %v2584, 2147483648
        %v4478 = vor.u32 1.1754944e-38, %v4477
        %v4479 = vsel %vm4476, %v4478, %v4474
        %v4480 = vmul.f32 1.0, %v4479
        %v4481 = vrcp.pop %v2585
        %v4482 = vmul.f32 %v2585, %v4481
        %v4483 = vsub.f32 1.0, %v4482
        %v4484 = vmul.f32 %v4481, %v4483
        %v4485 = vadd.f32 %v4481, %v4484
        %vm4486 = vweird.f32 %v2585
        %vm4487 = vweird.f32 %v4481
        %vm4488 = vmor %vm4486, %vm4487
        %v4489 = vsel %vm4488, %v4481, %v4485
        %v4490 = vand.u32 2147483647, %v2585
        %vm4491 = vcmp.eq.f32.partialorder %v4490, 8.507059e+37
        %v4492 = vand.u32 %v2585, 2147483648
        %v4493 = vor.u32 1.1754944e-38, %v4492
        %v4494 = vsel %vm4491, %v4493, %v4489
        %v4495 = vmul.f32 1.0, %v4494
        %v4496 = vrcp.pop %v2586
        %v4497 = vmul.f32 %v2586, %v4496
        %v4498 = vsub.f32 1.0, %v4497
        %v4499 = vmul.f32 %v4496, %v4498
        %v4500 = vadd.f32 %v4496, %v4499
        %vm4501 = vweird.f32 %v2586
        %vm4502 = vweird.f32 %v4496
        %vm4503 = vmor %vm4501, %vm4502
        %v4504 = vsel %vm4503, %v4496, %v4500
        %v4505 = vand.u32 2147483647, %v2586
        %vm4506 = vcmp.eq.f32.partialorder %v4505, 8.507059e+37
        %v4507 = vand.u32 %v2586, 2147483648
        %v4508 = vor.u32 1.1754944e-38, %v4507
        %v4509 = vsel %vm4506, %v4508, %v4504
        %v4510 = vmul.f32 1.0, %v4509
        %v4511 = vrcp.pop %v2587
        %v4512 = vmul.f32 %v2587, %v4511
        %v4513 = vsub.f32 1.0, %v4512
        %v4514 = vmul.f32 %v4511, %v4513
        %v4515 = vadd.f32 %v4511, %v4514
        %vm4516 = vweird.f32 %v2587
        %vm4517 = vweird.f32 %v4511
        %vm4518 = vmor %vm4516, %vm4517
        %v4519 = vsel %vm4518, %v4511, %v4515
        %v4520 = vand.u32 2147483647, %v2587
        %vm4521 = vcmp.eq.f32.partialorder %v4520, 8.507059e+37
        %v4522 = vand.u32 %v2587, 2147483648
        %v4523 = vor.u32 1.1754944e-38, %v4522
        %v4524 = vsel %vm4521, %v4523, %v4519
        %v4525 = vmul.f32 1.0, %v4524
        %v4526 = vrcp.pop %v2588
        %v4527 = vmul.f32 %v2588, %v4526
        %v4528 = vsub.f32 1.0, %v4527
        %v4529 = vmul.f32 %v4526, %v4528
        %v4530 = vadd.f32 %v4526, %v4529
        %vm4531 = vweird.f32 %v2588
        %vm4532 = vweird.f32 %v4526
        %vm4533 = vmor %vm4531, %vm4532
        %v4534 = vsel %vm4533, %v4526, %v4530
        %v4535 = vand.u32 2147483647, %v2588
        %vm4536 = vcmp.eq.f32.partialorder %v4535, 8.507059e+37
        %v4537 = vand.u32 %v2588, 2147483648
        %v4538 = vor.u32 1.1754944e-38, %v4537
        %v4539 = vsel %vm4536, %v4538, %v4534
        %v4540 = vmul.f32 1.0, %v4539
        %v4541 = vrcp.pop %v2589
        %v4542 = vmul.f32 %v2589, %v4541
        %v4543 = vsub.f32 1.0, %v4542
        %v4544 = vmul.f32 %v4541, %v4543
        %v4545 = vadd.f32 %v4541, %v4544
        %vm4546 = vweird.f32 %v2589
        %vm4547 = vweird.f32 %v4541
        %vm4548 = vmor %vm4546, %vm4547
        %v4549 = vsel %vm4548, %v4541, %v4545
        %v4550 = vand.u32 2147483647, %v2589
        %vm4551 = vcmp.eq.f32.partialorder %v4550, 8.507059e+37
        %v4552 = vand.u32 %v2589, 2147483648
        %v4553 = vor.u32 1.1754944e-38, %v4552
        %v4554 = vsel %vm4551, %v4553, %v4549
        %v4555 = vmul.f32 1.0, %v4554
        %v4556 = vrcp.pop %v2590
        %v4557 = vmul.f32 %v2590, %v4556
        %v4558 = vsub.f32 1.0, %v4557
        %v4559 = vmul.f32 %v4556, %v4558
        %v4560 = vadd.f32 %v4556, %v4559
        %vm4561 = vweird.f32 %v2590
        %vm4562 = vweird.f32 %v4556
        %vm4563 = vmor %vm4561, %vm4562
        %v4564 = vsel %vm4563, %v4556, %v4560
        %v4565 = vand.u32 2147483647, %v2590
        %vm4566 = vcmp.eq.f32.partialorder %v4565, 8.507059e+37
        %v4567 = vand.u32 %v2590, 2147483648
        %v4568 = vor.u32 1.1754944e-38, %v4567
        %v4569 = vsel %vm4566, %v4568, %v4564
        %v4570 = vmul.f32 1.0, %v4569
        %v4571 = vrcp.pop %v2591
        %v4572 = vmul.f32 %v2591, %v4571
        %v4573 = vsub.f32 1.0, %v4572
        %v4574 = vmul.f32 %v4571, %v4573
        %v4575 = vadd.f32 %v4571, %v4574
        %vm4576 = vweird.f32 %v2591
        %vm4577 = vweird.f32 %v4571
        %vm4578 = vmor %vm4576, %vm4577
        %v4579 = vsel %vm4578, %v4571, %v4575
        %v4580 = vand.u32 2147483647, %v2591
        %vm4581 = vcmp.eq.f32.partialorder %v4580, 8.507059e+37
        %v4582 = vand.u32 %v2591, 2147483648
        %v4583 = vor.u32 1.1754944e-38, %v4582
        %v4584 = vsel %vm4581, %v4583, %v4579
        %v4585 = vmul.f32 1.0, %v4584
        %v4586 = vrcp.pop %v2592
        %v4587 = vmul.f32 %v2592, %v4586
        %v4588 = vsub.f32 1.0, %v4587
        %v4589 = vmul.f32 %v4586, %v4588
        %v4590 = vadd.f32 %v4586, %v4589
        %vm4591 = vweird.f32 %v2592
        %vm4592 = vweird.f32 %v4586
        %vm4593 = vmor %vm4591, %vm4592
        %v4594 = vsel %vm4593, %v4586, %v4590
        %v4595 = vand.u32 2147483647, %v2592
        %vm4596 = vcmp.eq.f32.partialorder %v4595, 8.507059e+37
        %v4597 = vand.u32 %v2592, 2147483648
        %v4598 = vor.u32 1.1754944e-38, %v4597
        %v4599 = vsel %vm4596, %v4598, %v4594
        %v4600 = vmul.f32 1.0, %v4599
        %v4601 = vrcp.pop %v2593
        %v4602 = vmul.f32 %v2593, %v4601
        %v4603 = vsub.f32 1.0, %v4602
        %v4604 = vmul.f32 %v4601, %v4603
        %v4605 = vadd.f32 %v4601, %v4604
        %vm4606 = vweird.f32 %v2593
        %vm4607 = vweird.f32 %v4601
        %vm4608 = vmor %vm4606, %vm4607
        %v4609 = vsel %vm4608, %v4601, %v4605
        %v4610 = vand.u32 2147483647, %v2593
        %vm4611 = vcmp.eq.f32.partialorder %v4610, 8.507059e+37
        %v4612 = vand.u32 %v2593, 2147483648
        %v4613 = vor.u32 1.1754944e-38, %v4612
        %v4614 = vsel %vm4611, %v4613, %v4609
        %v4615 = vmul.f32 1.0, %v4614
        %v4616 = vrcp.pop %v2594
        %v4617 = vmul.f32 %v2594, %v4616
        %v4618 = vsub.f32 1.0, %v4617
        %v4619 = vmul.f32 %v4616, %v4618
        %v4620 = vadd.f32 %v4616, %v4619
        %vm4621 = vweird.f32 %v2594
        %vm4622 = vweird.f32 %v4616
        %vm4623 = vmor %vm4621, %vm4622
        %v4624 = vsel %vm4623, %v4616, %v4620
        %v4625 = vand.u32 2147483647, %v2594
        %vm4626 = vcmp.eq.f32.partialorder %v4625, 8.507059e+37
        %v4627 = vand.u32 %v2594, 2147483648
        %v4628 = vor.u32 1.1754944e-38, %v4627
        %v4629 = vsel %vm4626, %v4628, %v4624
        %v4630 = vmul.f32 1.0, %v4629
        %v4631 = vrcp.pop %v2595
        %v4632 = vmul.f32 %v2595, %v4631
        %v4633 = vsub.f32 1.0, %v4632
        %v4634 = vmul.f32 %v4631, %v4633
        %v4635 = vadd.f32 %v4631, %v4634
        %vm4636 = vweird.f32 %v2595
        %vm4637 = vweird.f32 %v4631
        %vm4638 = vmor %vm4636, %vm4637
        %v4639 = vsel %vm4638, %v4631, %v4635
        %v4640 = vand.u32 2147483647, %v2595
        %vm4641 = vcmp.eq.f32.partialorder %v4640, 8.507059e+37
        %v4642 = vand.u32 %v2595, 2147483648
        %v4643 = vor.u32 1.1754944e-38, %v4642
        %v4644 = vsel %vm4641, %v4643, %v4639
        %v4645 = vmul.f32 1.0, %v4644
        %v4646 = vrcp.pop %v2596
        %v4647 = vmul.f32 %v2596, %v4646
        %v4648 = vsub.f32 1.0, %v4647
        %v4649 = vmul.f32 %v4646, %v4648
        %v4650 = vadd.f32 %v4646, %v4649
        %vm4651 = vweird.f32 %v2596
        %vm4652 = vweird.f32 %v4646
        %vm4653 = vmor %vm4651, %vm4652
        %v4654 = vsel %vm4653, %v4646, %v4650
        %v4655 = vand.u32 2147483647, %v2596
        %vm4656 = vcmp.eq.f32.partialorder %v4655, 8.507059e+37
        %v4657 = vand.u32 %v2596, 2147483648
        %v4658 = vor.u32 1.1754944e-38, %v4657
        %v4659 = vsel %vm4656, %v4658, %v4654
        %v4660 = vmul.f32 1.0, %v4659
        %v4661 = vrcp.pop %v2597
        %v4662 = vmul.f32 %v2597, %v4661
        %v4663 = vsub.f32 1.0, %v4662
        %v4664 = vmul.f32 %v4661, %v4663
        %v4665 = vadd.f32 %v4661, %v4664
        %vm4666 = vweird.f32 %v2597
        %vm4667 = vweird.f32 %v4661
        %vm4668 = vmor %vm4666, %vm4667
        %v4669 = vsel %vm4668, %v4661, %v4665
        %v4670 = vand.u32 2147483647, %v2597
        %vm4671 = vcmp.eq.f32.partialorder %v4670, 8.507059e+37
        %v4672 = vand.u32 %v2597, 2147483648
        %v4673 = vor.u32 1.1754944e-38, %v4672
        %v4674 = vsel %vm4671, %v4673, %v4669
        %v4675 = vmul.f32 1.0, %v4674
        %v4676 = vrcp.pop %v2598
        %v4677 = vmul.f32 %v2598, %v4676
        %v4678 = vsub.f32 1.0, %v4677
        %v4679 = vmul.f32 %v4676, %v4678
        %v4680 = vadd.f32 %v4676, %v4679
        %vm4681 = vweird.f32 %v2598
        %vm4682 = vweird.f32 %v4676
        %vm4683 = vmor %vm4681, %vm4682
        %v4684 = vsel %vm4683, %v4676, %v4680
        %v4685 = vand.u32 2147483647, %v2598
        %vm4686 = vcmp.eq.f32.partialorder %v4685, 8.507059e+37
        %v4687 = vand.u32 %v2598, 2147483648
        %v4688 = vor.u32 1.1754944e-38, %v4687
        %v4689 = vsel %vm4686, %v4688, %v4684
        %v4690 = vmul.f32 1.0, %v4689
        %v4691 = vrcp.pop %v2599
        %v4692 = vmul.f32 %v2599, %v4691
        %v4693 = vsub.f32 1.0, %v4692
        %v4694 = vmul.f32 %v4691, %v4693
        %v4695 = vadd.f32 %v4691, %v4694
        %vm4696 = vweird.f32 %v2599
        %vm4697 = vweird.f32 %v4691
        %vm4698 = vmor %vm4696, %vm4697
        %v4699 = vsel %vm4698, %v4691, %v4695
        %v4700 = vand.u32 2147483647, %v2599
        %vm4701 = vcmp.eq.f32.partialorder %v4700, 8.507059e+37
        %v4702 = vand.u32 %v2599, 2147483648
        %v4703 = vor.u32 1.1754944e-38, %v4702
        %v4704 = vsel %vm4701, %v4703, %v4699
        %v4705 = vmul.f32 1.0, %v4704
        %v4706 = vrcp.pop %v2600
        %v4707 = vmul.f32 %v2600, %v4706
        %v4708 = vsub.f32 1.0, %v4707
        %v4709 = vmul.f32 %v4706, %v4708
        %v4710 = vadd.f32 %v4706, %v4709
        %vm4711 = vweird.f32 %v2600
        %vm4712 = vweird.f32 %v4706
        %vm4713 = vmor %vm4711, %vm4712
        %v4714 = vsel %vm4713, %v4706, %v4710
        %v4715 = vand.u32 2147483647, %v2600
        %vm4716 = vcmp.eq.f32.partialorder %v4715, 8.507059e+37
        %v4717 = vand.u32 %v2600, 2147483648
        %v4718 = vor.u32 1.1754944e-38, %v4717
        %v4719 = vsel %vm4716, %v4718, %v4714
        %v4720 = vmul.f32 1.0, %v4719
        %v4721 = vrcp.pop %v2601
        %v4722 = vmul.f32 %v2601, %v4721
        %v4723 = vsub.f32 1.0, %v4722
        %v4724 = vmul.f32 %v4721, %v4723
        %v4725 = vadd.f32 %v4721, %v4724
        %vm4726 = vweird.f32 %v2601
        %vm4727 = vweird.f32 %v4721
        %vm4728 = vmor %vm4726, %vm4727
        %v4729 = vsel %vm4728, %v4721, %v4725
        %v4730 = vand.u32 2147483647, %v2601
        %vm4731 = vcmp.eq.f32.partialorder %v4730, 8.507059e+37
        %v4732 = vand.u32 %v2601, 2147483648
        %v4733 = vor.u32 1.1754944e-38, %v4732
        %v4734 = vsel %vm4731, %v4733, %v4729
        %v4735 = vmul.f32 1.0, %v4734
        %v4736 = vrcp.pop %v2602
        %v4737 = vmul.f32 %v2602, %v4736
        %v4738 = vsub.f32 1.0, %v4737
        %v4739 = vmul.f32 %v4736, %v4738
        %v4740 = vadd.f32 %v4736, %v4739
        %vm4741 = vweird.f32 %v2602
        %vm4742 = vweird.f32 %v4736
        %vm4743 = vmor %vm4741, %vm4742
        %v4744 = vsel %vm4743, %v4736, %v4740
        %v4745 = vand.u32 2147483647, %v2602
        %vm4746 = vcmp.eq.f32.partialorder %v4745, 8.507059e+37
        %v4747 = vand.u32 %v2602, 2147483648
        %v4748 = vor.u32 1.1754944e-38, %v4747
        %v4749 = vsel %vm4746, %v4748, %v4744
        %v4750 = vmul.f32 1.0, %v4749
        %v4751 = vrcp.pop %v2603
        %v4752 = vmul.f32 %v2603, %v4751
        %v4753 = vsub.f32 1.0, %v4752
        %v4754 = vmul.f32 %v4751, %v4753
        %v4755 = vadd.f32 %v4751, %v4754
        %vm4756 = vweird.f32 %v2603
        %vm4757 = vweird.f32 %v4751
        %vm4758 = vmor %vm4756, %vm4757
        %v4759 = vsel %vm4758, %v4751, %v4755
        %v4760 = vand.u32 2147483647, %v2603
        %vm4761 = vcmp.eq.f32.partialorder %v4760, 8.507059e+37
        %v4762 = vand.u32 %v2603, 2147483648
        %v4763 = vor.u32 1.1754944e-38, %v4762
        %v4764 = vsel %vm4761, %v4763, %v4759
        %v4765 = vmul.f32 1.0, %v4764
        %v4766 = vrcp.pop %v2604
        %v4767 = vmul.f32 %v2604, %v4766
        %v4768 = vsub.f32 1.0, %v4767
        %v4769 = vmul.f32 %v4766, %v4768
        %v4770 = vadd.f32 %v4766, %v4769
        %vm4771 = vweird.f32 %v2604
        %vm4772 = vweird.f32 %v4766
        %vm4773 = vmor %vm4771, %vm4772
        %v4774 = vsel %vm4773, %v4766, %v4770
        %v4775 = vand.u32 2147483647, %v2604
        %vm4776 = vcmp.eq.f32.partialorder %v4775, 8.507059e+37
        %v4777 = vand.u32 %v2604, 2147483648
        %v4778 = vor.u32 1.1754944e-38, %v4777
        %v4779 = vsel %vm4776, %v4778, %v4774
        %v4780 = vmul.f32 1.0, %v4779
        %v4781 = vrcp.pop %v2605
        %v4782 = vmul.f32 %v2605, %v4781
        %v4783 = vsub.f32 1.0, %v4782
        %v4784 = vmul.f32 %v4781, %v4783
        %v4785 = vadd.f32 %v4781, %v4784
        %vm4786 = vweird.f32 %v2605
        %vm4787 = vweird.f32 %v4781
        %vm4788 = vmor %vm4786, %vm4787
        %v4789 = vsel %vm4788, %v4781, %v4785
        %v4790 = vand.u32 2147483647, %v2605
        %vm4791 = vcmp.eq.f32.partialorder %v4790, 8.507059e+37
        %v4792 = vand.u32 %v2605, 2147483648
        %v4793 = vor.u32 1.1754944e-38, %v4792
        %v4794 = vsel %vm4791, %v4793, %v4789
        %v4795 = vmul.f32 1.0, %v4794
        %v4796 = vrcp.pop %v2606
        %v4797 = vmul.f32 %v2606, %v4796
        %v4798 = vsub.f32 1.0, %v4797
        %v4799 = vmul.f32 %v4796, %v4798
        %v4800 = vadd.f32 %v4796, %v4799
        %vm4801 = vweird.f32 %v2606
        %vm4802 = vweird.f32 %v4796
        %vm4803 = vmor %vm4801, %vm4802
        %v4804 = vsel %vm4803, %v4796, %v4800
        %v4805 = vand.u32 2147483647, %v2606
        %vm4806 = vcmp.eq.f32.partialorder %v4805, 8.507059e+37
        %v4807 = vand.u32 %v2606, 2147483648
        %v4808 = vor.u32 1.1754944e-38, %v4807
        %v4809 = vsel %vm4806, %v4808, %v4804
        %v4810 = vmul.f32 1.0, %v4809
        %v4811 = vrcp.pop %v2607
        %v4812 = vmul.f32 %v2607, %v4811
        %v4813 = vsub.f32 1.0, %v4812
        %v4814 = vmul.f32 %v4811, %v4813
        %v4815 = vadd.f32 %v4811, %v4814
        %vm4816 = vweird.f32 %v2607
        %vm4817 = vweird.f32 %v4811
        %vm4818 = vmor %vm4816, %vm4817
        %v4819 = vsel %vm4818, %v4811, %v4815
        %v4820 = vand.u32 2147483647, %v2607
        %vm4821 = vcmp.eq.f32.partialorder %v4820, 8.507059e+37
        %v4822 = vand.u32 %v2607, 2147483648
        %v4823 = vor.u32 1.1754944e-38, %v4822
        %v4824 = vsel %vm4821, %v4823, %v4819
        %v4825 = vmul.f32 1.0, %v4824
        %v4826 = vrcp.pop %v2608
        %v4827 = vmul.f32 %v2608, %v4826
        %v4828 = vsub.f32 1.0, %v4827
        %v4829 = vmul.f32 %v4826, %v4828
        %v4830 = vadd.f32 %v4826, %v4829
        %vm4831 = vweird.f32 %v2608
        %vm4832 = vweird.f32 %v4826
        %vm4833 = vmor %vm4831, %vm4832
        %v4834 = vsel %vm4833, %v4826, %v4830
        %v4835 = vand.u32 2147483647, %v2608
        %vm4836 = vcmp.eq.f32.partialorder %v4835, 8.507059e+37
        %v4837 = vand.u32 %v2608, 2147483648
        %v4838 = vor.u32 1.1754944e-38, %v4837
        %v4839 = vsel %vm4836, %v4838, %v4834
        %v4840 = vmul.f32 1.0, %v4839
        %v4841 = vrcp.pop %v2609
        %v4842 = vmul.f32 %v2609, %v4841
        %v4843 = vsub.f32 1.0, %v4842
        %v4844 = vmul.f32 %v4841, %v4843
        %v4845 = vadd.f32 %v4841, %v4844
        %vm4846 = vweird.f32 %v2609
        %vm4847 = vweird.f32 %v4841
        %vm4848 = vmor %vm4846, %vm4847
        %v4849 = vsel %vm4848, %v4841, %v4845
        %v4850 = vand.u32 2147483647, %v2609
        %vm4851 = vcmp.eq.f32.partialorder %v4850, 8.507059e+37
        %v4852 = vand.u32 %v2609, 2147483648
        %v4853 = vor.u32 1.1754944e-38, %v4852
        %v4854 = vsel %vm4851, %v4853, %v4849
        %v4855 = vmul.f32 1.0, %v4854
        %v4856 = vrcp.pop %v2610
        %v4857 = vmul.f32 %v2610, %v4856
        %v4858 = vsub.f32 1.0, %v4857
        %v4859 = vmul.f32 %v4856, %v4858
        %v4860 = vadd.f32 %v4856, %v4859
        %vm4861 = vweird.f32 %v2610
        %vm4862 = vweird.f32 %v4856
        %vm4863 = vmor %vm4861, %vm4862
        %v4864 = vsel %vm4863, %v4856, %v4860
        %v4865 = vand.u32 2147483647, %v2610
        %vm4866 = vcmp.eq.f32.partialorder %v4865, 8.507059e+37
        %v4867 = vand.u32 %v2610, 2147483648
        %v4868 = vor.u32 1.1754944e-38, %v4867
        %v4869 = vsel %vm4866, %v4868, %v4864
        %v4870 = vmul.f32 1.0, %v4869
        %v4871 = vrcp.pop %v2611
        %v4872 = vmul.f32 %v2611, %v4871
        %v4873 = vsub.f32 1.0, %v4872
        %v4874 = vmul.f32 %v4871, %v4873
        %v4875 = vadd.f32 %v4871, %v4874
        %vm4876 = vweird.f32 %v2611
        %vm4877 = vweird.f32 %v4871
        %vm4878 = vmor %vm4876, %vm4877
        %v4879 = vsel %vm4878, %v4871, %v4875
        %v4880 = vand.u32 2147483647, %v2611
        %vm4881 = vcmp.eq.f32.partialorder %v4880, 8.507059e+37
        %v4882 = vand.u32 %v2611, 2147483648
        %v4883 = vor.u32 1.1754944e-38, %v4882
        %v4884 = vsel %vm4881, %v4883, %v4879
        %v4885 = vmul.f32 1.0, %v4884
        %v4886 = vrcp.pop %v2612
        %v4887 = vmul.f32 %v2612, %v4886
        %v4888 = vsub.f32 1.0, %v4887
        %v4889 = vmul.f32 %v4886, %v4888
        %v4890 = vadd.f32 %v4886, %v4889
        %vm4891 = vweird.f32 %v2612
        %vm4892 = vweird.f32 %v4886
        %vm4893 = vmor %vm4891, %vm4892
        %v4894 = vsel %vm4893, %v4886, %v4890
        %v4895 = vand.u32 2147483647, %v2612
        %vm4896 = vcmp.eq.f32.partialorder %v4895, 8.507059e+37
        %v4897 = vand.u32 %v2612, 2147483648
        %v4898 = vor.u32 1.1754944e-38, %v4897
        %v4899 = vsel %vm4896, %v4898, %v4894
        %v4900 = vmul.f32 1.0, %v4899
        %v4901 = vrcp.pop %v2613
        %v4902 = vmul.f32 %v2613, %v4901
        %v4903 = vsub.f32 1.0, %v4902
        %v4904 = vmul.f32 %v4901, %v4903
        %v4905 = vadd.f32 %v4901, %v4904
        %vm4906 = vweird.f32 %v2613
        %vm4907 = vweird.f32 %v4901
        %vm4908 = vmor %vm4906, %vm4907
        %v4909 = vsel %vm4908, %v4901, %v4905
        %v4910 = vand.u32 2147483647, %v2613
        %vm4911 = vcmp.eq.f32.partialorder %v4910, 8.507059e+37
        %v4912 = vand.u32 %v2613, 2147483648
        %v4913 = vor.u32 1.1754944e-38, %v4912
        %v4914 = vsel %vm4911, %v4913, %v4909
        %v4915 = vmul.f32 1.0, %v4914
        %v4916 = vrcp.pop %v2614
        %v4917 = vmul.f32 %v2614, %v4916
        %v4918 = vsub.f32 1.0, %v4917
        %v4919 = vmul.f32 %v4916, %v4918
        %v4920 = vadd.f32 %v4916, %v4919
        %vm4921 = vweird.f32 %v2614
        %vm4922 = vweird.f32 %v4916
        %vm4923 = vmor %vm4921, %vm4922
        %v4924 = vsel %vm4923, %v4916, %v4920
        %v4925 = vand.u32 2147483647, %v2614
        %vm4926 = vcmp.eq.f32.partialorder %v4925, 8.507059e+37
        %v4927 = vand.u32 %v2614, 2147483648
        %v4928 = vor.u32 1.1754944e-38, %v4927
        %v4929 = vsel %vm4926, %v4928, %v4924
        %v4930 = vmul.f32 1.0, %v4929
        %v4931 = vrcp.pop %v2615
        %v4932 = vmul.f32 %v2615, %v4931
        %v4933 = vsub.f32 1.0, %v4932
        %v4934 = vmul.f32 %v4931, %v4933
        %v4935 = vadd.f32 %v4931, %v4934
        %vm4936 = vweird.f32 %v2615
        %vm4937 = vweird.f32 %v4931
        %vm4938 = vmor %vm4936, %vm4937
        %v4939 = vsel %vm4938, %v4931, %v4935
        %v4940 = vand.u32 2147483647, %v2615
        %vm4941 = vcmp.eq.f32.partialorder %v4940, 8.507059e+37
        %v4942 = vand.u32 %v2615, 2147483648
        %v4943 = vor.u32 1.1754944e-38, %v4942
        %v4944 = vsel %vm4941, %v4943, %v4939
        %v4945 = vmul.f32 1.0, %v4944
        %v4946 = vrcp.pop %v2616
        %v4947 = vmul.f32 %v2616, %v4946
        %v4948 = vsub.f32 1.0, %v4947
        %v4949 = vmul.f32 %v4946, %v4948
        %v4950 = vadd.f32 %v4946, %v4949
        %vm4951 = vweird.f32 %v2616
        %vm4952 = vweird.f32 %v4946
        %vm4953 = vmor %vm4951, %vm4952
        %v4954 = vsel %vm4953, %v4946, %v4950
        %v4955 = vand.u32 2147483647, %v2616
        %vm4956 = vcmp.eq.f32.partialorder %v4955, 8.507059e+37
        %v4957 = vand.u32 %v2616, 2147483648
        %v4958 = vor.u32 1.1754944e-38, %v4957
        %v4959 = vsel %vm4956, %v4958, %v4954
        %v4960 = vmul.f32 1.0, %v4959
        %v4961 = vrcp.pop %v2617
        %v4962 = vmul.f32 %v2617, %v4961
        %v4963 = vsub.f32 1.0, %v4962
        %v4964 = vmul.f32 %v4961, %v4963
        %v4965 = vadd.f32 %v4961, %v4964
        %vm4966 = vweird.f32 %v2617
        %vm4967 = vweird.f32 %v4961
        %vm4968 = vmor %vm4966, %vm4967
        %v4969 = vsel %vm4968, %v4961, %v4965
        %v4970 = vand.u32 2147483647, %v2617
        %vm4971 = vcmp.eq.f32.partialorder %v4970, 8.507059e+37
        %v4972 = vand.u32 %v2617, 2147483648
        %v4973 = vor.u32 1.1754944e-38, %v4972
        %v4974 = vsel %vm4971, %v4973, %v4969
        %v4975 = vmul.f32 1.0, %v4974
        %v4976 = vrcp.pop %v2618
        %v4977 = vmul.f32 %v2618, %v4976
        %v4978 = vsub.f32 1.0, %v4977
        %v4979 = vmul.f32 %v4976, %v4978
        %v4980 = vadd.f32 %v4976, %v4979
        %vm4981 = vweird.f32 %v2618
        %vm4982 = vweird.f32 %v4976
        %vm4983 = vmor %vm4981, %vm4982
        %v4984 = vsel %vm4983, %v4976, %v4980
        %v4985 = vand.u32 2147483647, %v2618
        %vm4986 = vcmp.eq.f32.partialorder %v4985, 8.507059e+37
        %v4987 = vand.u32 %v2618, 2147483648
        %v4988 = vor.u32 1.1754944e-38, %v4987
        %v4989 = vsel %vm4986, %v4988, %v4984
        %v4990 = vmul.f32 1.0, %v4989
        %v4991 = vrcp.pop %v2619
        %v4992 = vmul.f32 %v2619, %v4991
        %v4993 = vsub.f32 1.0, %v4992
        %v4994 = vmul.f32 %v4991, %v4993
        %v4995 = vadd.f32 %v4991, %v4994
        %vm4996 = vweird.f32 %v2619
        %vm4997 = vweird.f32 %v4991
        %vm4998 = vmor %vm4996, %vm4997
        %v4999 = vsel %vm4998, %v4991, %v4995
        %v5000 = vand.u32 2147483647, %v2619
        %vm5001 = vcmp.eq.f32.partialorder %v5000, 8.507059e+37
        %v5002 = vand.u32 %v2619, 2147483648
        %v5003 = vor.u32 1.1754944e-38, %v5002
        %v5004 = vsel %vm5001, %v5003, %v4999
        %v5005 = vmul.f32 1.0, %v5004
        %v5006 = vrcp.pop %v2620
        %v5007 = vmul.f32 %v2620, %v5006
        %v5008 = vsub.f32 1.0, %v5007
        %v5009 = vmul.f32 %v5006, %v5008
        %v5010 = vadd.f32 %v5006, %v5009
        %vm5011 = vweird.f32 %v2620
        %vm5012 = vweird.f32 %v5006
        %vm5013 = vmor %vm5011, %vm5012
        %v5014 = vsel %vm5013, %v5006, %v5010
        %v5015 = vand.u32 2147483647, %v2620
        %vm5016 = vcmp.eq.f32.partialorder %v5015, 8.507059e+37
        %v5017 = vand.u32 %v2620, 2147483648
        %v5018 = vor.u32 1.1754944e-38, %v5017
        %v5019 = vsel %vm5016, %v5018, %v5014
        %v5020 = vmul.f32 1.0, %v5019
        %v5021 = vmul.f32 %v1821, %v2635
        %v5022 = vmul.f32 %v1822, %v2650
        %v5023 = vmul.f32 %v1823, %v2665
        %v5024 = vmul.f32 %v1824, %v2680
        %v5025 = vmul.f32 %v1825, %v2695
        %v5026 = vmul.f32 %v1826, %v2710
        %v5027 = vmul.f32 %v1827, %v2725
        %v5028 = vmul.f32 %v1828, %v2740
        %v5029 = vmul.f32 %v1829, %v2755
        %v5030 = vmul.f32 %v1830, %v2770
        %v5031 = vmul.f32 %v1831, %v2785
        %v5032 = vmul.f32 %v1832, %v2800
        %v5033 = vmul.f32 %v1833, %v2815
        %v5034 = vmul.f32 %v1834, %v2830
        %v5035 = vmul.f32 %v1835, %v2845
        %v5036 = vmul.f32 %v1836, %v2860
        %v5037 = vmul.f32 %v1837, %v2875
        %v5038 = vmul.f32 %v1838, %v2890
        %v5039 = vmul.f32 %v1839, %v2905
        %v5040 = vmul.f32 %v1840, %v2920
        %v5041 = vmul.f32 %v1841, %v2935
        %v5042 = vmul.f32 %v1842, %v2950
        %v5043 = vmul.f32 %v1843, %v2965
        %v5044 = vmul.f32 %v1844, %v2980
        %v5045 = vmul.f32 %v1845, %v2995
        %v5046 = vmul.f32 %v1846, %v3010
        %v5047 = vmul.f32 %v1847, %v3025
        %v5048 = vmul.f32 %v1848, %v3040
        %v5049 = vmul.f32 %v1849, %v3055
        %v5050 = vmul.f32 %v1850, %v3070
        %v5051 = vmul.f32 %v1851, %v3085
        %v5052 = vmul.f32 %v1852, %v3100
        %v5053 = vmul.f32 %v1853, %v3115
        %v5054 = vmul.f32 %v1854, %v3130
        %v5055 = vmul.f32 %v1855, %v3145
        %v5056 = vmul.f32 %v1856, %v3160
        %v5057 = vmul.f32 %v1857, %v3175
        %v5058 = vmul.f32 %v1858, %v3190
        %v5059 = vmul.f32 %v1859, %v3205
        %v5060 = vmul.f32 %v1860, %v3220
        %v5061 = vmul.f32 %v1861, %v3235
        %v5062 = vmul.f32 %v1862, %v3250
        %v5063 = vmul.f32 %v1863, %v3265
        %v5064 = vmul.f32 %v1864, %v3280
        %v5065 = vmul.f32 %v1865, %v3295
        %v5066 = vmul.f32 %v1866, %v3310
        %v5067 = vmul.f32 %v1867, %v3325
        %v5068 = vmul.f32 %v1868, %v3340
        %v5069 = vmul.f32 %v1869, %v3355
        %v5070 = vmul.f32 %v1870, %v3370
        %v5071 = vmul.f32 %v1871, %v3385
        %v5072 = vmul.f32 %v1872, %v3400
        %v5073 = vmul.f32 %v1873, %v3415
        %v5074 = vmul.f32 %v1874, %v3430
        %v5075 = vmul.f32 %v1875, %v3445
        %v5076 = vmul.f32 %v1876, %v3460
        %v5077 = vmul.f32 %v1877, %v3475
        %v5078 = vmul.f32 %v1878, %v3490
        %v5079 = vmul.f32 %v1879, %v3505
        %v5080 = vmul.f32 %v1880, %v3520
        %v5081 = vmul.f32 %v1881, %v3535
        %v5082 = vmul.f32 %v1882, %v3550
        %v5083 = vmul.f32 %v1883, %v3565
        %v5084 = vmul.f32 %v1884, %v3580
        %v5085 = vmul.f32 %v1885, %v3595
        %v5086 = vmul.f32 %v1886, %v3610
        %v5087 = vmul.f32 %v1887, %v3625
        %v5088 = vmul.f32 %v1888, %v3640
        %v5089 = vmul.f32 %v1889, %v3655
        %v5090 = vmul.f32 %v1890, %v3670
        %v5091 = vmul.f32 %v1891, %v3685
        %v5092 = vmul.f32 %v1892, %v3700
        %v5093 = vmul.f32 %v1893, %v3715
        %v5094 = vmul.f32 %v1894, %v3730
        %v5095 = vmul.f32 %v1895, %v3745
        %v5096 = vmul.f32 %v1896, %v3760
        %v5097 = vmul.f32 %v1897, %v3775
        %v5098 = vmul.f32 %v1898, %v3790
        %v5099 = vmul.f32 %v1899, %v3805
        %v5100 = vmul.f32 %v1900, %v3820
        %v5101 = vmul.f32 %v1901, %v3835
        %v5102 = vmul.f32 %v1902, %v3850
        %v5103 = vmul.f32 %v1903, %v3865
        %v5104 = vmul.f32 %v1904, %v3880
        %v5105 = vmul.f32 %v1905, %v3895
        %v5106 = vmul.f32 %v1906, %v3910
        %v5107 = vmul.f32 %v1907, %v3925
        %v5108 = vmul.f32 %v1908, %v3940
        %v5109 = vmul.f32 %v1909, %v3955
        %v5110 = vmul.f32 %v1910, %v3970
        %v5111 = vmul.f32 %v1911, %v3985
        %v5112 = vmul.f32 %v1912, %v4000
        %v5113 = vmul.f32 %v1913, %v4015
        %v5114 = vmul.f32 %v1914, %v4030
        %v5115 = vmul.f32 %v1915, %v4045
        %v5116 = vmul.f32 %v1916, %v4060
        %v5117 = vmul.f32 %v1917, %v4075
        %v5118 = vmul.f32 %v1918, %v4090
        %v5119 = vmul.f32 %v1919, %v4105
        %v5120 = vmul.f32 %v1920, %v4120
        %v5121 = vmul.f32 %v1921, %v4135
        %v5122 = vmul.f32 %v1922, %v4150
        %v5123 = vmul.f32 %v1923, %v4165
        %v5124 = vmul.f32 %v1924, %v4180
        %v5125 = vmul.f32 %v1925, %v4195
        %v5126 = vmul.f32 %v1926, %v4210
        %v5127 = vmul.f32 %v1927, %v4225
        %v5128 = vmul.f32 %v1928, %v4240
        %v5129 = vmul.f32 %v1929, %v4255
        %v5130 = vmul.f32 %v1930, %v4270
        %v5131 = vmul.f32 %v1931, %v4285
        %v5132 = vmul.f32 %v1932, %v4300
        %v5133 = vmul.f32 %v1933, %v4315
        %v5134 = vmul.f32 %v1934, %v4330
        %v5135 = vmul.f32 %v1935, %v4345
        %v5136 = vmul.f32 %v1936, %v4360
        %v5137 = vmul.f32 %v1937, %v4375
        %v5138 = vmul.f32 %v1938, %v4390
        %v5139 = vmul.f32 %v1939, %v4405
        %v5140 = vmul.f32 %v1940, %v4420
        %v5141 = vmul.f32 %v1941, %v4435
        %v5142 = vmul.f32 %v1942, %v4450
        %v5143 = vmul.f32 %v1943, %v4465
        %v5144 = vmul.f32 %v1944, %v4480
        %v5145 = vmul.f32 %v1945, %v4495
        %v5146 = vmul.f32 %v1946, %v4510
        %v5147 = vmul.f32 %v1947, %v4525
        %v5148 = vmul.f32 %v1948, %v4540
        %v5149 = vmul.f32 %v1949, %v4555
        %v5150 = vmul.f32 %v1950, %v4570
        %v5151 = vmul.f32 %v1951, %v4585
        %v5152 = vmul.f32 %v1952, %v4600
        %v5153 = vmul.f32 %v1953, %v4615
        %v5154 = vmul.f32 %v1954, %v4630
        %v5155 = vmul.f32 %v1955, %v4645
        %v5156 = vmul.f32 %v1956, %v4660
        %v5157 = vmul.f32 %v1957, %v4675
        %v5158 = vmul.f32 %v1958, %v4690
        %v5159 = vmul.f32 %v1959, %v4705
        %v5160 = vmul.f32 %v1960, %v4720
        %v5161 = vmul.f32 %v1961, %v4735
        %v5162 = vmul.f32 %v1962, %v4750
        %v5163 = vmul.f32 %v1963, %v4765
        %v5164 = vmul.f32 %v1964, %v4780
        %v5165 = vmul.f32 %v1965, %v4795
        %v5166 = vmul.f32 %v1966, %v4810
        %v5167 = vmul.f32 %v1967, %v4825
        %v5168 = vmul.f32 %v1968, %v4840
        %v5169 = vmul.f32 %v1969, %v4855
        %v5170 = vmul.f32 %v1970, %v4870
        %v5171 = vmul.f32 %v1971, %v4885
        %v5172 = vmul.f32 %v1972, %v4900
        %v5173 = vmul.f32 %v1973, %v4915
        %v5174 = vmul.f32 %v1974, %v4930
        %v5175 = vmul.f32 %v1975, %v4945
        %v5176 = vmul.f32 %v1976, %v4960
        %v5177 = vmul.f32 %v1977, %v4975
        %v5178 = vmul.f32 %v1978, %v4990
        %v5179 = vmul.f32 %v1979, %v5005
        %v5180 = vmul.f32 %v1980, %v5020
        %v5181 = vld [vmem:[#allocation2] sm:$0xff]
        %v5182 = vld [vmem:[#allocation2 + $0x8] sm:$0xff]
        %v5183 = vld [vmem:[#allocation2 + $0x10] sm:$0xf]
        %v5184 = vadd.f32 %v5021, %v5031
        %v5185 = vadd.f32 %v5184, %v5041
        %v5186 = vadd.f32 %v5185, %v5051
        %v5187 = vadd.f32 %v5186, %v5061
        %v5188 = vadd.f32 %v5187, %v5071
        %v5189 = vadd.f32 %v5188, %v5081
        %v5190 = vadd.f32 %v5189, %v5091
        %v5191 = vrot.slane %v5190, 4
        %v5192 = vadd.f32 %v5190, %v5191
        %v5193 = vrot.slane %v5192, 2
        %v5194 = vadd.f32 %v5192, %v5193
        %v5195 = vrot.slane %v5194, 1
        %v5196 = vadd.f32 %v5194, %v5195
        %v5197 = vadd.f32 %v5022, %v5032
        %v5198 = vadd.f32 %v5197, %v5042
        %v5199 = vadd.f32 %v5198, %v5052
        %v5200 = vadd.f32 %v5199, %v5062
        %v5201 = vadd.f32 %v5200, %v5072
        %v5202 = vadd.f32 %v5201, %v5082
        %v5203 = vadd.f32 %v5202, %v5092
        %v5204 = vrot.slane %v5203, 4
        %v5205 = vadd.f32 %v5203, %v5204
        %v5206 = vrot.slane %v5205, 2
        %v5207 = vadd.f32 %v5205, %v5206
        %v5208 = vrot.slane %v5207, 1
        %v5209 = vadd.f32 %v5207, %v5208
        %v5210 = vadd.f32 %v5023, %v5033
        %v5211 = vadd.f32 %v5210, %v5043
        %v5212 = vadd.f32 %v5211, %v5053
        %v5213 = vadd.f32 %v5212, %v5063
        %v5214 = vadd.f32 %v5213, %v5073
        %v5215 = vadd.f32 %v5214, %v5083
        %v5216 = vadd.f32 %v5215, %v5093
        %v5217 = vrot.slane %v5216, 4
        %v5218 = vadd.f32 %v5216, %v5217
        %v5219 = vrot.slane %v5218, 2
        %v5220 = vadd.f32 %v5218, %v5219
        %v5221 = vrot.slane %v5220, 1
        %v5222 = vadd.f32 %v5220, %v5221
        %v5223 = vadd.f32 %v5024, %v5034
        %v5224 = vadd.f32 %v5223, %v5044
        %v5225 = vadd.f32 %v5224, %v5054
        %v5226 = vadd.f32 %v5225, %v5064
        %v5227 = vadd.f32 %v5226, %v5074
        %v5228 = vadd.f32 %v5227, %v5084
        %v5229 = vadd.f32 %v5228, %v5094
        %v5230 = vrot.slane %v5229, 4
        %v5231 = vadd.f32 %v5229, %v5230
        %v5232 = vrot.slane %v5231, 2
        %v5233 = vadd.f32 %v5231, %v5232
        %v5234 = vrot.slane %v5233, 1
        %v5235 = vadd.f32 %v5233, %v5234
        %v5236 = vadd.f32 %v5025, %v5035
        %v5237 = vadd.f32 %v5236, %v5045
        %v5238 = vadd.f32 %v5237, %v5055
        %v5239 = vadd.f32 %v5238, %v5065
        %v5240 = vadd.f32 %v5239, %v5075
        %v5241 = vadd.f32 %v5240, %v5085
        %v5242 = vadd.f32 %v5241, %v5095
        %v5243 = vrot.slane %v5242, 4
        %v5244 = vadd.f32 %v5242, %v5243
        %v5245 = vrot.slane %v5244, 2
        %v5246 = vadd.f32 %v5244, %v5245
        %v5247 = vrot.slane %v5246, 1
        %v5248 = vadd.f32 %v5246, %v5247
        %v5249 = vadd.f32 %v5026, %v5036
        %v5250 = vadd.f32 %v5249, %v5046
        %v5251 = vadd.f32 %v5250, %v5056
        %v5252 = vadd.f32 %v5251, %v5066
        %v5253 = vadd.f32 %v5252, %v5076
        %v5254 = vadd.f32 %v5253, %v5086
        %v5255 = vadd.f32 %v5254, %v5096
        %v5256 = vrot.slane %v5255, 4
        %v5257 = vadd.f32 %v5255, %v5256
        %v5258 = vrot.slane %v5257, 2
        %v5259 = vadd.f32 %v5257, %v5258
        %v5260 = vrot.slane %v5259, 1
        %v5261 = vadd.f32 %v5259, %v5260
        %v5262 = vadd.f32 %v5027, %v5037
        %v5263 = vadd.f32 %v5262, %v5047
        %v5264 = vadd.f32 %v5263, %v5057
        %v5265 = vadd.f32 %v5264, %v5067
        %v5266 = vadd.f32 %v5265, %v5077
        %v5267 = vadd.f32 %v5266, %v5087
        %v5268 = vadd.f32 %v5267, %v5097
        %v5269 = vrot.slane %v5268, 4
        %v5270 = vadd.f32 %v5268, %v5269
        %v5271 = vrot.slane %v5270, 2
        %v5272 = vadd.f32 %v5270, %v5271
        %v5273 = vrot.slane %v5272, 1
        %v5274 = vadd.f32 %v5272, %v5273
        %v5275 = vadd.f32 %v5028, %v5038
        %v5276 = vadd.f32 %v5275, %v5048
        %v5277 = vadd.f32 %v5276, %v5058
        %v5278 = vadd.f32 %v5277, %v5068
        %v5279 = vadd.f32 %v5278, %v5078
        %v5280 = vadd.f32 %v5279, %v5088
        %v5281 = vadd.f32 %v5280, %v5098
        %v5282 = vrot.slane %v5281, 4
        %v5283 = vadd.f32 %v5281, %v5282
        %v5284 = vrot.slane %v5283, 2
        %v5285 = vadd.f32 %v5283, %v5284
        %v5286 = vrot.slane %v5285, 1
        %v5287 = vadd.f32 %v5285, %v5286
        %v5288 = vadd.f32 %v5029, %v5039
        %v5289 = vadd.f32 %v5288, %v5049
        %v5290 = vadd.f32 %v5289, %v5059
        %v5291 = vadd.f32 %v5290, %v5069
        %v5292 = vadd.f32 %v5291, %v5079
        %v5293 = vadd.f32 %v5292, %v5089
        %v5294 = vadd.f32 %v5293, %v5099
        %v5295 = vrot.slane %v5294, 4
        %v5296 = vadd.f32 %v5294, %v5295
        %v5297 = vrot.slane %v5296, 2
        %v5298 = vadd.f32 %v5296, %v5297
        %v5299 = vrot.slane %v5298, 1
        %v5300 = vadd.f32 %v5298, %v5299
        %v5301 = vadd.f32 %v5030, %v5040
        %v5302 = vadd.f32 %v5301, %v5050
        %v5303 = vadd.f32 %v5302, %v5060
        %v5304 = vadd.f32 %v5303, %v5070
        %v5305 = vadd.f32 %v5304, %v5080
        %v5306 = vadd.f32 %v5305, %v5090
        %v5307 = vadd.f32 %v5306, %v5100
        %v5308 = vrot.slane %v5307, 4
        %v5309 = vadd.f32 %v5307, %v5308
        %v5310 = vrot.slane %v5309, 2
        %v5311 = vadd.f32 %v5309, %v5310
        %v5312 = vrot.slane %v5311, 1
        %v5313 = vadd.f32 %v5311, %v5312
        %v5314 = vadd.f32 %v5101, %v5111
        %v5315 = vadd.f32 %v5314, %v5121
        %v5316 = vadd.f32 %v5315, %v5131
        %v5317 = vadd.f32 %v5316, %v5141
        %v5318 = vadd.f32 %v5317, %v5151
        %v5319 = vadd.f32 %v5318, %v5161
        %v5320 = vadd.f32 %v5319, %v5171
        %v5321 = vrot.slane %v5320, 4
        %v5322 = vadd.f32 %v5320, %v5321
        %v5323 = vrot.slane %v5322, 2
        %v5324 = vadd.f32 %v5322, %v5323
        %v5325 = vrot.slane %v5324, 1
        %v5326 = vadd.f32 %v5324, %v5325
        %v5327 = vadd.f32 %v5102, %v5112
        %v5328 = vadd.f32 %v5327, %v5122
        %v5329 = vadd.f32 %v5328, %v5132
        %v5330 = vadd.f32 %v5329, %v5142
        %v5331 = vadd.f32 %v5330, %v5152
        %v5332 = vadd.f32 %v5331, %v5162
        %v5333 = vadd.f32 %v5332, %v5172
        %v5334 = vrot.slane %v5333, 4
        %v5335 = vadd.f32 %v5333, %v5334
        %v5336 = vrot.slane %v5335, 2
        %v5337 = vadd.f32 %v5335, %v5336
        %v5338 = vrot.slane %v5337, 1
        %v5339 = vadd.f32 %v5337, %v5338
        %v5340 = vadd.f32 %v5103, %v5113
        %v5341 = vadd.f32 %v5340, %v5123
        %v5342 = vadd.f32 %v5341, %v5133
        %v5343 = vadd.f32 %v5342, %v5143
        %v5344 = vadd.f32 %v5343, %v5153
        %v5345 = vadd.f32 %v5344, %v5163
        %v5346 = vadd.f32 %v5345, %v5173
        %v5347 = vrot.slane %v5346, 4
        %v5348 = vadd.f32 %v5346, %v5347
        %v5349 = vrot.slane %v5348, 2
        %v5350 = vadd.f32 %v5348, %v5349
        %v5351 = vrot.slane %v5350, 1
        %v5352 = vadd.f32 %v5350, %v5351
        %v5353 = vadd.f32 %v5104, %v5114
        %v5354 = vadd.f32 %v5353, %v5124
        %v5355 = vadd.f32 %v5354, %v5134
        %v5356 = vadd.f32 %v5355, %v5144
        %v5357 = vadd.f32 %v5356, %v5154
        %v5358 = vadd.f32 %v5357, %v5164
        %v5359 = vadd.f32 %v5358, %v5174
        %v5360 = vrot.slane %v5359, 4
        %v5361 = vadd.f32 %v5359, %v5360
        %v5362 = vrot.slane %v5361, 2
        %v5363 = vadd.f32 %v5361, %v5362
        %v5364 = vrot.slane %v5363, 1
        %v5365 = vadd.f32 %v5363, %v5364
        %v5366 = vadd.f32 %v5105, %v5115
        %v5367 = vadd.f32 %v5366, %v5125
        %v5368 = vadd.f32 %v5367, %v5135
        %v5369 = vadd.f32 %v5368, %v5145
        %v5370 = vadd.f32 %v5369, %v5155
        %v5371 = vadd.f32 %v5370, %v5165
        %v5372 = vadd.f32 %v5371, %v5175
        %v5373 = vrot.slane %v5372, 4
        %v5374 = vadd.f32 %v5372, %v5373
        %v5375 = vrot.slane %v5374, 2
        %v5376 = vadd.f32 %v5374, %v5375
        %v5377 = vrot.slane %v5376, 1
        %v5378 = vadd.f32 %v5376, %v5377
        %v5379 = vadd.f32 %v5106, %v5116
        %v5380 = vadd.f32 %v5379, %v5126
        %v5381 = vadd.f32 %v5380, %v5136
        %v5382 = vadd.f32 %v5381, %v5146
        %v5383 = vadd.f32 %v5382, %v5156
        %v5384 = vadd.f32 %v5383, %v5166
        %v5385 = vadd.f32 %v5384, %v5176
        %v5386 = vrot.slane %v5385, 4
        %v5387 = vadd.f32 %v5385, %v5386
        %v5388 = vrot.slane %v5387, 2
        %v5389 = vadd.f32 %v5387, %v5388
        %v5390 = vrot.slane %v5389, 1
        %v5391 = vadd.f32 %v5389, %v5390
        %v5392 = vadd.f32 %v5107, %v5117
        %v5393 = vadd.f32 %v5392, %v5127
        %v5394 = vadd.f32 %v5393, %v5137
        %v5395 = vadd.f32 %v5394, %v5147
        %v5396 = vadd.f32 %v5395, %v5157
        %v5397 = vadd.f32 %v5396, %v5167
        %v5398 = vadd.f32 %v5397, %v5177
        %v5399 = vrot.slane %v5398, 4
        %v5400 = vadd.f32 %v5398, %v5399
        %v5401 = vrot.slane %v5400, 2
        %v5402 = vadd.f32 %v5400, %v5401
        %v5403 = vrot.slane %v5402, 1
        %v5404 = vadd.f32 %v5402, %v5403
        %v5405 = vadd.f32 %v5108, %v5118
        %v5406 = vadd.f32 %v5405, %v5128
        %v5407 = vadd.f32 %v5406, %v5138
        %v5408 = vadd.f32 %v5407, %v5148
        %v5409 = vadd.f32 %v5408, %v5158
        %v5410 = vadd.f32 %v5409, %v5168
        %v5411 = vadd.f32 %v5410, %v5178
        %v5412 = vrot.slane %v5411, 4
        %v5413 = vadd.f32 %v5411, %v5412
        %v5414 = vrot.slane %v5413, 2
        %v5415 = vadd.f32 %v5413, %v5414
        %v5416 = vrot.slane %v5415, 1
        %v5417 = vadd.f32 %v5415, %v5416
        %v5418 = vadd.f32 %v5109, %v5119
        %v5419 = vadd.f32 %v5418, %v5129
        %v5420 = vadd.f32 %v5419, %v5139
        %v5421 = vadd.f32 %v5420, %v5149
        %v5422 = vadd.f32 %v5421, %v5159
        %v5423 = vadd.f32 %v5422, %v5169
        %v5424 = vadd.f32 %v5423, %v5179
        %v5425 = vrot.slane %v5424, 4
        %v5426 = vadd.f32 %v5424, %v5425
        %v5427 = vrot.slane %v5426, 2
        %v5428 = vadd.f32 %v5426, %v5427
        %v5429 = vrot.slane %v5428, 1
        %v5430 = vadd.f32 %v5428, %v5429
        %v5431 = vadd.f32 %v5110, %v5120
        %v5432 = vadd.f32 %v5431, %v5130
        %v5433 = vadd.f32 %v5432, %v5140
        %v5434 = vadd.f32 %v5433, %v5150
        %v5435 = vadd.f32 %v5434, %v5160
        %v5436 = vadd.f32 %v5435, %v5170
        %v5437 = vadd.f32 %v5436, %v5180
        %v5438 = vrot.slane %v5437, 4
        %v5439 = vadd.f32 %v5437, %v5438
        %v5440 = vrot.slane %v5439, 2
        %v5441 = vadd.f32 %v5439, %v5440
        %v5442 = vrot.slane %v5441, 1
        %v5443 = vadd.f32 %v5441, %v5442
        %v5464 = vrot.slane %v5209, 6
        %v5465 = vrot.slane %v5222, 4
        %v5466 = vrot.slane %v5235, 2
        %v5467 = vrot.slane %v5261, 6
        %v5468 = vrot.slane %v5274, 4
        %v5469 = vrot.slane %v5287, 2
        %v5470 = vrot.slane %v5313, 6
        %v5471 = vrot.slane %v5339, 6
        %v5472 = vrot.slane %v5352, 4
        %v5473 = vrot.slane %v5365, 2
        %v5474 = vrot.slane %v5391, 6
        %v5475 = vrot.slane %v5404, 4
        %v5476 = vrot.slane %v5417, 2
        %v5477 = vrot.slane %v5443, 6
        %vm5478 = vcmask 1041408
        %v5479 = vsel %vm5478, %v5196, %v5464
        %vm5480 = vcmask 1045508
        %v5481 = vsel %vm5480, %v5465, %v5466
        %vm5482 = vcmask 1043456
        %v5483 = vsel %vm5482, %v5479, %v5481
        %v5484 = vsel %vm5478, %v5248, %v5467
        %v5485 = vsel %vm5480, %v5468, %v5469
        %v5486 = vsel %vm5482, %v5484, %v5485
        %v5487 = vsel %vm5478, %v5300, %v5470
        %v5488 = vsel %vm5478, %v5326, %v5471
        %v5489 = vsel %vm5480, %v5472, %v5473
        %v5490 = vsel %vm5482, %v5488, %v5489
        %v5491 = vsel %vm5478, %v5378, %v5474
        %v5492 = vsel %vm5480, %v5475, %v5476
        %v5493 = vsel %vm5482, %v5491, %v5492
        %v5494 = vsel %vm5478, %v5430, %v5477
        %vm5495 = vcmask 1044484
        %v5496 = vsel %vm5495, %v5483, %v5483
        %vm5497 = vcmask 1046534
        %v5498 = vsel %vm5497, %v5483, %v5496
        %v5499 = vrot.slane %v5490, 7
        %vm5500 = vcmask 1041409
        %v5501 = vsel %vm5500, %v5499, %v5498
        %vm5502 = vcmask 1043459
        %v5503 = vsel %vm5502, %v5499, %v5501
        %vm5504 = vcmask 1045509
        %v5505 = vsel %vm5504, %v5499, %v5503
        %vm5506 = vcmask 1047559
        %v5507 = vsel %vm5506, %v5499, %v5505
        %v5508 = vsel %vm5495, %v5486, %v5486
        %v5509 = vsel %vm5497, %v5486, %v5508
        %v5510 = vrot.slane %v5493, 7
        %v5511 = vsel %vm5500, %v5510, %v5509
        %v5512 = vsel %vm5502, %v5510, %v5511
        %v5513 = vsel %vm5504, %v5510, %v5512
        %v5514 = vsel %vm5506, %v5510, %v5513
        %v5515 = vsel %vm5495, %v5487, %v5487
        %v5516 = vsel %vm5497, %v5487, %v5515
        %v5517 = vrot.slane %v5494, 7
        %v5518 = vsel %vm5500, %v5517, %v5516
        %v5519 = vsel %vm5502, %v5517, %v5518
        %v5520 = vsel %vm5504, %v5517, %v5519
        %v5521 = vsel %vm5506, %v5517, %v5520
        %v5525 = vadd.f32 %v5181, %v5507
        %v5526 = vadd.f32 %v5182, %v5514
        %v5527 = vadd.f32 %v5183, %v5521
        %5528 = vst [vmem:[#allocation2] sm:$0xff] %v5525
        %5529 = vst [vmem:[#allocation2 + $0x8] sm:$0xff] %v5526
        %5530 = vst [vmem:[#allocation2 + $0x10] sm:$0xf] %v5527
        %p5531 = scmp.eq.s32.totalorder %s23, 3
        // Predicated region
        $region94: #{geolocation_cnn_forward.2} parent=84 // pred_check
          %p5532 = pneg %p5531
        $region95: #{geolocation_cnn_forward.2} parent=84 // pred_check_branch
          %5534 = sbr.rel (%p5532) target = $region97
        $region96: #{geolocation_cnn_forward.2} parent=84 // pred_region
          %v5535 = vld [vmem:[#allocation2] sm:$0xff]
          %v5536 = vld [vmem:[#allocation2 + $0x8] sm:$0xff]
          %v5537 = vld [vmem:[#allocation2 + $0x10] sm:$0xf]
          %v5538 = vmul.f32 %v5535, 0.00390625
          %v5539 = vmul.f32 %v5536, 0.00390625
          %v5540 = vmul.f32 %v5537, 0.00390625
          %5541 = vst [vmem:[%s455] sm:$0xff] %v5538
          %5542 = vst [vmem:[%s455 + $0x8] sm:$0xff] %v5539
          %5543 = vst [vmem:[%s455 + $0x10] sm:$0xf] %v5540
        $region97: #{geolocation_cnn_forward.2} parent=84 // pred_fallthru
          _
        %s5544 = smul.u32 10, %s22
        %p5545 = scmp.lt.s32.totalorder %s5544, 9
        %s5546 = scalar_select %p5545, %s5544, 9
        %s5547 = smul.addr %s5546, 2
        %s5548 = scalar_lea.vmem %s7, %s5547
        // Predicated region
        $region98: #{geolocation_cnn_forward.2} parent=84 // pred_check
          %p5549 = pneg %p215
        $region99: #{geolocation_cnn_forward.2} parent=84 // pred_check_branch
          %5551 = sbr.rel (%p5549) target = $region101
        $region100: #{geolocation_cnn_forward.2} parent=84 // pred_region
          %s5552 = smul.u32 10, %s22
        $region101: #{geolocation_cnn_forward.2} parent=84 // pred_fallthru
          _
        // Predicated region
        $region102: #{geolocation_cnn_forward.2} parent=84 // pred_check
          %p5553 = pneg %p215
        $region103: #{geolocation_cnn_forward.2} parent=84 // pred_check_branch
          %5555 = sbr.rel (%p5553) target = $region105
        $region104: #{geolocation_cnn_forward.2} parent=84 // pred_region
          %s5556 = smul.u32 10, %s22
          %p5557 = scmp.lt.s32.totalorder %s5556, 9
          %s5558 = scalar_select %p5557, %s5556, 9
          %s5559 = smul.addr %s5558, 2
          %s5560 = scalar_lea.vmem %s7, %s5559
        $region105: #{geolocation_cnn_forward.2} parent=84 // pred_fallthru
          _
      $region85: #{geolocation_cnn_forward.2} parent=5 // pred_fallthru
        _
      %p5561 = scmp.le.s32.totalorder 2, %s13
      // Predicated region
      $region106: #{geolocation_cnn_forward.2} parent=5 // pred_check
        %p5562 = pneg %p5561
      $region107: #{geolocation_cnn_forward.2} parent=5 // pred_check_branch
        %5564 = sbr.rel (%p5562) target = $region109
      $region108: #{geolocation_cnn_forward.2} parent=5 // pred_region
        %s5565 = ssub.s32 %s13, 2
      $region109: #{geolocation_cnn_forward.2} parent=5 // pred_fallthru
        _
    $region6: #{geolocation_cnn_forward.2} parent=1 // loop_footer
      %s17 = sadd.s32 1, %s13
    $region7: #{geolocation_cnn_forward.2} parent=1 // loop_footer_branch
      %12 = sbr.rel target = $region3
    $region8: #{geolocation_cnn_forward.2} parent=1 // loop_exit
      _

// kernel: geolocation_cnn_forward.3
$region0: #{geolocation_cnn_forward.3}
  #allocation0 [shape = 'u32[]', space=smem, size = 0x4, offset = 0x4, fixed_abs, tag = 'smem constant byte address 0x4 - core index']
  #allocation1 [shape = 'u32[72,128]{1,0:T(1,128)}', space=vmem, size = 0x9000, scoped, tag = 'internal scratch']
  %s0 = inlined_call_operand.vmem [shape: f32[2,1280], index: 0, kind: input, shape index: {}]
  %s1 = inlined_call_operand.vmem [shape: bf16[1280,512], index: 1, kind: input, shape index: {}]
  %s2 = inlined_call_operand.vmem [shape: f32[1,512], index: 2, kind: input, shape index: {}]
  %s3 = inlined_call_operand.vmem [shape: bf16[512,128], index: 3, kind: input, shape index: {}]
  %s4 = inlined_call_operand.vmem [shape: f32[1,128], index: 4, kind: input, shape index: {}]
  %s5 = inlined_call_operand.hbm [shape: f32[2,128], index: 5, kind: output, shape index: {}]
  %s6 = sld [smem:[#allocation0]]
  $region30: #{geolocation_cnn_forward.3} parent=0
    _
  %s8 = ssub.s32 1, %s6
  %s9 = scalar_select 0, %s8, %s6
  $region1: #{geolocation_cnn_forward.3} parent=0
    #allocation2 [shape = 'u8[1024]{0}', space=vmem, size = 0x400, scoped, tag = 'output window, operand 0, single buffered']
    #allocation3 [shape = 's32[1]{0}', space=sflag, size = 0x4, scoped, tag = 'scoped memory for geolocation_cnn_forward.3']
    %10 = vsyncpa [#allocation3], 0
    // Predicated region
    $region2: #{geolocation_cnn_forward.3} parent=1 // pred_check
      _
    $region3: #{geolocation_cnn_forward.3} parent=1 // pred_check_branch
      %12 = sbr.rel (0) target = $region5
    $region4: #{geolocation_cnn_forward.3} parent=1 // pred_region
      _
    $region5: #{geolocation_cnn_forward.3} parent=1 // pred_fallthru
      _
    // Predicated region
    $region6: #{geolocation_cnn_forward.3} parent=1 // pred_check
      _
    $region7: #{geolocation_cnn_forward.3} parent=1 // pred_check_branch
      %14 = sbr.rel (0) target = $region9
    $region8: #{geolocation_cnn_forward.3} parent=1 // pred_region
      _
    $region9: #{geolocation_cnn_forward.3} parent=1 // pred_fallthru
      _
    // Predicated region
    $region10: #{geolocation_cnn_forward.3} parent=1 // pred_check
      _
    $region11: #{geolocation_cnn_forward.3} parent=1 // pred_check_branch
      %16 = sbr.rel (0) target = $region13
    $region12: #{geolocation_cnn_forward.3} parent=1 // pred_region
      _
    $region13: #{geolocation_cnn_forward.3} parent=1 // pred_fallthru
      _
    // Predicated region
    $region14: #{geolocation_cnn_forward.3} parent=1 // pred_check
      _
    $region15: #{geolocation_cnn_forward.3} parent=1 // pred_check_branch
      %18 = sbr.rel (0) target = $region17
    $region16: #{geolocation_cnn_forward.3} parent=1 // pred_region
      _
    $region17: #{geolocation_cnn_forward.3} parent=1 // pred_fallthru
      _
    // Predicated region
    $region18: #{geolocation_cnn_forward.3} parent=1 // pred_check
      _
    $region19: #{geolocation_cnn_forward.3} parent=1 // pred_check_branch
      %20 = sbr.rel (0) target = $region21
    $region20: #{geolocation_cnn_forward.3} parent=1 // pred_region
      _
    $region21: #{geolocation_cnn_forward.3} parent=1 // pred_fallthru
      _
    %v21 = vld [vmem:[%s0] sm:$0xff]
    %v22 = vld [vmem:[%s0 + $0x8] sm:$0xff]
    %v23 = vld [vmem:[%s0 + $0x10] sm:$0xf]
    %27 = vst [vmem:[#allocation1] ss:$4 sm:$0xff] %v21
    %s28 = scalar_lea.vmem [#allocation1], 32
    %29 = vst [vmem:[%s28] ss:$4 sm:$0xff] %v22
    %v30 = vld.sshfl [vmem:[#allocation1] sm:$0xff pattern:$0x73625140]
    %v31 = vld.sshfl [vmem:[#allocation1 + $0x8] sm:$0xff pattern:$0x73625140]
    %v32 = vld.sshfl [vmem:[#allocation1 + $0x10] sm:$0xff pattern:$0x73625140]
    %v33 = vld.sshfl [vmem:[#allocation1 + $0x18] sm:$0xff pattern:$0x73625140]
    %v34 = vld.sshfl [vmem:[#allocation1 + $0x20] sm:$0xff pattern:$0x73625140]
    %v35 = vld.sshfl [vmem:[#allocation1 + $0x28] sm:$0xff pattern:$0x73625140]
    %v36 = vld.sshfl [vmem:[#allocation1 + $0x30] sm:$0xff pattern:$0x73625140]
    %v37 = vld.sshfl [vmem:[#allocation1 + $0x38] sm:$0xff pattern:$0x73625140]
    %38 = vst [vmem:[#allocation1] ss:$4 sm:$0xff] %v23
    %v39 = vld.sshfl [vmem:[#allocation1] sm:$0xff pattern:$0x73625140]
    %v40 = vld.sshfl [vmem:[#allocation1 + $0x8] sm:$0xff pattern:$0x73625140]
    %v51 = vpack.c.bf16 %v30, %v30
    %v52 = vpack.c.bf16 %v31, %v31
    %v53 = vpack.c.bf16 %v32, %v32
    %v54 = vpack.c.bf16 %v33, %v33
    %v55 = vpack.c.bf16 %v34, %v34
    %v56 = vpack.c.bf16 %v35, %v35
    %v57 = vpack.c.bf16 %v36, %v36
    %v58 = vpack.c.bf16 %v37, %v37
    %v59 = vpack.c.bf16 %v39, %v39
    %v60 = vpack.c.bf16 %v40, %v40
    %v61 = vld [vmem:[%s1] sm:$0xff]
    %v62 = vld [vmem:[%s1 + $0x8] sm:$0xff]
    %v63 = vld [vmem:[%s1 + $0x10] sm:$0xff]
    %v64 = vld [vmem:[%s1 + $0x18] sm:$0xff]
    %v65 = vld [vmem:[%s1 + $0x20] sm:$0xff]
    %v66 = vld [vmem:[%s1 + $0x28] sm:$0xff]
    %v67 = vld [vmem:[%s1 + $0x30] sm:$0xff]
    %v68 = vld [vmem:[%s1 + $0x38] sm:$0xff]
    %v69 = vld [vmem:[%s1 + $0x40] sm:$0xff]
    %v70 = vld [vmem:[%s1 + $0x48] sm:$0xff]
    %v71 = vld [vmem:[%s1 + $0x50] sm:$0xff]
    %v72 = vld [vmem:[%s1 + $0x58] sm:$0xff]
    %v73 = vld [vmem:[%s1 + $0x60] sm:$0xff]
    %v74 = vld [vmem:[%s1 + $0x68] sm:$0xff]
    %v75 = vld [vmem:[%s1 + $0x70] sm:$0xff]
    %v76 = vld [vmem:[%s1 + $0x78] sm:$0xff]
    %v77 = vld [vmem:[%s1 + $0x80] sm:$0xff]
    %v78 = vld [vmem:[%s1 + $0x88] sm:$0xff]
    %v79 = vld [vmem:[%s1 + $0x90] sm:$0xff]
    %v80 = vld [vmem:[%s1 + $0x98] sm:$0xff]
    %v81 = vld [vmem:[%s1 + $0xa0] sm:$0xff]
    %v82 = vld [vmem:[%s1 + $0xa8] sm:$0xff]
    %v83 = vld [vmem:[%s1 + $0xb0] sm:$0xff]
    %v84 = vld [vmem:[%s1 + $0xb8] sm:$0xff]
    %v85 = vld [vmem:[%s1 + $0xc0] sm:$0xff]
    %v86 = vld [vmem:[%s1 + $0xc8] sm:$0xff]
    %v87 = vld [vmem:[%s1 + $0xd0] sm:$0xff]
    %v88 = vld [vmem:[%s1 + $0xd8] sm:$0xff]
    %v89 = vld [vmem:[%s1 + $0xe0] sm:$0xff]
    %v90 = vld [vmem:[%s1 + $0xe8] sm:$0xff]
    %v91 = vld [vmem:[%s1 + $0xf0] sm:$0xff]
    %v92 = vld [vmem:[%s1 + $0xf8] sm:$0xff]
    %v93 = vld [vmem:[%s1 + $0x100] sm:$0xff]
    %v94 = vld [vmem:[%s1 + $0x108] sm:$0xff]
    %v95 = vld [vmem:[%s1 + $0x110] sm:$0xff]
    %v96 = vld [vmem:[%s1 + $0x118] sm:$0xff]
    %v97 = vld [vmem:[%s1 + $0x120] sm:$0xff]
    %v98 = vld [vmem:[%s1 + $0x128] sm:$0xff]
    %v99 = vld [vmem:[%s1 + $0x130] sm:$0xff]
    %v100 = vld [vmem:[%s1 + $0x138] sm:$0xff]
    %v101 = vld [vmem:[%s1 + $0x140] sm:$0xff]
    %v102 = vld [vmem:[%s1 + $0x148] sm:$0xff]
    %v103 = vld [vmem:[%s1 + $0x150] sm:$0xff]
    %v104 = vld [vmem:[%s1 + $0x158] sm:$0xff]
    %v105 = vld [vmem:[%s1 + $0x160] sm:$0xff]
    %v106 = vld [vmem:[%s1 + $0x168] sm:$0xff]
    %v107 = vld [vmem:[%s1 + $0x170] sm:$0xff]
    %v108 = vld [vmem:[%s1 + $0x178] sm:$0xff]
    %v109 = vld [vmem:[%s1 + $0x180] sm:$0xff]
    %v110 = vld [vmem:[%s1 + $0x188] sm:$0xff]
    %v111 = vld [vmem:[%s1 + $0x190] sm:$0xff]
    %v112 = vld [vmem:[%s1 + $0x198] sm:$0xff]
    %v113 = vld [vmem:[%s1 + $0x1a0] sm:$0xff]
    %v114 = vld [vmem:[%s1 + $0x1a8] sm:$0xff]
    %v115 = vld [vmem:[%s1 + $0x1b0] sm:$0xff]
    %v116 = vld [vmem:[%s1 + $0x1b8] sm:$0xff]
    %v117 = vld [vmem:[%s1 + $0x1c0] sm:$0xff]
    %v118 = vld [vmem:[%s1 + $0x1c8] sm:$0xff]
    %v119 = vld [vmem:[%s1 + $0x1d0] sm:$0xff]
    %v120 = vld [vmem:[%s1 + $0x1d8] sm:$0xff]
    %v121 = vld [vmem:[%s1 + $0x1e0] sm:$0xff]
    %v122 = vld [vmem:[%s1 + $0x1e8] sm:$0xff]
    %v123 = vld [vmem:[%s1 + $0x1f0] sm:$0xff]
    %v124 = vld [vmem:[%s1 + $0x1f8] sm:$0xff]
    %v125 = vld [vmem:[%s1 + $0x200] sm:$0xff]
    %v126 = vld [vmem:[%s1 + $0x208] sm:$0xff]
    %v127 = vld [vmem:[%s1 + $0x210] sm:$0xff]
    %v128 = vld [vmem:[%s1 + $0x218] sm:$0xff]
    %v129 = vld [vmem:[%s1 + $0x220] sm:$0xff]
    %v130 = vld [vmem:[%s1 + $0x228] sm:$0xff]
    %v131 = vld [vmem:[%s1 + $0x230] sm:$0xff]
    %v132 = vld [vmem:[%s1 + $0x238] sm:$0xff]
    %v133 = vld [vmem:[%s1 + $0x240] sm:$0xff]
    %v134 = vld [vmem:[%s1 + $0x248] sm:$0xff]
    %v135 = vld [vmem:[%s1 + $0x250] sm:$0xff]
    %v136 = vld [vmem:[%s1 + $0x258] sm:$0xff]
    %v137 = vld [vmem:[%s1 + $0x260] sm:$0xff]
    %v138 = vld [vmem:[%s1 + $0x268] sm:$0xff]
    %v139 = vld [vmem:[%s1 + $0x270] sm:$0xff]
    %v140 = vld [vmem:[%s1 + $0x278] sm:$0xff]
    %v141 = vld [vmem:[%s1 + $0x280] sm:$0xff]
    %v142 = vld [vmem:[%s1 + $0x288] sm:$0xff]
    %v143 = vld [vmem:[%s1 + $0x290] sm:$0xff]
    %v144 = vld [vmem:[%s1 + $0x298] sm:$0xff]
    %v145 = vld [vmem:[%s1 + $0x2a0] sm:$0xff]
    %v146 = vld [vmem:[%s1 + $0x2a8] sm:$0xff]
    %v147 = vld [vmem:[%s1 + $0x2b0] sm:$0xff]
    %v148 = vld [vmem:[%s1 + $0x2b8] sm:$0xff]
    %v149 = vld [vmem:[%s1 + $0x2c0] sm:$0xff]
    %v150 = vld [vmem:[%s1 + $0x2c8] sm:$0xff]
    %v151 = vld [vmem:[%s1 + $0x2d0] sm:$0xff]
    %v152 = vld [vmem:[%s1 + $0x2d8] sm:$0xff]
    %v153 = vld [vmem:[%s1 + $0x2e0] sm:$0xff]
    %v154 = vld [vmem:[%s1 + $0x2e8] sm:$0xff]
    %v155 = vld [vmem:[%s1 + $0x2f0] sm:$0xff]
    %v156 = vld [vmem:[%s1 + $0x2f8] sm:$0xff]
    %v157 = vld [vmem:[%s1 + $0x300] sm:$0xff]
    %v158 = vld [vmem:[%s1 + $0x308] sm:$0xff]
    %v159 = vld [vmem:[%s1 + $0x310] sm:$0xff]
    %v160 = vld [vmem:[%s1 + $0x318] sm:$0xff]
    %v161 = vld [vmem:[%s1 + $0x320] sm:$0xff]
    %v162 = vld [vmem:[%s1 + $0x328] sm:$0xff]
    %v163 = vld [vmem:[%s1 + $0x330] sm:$0xff]
    %v164 = vld [vmem:[%s1 + $0x338] sm:$0xff]
    %v165 = vld [vmem:[%s1 + $0x340] sm:$0xff]
    %v166 = vld [vmem:[%s1 + $0x348] sm:$0xff]
    %v167 = vld [vmem:[%s1 + $0x350] sm:$0xff]
    %v168 = vld [vmem:[%s1 + $0x358] sm:$0xff]
    %v169 = vld [vmem:[%s1 + $0x360] sm:$0xff]
    %v170 = vld [vmem:[%s1 + $0x368] sm:$0xff]
    %v171 = vld [vmem:[%s1 + $0x370] sm:$0xff]
    %v172 = vld [vmem:[%s1 + $0x378] sm:$0xff]
    %v173 = vld [vmem:[%s1 + $0x380] sm:$0xff]
    %v174 = vld [vmem:[%s1 + $0x388] sm:$0xff]
    %v175 = vld [vmem:[%s1 + $0x390] sm:$0xff]
    %v176 = vld [vmem:[%s1 + $0x398] sm:$0xff]
    %v177 = vld [vmem:[%s1 + $0x3a0] sm:$0xff]
    %v178 = vld [vmem:[%s1 + $0x3a8] sm:$0xff]
    %v179 = vld [vmem:[%s1 + $0x3b0] sm:$0xff]
    %v180 = vld [vmem:[%s1 + $0x3b8] sm:$0xff]
    %v181 = vld [vmem:[%s1 + $0x3c0] sm:$0xff]
    %v182 = vld [vmem:[%s1 + $0x3c8] sm:$0xff]
    %v183 = vld [vmem:[%s1 + $0x3d0] sm:$0xff]
    %v184 = vld [vmem:[%s1 + $0x3d8] sm:$0xff]
    %v185 = vld [vmem:[%s1 + $0x3e0] sm:$0xff]
    %v186 = vld [vmem:[%s1 + $0x3e8] sm:$0xff]
    %v187 = vld [vmem:[%s1 + $0x3f0] sm:$0xff]
    %v188 = vld [vmem:[%s1 + $0x3f8] sm:$0xff]
    %v189 = vld [vmem:[%s1 + $0x400] sm:$0xff]
    %v190 = vld [vmem:[%s1 + $0x408] sm:$0xff]
    %v191 = vld [vmem:[%s1 + $0x410] sm:$0xff]
    %v192 = vld [vmem:[%s1 + $0x418] sm:$0xff]
    %v193 = vld [vmem:[%s1 + $0x420] sm:$0xff]
    %v194 = vld [vmem:[%s1 + $0x428] sm:$0xff]
    %v195 = vld [vmem:[%s1 + $0x430] sm:$0xff]
    %v196 = vld [vmem:[%s1 + $0x438] sm:$0xff]
    %v197 = vld [vmem:[%s1 + $0x440] sm:$0xff]
    %v198 = vld [vmem:[%s1 + $0x448] sm:$0xff]
    %v199 = vld [vmem:[%s1 + $0x450] sm:$0xff]
    %v200 = vld [vmem:[%s1 + $0x458] sm:$0xff]
    %v201 = vld [vmem:[%s1 + $0x460] sm:$0xff]
    %v202 = vld [vmem:[%s1 + $0x468] sm:$0xff]
    %v203 = vld [vmem:[%s1 + $0x470] sm:$0xff]
    %v204 = vld [vmem:[%s1 + $0x478] sm:$0xff]
    %v205 = vld [vmem:[%s1 + $0x480] sm:$0xff]
    %v206 = vld [vmem:[%s1 + $0x488] sm:$0xff]
    %v207 = vld [vmem:[%s1 + $0x490] sm:$0xff]
    %v208 = vld [vmem:[%s1 + $0x498] sm:$0xff]
    %v209 = vld [vmem:[%s1 + $0x4a0] sm:$0xff]
    %v210 = vld [vmem:[%s1 + $0x4a8] sm:$0xff]
    %v211 = vld [vmem:[%s1 + $0x4b0] sm:$0xff]
    %v212 = vld [vmem:[%s1 + $0x4b8] sm:$0xff]
    %v213 = vld [vmem:[%s1 + $0x4c0] sm:$0xff]
    %v214 = vld [vmem:[%s1 + $0x4c8] sm:$0xff]
    %v215 = vld [vmem:[%s1 + $0x4d0] sm:$0xff]
    %v216 = vld [vmem:[%s1 + $0x4d8] sm:$0xff]
    %v217 = vld [vmem:[%s1 + $0x4e0] sm:$0xff]
    %v218 = vld [vmem:[%s1 + $0x4e8] sm:$0xff]
    %v219 = vld [vmem:[%s1 + $0x4f0] sm:$0xff]
    %v220 = vld [vmem:[%s1 + $0x4f8] sm:$0xff]
    %v221 = vld [vmem:[%s1 + $0x500] sm:$0xff]
    %v222 = vld [vmem:[%s1 + $0x508] sm:$0xff]
    %v223 = vld [vmem:[%s1 + $0x510] sm:$0xff]
    %v224 = vld [vmem:[%s1 + $0x518] sm:$0xff]
    %v225 = vld [vmem:[%s1 + $0x520] sm:$0xff]
    %v226 = vld [vmem:[%s1 + $0x528] sm:$0xff]
    %v227 = vld [vmem:[%s1 + $0x530] sm:$0xff]
    %v228 = vld [vmem:[%s1 + $0x538] sm:$0xff]
    %v229 = vld [vmem:[%s1 + $0x540] sm:$0xff]
    %v230 = vld [vmem:[%s1 + $0x548] sm:$0xff]
    %v231 = vld [vmem:[%s1 + $0x550] sm:$0xff]
    %v232 = vld [vmem:[%s1 + $0x558] sm:$0xff]
    %v233 = vld [vmem:[%s1 + $0x560] sm:$0xff]
    %v234 = vld [vmem:[%s1 + $0x568] sm:$0xff]
    %v235 = vld [vmem:[%s1 + $0x570] sm:$0xff]
    %v236 = vld [vmem:[%s1 + $0x578] sm:$0xff]
    %v237 = vld [vmem:[%s1 + $0x580] sm:$0xff]
    %v238 = vld [vmem:[%s1 + $0x588] sm:$0xff]
    %v239 = vld [vmem:[%s1 + $0x590] sm:$0xff]
    %v240 = vld [vmem:[%s1 + $0x598] sm:$0xff]
    %v241 = vld [vmem:[%s1 + $0x5a0] sm:$0xff]
    %v242 = vld [vmem:[%s1 + $0x5a8] sm:$0xff]
    %v243 = vld [vmem:[%s1 + $0x5b0] sm:$0xff]
    %v244 = vld [vmem:[%s1 + $0x5b8] sm:$0xff]
    %v245 = vld [vmem:[%s1 + $0x5c0] sm:$0xff]
    %v246 = vld [vmem:[%s1 + $0x5c8] sm:$0xff]
    %v247 = vld [vmem:[%s1 + $0x5d0] sm:$0xff]
    %v248 = vld [vmem:[%s1 + $0x5d8] sm:$0xff]
    %v249 = vld [vmem:[%s1 + $0x5e0] sm:$0xff]
    %v250 = vld [vmem:[%s1 + $0x5e8] sm:$0xff]
    %v251 = vld [vmem:[%s1 + $0x5f0] sm:$0xff]
    %v252 = vld [vmem:[%s1 + $0x5f8] sm:$0xff]
    %v253 = vld [vmem:[%s1 + $0x600] sm:$0xff]
    %v254 = vld [vmem:[%s1 + $0x608] sm:$0xff]
    %v255 = vld [vmem:[%s1 + $0x610] sm:$0xff]
    %v256 = vld [vmem:[%s1 + $0x618] sm:$0xff]
    %v257 = vld [vmem:[%s1 + $0x620] sm:$0xff]
    %v258 = vld [vmem:[%s1 + $0x628] sm:$0xff]
    %v259 = vld [vmem:[%s1 + $0x630] sm:$0xff]
    %v260 = vld [vmem:[%s1 + $0x638] sm:$0xff]
    %v261 = vld [vmem:[%s1 + $0x640] sm:$0xff]
    %v262 = vld [vmem:[%s1 + $0x648] sm:$0xff]
    %v263 = vld [vmem:[%s1 + $0x650] sm:$0xff]
    %v264 = vld [vmem:[%s1 + $0x658] sm:$0xff]
    %v265 = vld [vmem:[%s1 + $0x660] sm:$0xff]
    %v266 = vld [vmem:[%s1 + $0x668] sm:$0xff]
    %v267 = vld [vmem:[%s1 + $0x670] sm:$0xff]
    %v268 = vld [vmem:[%s1 + $0x678] sm:$0xff]
    %v269 = vld [vmem:[%s1 + $0x680] sm:$0xff]
    %v270 = vld [vmem:[%s1 + $0x688] sm:$0xff]
    %v271 = vld [vmem:[%s1 + $0x690] sm:$0xff]
    %v272 = vld [vmem:[%s1 + $0x698] sm:$0xff]
    %v273 = vld [vmem:[%s1 + $0x6a0] sm:$0xff]
    %v274 = vld [vmem:[%s1 + $0x6a8] sm:$0xff]
    %v275 = vld [vmem:[%s1 + $0x6b0] sm:$0xff]
    %v276 = vld [vmem:[%s1 + $0x6b8] sm:$0xff]
    %v277 = vld [vmem:[%s1 + $0x6c0] sm:$0xff]
    %v278 = vld [vmem:[%s1 + $0x6c8] sm:$0xff]
    %v279 = vld [vmem:[%s1 + $0x6d0] sm:$0xff]
    %v280 = vld [vmem:[%s1 + $0x6d8] sm:$0xff]
    %v281 = vld [vmem:[%s1 + $0x6e0] sm:$0xff]
    %v282 = vld [vmem:[%s1 + $0x6e8] sm:$0xff]
    %v283 = vld [vmem:[%s1 + $0x6f0] sm:$0xff]
    %v284 = vld [vmem:[%s1 + $0x6f8] sm:$0xff]
    %v285 = vld [vmem:[%s1 + $0x700] sm:$0xff]
    %v286 = vld [vmem:[%s1 + $0x708] sm:$0xff]
    %v287 = vld [vmem:[%s1 + $0x710] sm:$0xff]
    %v288 = vld [vmem:[%s1 + $0x718] sm:$0xff]
    %v289 = vld [vmem:[%s1 + $0x720] sm:$0xff]
    %v290 = vld [vmem:[%s1 + $0x728] sm:$0xff]
    %v291 = vld [vmem:[%s1 + $0x730] sm:$0xff]
    %v292 = vld [vmem:[%s1 + $0x738] sm:$0xff]
    %v293 = vld [vmem:[%s1 + $0x740] sm:$0xff]
    %v294 = vld [vmem:[%s1 + $0x748] sm:$0xff]
    %v295 = vld [vmem:[%s1 + $0x750] sm:$0xff]
    %v296 = vld [vmem:[%s1 + $0x758] sm:$0xff]
    %v297 = vld [vmem:[%s1 + $0x760] sm:$0xff]
    %v298 = vld [vmem:[%s1 + $0x768] sm:$0xff]
    %v299 = vld [vmem:[%s1 + $0x770] sm:$0xff]
    %v300 = vld [vmem:[%s1 + $0x778] sm:$0xff]
    %v301 = vld [vmem:[%s1 + $0x780] sm:$0xff]
    %v302 = vld [vmem:[%s1 + $0x788] sm:$0xff]
    %v303 = vld [vmem:[%s1 + $0x790] sm:$0xff]
    %v304 = vld [vmem:[%s1 + $0x798] sm:$0xff]
    %v305 = vld [vmem:[%s1 + $0x7a0] sm:$0xff]
    %v306 = vld [vmem:[%s1 + $0x7a8] sm:$0xff]
    %v307 = vld [vmem:[%s1 + $0x7b0] sm:$0xff]
    %v308 = vld [vmem:[%s1 + $0x7b8] sm:$0xff]
    %v309 = vld [vmem:[%s1 + $0x7c0] sm:$0xff]
    %v310 = vld [vmem:[%s1 + $0x7c8] sm:$0xff]
    %v311 = vld [vmem:[%s1 + $0x7d0] sm:$0xff]
    %v312 = vld [vmem:[%s1 + $0x7d8] sm:$0xff]
    %v313 = vld [vmem:[%s1 + $0x7e0] sm:$0xff]
    %v314 = vld [vmem:[%s1 + $0x7e8] sm:$0xff]
    %v315 = vld [vmem:[%s1 + $0x7f0] sm:$0xff]
    %v316 = vld [vmem:[%s1 + $0x7f8] sm:$0xff]
    %v317 = vld [vmem:[%s1 + $0x800] sm:$0xff]
    %v318 = vld [vmem:[%s1 + $0x808] sm:$0xff]
    %v319 = vld [vmem:[%s1 + $0x810] sm:$0xff]
    %v320 = vld [vmem:[%s1 + $0x818] sm:$0xff]
    %v321 = vld [vmem:[%s1 + $0x820] sm:$0xff]
    %v322 = vld [vmem:[%s1 + $0x828] sm:$0xff]
    %v323 = vld [vmem:[%s1 + $0x830] sm:$0xff]
    %v324 = vld [vmem:[%s1 + $0x838] sm:$0xff]
    %v325 = vld [vmem:[%s1 + $0x840] sm:$0xff]
    %v326 = vld [vmem:[%s1 + $0x848] sm:$0xff]
    %v327 = vld [vmem:[%s1 + $0x850] sm:$0xff]
    %v328 = vld [vmem:[%s1 + $0x858] sm:$0xff]
    %v329 = vld [vmem:[%s1 + $0x860] sm:$0xff]
    %v330 = vld [vmem:[%s1 + $0x868] sm:$0xff]
    %v331 = vld [vmem:[%s1 + $0x870] sm:$0xff]
    %v332 = vld [vmem:[%s1 + $0x878] sm:$0xff]
    %v333 = vld [vmem:[%s1 + $0x880] sm:$0xff]
    %v334 = vld [vmem:[%s1 + $0x888] sm:$0xff]
    %v335 = vld [vmem:[%s1 + $0x890] sm:$0xff]
    %v336 = vld [vmem:[%s1 + $0x898] sm:$0xff]
    %v337 = vld [vmem:[%s1 + $0x8a0] sm:$0xff]
    %v338 = vld [vmem:[%s1 + $0x8a8] sm:$0xff]
    %v339 = vld [vmem:[%s1 + $0x8b0] sm:$0xff]
    %v340 = vld [vmem:[%s1 + $0x8b8] sm:$0xff]
    %v341 = vld [vmem:[%s1 + $0x8c0] sm:$0xff]
    %v342 = vld [vmem:[%s1 + $0x8c8] sm:$0xff]
    %v343 = vld [vmem:[%s1 + $0x8d0] sm:$0xff]
    %v344 = vld [vmem:[%s1 + $0x8d8] sm:$0xff]
    %v345 = vld [vmem:[%s1 + $0x8e0] sm:$0xff]
    %v346 = vld [vmem:[%s1 + $0x8e8] sm:$0xff]
    %v347 = vld [vmem:[%s1 + $0x8f0] sm:$0xff]
    %v348 = vld [vmem:[%s1 + $0x8f8] sm:$0xff]
    %v349 = vld [vmem:[%s1 + $0x900] sm:$0xff]
    %v350 = vld [vmem:[%s1 + $0x908] sm:$0xff]
    %v351 = vld [vmem:[%s1 + $0x910] sm:$0xff]
    %v352 = vld [vmem:[%s1 + $0x918] sm:$0xff]
    %v353 = vld [vmem:[%s1 + $0x920] sm:$0xff]
    %v354 = vld [vmem:[%s1 + $0x928] sm:$0xff]
    %v355 = vld [vmem:[%s1 + $0x930] sm:$0xff]
    %v356 = vld [vmem:[%s1 + $0x938] sm:$0xff]
    %v357 = vld [vmem:[%s1 + $0x940] sm:$0xff]
    %v358 = vld [vmem:[%s1 + $0x948] sm:$0xff]
    %v359 = vld [vmem:[%s1 + $0x950] sm:$0xff]
    %v360 = vld [vmem:[%s1 + $0x958] sm:$0xff]
    %v361 = vld [vmem:[%s1 + $0x960] sm:$0xff]
    %v362 = vld [vmem:[%s1 + $0x968] sm:$0xff]
    %v363 = vld [vmem:[%s1 + $0x970] sm:$0xff]
    %v364 = vld [vmem:[%s1 + $0x978] sm:$0xff]
    %v365 = vld [vmem:[%s1 + $0x980] sm:$0xff]
    %v366 = vld [vmem:[%s1 + $0x988] sm:$0xff]
    %v367 = vld [vmem:[%s1 + $0x990] sm:$0xff]
    %v368 = vld [vmem:[%s1 + $0x998] sm:$0xff]
    %v369 = vld [vmem:[%s1 + $0x9a0] sm:$0xff]
    %v370 = vld [vmem:[%s1 + $0x9a8] sm:$0xff]
    %v371 = vld [vmem:[%s1 + $0x9b0] sm:$0xff]
    %v372 = vld [vmem:[%s1 + $0x9b8] sm:$0xff]
    %v373 = vld [vmem:[%s1 + $0x9c0] sm:$0xff]
    %v374 = vld [vmem:[%s1 + $0x9c8] sm:$0xff]
    %v375 = vld [vmem:[%s1 + $0x9d0] sm:$0xff]
    %v376 = vld [vmem:[%s1 + $0x9d8] sm:$0xff]
    %v377 = vld [vmem:[%s1 + $0x9e0] sm:$0xff]
    %v378 = vld [vmem:[%s1 + $0x9e8] sm:$0xff]
    %v379 = vld [vmem:[%s1 + $0x9f0] sm:$0xff]
    %v380 = vld [vmem:[%s1 + $0x9f8] sm:$0xff]
    %v381 = vld [vmem:[%s2] sm:$0xf]
    %v383 = vperm.slane %v381, 0
    %v384 = vperm.slane %v381, 1
    %v385 = vperm.slane %v381, 2
    %v386 = vperm.slane %v381, 3
    %v711 = vunpack.c.l.b16 %v61
    %v712 = vunpack.c.h.b16 %v61
    %v713 = vunpack.c.l.b16 %v62
    %v714 = vunpack.c.h.b16 %v62
    %v715 = vunpack.c.l.b16 %v63
    %v716 = vunpack.c.h.b16 %v63
    %v717 = vunpack.c.l.b16 %v64
    %v718 = vunpack.c.h.b16 %v64
    %v719 = vunpack.c.l.b16 %v65
    %v720 = vunpack.c.h.b16 %v65
    %v721 = vunpack.c.l.b16 %v66
    %v722 = vunpack.c.h.b16 %v66
    %v723 = vunpack.c.l.b16 %v67
    %v724 = vunpack.c.h.b16 %v67
    %v725 = vunpack.c.l.b16 %v68
    %v726 = vunpack.c.h.b16 %v68
    %v727 = vunpack.c.l.b16 %v69
    %v728 = vunpack.c.h.b16 %v69
    %v729 = vunpack.c.l.b16 %v70
    %v730 = vunpack.c.h.b16 %v70
    %v731 = vunpack.c.l.b16 %v71
    %v732 = vunpack.c.h.b16 %v71
    %v733 = vunpack.c.l.b16 %v72
    %v734 = vunpack.c.h.b16 %v72
    %v735 = vunpack.c.l.b16 %v73
    %v736 = vunpack.c.h.b16 %v73
    %v737 = vunpack.c.l.b16 %v74
    %v738 = vunpack.c.h.b16 %v74
    %v739 = vunpack.c.l.b16 %v75
    %v740 = vunpack.c.h.b16 %v75
    %v741 = vunpack.c.l.b16 %v76
    %v742 = vunpack.c.h.b16 %v76
    %v743 = vunpack.c.l.b16 %v77
    %v744 = vunpack.c.h.b16 %v77
    %v745 = vunpack.c.l.b16 %v78
    %v746 = vunpack.c.h.b16 %v78
    %v747 = vunpack.c.l.b16 %v79
    %v748 = vunpack.c.h.b16 %v79
    %v749 = vunpack.c.l.b16 %v80
    %v750 = vunpack.c.h.b16 %v80
    %v751 = vunpack.c.l.b16 %v81
    %v752 = vunpack.c.h.b16 %v81
    %v753 = vunpack.c.l.b16 %v82
    %v754 = vunpack.c.h.b16 %v82
    %v755 = vunpack.c.l.b16 %v83
    %v756 = vunpack.c.h.b16 %v83
    %v757 = vunpack.c.l.b16 %v84
    %v758 = vunpack.c.h.b16 %v84
    %v759 = vunpack.c.l.b16 %v85
    %v760 = vunpack.c.h.b16 %v85
    %v761 = vunpack.c.l.b16 %v86
    %v762 = vunpack.c.h.b16 %v86
    %v763 = vunpack.c.l.b16 %v87
    %v764 = vunpack.c.h.b16 %v87
    %v765 = vunpack.c.l.b16 %v88
    %v766 = vunpack.c.h.b16 %v88
    %v767 = vunpack.c.l.b16 %v89
    %v768 = vunpack.c.h.b16 %v89
    %v769 = vunpack.c.l.b16 %v90
    %v770 = vunpack.c.h.b16 %v90
    %v771 = vunpack.c.l.b16 %v91
    %v772 = vunpack.c.h.b16 %v91
    %v773 = vunpack.c.l.b16 %v92
    %v774 = vunpack.c.h.b16 %v92
    %v775 = vunpack.c.l.b16 %v93
    %v776 = vunpack.c.h.b16 %v93
    %v777 = vunpack.c.l.b16 %v94
    %v778 = vunpack.c.h.b16 %v94
    %v779 = vunpack.c.l.b16 %v95
    %v780 = vunpack.c.h.b16 %v95
    %v781 = vunpack.c.l.b16 %v96
    %v782 = vunpack.c.h.b16 %v96
    %v783 = vunpack.c.l.b16 %v97
    %v784 = vunpack.c.h.b16 %v97
    %v785 = vunpack.c.l.b16 %v98
    %v786 = vunpack.c.h.b16 %v98
    %v787 = vunpack.c.l.b16 %v99
    %v788 = vunpack.c.h.b16 %v99
    %v789 = vunpack.c.l.b16 %v100
    %v790 = vunpack.c.h.b16 %v100
    %v791 = vunpack.c.l.b16 %v101
    %v792 = vunpack.c.h.b16 %v101
    %v793 = vunpack.c.l.b16 %v102
    %v794 = vunpack.c.h.b16 %v102
    %v795 = vunpack.c.l.b16 %v103
    %v796 = vunpack.c.h.b16 %v103
    %v797 = vunpack.c.l.b16 %v104
    %v798 = vunpack.c.h.b16 %v104
    %v799 = vunpack.c.l.b16 %v105
    %v800 = vunpack.c.h.b16 %v105
    %v801 = vunpack.c.l.b16 %v106
    %v802 = vunpack.c.h.b16 %v106
    %v803 = vunpack.c.l.b16 %v107
    %v804 = vunpack.c.h.b16 %v107
    %v805 = vunpack.c.l.b16 %v108
    %v806 = vunpack.c.h.b16 %v108
    %v807 = vunpack.c.l.b16 %v109
    %v808 = vunpack.c.h.b16 %v109
    %v809 = vunpack.c.l.b16 %v110
    %v810 = vunpack.c.h.b16 %v110
    %v811 = vunpack.c.l.b16 %v111
    %v812 = vunpack.c.h.b16 %v111
    %v813 = vunpack.c.l.b16 %v112
    %v814 = vunpack.c.h.b16 %v112
    %v815 = vunpack.c.l.b16 %v113
    %v816 = vunpack.c.h.b16 %v113
    %v817 = vunpack.c.l.b16 %v114
    %v818 = vunpack.c.h.b16 %v114
    %v819 = vunpack.c.l.b16 %v115
    %v820 = vunpack.c.h.b16 %v115
    %v821 = vunpack.c.l.b16 %v116
    %v822 = vunpack.c.h.b16 %v116
    %v823 = vunpack.c.l.b16 %v117
    %v824 = vunpack.c.h.b16 %v117
    %v825 = vunpack.c.l.b16 %v118
    %v826 = vunpack.c.h.b16 %v118
    %v827 = vunpack.c.l.b16 %v119
    %v828 = vunpack.c.h.b16 %v119
    %v829 = vunpack.c.l.b16 %v120
    %v830 = vunpack.c.h.b16 %v120
    %v831 = vunpack.c.l.b16 %v121
    %v832 = vunpack.c.h.b16 %v121
    %v833 = vunpack.c.l.b16 %v122
    %v834 = vunpack.c.h.b16 %v122
    %v835 = vunpack.c.l.b16 %v123
    %v836 = vunpack.c.h.b16 %v123
    %v837 = vunpack.c.l.b16 %v124
    %v838 = vunpack.c.h.b16 %v124
    %v839 = vunpack.c.l.b16 %v125
    %v840 = vunpack.c.h.b16 %v125
    %v841 = vunpack.c.l.b16 %v126
    %v842 = vunpack.c.h.b16 %v126
    %v843 = vunpack.c.l.b16 %v127
    %v844 = vunpack.c.h.b16 %v127
    %v845 = vunpack.c.l.b16 %v128
    %v846 = vunpack.c.h.b16 %v128
    %v847 = vunpack.c.l.b16 %v129
    %v848 = vunpack.c.h.b16 %v129
    %v849 = vunpack.c.l.b16 %v130
    %v850 = vunpack.c.h.b16 %v130
    %v851 = vunpack.c.l.b16 %v131
    %v852 = vunpack.c.h.b16 %v131
    %v853 = vunpack.c.l.b16 %v132
    %v854 = vunpack.c.h.b16 %v132
    %v855 = vunpack.c.l.b16 %v133
    %v856 = vunpack.c.h.b16 %v133
    %v857 = vunpack.c.l.b16 %v134
    %v858 = vunpack.c.h.b16 %v134
    %v859 = vunpack.c.l.b16 %v135
    %v860 = vunpack.c.h.b16 %v135
    %v861 = vunpack.c.l.b16 %v136
    %v862 = vunpack.c.h.b16 %v136
    %v863 = vunpack.c.l.b16 %v137
    %v864 = vunpack.c.h.b16 %v137
    %v865 = vunpack.c.l.b16 %v138
    %v866 = vunpack.c.h.b16 %v138
    %v867 = vunpack.c.l.b16 %v139
    %v868 = vunpack.c.h.b16 %v139
    %v869 = vunpack.c.l.b16 %v140
    %v870 = vunpack.c.h.b16 %v140
    %v871 = vunpack.c.l.b16 %v141
    %v872 = vunpack.c.h.b16 %v141
    %v873 = vunpack.c.l.b16 %v142
    %v874 = vunpack.c.h.b16 %v142
    %v875 = vunpack.c.l.b16 %v143
    %v876 = vunpack.c.h.b16 %v143
    %v877 = vunpack.c.l.b16 %v144
    %v878 = vunpack.c.h.b16 %v144
    %v879 = vunpack.c.l.b16 %v145
    %v880 = vunpack.c.h.b16 %v145
    %v881 = vunpack.c.l.b16 %v146
    %v882 = vunpack.c.h.b16 %v146
    %v883 = vunpack.c.l.b16 %v147
    %v884 = vunpack.c.h.b16 %v147
    %v885 = vunpack.c.l.b16 %v148
    %v886 = vunpack.c.h.b16 %v148
    %v887 = vunpack.c.l.b16 %v149
    %v888 = vunpack.c.h.b16 %v149
    %v889 = vunpack.c.l.b16 %v150
    %v890 = vunpack.c.h.b16 %v150
    %v891 = vunpack.c.l.b16 %v151
    %v892 = vunpack.c.h.b16 %v151
    %v893 = vunpack.c.l.b16 %v152
    %v894 = vunpack.c.h.b16 %v152
    %v895 = vunpack.c.l.b16 %v153
    %v896 = vunpack.c.h.b16 %v153
    %v897 = vunpack.c.l.b16 %v154
    %v898 = vunpack.c.h.b16 %v154
    %v899 = vunpack.c.l.b16 %v155
    %v900 = vunpack.c.h.b16 %v155
    %v901 = vunpack.c.l.b16 %v156
    %v902 = vunpack.c.h.b16 %v156
    %v903 = vunpack.c.l.b16 %v157
    %v904 = vunpack.c.h.b16 %v157
    %v905 = vunpack.c.l.b16 %v158
    %v906 = vunpack.c.h.b16 %v158
    %v907 = vunpack.c.l.b16 %v159
    %v908 = vunpack.c.h.b16 %v159
    %v909 = vunpack.c.l.b16 %v160
    %v910 = vunpack.c.h.b16 %v160
    %v911 = vunpack.c.l.b16 %v161
    %v912 = vunpack.c.h.b16 %v161
    %v913 = vunpack.c.l.b16 %v162
    %v914 = vunpack.c.h.b16 %v162
    %v915 = vunpack.c.l.b16 %v163
    %v916 = vunpack.c.h.b16 %v163
    %v917 = vunpack.c.l.b16 %v164
    %v918 = vunpack.c.h.b16 %v164
    %v919 = vunpack.c.l.b16 %v165
    %v920 = vunpack.c.h.b16 %v165
    %v921 = vunpack.c.l.b16 %v166
    %v922 = vunpack.c.h.b16 %v166
    %v923 = vunpack.c.l.b16 %v167
    %v924 = vunpack.c.h.b16 %v167
    %v925 = vunpack.c.l.b16 %v168
    %v926 = vunpack.c.h.b16 %v168
    %v927 = vunpack.c.l.b16 %v169
    %v928 = vunpack.c.h.b16 %v169
    %v929 = vunpack.c.l.b16 %v170
    %v930 = vunpack.c.h.b16 %v170
    %v931 = vunpack.c.l.b16 %v171
    %v932 = vunpack.c.h.b16 %v171
    %v933 = vunpack.c.l.b16 %v172
    %v934 = vunpack.c.h.b16 %v172
    %v935 = vunpack.c.l.b16 %v173
    %v936 = vunpack.c.h.b16 %v173
    %v937 = vunpack.c.l.b16 %v174
    %v938 = vunpack.c.h.b16 %v174
    %v939 = vunpack.c.l.b16 %v175
    %v940 = vunpack.c.h.b16 %v175
    %v941 = vunpack.c.l.b16 %v176
    %v942 = vunpack.c.h.b16 %v176
    %v943 = vunpack.c.l.b16 %v177
    %v944 = vunpack.c.h.b16 %v177
    %v945 = vunpack.c.l.b16 %v178
    %v946 = vunpack.c.h.b16 %v178
    %v947 = vunpack.c.l.b16 %v179
    %v948 = vunpack.c.h.b16 %v179
    %v949 = vunpack.c.l.b16 %v180
    %v950 = vunpack.c.h.b16 %v180
    %v951 = vunpack.c.l.b16 %v181
    %v952 = vunpack.c.h.b16 %v181
    %v953 = vunpack.c.l.b16 %v182
    %v954 = vunpack.c.h.b16 %v182
    %v955 = vunpack.c.l.b16 %v183
    %v956 = vunpack.c.h.b16 %v183
    %v957 = vunpack.c.l.b16 %v184
    %v958 = vunpack.c.h.b16 %v184
    %v959 = vunpack.c.l.b16 %v185
    %v960 = vunpack.c.h.b16 %v185
    %v961 = vunpack.c.l.b16 %v186
    %v962 = vunpack.c.h.b16 %v186
    %v963 = vunpack.c.l.b16 %v187
    %v964 = vunpack.c.h.b16 %v187
    %v965 = vunpack.c.l.b16 %v188
    %v966 = vunpack.c.h.b16 %v188
    %v967 = vunpack.c.l.b16 %v189
    %v968 = vunpack.c.h.b16 %v189
    %v969 = vunpack.c.l.b16 %v190
    %v970 = vunpack.c.h.b16 %v190
    %v971 = vunpack.c.l.b16 %v191
    %v972 = vunpack.c.h.b16 %v191
    %v973 = vunpack.c.l.b16 %v192
    %v974 = vunpack.c.h.b16 %v192
    %v975 = vunpack.c.l.b16 %v193
    %v976 = vunpack.c.h.b16 %v193
    %v977 = vunpack.c.l.b16 %v194
    %v978 = vunpack.c.h.b16 %v194
    %v979 = vunpack.c.l.b16 %v195
    %v980 = vunpack.c.h.b16 %v195
    %v981 = vunpack.c.l.b16 %v196
    %v982 = vunpack.c.h.b16 %v196
    %v983 = vunpack.c.l.b16 %v197
    %v984 = vunpack.c.h.b16 %v197
    %v985 = vunpack.c.l.b16 %v198
    %v986 = vunpack.c.h.b16 %v198
    %v987 = vunpack.c.l.b16 %v199
    %v988 = vunpack.c.h.b16 %v199
    %v989 = vunpack.c.l.b16 %v200
    %v990 = vunpack.c.h.b16 %v200
    %v991 = vunpack.c.l.b16 %v201
    %v992 = vunpack.c.h.b16 %v201
    %v993 = vunpack.c.l.b16 %v202
    %v994 = vunpack.c.h.b16 %v202
    %v995 = vunpack.c.l.b16 %v203
    %v996 = vunpack.c.h.b16 %v203
    %v997 = vunpack.c.l.b16 %v204
    %v998 = vunpack.c.h.b16 %v204
    %v999 = vunpack.c.l.b16 %v205
    %v1000 = vunpack.c.h.b16 %v205
    %v1001 = vunpack.c.l.b16 %v206
    %v1002 = vunpack.c.h.b16 %v206
    %v1003 = vunpack.c.l.b16 %v207
    %v1004 = vunpack.c.h.b16 %v207
    %v1005 = vunpack.c.l.b16 %v208
    %v1006 = vunpack.c.h.b16 %v208
    %v1007 = vunpack.c.l.b16 %v209
    %v1008 = vunpack.c.h.b16 %v209
    %v1009 = vunpack.c.l.b16 %v210
    %v1010 = vunpack.c.h.b16 %v210
    %v1011 = vunpack.c.l.b16 %v211
    %v1012 = vunpack.c.h.b16 %v211
    %v1013 = vunpack.c.l.b16 %v212
    %v1014 = vunpack.c.h.b16 %v212
    %v1015 = vunpack.c.l.b16 %v213
    %v1016 = vunpack.c.h.b16 %v213
    %v1017 = vunpack.c.l.b16 %v214
    %v1018 = vunpack.c.h.b16 %v214
    %v1019 = vunpack.c.l.b16 %v215
    %v1020 = vunpack.c.h.b16 %v215
    %v1021 = vunpack.c.l.b16 %v216
    %v1022 = vunpack.c.h.b16 %v216
    %v1023 = vunpack.c.l.b16 %v217
    %v1024 = vunpack.c.h.b16 %v217
    %v1025 = vunpack.c.l.b16 %v218
    %v1026 = vunpack.c.h.b16 %v218
    %v1027 = vunpack.c.l.b16 %v219
    %v1028 = vunpack.c.h.b16 %v219
    %v1029 = vunpack.c.l.b16 %v220
    %v1030 = vunpack.c.h.b16 %v220
    %v1031 = vunpack.c.l.b16 %v221
    %v1032 = vunpack.c.h.b16 %v221
    %v1033 = vunpack.c.l.b16 %v222
    %v1034 = vunpack.c.h.b16 %v222
    %v1035 = vunpack.c.l.b16 %v223
    %v1036 = vunpack.c.h.b16 %v223
    %v1037 = vunpack.c.l.b16 %v224
    %v1038 = vunpack.c.h.b16 %v224
    %v1039 = vunpack.c.l.b16 %v225
    %v1040 = vunpack.c.h.b16 %v225
    %v1041 = vunpack.c.l.b16 %v226
    %v1042 = vunpack.c.h.b16 %v226
    %v1043 = vunpack.c.l.b16 %v227
    %v1044 = vunpack.c.h.b16 %v227
    %v1045 = vunpack.c.l.b16 %v228
    %v1046 = vunpack.c.h.b16 %v228
    %v1047 = vunpack.c.l.b16 %v229
    %v1048 = vunpack.c.h.b16 %v229
    %v1049 = vunpack.c.l.b16 %v230
    %v1050 = vunpack.c.h.b16 %v230
    %v1051 = vunpack.c.l.b16 %v231
    %v1052 = vunpack.c.h.b16 %v231
    %v1053 = vunpack.c.l.b16 %v232
    %v1054 = vunpack.c.h.b16 %v232
    %v1055 = vunpack.c.l.b16 %v233
    %v1056 = vunpack.c.h.b16 %v233
    %v1057 = vunpack.c.l.b16 %v234
    %v1058 = vunpack.c.h.b16 %v234
    %v1059 = vunpack.c.l.b16 %v235
    %v1060 = vunpack.c.h.b16 %v235
    %v1061 = vunpack.c.l.b16 %v236
    %v1062 = vunpack.c.h.b16 %v236
    %v1063 = vunpack.c.l.b16 %v237
    %v1064 = vunpack.c.h.b16 %v237
    %v1065 = vunpack.c.l.b16 %v238
    %v1066 = vunpack.c.h.b16 %v238
    %v1067 = vunpack.c.l.b16 %v239
    %v1068 = vunpack.c.h.b16 %v239
    %v1069 = vunpack.c.l.b16 %v240
    %v1070 = vunpack.c.h.b16 %v240
    %v1071 = vunpack.c.l.b16 %v241
    %v1072 = vunpack.c.h.b16 %v241
    %v1073 = vunpack.c.l.b16 %v242
    %v1074 = vunpack.c.h.b16 %v242
    %v1075 = vunpack.c.l.b16 %v243
    %v1076 = vunpack.c.h.b16 %v243
    %v1077 = vunpack.c.l.b16 %v244
    %v1078 = vunpack.c.h.b16 %v244
    %v1079 = vunpack.c.l.b16 %v245
    %v1080 = vunpack.c.h.b16 %v245
    %v1081 = vunpack.c.l.b16 %v246
    %v1082 = vunpack.c.h.b16 %v246
    %v1083 = vunpack.c.l.b16 %v247
    %v1084 = vunpack.c.h.b16 %v247
    %v1085 = vunpack.c.l.b16 %v248
    %v1086 = vunpack.c.h.b16 %v248
    %v1087 = vunpack.c.l.b16 %v249
    %v1088 = vunpack.c.h.b16 %v249
    %v1089 = vunpack.c.l.b16 %v250
    %v1090 = vunpack.c.h.b16 %v250
    %v1091 = vunpack.c.l.b16 %v251
    %v1092 = vunpack.c.h.b16 %v251
    %v1093 = vunpack.c.l.b16 %v252
    %v1094 = vunpack.c.h.b16 %v252
    %v1095 = vunpack.c.l.b16 %v253
    %v1096 = vunpack.c.h.b16 %v253
    %v1097 = vunpack.c.l.b16 %v254
    %v1098 = vunpack.c.h.b16 %v254
    %v1099 = vunpack.c.l.b16 %v255
    %v1100 = vunpack.c.h.b16 %v255
    %v1101 = vunpack.c.l.b16 %v256
    %v1102 = vunpack.c.h.b16 %v256
    %v1103 = vunpack.c.l.b16 %v257
    %v1104 = vunpack.c.h.b16 %v257
    %v1105 = vunpack.c.l.b16 %v258
    %v1106 = vunpack.c.h.b16 %v258
    %v1107 = vunpack.c.l.b16 %v259
    %v1108 = vunpack.c.h.b16 %v259
    %v1109 = vunpack.c.l.b16 %v260
    %v1110 = vunpack.c.h.b16 %v260
    %v1111 = vunpack.c.l.b16 %v261
    %v1112 = vunpack.c.h.b16 %v261
    %v1113 = vunpack.c.l.b16 %v262
    %v1114 = vunpack.c.h.b16 %v262
    %v1115 = vunpack.c.l.b16 %v263
    %v1116 = vunpack.c.h.b16 %v263
    %v1117 = vunpack.c.l.b16 %v264
    %v1118 = vunpack.c.h.b16 %v264
    %v1119 = vunpack.c.l.b16 %v265
    %v1120 = vunpack.c.h.b16 %v265
    %v1121 = vunpack.c.l.b16 %v266
    %v1122 = vunpack.c.h.b16 %v266
    %v1123 = vunpack.c.l.b16 %v267
    %v1124 = vunpack.c.h.b16 %v267
    %v1125 = vunpack.c.l.b16 %v268
    %v1126 = vunpack.c.h.b16 %v268
    %v1127 = vunpack.c.l.b16 %v269
    %v1128 = vunpack.c.h.b16 %v269
    %v1129 = vunpack.c.l.b16 %v270
    %v1130 = vunpack.c.h.b16 %v270
    %v1131 = vunpack.c.l.b16 %v271
    %v1132 = vunpack.c.h.b16 %v271
    %v1133 = vunpack.c.l.b16 %v272
    %v1134 = vunpack.c.h.b16 %v272
    %v1135 = vunpack.c.l.b16 %v273
    %v1136 = vunpack.c.h.b16 %v273
    %v1137 = vunpack.c.l.b16 %v274
    %v1138 = vunpack.c.h.b16 %v274
    %v1139 = vunpack.c.l.b16 %v275
    %v1140 = vunpack.c.h.b16 %v275
    %v1141 = vunpack.c.l.b16 %v276
    %v1142 = vunpack.c.h.b16 %v276
    %v1143 = vunpack.c.l.b16 %v277
    %v1144 = vunpack.c.h.b16 %v277
    %v1145 = vunpack.c.l.b16 %v278
    %v1146 = vunpack.c.h.b16 %v278
    %v1147 = vunpack.c.l.b16 %v279
    %v1148 = vunpack.c.h.b16 %v279
    %v1149 = vunpack.c.l.b16 %v280
    %v1150 = vunpack.c.h.b16 %v280
    %v1151 = vunpack.c.l.b16 %v281
    %v1152 = vunpack.c.h.b16 %v281
    %v1153 = vunpack.c.l.b16 %v282
    %v1154 = vunpack.c.h.b16 %v282
    %v1155 = vunpack.c.l.b16 %v283
    %v1156 = vunpack.c.h.b16 %v283
    %v1157 = vunpack.c.l.b16 %v284
    %v1158 = vunpack.c.h.b16 %v284
    %v1159 = vunpack.c.l.b16 %v285
    %v1160 = vunpack.c.h.b16 %v285
    %v1161 = vunpack.c.l.b16 %v286
    %v1162 = vunpack.c.h.b16 %v286
    %v1163 = vunpack.c.l.b16 %v287
    %v1164 = vunpack.c.h.b16 %v287
    %v1165 = vunpack.c.l.b16 %v288
    %v1166 = vunpack.c.h.b16 %v288
    %v1167 = vunpack.c.l.b16 %v289
    %v1168 = vunpack.c.h.b16 %v289
    %v1169 = vunpack.c.l.b16 %v290
    %v1170 = vunpack.c.h.b16 %v290
    %v1171 = vunpack.c.l.b16 %v291
    %v1172 = vunpack.c.h.b16 %v291
    %v1173 = vunpack.c.l.b16 %v292
    %v1174 = vunpack.c.h.b16 %v292
    %v1175 = vunpack.c.l.b16 %v293
    %v1176 = vunpack.c.h.b16 %v293
    %v1177 = vunpack.c.l.b16 %v294
    %v1178 = vunpack.c.h.b16 %v294
    %v1179 = vunpack.c.l.b16 %v295
    %v1180 = vunpack.c.h.b16 %v295
    %v1181 = vunpack.c.l.b16 %v296
    %v1182 = vunpack.c.h.b16 %v296
    %v1183 = vunpack.c.l.b16 %v297
    %v1184 = vunpack.c.h.b16 %v297
    %v1185 = vunpack.c.l.b16 %v298
    %v1186 = vunpack.c.h.b16 %v298
    %v1187 = vunpack.c.l.b16 %v299
    %v1188 = vunpack.c.h.b16 %v299
    %v1189 = vunpack.c.l.b16 %v300
    %v1190 = vunpack.c.h.b16 %v300
    %v1191 = vunpack.c.l.b16 %v301
    %v1192 = vunpack.c.h.b16 %v301
    %v1193 = vunpack.c.l.b16 %v302
    %v1194 = vunpack.c.h.b16 %v302
    %v1195 = vunpack.c.l.b16 %v303
    %v1196 = vunpack.c.h.b16 %v303
    %v1197 = vunpack.c.l.b16 %v304
    %v1198 = vunpack.c.h.b16 %v304
    %v1199 = vunpack.c.l.b16 %v305
    %v1200 = vunpack.c.h.b16 %v305
    %v1201 = vunpack.c.l.b16 %v306
    %v1202 = vunpack.c.h.b16 %v306
    %v1203 = vunpack.c.l.b16 %v307
    %v1204 = vunpack.c.h.b16 %v307
    %v1205 = vunpack.c.l.b16 %v308
    %v1206 = vunpack.c.h.b16 %v308
    %v1207 = vunpack.c.l.b16 %v309
    %v1208 = vunpack.c.h.b16 %v309
    %v1209 = vunpack.c.l.b16 %v310
    %v1210 = vunpack.c.h.b16 %v310
    %v1211 = vunpack.c.l.b16 %v311
    %v1212 = vunpack.c.h.b16 %v311
    %v1213 = vunpack.c.l.b16 %v312
    %v1214 = vunpack.c.h.b16 %v312
    %v1215 = vunpack.c.l.b16 %v313
    %v1216 = vunpack.c.h.b16 %v313
    %v1217 = vunpack.c.l.b16 %v314
    %v1218 = vunpack.c.h.b16 %v314
    %v1219 = vunpack.c.l.b16 %v315
    %v1220 = vunpack.c.h.b16 %v315
    %v1221 = vunpack.c.l.b16 %v316
    %v1222 = vunpack.c.h.b16 %v316
    %v1223 = vunpack.c.l.b16 %v317
    %v1224 = vunpack.c.h.b16 %v317
    %v1225 = vunpack.c.l.b16 %v318
    %v1226 = vunpack.c.h.b16 %v318
    %v1227 = vunpack.c.l.b16 %v319
    %v1228 = vunpack.c.h.b16 %v319
    %v1229 = vunpack.c.l.b16 %v320
    %v1230 = vunpack.c.h.b16 %v320
    %v1231 = vunpack.c.l.b16 %v321
    %v1232 = vunpack.c.h.b16 %v321
    %v1233 = vunpack.c.l.b16 %v322
    %v1234 = vunpack.c.h.b16 %v322
    %v1235 = vunpack.c.l.b16 %v323
    %v1236 = vunpack.c.h.b16 %v323
    %v1237 = vunpack.c.l.b16 %v324
    %v1238 = vunpack.c.h.b16 %v324
    %v1239 = vunpack.c.l.b16 %v325
    %v1240 = vunpack.c.h.b16 %v325
    %v1241 = vunpack.c.l.b16 %v326
    %v1242 = vunpack.c.h.b16 %v326
    %v1243 = vunpack.c.l.b16 %v327
    %v1244 = vunpack.c.h.b16 %v327
    %v1245 = vunpack.c.l.b16 %v328
    %v1246 = vunpack.c.h.b16 %v328
    %v1247 = vunpack.c.l.b16 %v329
    %v1248 = vunpack.c.h.b16 %v329
    %v1249 = vunpack.c.l.b16 %v330
    %v1250 = vunpack.c.h.b16 %v330
    %v1251 = vunpack.c.l.b16 %v331
    %v1252 = vunpack.c.h.b16 %v331
    %v1253 = vunpack.c.l.b16 %v332
    %v1254 = vunpack.c.h.b16 %v332
    %v1255 = vunpack.c.l.b16 %v333
    %v1256 = vunpack.c.h.b16 %v333
    %v1257 = vunpack.c.l.b16 %v334
    %v1258 = vunpack.c.h.b16 %v334
    %v1259 = vunpack.c.l.b16 %v335
    %v1260 = vunpack.c.h.b16 %v335
    %v1261 = vunpack.c.l.b16 %v336
    %v1262 = vunpack.c.h.b16 %v336
    %v1263 = vunpack.c.l.b16 %v337
    %v1264 = vunpack.c.h.b16 %v337
    %v1265 = vunpack.c.l.b16 %v338
    %v1266 = vunpack.c.h.b16 %v338
    %v1267 = vunpack.c.l.b16 %v339
    %v1268 = vunpack.c.h.b16 %v339
    %v1269 = vunpack.c.l.b16 %v340
    %v1270 = vunpack.c.h.b16 %v340
    %v1271 = vunpack.c.l.b16 %v341
    %v1272 = vunpack.c.h.b16 %v341
    %v1273 = vunpack.c.l.b16 %v342
    %v1274 = vunpack.c.h.b16 %v342
    %v1275 = vunpack.c.l.b16 %v343
    %v1276 = vunpack.c.h.b16 %v343
    %v1277 = vunpack.c.l.b16 %v344
    %v1278 = vunpack.c.h.b16 %v344
    %v1279 = vunpack.c.l.b16 %v345
    %v1280 = vunpack.c.h.b16 %v345
    %v1281 = vunpack.c.l.b16 %v346
    %v1282 = vunpack.c.h.b16 %v346
    %v1283 = vunpack.c.l.b16 %v347
    %v1284 = vunpack.c.h.b16 %v347
    %v1285 = vunpack.c.l.b16 %v348
    %v1286 = vunpack.c.h.b16 %v348
    %v1287 = vunpack.c.l.b16 %v349
    %v1288 = vunpack.c.h.b16 %v349
    %v1289 = vunpack.c.l.b16 %v350
    %v1290 = vunpack.c.h.b16 %v350
    %v1291 = vunpack.c.l.b16 %v351
    %v1292 = vunpack.c.h.b16 %v351
    %v1293 = vunpack.c.l.b16 %v352
    %v1294 = vunpack.c.h.b16 %v352
    %v1295 = vunpack.c.l.b16 %v353
    %v1296 = vunpack.c.h.b16 %v353
    %v1297 = vunpack.c.l.b16 %v354
    %v1298 = vunpack.c.h.b16 %v354
    %v1299 = vunpack.c.l.b16 %v355
    %v1300 = vunpack.c.h.b16 %v355
    %v1301 = vunpack.c.l.b16 %v356
    %v1302 = vunpack.c.h.b16 %v356
    %v1303 = vunpack.c.l.b16 %v357
    %v1304 = vunpack.c.h.b16 %v357
    %v1305 = vunpack.c.l.b16 %v358
    %v1306 = vunpack.c.h.b16 %v358
    %v1307 = vunpack.c.l.b16 %v359
    %v1308 = vunpack.c.h.b16 %v359
    %v1309 = vunpack.c.l.b16 %v360
    %v1310 = vunpack.c.h.b16 %v360
    %v1311 = vunpack.c.l.b16 %v361
    %v1312 = vunpack.c.h.b16 %v361
    %v1313 = vunpack.c.l.b16 %v362
    %v1314 = vunpack.c.h.b16 %v362
    %v1315 = vunpack.c.l.b16 %v363
    %v1316 = vunpack.c.h.b16 %v363
    %v1317 = vunpack.c.l.b16 %v364
    %v1318 = vunpack.c.h.b16 %v364
    %v1319 = vunpack.c.l.b16 %v365
    %v1320 = vunpack.c.h.b16 %v365
    %v1321 = vunpack.c.l.b16 %v366
    %v1322 = vunpack.c.h.b16 %v366
    %v1323 = vunpack.c.l.b16 %v367
    %v1324 = vunpack.c.h.b16 %v367
    %v1325 = vunpack.c.l.b16 %v368
    %v1326 = vunpack.c.h.b16 %v368
    %v1327 = vunpack.c.l.b16 %v369
    %v1328 = vunpack.c.h.b16 %v369
    %v1329 = vunpack.c.l.b16 %v370
    %v1330 = vunpack.c.h.b16 %v370
    %v1331 = vunpack.c.l.b16 %v371
    %v1332 = vunpack.c.h.b16 %v371
    %v1333 = vunpack.c.l.b16 %v372
    %v1334 = vunpack.c.h.b16 %v372
    %v1335 = vunpack.c.l.b16 %v373
    %v1336 = vunpack.c.h.b16 %v373
    %v1337 = vunpack.c.l.b16 %v374
    %v1338 = vunpack.c.h.b16 %v374
    %v1339 = vunpack.c.l.b16 %v375
    %v1340 = vunpack.c.h.b16 %v375
    %v1341 = vunpack.c.l.b16 %v376
    %v1342 = vunpack.c.h.b16 %v376
    %v1343 = vunpack.c.l.b16 %v377
    %v1344 = vunpack.c.h.b16 %v377
    %v1345 = vunpack.c.l.b16 %v378
    %v1346 = vunpack.c.h.b16 %v378
    %v1347 = vunpack.c.l.b16 %v379
    %v1348 = vunpack.c.h.b16 %v379
    %v1349 = vunpack.c.l.b16 %v380
    %v1350 = vunpack.c.h.b16 %v380
    %v1351 = vpack.c.b16 %v715, %v711
    %v1352 = vpack.c.b16 %v716, %v712
    %v1353 = vpack.c.b16 %v717, %v713
    %v1354 = vpack.c.b16 %v718, %v714
    %v1355 = vpack.c.b16 %v723, %v719
    %v1356 = vpack.c.b16 %v724, %v720
    %v1357 = vpack.c.b16 %v725, %v721
    %v1358 = vpack.c.b16 %v726, %v722
    %v1359 = vpack.c.b16 %v731, %v727
    %v1360 = vpack.c.b16 %v732, %v728
    %v1361 = vpack.c.b16 %v733, %v729
    %v1362 = vpack.c.b16 %v734, %v730
    %v1363 = vpack.c.b16 %v739, %v735
    %v1364 = vpack.c.b16 %v740, %v736
    %v1365 = vpack.c.b16 %v741, %v737
    %v1366 = vpack.c.b16 %v742, %v738
    %v1367 = vpack.c.b16 %v747, %v743
    %v1368 = vpack.c.b16 %v748, %v744
    %v1369 = vpack.c.b16 %v749, %v745
    %v1370 = vpack.c.b16 %v750, %v746
    %v1371 = vpack.c.b16 %v755, %v751
    %v1372 = vpack.c.b16 %v756, %v752
    %v1373 = vpack.c.b16 %v757, %v753
    %v1374 = vpack.c.b16 %v758, %v754
    %v1375 = vpack.c.b16 %v763, %v759
    %v1376 = vpack.c.b16 %v764, %v760
    %v1377 = vpack.c.b16 %v765, %v761
    %v1378 = vpack.c.b16 %v766, %v762
    %v1379 = vpack.c.b16 %v771, %v767
    %v1380 = vpack.c.b16 %v772, %v768
    %v1381 = vpack.c.b16 %v773, %v769
    %v1382 = vpack.c.b16 %v774, %v770
    %v1383 = vpack.c.b16 %v779, %v775
    %v1384 = vpack.c.b16 %v780, %v776
    %v1385 = vpack.c.b16 %v781, %v777
    %v1386 = vpack.c.b16 %v782, %v778
    %v1387 = vpack.c.b16 %v787, %v783
    %v1388 = vpack.c.b16 %v788, %v784
    %v1389 = vpack.c.b16 %v789, %v785
    %v1390 = vpack.c.b16 %v790, %v786
    %v1391 = vpack.c.b16 %v795, %v791
    %v1392 = vpack.c.b16 %v796, %v792
    %v1393 = vpack.c.b16 %v797, %v793
    %v1394 = vpack.c.b16 %v798, %v794
    %v1395 = vpack.c.b16 %v803, %v799
    %v1396 = vpack.c.b16 %v804, %v800
    %v1397 = vpack.c.b16 %v805, %v801
    %v1398 = vpack.c.b16 %v806, %v802
    %v1399 = vpack.c.b16 %v811, %v807
    %v1400 = vpack.c.b16 %v812, %v808
    %v1401 = vpack.c.b16 %v813, %v809
    %v1402 = vpack.c.b16 %v814, %v810
    %v1403 = vpack.c.b16 %v819, %v815
    %v1404 = vpack.c.b16 %v820, %v816
    %v1405 = vpack.c.b16 %v821, %v817
    %v1406 = vpack.c.b16 %v822, %v818
    %v1407 = vpack.c.b16 %v827, %v823
    %v1408 = vpack.c.b16 %v828, %v824
    %v1409 = vpack.c.b16 %v829, %v825
    %v1410 = vpack.c.b16 %v830, %v826
    %v1411 = vpack.c.b16 %v835, %v831
    %v1412 = vpack.c.b16 %v836, %v832
    %v1413 = vpack.c.b16 %v837, %v833
    %v1414 = vpack.c.b16 %v838, %v834
    %v1415 = vpack.c.b16 %v843, %v839
    %v1416 = vpack.c.b16 %v844, %v840
    %v1417 = vpack.c.b16 %v845, %v841
    %v1418 = vpack.c.b16 %v846, %v842
    %v1419 = vpack.c.b16 %v851, %v847
    %v1420 = vpack.c.b16 %v852, %v848
    %v1421 = vpack.c.b16 %v853, %v849
    %v1422 = vpack.c.b16 %v854, %v850
    %v1423 = vpack.c.b16 %v859, %v855
    %v1424 = vpack.c.b16 %v860, %v856
    %v1425 = vpack.c.b16 %v861, %v857
    %v1426 = vpack.c.b16 %v862, %v858
    %v1427 = vpack.c.b16 %v867, %v863
    %v1428 = vpack.c.b16 %v868, %v864
    %v1429 = vpack.c.b16 %v869, %v865
    %v1430 = vpack.c.b16 %v870, %v866
    %v1431 = vpack.c.b16 %v875, %v871
    %v1432 = vpack.c.b16 %v876, %v872
    %v1433 = vpack.c.b16 %v877, %v873
    %v1434 = vpack.c.b16 %v878, %v874
    %v1435 = vpack.c.b16 %v883, %v879
    %v1436 = vpack.c.b16 %v884, %v880
    %v1437 = vpack.c.b16 %v885, %v881
    %v1438 = vpack.c.b16 %v886, %v882
    %v1439 = vpack.c.b16 %v891, %v887
    %v1440 = vpack.c.b16 %v892, %v888
    %v1441 = vpack.c.b16 %v893, %v889
    %v1442 = vpack.c.b16 %v894, %v890
    %v1443 = vpack.c.b16 %v899, %v895
    %v1444 = vpack.c.b16 %v900, %v896
    %v1445 = vpack.c.b16 %v901, %v897
    %v1446 = vpack.c.b16 %v902, %v898
    %v1447 = vpack.c.b16 %v907, %v903
    %v1448 = vpack.c.b16 %v908, %v904
    %v1449 = vpack.c.b16 %v909, %v905
    %v1450 = vpack.c.b16 %v910, %v906
    %v1451 = vpack.c.b16 %v915, %v911
    %v1452 = vpack.c.b16 %v916, %v912
    %v1453 = vpack.c.b16 %v917, %v913
    %v1454 = vpack.c.b16 %v918, %v914
    %v1455 = vpack.c.b16 %v923, %v919
    %v1456 = vpack.c.b16 %v924, %v920
    %v1457 = vpack.c.b16 %v925, %v921
    %v1458 = vpack.c.b16 %v926, %v922
    %v1459 = vpack.c.b16 %v931, %v927
    %v1460 = vpack.c.b16 %v932, %v928
    %v1461 = vpack.c.b16 %v933, %v929
    %v1462 = vpack.c.b16 %v934, %v930
    %v1463 = vpack.c.b16 %v939, %v935
    %v1464 = vpack.c.b16 %v940, %v936
    %v1465 = vpack.c.b16 %v941, %v937
    %v1466 = vpack.c.b16 %v942, %v938
    %v1467 = vpack.c.b16 %v947, %v943
    %v1468 = vpack.c.b16 %v948, %v944
    %v1469 = vpack.c.b16 %v949, %v945
    %v1470 = vpack.c.b16 %v950, %v946
    %v1471 = vpack.c.b16 %v955, %v951
    %v1472 = vpack.c.b16 %v956, %v952
    %v1473 = vpack.c.b16 %v957, %v953
    %v1474 = vpack.c.b16 %v958, %v954
    %v1475 = vpack.c.b16 %v963, %v959
    %v1476 = vpack.c.b16 %v964, %v960
    %v1477 = vpack.c.b16 %v965, %v961
    %v1478 = vpack.c.b16 %v966, %v962
    %v1479 = vpack.c.b16 %v971, %v967
    %v1480 = vpack.c.b16 %v972, %v968
    %v1481 = vpack.c.b16 %v973, %v969
    %v1482 = vpack.c.b16 %v974, %v970
    %v1483 = vpack.c.b16 %v979, %v975
    %v1484 = vpack.c.b16 %v980, %v976
    %v1485 = vpack.c.b16 %v981, %v977
    %v1486 = vpack.c.b16 %v982, %v978
    %v1487 = vpack.c.b16 %v987, %v983
    %v1488 = vpack.c.b16 %v988, %v984
    %v1489 = vpack.c.b16 %v989, %v985
    %v1490 = vpack.c.b16 %v990, %v986
    %v1491 = vpack.c.b16 %v995, %v991
    %v1492 = vpack.c.b16 %v996, %v992
    %v1493 = vpack.c.b16 %v997, %v993
    %v1494 = vpack.c.b16 %v998, %v994
    %v1495 = vpack.c.b16 %v1003, %v999
    %v1496 = vpack.c.b16 %v1004, %v1000
    %v1497 = vpack.c.b16 %v1005, %v1001
    %v1498 = vpack.c.b16 %v1006, %v1002
    %v1499 = vpack.c.b16 %v1011, %v1007
    %v1500 = vpack.c.b16 %v1012, %v1008
    %v1501 = vpack.c.b16 %v1013, %v1009
    %v1502 = vpack.c.b16 %v1014, %v1010
    %v1503 = vpack.c.b16 %v1019, %v1015
    %v1504 = vpack.c.b16 %v1020, %v1016
    %v1505 = vpack.c.b16 %v1021, %v1017
    %v1506 = vpack.c.b16 %v1022, %v1018
    %v1507 = vpack.c.b16 %v1027, %v1023
    %v1508 = vpack.c.b16 %v1028, %v1024
    %v1509 = vpack.c.b16 %v1029, %v1025
    %v1510 = vpack.c.b16 %v1030, %v1026
    %v1511 = vpack.c.b16 %v1035, %v1031
    %v1512 = vpack.c.b16 %v1036, %v1032
    %v1513 = vpack.c.b16 %v1037, %v1033
    %v1514 = vpack.c.b16 %v1038, %v1034
    %v1515 = vpack.c.b16 %v1043, %v1039
    %v1516 = vpack.c.b16 %v1044, %v1040
    %v1517 = vpack.c.b16 %v1045, %v1041
    %v1518 = vpack.c.b16 %v1046, %v1042
    %v1519 = vpack.c.b16 %v1051, %v1047
    %v1520 = vpack.c.b16 %v1052, %v1048
    %v1521 = vpack.c.b16 %v1053, %v1049
    %v1522 = vpack.c.b16 %v1054, %v1050
    %v1523 = vpack.c.b16 %v1059, %v1055
    %v1524 = vpack.c.b16 %v1060, %v1056
    %v1525 = vpack.c.b16 %v1061, %v1057
    %v1526 = vpack.c.b16 %v1062, %v1058
    %v1527 = vpack.c.b16 %v1067, %v1063
    %v1528 = vpack.c.b16 %v1068, %v1064
    %v1529 = vpack.c.b16 %v1069, %v1065
    %v1530 = vpack.c.b16 %v1070, %v1066
    %v1531 = vpack.c.b16 %v1075, %v1071
    %v1532 = vpack.c.b16 %v1076, %v1072
    %v1533 = vpack.c.b16 %v1077, %v1073
    %v1534 = vpack.c.b16 %v1078, %v1074
    %v1535 = vpack.c.b16 %v1083, %v1079
    %v1536 = vpack.c.b16 %v1084, %v1080
    %v1537 = vpack.c.b16 %v1085, %v1081
    %v1538 = vpack.c.b16 %v1086, %v1082
    %v1539 = vpack.c.b16 %v1091, %v1087
    %v1540 = vpack.c.b16 %v1092, %v1088
    %v1541 = vpack.c.b16 %v1093, %v1089
    %v1542 = vpack.c.b16 %v1094, %v1090
    %v1543 = vpack.c.b16 %v1099, %v1095
    %v1544 = vpack.c.b16 %v1100, %v1096
    %v1545 = vpack.c.b16 %v1101, %v1097
    %v1546 = vpack.c.b16 %v1102, %v1098
    %v1547 = vpack.c.b16 %v1107, %v1103
    %v1548 = vpack.c.b16 %v1108, %v1104
    %v1549 = vpack.c.b16 %v1109, %v1105
    %v1550 = vpack.c.b16 %v1110, %v1106
    %v1551 = vpack.c.b16 %v1115, %v1111
    %v1552 = vpack.c.b16 %v1116, %v1112
    %v1553 = vpack.c.b16 %v1117, %v1113
    %v1554 = vpack.c.b16 %v1118, %v1114
    %v1555 = vpack.c.b16 %v1123, %v1119
    %v1556 = vpack.c.b16 %v1124, %v1120
    %v1557 = vpack.c.b16 %v1125, %v1121
    %v1558 = vpack.c.b16 %v1126, %v1122
    %v1559 = vpack.c.b16 %v1131, %v1127
    %v1560 = vpack.c.b16 %v1132, %v1128
    %v1561 = vpack.c.b16 %v1133, %v1129
    %v1562 = vpack.c.b16 %v1134, %v1130
    %v1563 = vpack.c.b16 %v1139, %v1135
    %v1564 = vpack.c.b16 %v1140, %v1136
    %v1565 = vpack.c.b16 %v1141, %v1137
    %v1566 = vpack.c.b16 %v1142, %v1138
    %v1567 = vpack.c.b16 %v1147, %v1143
    %v1568 = vpack.c.b16 %v1148, %v1144
    %v1569 = vpack.c.b16 %v1149, %v1145
    %v1570 = vpack.c.b16 %v1150, %v1146
    %v1571 = vpack.c.b16 %v1155, %v1151
    %v1572 = vpack.c.b16 %v1156, %v1152
    %v1573 = vpack.c.b16 %v1157, %v1153
    %v1574 = vpack.c.b16 %v1158, %v1154
    %v1575 = vpack.c.b16 %v1163, %v1159
    %v1576 = vpack.c.b16 %v1164, %v1160
    %v1577 = vpack.c.b16 %v1165, %v1161
    %v1578 = vpack.c.b16 %v1166, %v1162
    %v1579 = vpack.c.b16 %v1171, %v1167
    %v1580 = vpack.c.b16 %v1172, %v1168
    %v1581 = vpack.c.b16 %v1173, %v1169
    %v1582 = vpack.c.b16 %v1174, %v1170
    %v1583 = vpack.c.b16 %v1179, %v1175
    %v1584 = vpack.c.b16 %v1180, %v1176
    %v1585 = vpack.c.b16 %v1181, %v1177
    %v1586 = vpack.c.b16 %v1182, %v1178
    %v1587 = vpack.c.b16 %v1187, %v1183
    %v1588 = vpack.c.b16 %v1188, %v1184
    %v1589 = vpack.c.b16 %v1189, %v1185
    %v1590 = vpack.c.b16 %v1190, %v1186
    %v1591 = vpack.c.b16 %v1195, %v1191
    %v1592 = vpack.c.b16 %v1196, %v1192
    %v1593 = vpack.c.b16 %v1197, %v1193
    %v1594 = vpack.c.b16 %v1198, %v1194
    %v1595 = vpack.c.b16 %v1203, %v1199
    %v1596 = vpack.c.b16 %v1204, %v1200
    %v1597 = vpack.c.b16 %v1205, %v1201
    %v1598 = vpack.c.b16 %v1206, %v1202
    %v1599 = vpack.c.b16 %v1211, %v1207
    %v1600 = vpack.c.b16 %v1212, %v1208
    %v1601 = vpack.c.b16 %v1213, %v1209
    %v1602 = vpack.c.b16 %v1214, %v1210
    %v1603 = vpack.c.b16 %v1219, %v1215
    %v1604 = vpack.c.b16 %v1220, %v1216
    %v1605 = vpack.c.b16 %v1221, %v1217
    %v1606 = vpack.c.b16 %v1222, %v1218
    %v1607 = vpack.c.b16 %v1227, %v1223
    %v1608 = vpack.c.b16 %v1228, %v1224
    %v1609 = vpack.c.b16 %v1229, %v1225
    %v1610 = vpack.c.b16 %v1230, %v1226
    %v1611 = vpack.c.b16 %v1235, %v1231
    %v1612 = vpack.c.b16 %v1236, %v1232
    %v1613 = vpack.c.b16 %v1237, %v1233
    %v1614 = vpack.c.b16 %v1238, %v1234
    %v1615 = vpack.c.b16 %v1243, %v1239
    %v1616 = vpack.c.b16 %v1244, %v1240
    %v1617 = vpack.c.b16 %v1245, %v1241
    %v1618 = vpack.c.b16 %v1246, %v1242
    %v1619 = vpack.c.b16 %v1251, %v1247
    %v1620 = vpack.c.b16 %v1252, %v1248
    %v1621 = vpack.c.b16 %v1253, %v1249
    %v1622 = vpack.c.b16 %v1254, %v1250
    %v1623 = vpack.c.b16 %v1259, %v1255
    %v1624 = vpack.c.b16 %v1260, %v1256
    %v1625 = vpack.c.b16 %v1261, %v1257
    %v1626 = vpack.c.b16 %v1262, %v1258
    %v1627 = vpack.c.b16 %v1267, %v1263
    %v1628 = vpack.c.b16 %v1268, %v1264
    %v1629 = vpack.c.b16 %v1269, %v1265
    %v1630 = vpack.c.b16 %v1270, %v1266
    %v1631 = vpack.c.b16 %v1275, %v1271
    %v1632 = vpack.c.b16 %v1276, %v1272
    %v1633 = vpack.c.b16 %v1277, %v1273
    %v1634 = vpack.c.b16 %v1278, %v1274
    %v1635 = vpack.c.b16 %v1283, %v1279
    %v1636 = vpack.c.b16 %v1284, %v1280
    %v1637 = vpack.c.b16 %v1285, %v1281
    %v1638 = vpack.c.b16 %v1286, %v1282
    %v1639 = vpack.c.b16 %v1291, %v1287
    %v1640 = vpack.c.b16 %v1292, %v1288
    %v1641 = vpack.c.b16 %v1293, %v1289
    %v1642 = vpack.c.b16 %v1294, %v1290
    %v1643 = vpack.c.b16 %v1299, %v1295
    %v1644 = vpack.c.b16 %v1300, %v1296
    %v1645 = vpack.c.b16 %v1301, %v1297
    %v1646 = vpack.c.b16 %v1302, %v1298
    %v1647 = vpack.c.b16 %v1307, %v1303
    %v1648 = vpack.c.b16 %v1308, %v1304
    %v1649 = vpack.c.b16 %v1309, %v1305
    %v1650 = vpack.c.b16 %v1310, %v1306
    %v1651 = vpack.c.b16 %v1315, %v1311
    %v1652 = vpack.c.b16 %v1316, %v1312
    %v1653 = vpack.c.b16 %v1317, %v1313
    %v1654 = vpack.c.b16 %v1318, %v1314
    %v1655 = vpack.c.b16 %v1323, %v1319
    %v1656 = vpack.c.b16 %v1324, %v1320
    %v1657 = vpack.c.b16 %v1325, %v1321
    %v1658 = vpack.c.b16 %v1326, %v1322
    %v1659 = vpack.c.b16 %v1331, %v1327
    %v1660 = vpack.c.b16 %v1332, %v1328
    %v1661 = vpack.c.b16 %v1333, %v1329
    %v1662 = vpack.c.b16 %v1334, %v1330
    %v1663 = vpack.c.b16 %v1339, %v1335
    %v1664 = vpack.c.b16 %v1340, %v1336
    %v1665 = vpack.c.b16 %v1341, %v1337
    %v1666 = vpack.c.b16 %v1342, %v1338
    %v1667 = vpack.c.b16 %v1347, %v1343
    %v1668 = vpack.c.b16 %v1348, %v1344
    %v1669 = vpack.c.b16 %v1349, %v1345
    %v1670 = vpack.c.b16 %v1350, %v1346
    %1991 = vmatpush.bf16.msra.mxu0 %v1379
    %1992 = vmatpush.bf16.msra.mxu0 %v1375
    %1993 = vmatpush.bf16.msra.mxu0 %v1371
    %1994 = vmatpush.bf16.msra.mxu0 %v1367
    %1995 = vmatpush.bf16.msra.mxu0 %v1363
    %1996 = vmatpush.bf16.msra.mxu0 %v1359
    %1997 = vmatpush.bf16.msra.mxu0 %v1355
    %1998 = vmatpush.bf16.msra.mxu0 %v1351
    %1999 = vmatmul.bf16.gmra.mxu0 %v51
    %v2000 = vpop.f32.mrf.mxu0
    %v2001 = vadd.f32 %v383, %v2000
    %v2002 = vpop.f32.mrf.mxu0
    %2003 = vdwg.mxu0
    %2004 = vmatpush.bf16.msra.mxu0 %v1411
    %2005 = vmatpush.bf16.msra.mxu0 %v1407
    %2006 = vmatpush.bf16.msra.mxu0 %v1403
    %2007 = vmatpush.bf16.msra.mxu0 %v1399
    %2008 = vmatpush.bf16.msra.mxu0 %v1395
    %2009 = vmatpush.bf16.msra.mxu0 %v1391
    %2010 = vmatpush.bf16.msra.mxu0 %v1387
    %2011 = vmatpush.bf16.msra.mxu0 %v1383
    %2012 = vmatmul.bf16.gmra.mxu0 %v52
    %v2013 = vpop.f32.mrf.mxu0
    %v2014 = vadd.f32 %v2001, %v2013
    %v2015 = vpop.f32.mrf.mxu0
    %2016 = vdwg.mxu0
    %2017 = vmatpush.bf16.msra.mxu0 %v1443
    %2018 = vmatpush.bf16.msra.mxu0 %v1439
    %2019 = vmatpush.bf16.msra.mxu0 %v1435
    %2020 = vmatpush.bf16.msra.mxu0 %v1431
    %2021 = vmatpush.bf16.msra.mxu0 %v1427
    %2022 = vmatpush.bf16.msra.mxu0 %v1423
    %2023 = vmatpush.bf16.msra.mxu0 %v1419
    %2024 = vmatpush.bf16.msra.mxu0 %v1415
    %2025 = vmatmul.bf16.gmra.mxu0 %v53
    %v2026 = vpop.f32.mrf.mxu0
    %v2027 = vadd.f32 %v2014, %v2026
    %v2028 = vpop.f32.mrf.mxu0
    %2029 = vdwg.mxu0
    %2030 = vmatpush.bf16.msra.mxu0 %v1475
    %2031 = vmatpush.bf16.msra.mxu0 %v1471
    %2032 = vmatpush.bf16.msra.mxu0 %v1467
    %2033 = vmatpush.bf16.msra.mxu0 %v1463
    %2034 = vmatpush.bf16.msra.mxu0 %v1459
    %2035 = vmatpush.bf16.msra.mxu0 %v1455
    %2036 = vmatpush.bf16.msra.mxu0 %v1451
    %2037 = vmatpush.bf16.msra.mxu0 %v1447
    %2038 = vmatmul.bf16.gmra.mxu0 %v54
    %v2039 = vpop.f32.mrf.mxu0
    %v2040 = vadd.f32 %v2027, %v2039
    %v2041 = vpop.f32.mrf.mxu0
    %2042 = vdwg.mxu0
    %2043 = vmatpush.bf16.msra.mxu0 %v1507
    %2044 = vmatpush.bf16.msra.mxu0 %v1503
    %2045 = vmatpush.bf16.msra.mxu0 %v1499
    %2046 = vmatpush.bf16.msra.mxu0 %v1495
    %2047 = vmatpush.bf16.msra.mxu0 %v1491
    %2048 = vmatpush.bf16.msra.mxu0 %v1487
    %2049 = vmatpush.bf16.msra.mxu0 %v1483
    %2050 = vmatpush.bf16.msra.mxu0 %v1479
    %2051 = vmatmul.bf16.gmra.mxu0 %v55
    %v2052 = vpop.f32.mrf.mxu0
    %v2053 = vadd.f32 %v2040, %v2052
    %v2054 = vpop.f32.mrf.mxu0
    %2055 = vdwg.mxu0
    %2056 = vmatpush.bf16.msra.mxu0 %v1539
    %2057 = vmatpush.bf16.msra.mxu0 %v1535
    %2058 = vmatpush.bf16.msra.mxu0 %v1531
    %2059 = vmatpush.bf16.msra.mxu0 %v1527
    %2060 = vmatpush.bf16.msra.mxu0 %v1523
    %2061 = vmatpush.bf16.msra.mxu0 %v1519
    %2062 = vmatpush.bf16.msra.mxu0 %v1515
    %2063 = vmatpush.bf16.msra.mxu0 %v1511
    %2064 = vmatmul.bf16.gmra.mxu0 %v56
    %v2065 = vpop.f32.mrf.mxu0
    %v2066 = vadd.f32 %v2053, %v2065
    %v2067 = vpop.f32.mrf.mxu0
    %2068 = vdwg.mxu0
    %2069 = vmatpush.bf16.msra.mxu0 %v1571
    %2070 = vmatpush.bf16.msra.mxu0 %v1567
    %2071 = vmatpush.bf16.msra.mxu0 %v1563
    %2072 = vmatpush.bf16.msra.mxu0 %v1559
    %2073 = vmatpush.bf16.msra.mxu0 %v1555
    %2074 = vmatpush.bf16.msra.mxu0 %v1551
    %2075 = vmatpush.bf16.msra.mxu0 %v1547
    %2076 = vmatpush.bf16.msra.mxu0 %v1543
    %2077 = vmatmul.bf16.gmra.mxu0 %v57
    %v2078 = vpop.f32.mrf.mxu0
    %v2079 = vadd.f32 %v2066, %v2078
    %v2080 = vpop.f32.mrf.mxu0
    %2081 = vdwg.mxu0
    %2082 = vmatpush.bf16.msra.mxu0 %v1603
    %2083 = vmatpush.bf16.msra.mxu0 %v1599
    %2084 = vmatpush.bf16.msra.mxu0 %v1595
    %2085 = vmatpush.bf16.msra.mxu0 %v1591
    %2086 = vmatpush.bf16.msra.mxu0 %v1587
    %2087 = vmatpush.bf16.msra.mxu0 %v1583
    %2088 = vmatpush.bf16.msra.mxu0 %v1579
    %2089 = vmatpush.bf16.msra.mxu0 %v1575
    %2090 = vmatmul.bf16.gmra.mxu0 %v58
    %v2091 = vpop.f32.mrf.mxu0
    %v2092 = vadd.f32 %v2079, %v2091
    %v2093 = vpop.f32.mrf.mxu0
    %2094 = vdwg.mxu0
    %2095 = vmatpush.bf16.msra.mxu0 %v1635
    %2096 = vmatpush.bf16.msra.mxu0 %v1631
    %2097 = vmatpush.bf16.msra.mxu0 %v1627
    %2098 = vmatpush.bf16.msra.mxu0 %v1623
    %2099 = vmatpush.bf16.msra.mxu0 %v1619
    %2100 = vmatpush.bf16.msra.mxu0 %v1615
    %2101 = vmatpush.bf16.msra.mxu0 %v1611
    %2102 = vmatpush.bf16.msra.mxu0 %v1607
    %2103 = vmatmul.bf16.gmra.mxu0 %v59
    %v2104 = vpop.f32.mrf.mxu0
    %v2105 = vadd.f32 %v2092, %v2104
    %v2106 = vpop.f32.mrf.mxu0
    %2107 = vdwg.mxu0
    %2108 = vmatpush.bf16.msra.mxu0 %v1667
    %2109 = vmatpush.bf16.msra.mxu0 %v1663
    %2110 = vmatpush.bf16.msra.mxu0 %v1659
    %2111 = vmatpush.bf16.msra.mxu0 %v1655
    %2112 = vmatpush.bf16.msra.mxu0 %v1651
    %2113 = vmatpush.bf16.msra.mxu0 %v1647
    %2114 = vmatpush.bf16.msra.mxu0 %v1643
    %2115 = vmatpush.bf16.msra.mxu0 %v1639
    %2116 = vmatmul.bf16.gmra.mxu0 %v60
    %v2117 = vpop.f32.mrf.mxu0
    %v2118 = vadd.f32 %v2105, %v2117
    %v2119 = vpop.f32.mrf.mxu0
    %2120 = vdwg.mxu0
    %2121 = vmatpush.bf16.msra.mxu0 %v1380
    %2122 = vmatpush.bf16.msra.mxu0 %v1376
    %2123 = vmatpush.bf16.msra.mxu0 %v1372
    %2124 = vmatpush.bf16.msra.mxu0 %v1368
    %2125 = vmatpush.bf16.msra.mxu0 %v1364
    %2126 = vmatpush.bf16.msra.mxu0 %v1360
    %2127 = vmatpush.bf16.msra.mxu0 %v1356
    %2128 = vmatpush.bf16.msra.mxu0 %v1352
    %2129 = vmatmul.bf16.gmra.mxu0 %v51
    %v2130 = vpop.f32.mrf.mxu0
    %v2131 = vadd.f32 %v384, %v2130
    %v2132 = vpop.f32.mrf.mxu0
    %2133 = vdwg.mxu0
    %2134 = vmatpush.bf16.msra.mxu0 %v1412
    %2135 = vmatpush.bf16.msra.mxu0 %v1408
    %2136 = vmatpush.bf16.msra.mxu0 %v1404
    %2137 = vmatpush.bf16.msra.mxu0 %v1400
    %2138 = vmatpush.bf16.msra.mxu0 %v1396
    %2139 = vmatpush.bf16.msra.mxu0 %v1392
    %2140 = vmatpush.bf16.msra.mxu0 %v1388
    %2141 = vmatpush.bf16.msra.mxu0 %v1384
    %2142 = vmatmul.bf16.gmra.mxu0 %v52
    %v2143 = vpop.f32.mrf.mxu0
    %v2144 = vadd.f32 %v2131, %v2143
    %v2145 = vpop.f32.mrf.mxu0
    %2146 = vdwg.mxu0
    %2147 = vmatpush.bf16.msra.mxu0 %v1444
    %2148 = vmatpush.bf16.msra.mxu0 %v1440
    %2149 = vmatpush.bf16.msra.mxu0 %v1436
    %2150 = vmatpush.bf16.msra.mxu0 %v1432
    %2151 = vmatpush.bf16.msra.mxu0 %v1428
    %2152 = vmatpush.bf16.msra.mxu0 %v1424
    %2153 = vmatpush.bf16.msra.mxu0 %v1420
    %2154 = vmatpush.bf16.msra.mxu0 %v1416
    %2155 = vmatmul.bf16.gmra.mxu0 %v53
    %v2156 = vpop.f32.mrf.mxu0
    %v2157 = vadd.f32 %v2144, %v2156
    %v2158 = vpop.f32.mrf.mxu0
    %2159 = vdwg.mxu0
    %2160 = vmatpush.bf16.msra.mxu0 %v1476
    %2161 = vmatpush.bf16.msra.mxu0 %v1472
    %2162 = vmatpush.bf16.msra.mxu0 %v1468
    %2163 = vmatpush.bf16.msra.mxu0 %v1464
    %2164 = vmatpush.bf16.msra.mxu0 %v1460
    %2165 = vmatpush.bf16.msra.mxu0 %v1456
    %2166 = vmatpush.bf16.msra.mxu0 %v1452
    %2167 = vmatpush.bf16.msra.mxu0 %v1448
    %2168 = vmatmul.bf16.gmra.mxu0 %v54
    %v2169 = vpop.f32.mrf.mxu0
    %v2170 = vadd.f32 %v2157, %v2169
    %v2171 = vpop.f32.mrf.mxu0
    %2172 = vdwg.mxu0
    %2173 = vmatpush.bf16.msra.mxu0 %v1508
    %2174 = vmatpush.bf16.msra.mxu0 %v1504
    %2175 = vmatpush.bf16.msra.mxu0 %v1500
    %2176 = vmatpush.bf16.msra.mxu0 %v1496
    %2177 = vmatpush.bf16.msra.mxu0 %v1492
    %2178 = vmatpush.bf16.msra.mxu0 %v1488
    %2179 = vmatpush.bf16.msra.mxu0 %v1484
    %2180 = vmatpush.bf16.msra.mxu0 %v1480
    %2181 = vmatmul.bf16.gmra.mxu0 %v55
    %v2182 = vpop.f32.mrf.mxu0
    %v2183 = vadd.f32 %v2170, %v2182
    %v2184 = vpop.f32.mrf.mxu0
    %2185 = vdwg.mxu0
    %2186 = vmatpush.bf16.msra.mxu0 %v1540
    %2187 = vmatpush.bf16.msra.mxu0 %v1536
    %2188 = vmatpush.bf16.msra.mxu0 %v1532
    %2189 = vmatpush.bf16.msra.mxu0 %v1528
    %2190 = vmatpush.bf16.msra.mxu0 %v1524
    %2191 = vmatpush.bf16.msra.mxu0 %v1520
    %2192 = vmatpush.bf16.msra.mxu0 %v1516
    %2193 = vmatpush.bf16.msra.mxu0 %v1512
    %2194 = vmatmul.bf16.gmra.mxu0 %v56
    %v2195 = vpop.f32.mrf.mxu0
    %v2196 = vadd.f32 %v2183, %v2195
    %v2197 = vpop.f32.mrf.mxu0
    %2198 = vdwg.mxu0
    %2199 = vmatpush.bf16.msra.mxu0 %v1572
    %2200 = vmatpush.bf16.msra.mxu0 %v1568
    %2201 = vmatpush.bf16.msra.mxu0 %v1564
    %2202 = vmatpush.bf16.msra.mxu0 %v1560
    %2203 = vmatpush.bf16.msra.mxu0 %v1556
    %2204 = vmatpush.bf16.msra.mxu0 %v1552
    %2205 = vmatpush.bf16.msra.mxu0 %v1548
    %2206 = vmatpush.bf16.msra.mxu0 %v1544
    %2207 = vmatmul.bf16.gmra.mxu0 %v57
    %v2208 = vpop.f32.mrf.mxu0
    %v2209 = vadd.f32 %v2196, %v2208
    %v2210 = vpop.f32.mrf.mxu0
    %2211 = vdwg.mxu0
    %2212 = vmatpush.bf16.msra.mxu0 %v1604
    %2213 = vmatpush.bf16.msra.mxu0 %v1600
    %2214 = vmatpush.bf16.msra.mxu0 %v1596
    %2215 = vmatpush.bf16.msra.mxu0 %v1592
    %2216 = vmatpush.bf16.msra.mxu0 %v1588
    %2217 = vmatpush.bf16.msra.mxu0 %v1584
    %2218 = vmatpush.bf16.msra.mxu0 %v1580
    %2219 = vmatpush.bf16.msra.mxu0 %v1576
    %2220 = vmatmul.bf16.gmra.mxu0 %v58
    %v2221 = vpop.f32.mrf.mxu0
    %v2222 = vadd.f32 %v2209, %v2221
    %v2223 = vpop.f32.mrf.mxu0
    %2224 = vdwg.mxu0
    %2225 = vmatpush.bf16.msra.mxu0 %v1636
    %2226 = vmatpush.bf16.msra.mxu0 %v1632
    %2227 = vmatpush.bf16.msra.mxu0 %v1628
    %2228 = vmatpush.bf16.msra.mxu0 %v1624
    %2229 = vmatpush.bf16.msra.mxu0 %v1620
    %2230 = vmatpush.bf16.msra.mxu0 %v1616
    %2231 = vmatpush.bf16.msra.mxu0 %v1612
    %2232 = vmatpush.bf16.msra.mxu0 %v1608
    %2233 = vmatmul.bf16.gmra.mxu0 %v59
    %v2234 = vpop.f32.mrf.mxu0
    %v2235 = vadd.f32 %v2222, %v2234
    %v2236 = vpop.f32.mrf.mxu0
    %2237 = vdwg.mxu0
    %2238 = vmatpush.bf16.msra.mxu0 %v1668
    %2239 = vmatpush.bf16.msra.mxu0 %v1664
    %2240 = vmatpush.bf16.msra.mxu0 %v1660
    %2241 = vmatpush.bf16.msra.mxu0 %v1656
    %2242 = vmatpush.bf16.msra.mxu0 %v1652
    %2243 = vmatpush.bf16.msra.mxu0 %v1648
    %2244 = vmatpush.bf16.msra.mxu0 %v1644
    %2245 = vmatpush.bf16.msra.mxu0 %v1640
    %2246 = vmatmul.bf16.gmra.mxu0 %v60
    %v2247 = vpop.f32.mrf.mxu0
    %v2248 = vadd.f32 %v2235, %v2247
    %v2249 = vpop.f32.mrf.mxu0
    %2250 = vdwg.mxu0
    %2251 = vmatpush.bf16.msra.mxu0 %v1381
    %2252 = vmatpush.bf16.msra.mxu0 %v1377
    %2253 = vmatpush.bf16.msra.mxu0 %v1373
    %2254 = vmatpush.bf16.msra.mxu0 %v1369
    %2255 = vmatpush.bf16.msra.mxu0 %v1365
    %2256 = vmatpush.bf16.msra.mxu0 %v1361
    %2257 = vmatpush.bf16.msra.mxu0 %v1357
    %2258 = vmatpush.bf16.msra.mxu0 %v1353
    %2259 = vmatmul.bf16.gmra.mxu0 %v51
    %v2260 = vpop.f32.mrf.mxu0
    %v2261 = vadd.f32 %v385, %v2260
    %v2262 = vpop.f32.mrf.mxu0
    %2263 = vdwg.mxu0
    %2264 = vmatpush.bf16.msra.mxu0 %v1413
    %2265 = vmatpush.bf16.msra.mxu0 %v1409
    %2266 = vmatpush.bf16.msra.mxu0 %v1405
    %2267 = vmatpush.bf16.msra.mxu0 %v1401
    %2268 = vmatpush.bf16.msra.mxu0 %v1397
    %2269 = vmatpush.bf16.msra.mxu0 %v1393
    %2270 = vmatpush.bf16.msra.mxu0 %v1389
    %2271 = vmatpush.bf16.msra.mxu0 %v1385
    %2272 = vmatmul.bf16.gmra.mxu0 %v52
    %v2273 = vpop.f32.mrf.mxu0
    %v2274 = vadd.f32 %v2261, %v2273
    %v2275 = vpop.f32.mrf.mxu0
    %2276 = vdwg.mxu0
    %2277 = vmatpush.bf16.msra.mxu0 %v1445
    %2278 = vmatpush.bf16.msra.mxu0 %v1441
    %2279 = vmatpush.bf16.msra.mxu0 %v1437
    %2280 = vmatpush.bf16.msra.mxu0 %v1433
    %2281 = vmatpush.bf16.msra.mxu0 %v1429
    %2282 = vmatpush.bf16.msra.mxu0 %v1425
    %2283 = vmatpush.bf16.msra.mxu0 %v1421
    %2284 = vmatpush.bf16.msra.mxu0 %v1417
    %2285 = vmatmul.bf16.gmra.mxu0 %v53
    %v2286 = vpop.f32.mrf.mxu0
    %v2287 = vadd.f32 %v2274, %v2286
    %v2288 = vpop.f32.mrf.mxu0
    %2289 = vdwg.mxu0
    %2290 = vmatpush.bf16.msra.mxu0 %v1477
    %2291 = vmatpush.bf16.msra.mxu0 %v1473
    %2292 = vmatpush.bf16.msra.mxu0 %v1469
    %2293 = vmatpush.bf16.msra.mxu0 %v1465
    %2294 = vmatpush.bf16.msra.mxu0 %v1461
    %2295 = vmatpush.bf16.msra.mxu0 %v1457
    %2296 = vmatpush.bf16.msra.mxu0 %v1453
    %2297 = vmatpush.bf16.msra.mxu0 %v1449
    %2298 = vmatmul.bf16.gmra.mxu0 %v54
    %v2299 = vpop.f32.mrf.mxu0
    %v2300 = vadd.f32 %v2287, %v2299
    %v2301 = vpop.f32.mrf.mxu0
    %2302 = vdwg.mxu0
    %2303 = vmatpush.bf16.msra.mxu0 %v1509
    %2304 = vmatpush.bf16.msra.mxu0 %v1505
    %2305 = vmatpush.bf16.msra.mxu0 %v1501
    %2306 = vmatpush.bf16.msra.mxu0 %v1497
    %2307 = vmatpush.bf16.msra.mxu0 %v1493
    %2308 = vmatpush.bf16.msra.mxu0 %v1489
    %2309 = vmatpush.bf16.msra.mxu0 %v1485
    %2310 = vmatpush.bf16.msra.mxu0 %v1481
    %2311 = vmatmul.bf16.gmra.mxu0 %v55
    %v2312 = vpop.f32.mrf.mxu0
    %v2313 = vadd.f32 %v2300, %v2312
    %v2314 = vpop.f32.mrf.mxu0
    %2315 = vdwg.mxu0
    %2316 = vmatpush.bf16.msra.mxu0 %v1541
    %2317 = vmatpush.bf16.msra.mxu0 %v1537
    %2318 = vmatpush.bf16.msra.mxu0 %v1533
    %2319 = vmatpush.bf16.msra.mxu0 %v1529
    %2320 = vmatpush.bf16.msra.mxu0 %v1525
    %2321 = vmatpush.bf16.msra.mxu0 %v1521
    %2322 = vmatpush.bf16.msra.mxu0 %v1517
    %2323 = vmatpush.bf16.msra.mxu0 %v1513
    %2324 = vmatmul.bf16.gmra.mxu0 %v56
    %v2325 = vpop.f32.mrf.mxu0
    %v2326 = vadd.f32 %v2313, %v2325
    %v2327 = vpop.f32.mrf.mxu0
    %2328 = vdwg.mxu0
    %2329 = vmatpush.bf16.msra.mxu0 %v1573
    %2330 = vmatpush.bf16.msra.mxu0 %v1569
    %2331 = vmatpush.bf16.msra.mxu0 %v1565
    %2332 = vmatpush.bf16.msra.mxu0 %v1561
    %2333 = vmatpush.bf16.msra.mxu0 %v1557
    %2334 = vmatpush.bf16.msra.mxu0 %v1553
    %2335 = vmatpush.bf16.msra.mxu0 %v1549
    %2336 = vmatpush.bf16.msra.mxu0 %v1545
    %2337 = vmatmul.bf16.gmra.mxu0 %v57
    %v2338 = vpop.f32.mrf.mxu0
    %v2339 = vadd.f32 %v2326, %v2338
    %v2340 = vpop.f32.mrf.mxu0
    %2341 = vdwg.mxu0
    %2342 = vmatpush.bf16.msra.mxu0 %v1605
    %2343 = vmatpush.bf16.msra.mxu0 %v1601
    %2344 = vmatpush.bf16.msra.mxu0 %v1597
    %2345 = vmatpush.bf16.msra.mxu0 %v1593
    %2346 = vmatpush.bf16.msra.mxu0 %v1589
    %2347 = vmatpush.bf16.msra.mxu0 %v1585
    %2348 = vmatpush.bf16.msra.mxu0 %v1581
    %2349 = vmatpush.bf16.msra.mxu0 %v1577
    %2350 = vmatmul.bf16.gmra.mxu0 %v58
    %v2351 = vpop.f32.mrf.mxu0
    %v2352 = vadd.f32 %v2339, %v2351
    %v2353 = vpop.f32.mrf.mxu0
    %2354 = vdwg.mxu0
    %2355 = vmatpush.bf16.msra.mxu0 %v1637
    %2356 = vmatpush.bf16.msra.mxu0 %v1633
    %2357 = vmatpush.bf16.msra.mxu0 %v1629
    %2358 = vmatpush.bf16.msra.mxu0 %v1625
    %2359 = vmatpush.bf16.msra.mxu0 %v1621
    %2360 = vmatpush.bf16.msra.mxu0 %v1617
    %2361 = vmatpush.bf16.msra.mxu0 %v1613
    %2362 = vmatpush.bf16.msra.mxu0 %v1609
    %2363 = vmatmul.bf16.gmra.mxu0 %v59
    %v2364 = vpop.f32.mrf.mxu0
    %v2365 = vadd.f32 %v2352, %v2364
    %v2366 = vpop.f32.mrf.mxu0
    %2367 = vdwg.mxu0
    %2368 = vmatpush.bf16.msra.mxu0 %v1669
    %2369 = vmatpush.bf16.msra.mxu0 %v1665
    %2370 = vmatpush.bf16.msra.mxu0 %v1661
    %2371 = vmatpush.bf16.msra.mxu0 %v1657
    %2372 = vmatpush.bf16.msra.mxu0 %v1653
    %2373 = vmatpush.bf16.msra.mxu0 %v1649
    %2374 = vmatpush.bf16.msra.mxu0 %v1645
    %2375 = vmatpush.bf16.msra.mxu0 %v1641
    %2376 = vmatmul.bf16.gmra.mxu0 %v60
    %v2377 = vpop.f32.mrf.mxu0
    %v2378 = vadd.f32 %v2365, %v2377
    %v2379 = vpop.f32.mrf.mxu0
    %2380 = vdwg.mxu0
    %2381 = vmatpush.bf16.msra.mxu0 %v1382
    %2382 = vmatpush.bf16.msra.mxu0 %v1378
    %2383 = vmatpush.bf16.msra.mxu0 %v1374
    %2384 = vmatpush.bf16.msra.mxu0 %v1370
    %2385 = vmatpush.bf16.msra.mxu0 %v1366
    %2386 = vmatpush.bf16.msra.mxu0 %v1362
    %2387 = vmatpush.bf16.msra.mxu0 %v1358
    %2388 = vmatpush.bf16.msra.mxu0 %v1354
    %2389 = vmatmul.bf16.gmra.mxu0 %v51
    %v2390 = vpop.f32.mrf.mxu0
    %v2391 = vadd.f32 %v386, %v2390
    %v2392 = vpop.f32.mrf.mxu0
    %2393 = vdwg.mxu0
    %2394 = vmatpush.bf16.msra.mxu0 %v1414
    %2395 = vmatpush.bf16.msra.mxu0 %v1410
    %2396 = vmatpush.bf16.msra.mxu0 %v1406
    %2397 = vmatpush.bf16.msra.mxu0 %v1402
    %2398 = vmatpush.bf16.msra.mxu0 %v1398
    %2399 = vmatpush.bf16.msra.mxu0 %v1394
    %2400 = vmatpush.bf16.msra.mxu0 %v1390
    %2401 = vmatpush.bf16.msra.mxu0 %v1386
    %2402 = vmatmul.bf16.gmra.mxu0 %v52
    %v2403 = vpop.f32.mrf.mxu0
    %v2404 = vadd.f32 %v2391, %v2403
    %v2405 = vpop.f32.mrf.mxu0
    %2406 = vdwg.mxu0
    %2407 = vmatpush.bf16.msra.mxu0 %v1446
    %2408 = vmatpush.bf16.msra.mxu0 %v1442
    %2409 = vmatpush.bf16.msra.mxu0 %v1438
    %2410 = vmatpush.bf16.msra.mxu0 %v1434
    %2411 = vmatpush.bf16.msra.mxu0 %v1430
    %2412 = vmatpush.bf16.msra.mxu0 %v1426
    %2413 = vmatpush.bf16.msra.mxu0 %v1422
    %2414 = vmatpush.bf16.msra.mxu0 %v1418
    %2415 = vmatmul.bf16.gmra.mxu0 %v53
    %v2416 = vpop.f32.mrf.mxu0
    %v2417 = vadd.f32 %v2404, %v2416
    %v2418 = vpop.f32.mrf.mxu0
    %2419 = vdwg.mxu0
    %2420 = vmatpush.bf16.msra.mxu0 %v1478
    %2421 = vmatpush.bf16.msra.mxu0 %v1474
    %2422 = vmatpush.bf16.msra.mxu0 %v1470
    %2423 = vmatpush.bf16.msra.mxu0 %v1466
    %2424 = vmatpush.bf16.msra.mxu0 %v1462
    %2425 = vmatpush.bf16.msra.mxu0 %v1458
    %2426 = vmatpush.bf16.msra.mxu0 %v1454
    %2427 = vmatpush.bf16.msra.mxu0 %v1450
    %2428 = vmatmul.bf16.gmra.mxu0 %v54
    %v2429 = vpop.f32.mrf.mxu0
    %v2430 = vadd.f32 %v2417, %v2429
    %v2431 = vpop.f32.mrf.mxu0
    %2432 = vdwg.mxu0
    %2433 = vmatpush.bf16.msra.mxu0 %v1510
    %2434 = vmatpush.bf16.msra.mxu0 %v1506
    %2435 = vmatpush.bf16.msra.mxu0 %v1502
    %2436 = vmatpush.bf16.msra.mxu0 %v1498
    %2437 = vmatpush.bf16.msra.mxu0 %v1494
    %2438 = vmatpush.bf16.msra.mxu0 %v1490
    %2439 = vmatpush.bf16.msra.mxu0 %v1486
    %2440 = vmatpush.bf16.msra.mxu0 %v1482
    %2441 = vmatmul.bf16.gmra.mxu0 %v55
    %v2442 = vpop.f32.mrf.mxu0
    %v2443 = vadd.f32 %v2430, %v2442
    %v2444 = vpop.f32.mrf.mxu0
    %2445 = vdwg.mxu0
    %2446 = vmatpush.bf16.msra.mxu0 %v1542
    %2447 = vmatpush.bf16.msra.mxu0 %v1538
    %2448 = vmatpush.bf16.msra.mxu0 %v1534
    %2449 = vmatpush.bf16.msra.mxu0 %v1530
    %2450 = vmatpush.bf16.msra.mxu0 %v1526
    %2451 = vmatpush.bf16.msra.mxu0 %v1522
    %2452 = vmatpush.bf16.msra.mxu0 %v1518
    %2453 = vmatpush.bf16.msra.mxu0 %v1514
    %2454 = vmatmul.bf16.gmra.mxu0 %v56
    %v2455 = vpop.f32.mrf.mxu0
    %v2456 = vadd.f32 %v2443, %v2455
    %v2457 = vpop.f32.mrf.mxu0
    %2458 = vdwg.mxu0
    %2459 = vmatpush.bf16.msra.mxu0 %v1574
    %2460 = vmatpush.bf16.msra.mxu0 %v1570
    %2461 = vmatpush.bf16.msra.mxu0 %v1566
    %2462 = vmatpush.bf16.msra.mxu0 %v1562
    %2463 = vmatpush.bf16.msra.mxu0 %v1558
    %2464 = vmatpush.bf16.msra.mxu0 %v1554
    %2465 = vmatpush.bf16.msra.mxu0 %v1550
    %2466 = vmatpush.bf16.msra.mxu0 %v1546
    %2467 = vmatmul.bf16.gmra.mxu0 %v57
    %v2468 = vpop.f32.mrf.mxu0
    %v2469 = vadd.f32 %v2456, %v2468
    %v2470 = vpop.f32.mrf.mxu0
    %2471 = vdwg.mxu0
    %2472 = vmatpush.bf16.msra.mxu0 %v1606
    %2473 = vmatpush.bf16.msra.mxu0 %v1602
    %2474 = vmatpush.bf16.msra.mxu0 %v1598
    %2475 = vmatpush.bf16.msra.mxu0 %v1594
    %2476 = vmatpush.bf16.msra.mxu0 %v1590
    %2477 = vmatpush.bf16.msra.mxu0 %v1586
    %2478 = vmatpush.bf16.msra.mxu0 %v1582
    %2479 = vmatpush.bf16.msra.mxu0 %v1578
    %2480 = vmatmul.bf16.gmra.mxu0 %v58
    %v2481 = vpop.f32.mrf.mxu0
    %v2482 = vadd.f32 %v2469, %v2481
    %v2483 = vpop.f32.mrf.mxu0
    %2484 = vdwg.mxu0
    %2485 = vmatpush.bf16.msra.mxu0 %v1638
    %2486 = vmatpush.bf16.msra.mxu0 %v1634
    %2487 = vmatpush.bf16.msra.mxu0 %v1630
    %2488 = vmatpush.bf16.msra.mxu0 %v1626
    %2489 = vmatpush.bf16.msra.mxu0 %v1622
    %2490 = vmatpush.bf16.msra.mxu0 %v1618
    %2491 = vmatpush.bf16.msra.mxu0 %v1614
    %2492 = vmatpush.bf16.msra.mxu0 %v1610
    %2493 = vmatmul.bf16.gmra.mxu0 %v59
    %v2494 = vpop.f32.mrf.mxu0
    %v2495 = vadd.f32 %v2482, %v2494
    %v2496 = vpop.f32.mrf.mxu0
    %2497 = vdwg.mxu0
    %2498 = vmatpush.bf16.msra.mxu0 %v1670
    %2499 = vmatpush.bf16.msra.mxu0 %v1666
    %2500 = vmatpush.bf16.msra.mxu0 %v1662
    %2501 = vmatpush.bf16.msra.mxu0 %v1658
    %2502 = vmatpush.bf16.msra.mxu0 %v1654
    %2503 = vmatpush.bf16.msra.mxu0 %v1650
    %2504 = vmatpush.bf16.msra.mxu0 %v1646
    %2505 = vmatpush.bf16.msra.mxu0 %v1642
    %2506 = vmatmul.bf16.gmra.mxu0 %v60
    %v2507 = vpop.f32.mrf.mxu0
    %v2508 = vadd.f32 %v2495, %v2507
    %v2509 = vpop.f32.mrf.mxu0
    %2510 = vdwg.mxu0
    %v2511 = vmax.f32 %v2118, 0.0
    %v2512 = vmax.f32 %v2248, 0.0
    %v2513 = vmax.f32 %v2378, 0.0
    %v2514 = vmax.f32 %v2508, 0.0
    %v2515 = vpack.c.bf16 %v2511, %v2511
    %v2516 = vpack.c.bf16 %v2512, %v2512
    %v2517 = vpack.c.bf16 %v2513, %v2513
    %v2518 = vpack.c.bf16 %v2514, %v2514
    %v2519 = vld [vmem:[%s3] sm:$0xf]
    %v2520 = vld [vmem:[%s3 + $0x4] sm:$0xf]
    %v2521 = vld [vmem:[%s3 + $0x8] sm:$0xf]
    %v2522 = vld [vmem:[%s3 + $0xc] sm:$0xf]
    %v2523 = vld [vmem:[%s3 + $0x10] sm:$0xf]
    %v2524 = vld [vmem:[%s3 + $0x14] sm:$0xf]
    %v2525 = vld [vmem:[%s3 + $0x18] sm:$0xf]
    %v2526 = vld [vmem:[%s3 + $0x1c] sm:$0xf]
    %v2527 = vld [vmem:[%s3 + $0x20] sm:$0xf]
    %v2528 = vld [vmem:[%s3 + $0x24] sm:$0xf]
    %v2529 = vld [vmem:[%s3 + $0x28] sm:$0xf]
    %v2530 = vld [vmem:[%s3 + $0x2c] sm:$0xf]
    %v2531 = vld [vmem:[%s3 + $0x30] sm:$0xf]
    %v2532 = vld [vmem:[%s3 + $0x34] sm:$0xf]
    %v2533 = vld [vmem:[%s3 + $0x38] sm:$0xf]
    %v2534 = vld [vmem:[%s3 + $0x3c] sm:$0xf]
    %v2535 = vld [vmem:[%s3 + $0x40] sm:$0xf]
    %v2536 = vld [vmem:[%s3 + $0x44] sm:$0xf]
    %v2537 = vld [vmem:[%s3 + $0x48] sm:$0xf]
    %v2538 = vld [vmem:[%s3 + $0x4c] sm:$0xf]
    %v2539 = vld [vmem:[%s3 + $0x50] sm:$0xf]
    %v2540 = vld [vmem:[%s3 + $0x54] sm:$0xf]
    %v2541 = vld [vmem:[%s3 + $0x58] sm:$0xf]
    %v2542 = vld [vmem:[%s3 + $0x5c] sm:$0xf]
    %v2543 = vld [vmem:[%s3 + $0x60] sm:$0xf]
    %v2544 = vld [vmem:[%s3 + $0x64] sm:$0xf]
    %v2545 = vld [vmem:[%s3 + $0x68] sm:$0xf]
    %v2546 = vld [vmem:[%s3 + $0x6c] sm:$0xf]
    %v2547 = vld [vmem:[%s3 + $0x70] sm:$0xf]
    %v2548 = vld [vmem:[%s3 + $0x74] sm:$0xf]
    %v2549 = vld [vmem:[%s3 + $0x78] sm:$0xf]
    %v2550 = vld [vmem:[%s3 + $0x7c] sm:$0xf]
    %v2551 = vld [vmem:[%s3 + $0x80] sm:$0xf]
    %v2552 = vld [vmem:[%s3 + $0x84] sm:$0xf]
    %v2553 = vld [vmem:[%s3 + $0x88] sm:$0xf]
    %v2554 = vld [vmem:[%s3 + $0x8c] sm:$0xf]
    %v2555 = vld [vmem:[%s3 + $0x90] sm:$0xf]
    %v2556 = vld [vmem:[%s3 + $0x94] sm:$0xf]
    %v2557 = vld [vmem:[%s3 + $0x98] sm:$0xf]
    %v2558 = vld [vmem:[%s3 + $0x9c] sm:$0xf]
    %v2559 = vld [vmem:[%s3 + $0xa0] sm:$0xf]
    %v2560 = vld [vmem:[%s3 + $0xa4] sm:$0xf]
    %v2561 = vld [vmem:[%s3 + $0xa8] sm:$0xf]
    %v2562 = vld [vmem:[%s3 + $0xac] sm:$0xf]
    %v2563 = vld [vmem:[%s3 + $0xb0] sm:$0xf]
    %v2564 = vld [vmem:[%s3 + $0xb4] sm:$0xf]
    %v2565 = vld [vmem:[%s3 + $0xb8] sm:$0xf]
    %v2566 = vld [vmem:[%s3 + $0xbc] sm:$0xf]
    %v2567 = vld [vmem:[%s3 + $0xc0] sm:$0xf]
    %v2568 = vld [vmem:[%s3 + $0xc4] sm:$0xf]
    %v2569 = vld [vmem:[%s3 + $0xc8] sm:$0xf]
    %v2570 = vld [vmem:[%s3 + $0xcc] sm:$0xf]
    %v2571 = vld [vmem:[%s3 + $0xd0] sm:$0xf]
    %v2572 = vld [vmem:[%s3 + $0xd4] sm:$0xf]
    %v2573 = vld [vmem:[%s3 + $0xd8] sm:$0xf]
    %v2574 = vld [vmem:[%s3 + $0xdc] sm:$0xf]
    %v2575 = vld [vmem:[%s3 + $0xe0] sm:$0xf]
    %v2576 = vld [vmem:[%s3 + $0xe4] sm:$0xf]
    %v2577 = vld [vmem:[%s3 + $0xe8] sm:$0xf]
    %v2578 = vld [vmem:[%s3 + $0xec] sm:$0xf]
    %v2579 = vld [vmem:[%s3 + $0xf0] sm:$0xf]
    %v2580 = vld [vmem:[%s3 + $0xf4] sm:$0xf]
    %v2581 = vld [vmem:[%s3 + $0xf8] sm:$0xf]
    %v2582 = vld [vmem:[%s3 + $0xfc] sm:$0xf]
    %v2583 = vld [vmem:[%s4] sm:$0x1]
    %v2585 = vperm.slane %v2583, 0
    %v2651 = vunpack.c.l.b16 %v2519
    %v2652 = vunpack.c.l.b16 %v2520
    %v2653 = vunpack.c.l.b16 %v2521
    %v2654 = vunpack.c.l.b16 %v2522
    %v2655 = vunpack.c.l.b16 %v2523
    %v2656 = vunpack.c.l.b16 %v2524
    %v2657 = vunpack.c.l.b16 %v2525
    %v2658 = vunpack.c.l.b16 %v2526
    %v2659 = vunpack.c.l.b16 %v2527
    %v2660 = vunpack.c.l.b16 %v2528
    %v2661 = vunpack.c.l.b16 %v2529
    %v2662 = vunpack.c.l.b16 %v2530
    %v2663 = vunpack.c.l.b16 %v2531
    %v2664 = vunpack.c.l.b16 %v2532
    %v2665 = vunpack.c.l.b16 %v2533
    %v2666 = vunpack.c.l.b16 %v2534
    %v2667 = vunpack.c.l.b16 %v2535
    %v2668 = vunpack.c.l.b16 %v2536
    %v2669 = vunpack.c.l.b16 %v2537
    %v2670 = vunpack.c.l.b16 %v2538
    %v2671 = vunpack.c.l.b16 %v2539
    %v2672 = vunpack.c.l.b16 %v2540
    %v2673 = vunpack.c.l.b16 %v2541
    %v2674 = vunpack.c.l.b16 %v2542
    %v2675 = vunpack.c.l.b16 %v2543
    %v2676 = vunpack.c.l.b16 %v2544
    %v2677 = vunpack.c.l.b16 %v2545
    %v2678 = vunpack.c.l.b16 %v2546
    %v2679 = vunpack.c.l.b16 %v2547
    %v2680 = vunpack.c.l.b16 %v2548
    %v2681 = vunpack.c.l.b16 %v2549
    %v2682 = vunpack.c.l.b16 %v2550
    %v2683 = vunpack.c.l.b16 %v2551
    %v2684 = vunpack.c.l.b16 %v2552
    %v2685 = vunpack.c.l.b16 %v2553
    %v2686 = vunpack.c.l.b16 %v2554
    %v2687 = vunpack.c.l.b16 %v2555
    %v2688 = vunpack.c.l.b16 %v2556
    %v2689 = vunpack.c.l.b16 %v2557
    %v2690 = vunpack.c.l.b16 %v2558
    %v2691 = vunpack.c.l.b16 %v2559
    %v2692 = vunpack.c.l.b16 %v2560
    %v2693 = vunpack.c.l.b16 %v2561
    %v2694 = vunpack.c.l.b16 %v2562
    %v2695 = vunpack.c.l.b16 %v2563
    %v2696 = vunpack.c.l.b16 %v2564
    %v2697 = vunpack.c.l.b16 %v2565
    %v2698 = vunpack.c.l.b16 %v2566
    %v2699 = vunpack.c.l.b16 %v2567
    %v2700 = vunpack.c.l.b16 %v2568
    %v2701 = vunpack.c.l.b16 %v2569
    %v2702 = vunpack.c.l.b16 %v2570
    %v2703 = vunpack.c.l.b16 %v2571
    %v2704 = vunpack.c.l.b16 %v2572
    %v2705 = vunpack.c.l.b16 %v2573
    %v2706 = vunpack.c.l.b16 %v2574
    %v2707 = vunpack.c.l.b16 %v2575
    %v2708 = vunpack.c.l.b16 %v2576
    %v2709 = vunpack.c.l.b16 %v2577
    %v2710 = vunpack.c.l.b16 %v2578
    %v2711 = vunpack.c.l.b16 %v2579
    %v2712 = vunpack.c.l.b16 %v2580
    %v2713 = vunpack.c.l.b16 %v2581
    %v2714 = vunpack.c.l.b16 %v2582
    %v2715 = vpack.c.b16 %v2652, %v2651
    %v2716 = vpack.c.b16 %v2654, %v2653
    %v2717 = vpack.c.b16 %v2656, %v2655
    %v2718 = vpack.c.b16 %v2658, %v2657
    %v2719 = vpack.c.b16 %v2660, %v2659
    %v2720 = vpack.c.b16 %v2662, %v2661
    %v2721 = vpack.c.b16 %v2664, %v2663
    %v2722 = vpack.c.b16 %v2666, %v2665
    %v2723 = vpack.c.b16 %v2668, %v2667
    %v2724 = vpack.c.b16 %v2670, %v2669
    %v2725 = vpack.c.b16 %v2672, %v2671
    %v2726 = vpack.c.b16 %v2674, %v2673
    %v2727 = vpack.c.b16 %v2676, %v2675
    %v2728 = vpack.c.b16 %v2678, %v2677
    %v2729 = vpack.c.b16 %v2680, %v2679
    %v2730 = vpack.c.b16 %v2682, %v2681
    %v2731 = vpack.c.b16 %v2684, %v2683
    %v2732 = vpack.c.b16 %v2686, %v2685
    %v2733 = vpack.c.b16 %v2688, %v2687
    %v2734 = vpack.c.b16 %v2690, %v2689
    %v2735 = vpack.c.b16 %v2692, %v2691
    %v2736 = vpack.c.b16 %v2694, %v2693
    %v2737 = vpack.c.b16 %v2696, %v2695
    %v2738 = vpack.c.b16 %v2698, %v2697
    %v2739 = vpack.c.b16 %v2700, %v2699
    %v2740 = vpack.c.b16 %v2702, %v2701
    %v2741 = vpack.c.b16 %v2704, %v2703
    %v2742 = vpack.c.b16 %v2706, %v2705
    %v2743 = vpack.c.b16 %v2708, %v2707
    %v2744 = vpack.c.b16 %v2710, %v2709
    %v2745 = vpack.c.b16 %v2712, %v2711
    %v2746 = vpack.c.b16 %v2714, %v2713
    %2779 = vmatpush.bf16.msra.mxu0 %v2722
    %2780 = vmatpush.bf16.msra.mxu0 %v2721
    %2781 = vmatpush.bf16.msra.mxu0 %v2720
    %2782 = vmatpush.bf16.msra.mxu0 %v2719
    %2783 = vmatpush.bf16.msra.mxu0 %v2718
    %2784 = vmatpush.bf16.msra.mxu0 %v2717
    %2785 = vmatpush.bf16.msra.mxu0 %v2716
    %2786 = vmatpush.bf16.msra.mxu0 %v2715
    %2787 = vmatmul.bf16.gmra.mxu0 %v2515
    %v2788 = vpop.f32.mrf.mxu0
    %v2789 = vadd.f32 %v2585, %v2788
    %v2790 = vpop.f32.mrf.mxu0
    %2791 = vdwg.mxu0
    %2792 = vmatpush.bf16.msra.mxu0 %v2730
    %2793 = vmatpush.bf16.msra.mxu0 %v2729
    %2794 = vmatpush.bf16.msra.mxu0 %v2728
    %2795 = vmatpush.bf16.msra.mxu0 %v2727
    %2796 = vmatpush.bf16.msra.mxu0 %v2726
    %2797 = vmatpush.bf16.msra.mxu0 %v2725
    %2798 = vmatpush.bf16.msra.mxu0 %v2724
    %2799 = vmatpush.bf16.msra.mxu0 %v2723
    %2800 = vmatmul.bf16.gmra.mxu0 %v2516
    %v2801 = vpop.f32.mrf.mxu0
    %v2802 = vadd.f32 %v2789, %v2801
    %v2803 = vpop.f32.mrf.mxu0
    %2804 = vdwg.mxu0
    %2805 = vmatpush.bf16.msra.mxu0 %v2738
    %2806 = vmatpush.bf16.msra.mxu0 %v2737
    %2807 = vmatpush.bf16.msra.mxu0 %v2736
    %2808 = vmatpush.bf16.msra.mxu0 %v2735
    %2809 = vmatpush.bf16.msra.mxu0 %v2734
    %2810 = vmatpush.bf16.msra.mxu0 %v2733
    %2811 = vmatpush.bf16.msra.mxu0 %v2732
    %2812 = vmatpush.bf16.msra.mxu0 %v2731
    %2813 = vmatmul.bf16.gmra.mxu0 %v2517
    %v2814 = vpop.f32.mrf.mxu0
    %v2815 = vadd.f32 %v2802, %v2814
    %v2816 = vpop.f32.mrf.mxu0
    %2817 = vdwg.mxu0
    %2818 = vmatpush.bf16.msra.mxu0 %v2746
    %2819 = vmatpush.bf16.msra.mxu0 %v2745
    %2820 = vmatpush.bf16.msra.mxu0 %v2744
    %2821 = vmatpush.bf16.msra.mxu0 %v2743
    %2822 = vmatpush.bf16.msra.mxu0 %v2742
    %2823 = vmatpush.bf16.msra.mxu0 %v2741
    %2824 = vmatpush.bf16.msra.mxu0 %v2740
    %2825 = vmatpush.bf16.msra.mxu0 %v2739
    %2826 = vmatmul.bf16.gmra.mxu0 %v2518
    %v2827 = vpop.f32.mrf.mxu0
    %v2828 = vadd.f32 %v2815, %v2827
    %v2829 = vpop.f32.mrf.mxu0
    %2830 = vdwg.mxu0
    %2831 = vst [vmem:[#allocation2] sm:$0x3] %v2828
    // Predicated region
    $region22: #{geolocation_cnn_forward.3} parent=1 // pred_check
      _
    $region23: #{geolocation_cnn_forward.3} parent=1 // pred_check_branch
      %2833 = sbr.rel (0) target = $region25
    $region24: #{geolocation_cnn_forward.3} parent=1 // pred_region
      %2835 = vsyncadd [#allocation3], 0
      %s2837 = sshll.u32 [#allocation2], 4
      %s2838 = int_to_ptr.vmem [resolvable:$true] %s2837
      %s2839 = sshll.u32 %s5, 4
      %s2840 = int_to_ptr.hbm [resolvable:$true] %s2839
      %2842 = dma.vmem_to_hbm [thread:$0]  %s2838, 32, %s2840, [#allocation3]
    $region25: #{geolocation_cnn_forward.3} parent=1 // pred_fallthru
      _
    // Predicated region
    $region26: #{geolocation_cnn_forward.3} parent=1 // pred_check
      _
    $region27: #{geolocation_cnn_forward.3} parent=1 // pred_check_branch
      %2844 = sbr.rel (0) target = $region29
    $region28: #{geolocation_cnn_forward.3} parent=1 // pred_region
      %2846 = dma.done [#allocation3], 32
    $region29: #{geolocation_cnn_forward.3} parent=1 // pred_fallthru
      _
    %2847 = vsyncpa [#allocation3], 1

</llo_original>
